<compile_context>
chip_gen: v7x
topology: tpu7x:2x2x1
jax: 0.10.0
libtpu: 0.0.40
codegen_flags: <defaults>
</compile_context>

<pallas_src>
import numpy as np
import jax
import jax.numpy as jnp
from jax import lax
from jax.experimental import pallas as pl
from jax.experimental.pallas import tpu as pltpu


# ------------------------- static geometry / constants -----------------------

def _stage_geometry(H, W):
    Hp, Wp = H + 2, W + 2
    return dict(H=H, W=W, Hp=Hp, Wp=Wp, L=Hp * Wp, G=Wp + 1,
                H2=H // 2, W2=W // 2)


def _interior_mask(H, W):
    """(1, Hp*Wp) mask: 1 at interior (valid) positions, 0 on the padding ring."""
    Hp, Wp = H + 2, W + 2
    m = np.zeros((Hp, Wp), np.float32)
    m[1:H + 1, 1:W + 1] = 1.0
    return m.reshape(1, Hp * Wp)


def _pool_select_batched(H, W, n_img, *, last):
    """Block-diagonal 0/1 matrix mapping 2x2-window top-left positions of the
    batched padded lane layout (width n_img*Hp*Wp - (Wp+1)) to either the NEXT
    stage's batched padded layout with zero ring (image-major columns), or, for
    the last stage, to flattened features in position-major column order
    p*n_img + n.  One matmul therefore performs 'extract pooled values for all
    images + re-pad for the next conv' (or 'extract + pack for flatten')."""
    Hp, Wp = H + 2, W + 2
    L = Hp * Wp
    H2, W2 = H // 2, W // 2
    Lv = n_img * L - (Wp + 1)
    if last:
        cols = n_img * H2 * W2
    else:
        Hp2, Wp2 = H2 + 2, W2 + 2
        cols = n_img * Hp2 * Wp2
    S = np.zeros((Lv, cols), np.float32)
    for n in range(n_img):
        for io in range(H2):
            for jo in range(W2):
                src = n * L + (2 * io + 1) * Wp + (2 * jo + 1)
                if last:
                    dst = (io * W2 + jo) * n_img + n
                else:
                    dst = n * (Hp2 * Wp2) + (io + 1) * Wp2 + (jo + 1)
                S[src, dst] = 1.0
    return S


# ------------------------------ Pallas kernel ---------------------------------

def _taps(padded, G, NL, offs):
    """In-VMEM im2col: 9 lane-shifted views of the guarded (already-bf16) padded
    activation, stacked on the sublane (contraction) axis -> (9*C, NL)."""
    return jnp.concatenate([padded[:, G + o: G + o + NL] for o in offs], axis=0)


def _make_fused_kernel(geoms, n_img, channels, ld_last):
    """Whole network (ResBlock+MaxPool stages + Linear bridge) in one kernel."""
    n_stages = len(geoms)
    koffs = [[(dy - 1) * g["Wp"] + (dx - 1) for dy in range(3) for dx in range(3)]
             for g in geoms]

    def kernel(xg_ref, *refs):
        stage_refs = refs[:8 * n_stages]
        wlt_ref = refs[8 * n_stages]
        blt_ref = refs[8 * n_stages + 1]
        feat_ref = refs[8 * n_stages + 2]
        emb_ref = refs[8 * n_stages + 3]

        xg = xg_ref[...]                      # (Cin, NL + 2G) guarded, bf16
        for s in range(n_stages):
            g = geoms[s]
            cin, cout = channels[s], channels[s + 1]
            (w1_ref, b1_ref, w2_ref, b2_ref,
             ws_ref, bs_ref, m_ref, sel_ref) = stage_refs[8 * s: 8 * (s + 1)]
            Wp, L, G = g["Wp"], g["L"], g["G"]
            NL = n_img * L
            offs = koffs[s]

            # --- conv1 (3x3 same, BN scale folded into weights) + bias + ReLU ---
            p1 = _taps(xg, G, NL, offs)                              # (9*Cin, NL) bf16
            y1 = jnp.dot(w1_ref[...], p1, preferred_element_type=jnp.float32)
            # zero the padding ring (it acts as conv2's 'same' padding)
            h1b = (jnp.maximum(y1 + b1_ref[...], 0.0) * m_ref[...]).astype(jnp.bfloat16)

            # --- shortcut (identity or fused 1x1 conv + BN), same VMEM tile ----
            x_in = xg[:, G: G + NL]
            if cin == cout:
                res = x_in.astype(jnp.float32)
            else:
                res = (jnp.dot(ws_ref[...], x_in, preferred_element_type=jnp.float32)
                       + bs_ref[...])

            # --- conv2 + bias + residual + ReLU --------------------------------
            zg = jnp.zeros((cout, G), jnp.bfloat16)
            h1g = jnp.concatenate([zg, h1b, zg], axis=1)
            p2 = _taps(h1g, G, NL, offs)                             # (9*Cout, NL) bf16
            y2 = jnp.dot(w2_ref[...], p2, preferred_element_type=jnp.float32)
            act = jnp.maximum(y2 + b2_ref[...] + res, 0.0)

            # --- fused MaxPool2d(2): 4-corner max + ONE batched selection matmul
            Lv = NL - (Wp + 1)
            v = jnp.maximum(jnp.maximum(act[:, 0:Lv], act[:, 1:1 + Lv]),
                            jnp.maximum(act[:, Wp:Wp + Lv], act[:, Wp + 1:Wp + 1 + Lv]))
            pooled = jnp.dot(v.astype(jnp.bfloat16), sel_ref[...],
                             preferred_element_type=jnp.float32)

            if s == n_stages - 1:
                # pooled columns are position-major: col = p*n_img + n.
                # Stack per-position blocks on sublanes -> featT[p*C + c, n].
                featT = jnp.concatenate(
                    [pooled[:, p * n_img:(p + 1) * n_img] for p in range(ld_last)],
                    axis=0)                                          # (Ld*C, N) f32
                feat_ref[...] = featT
                # fused Linear bridge (weights pre-permuted to p*C + c packing)
                embT = (jnp.dot(wlt_ref[...], featT.astype(jnp.bfloat16),
                                preferred_element_type=jnp.float32)
                        + blt_ref[...])
                emb_ref[...] = embT                                  # (E, N) f32
            else:
                # pooled is the next stage's padded interior (zero ring) for all
                # images; just re-attach the bf16 guard columns.
                g2 = geoms[s + 1]
                zg2 = jnp.zeros((cout, g2["G"]), jnp.bfloat16)
                xg = jnp.concatenate([zg2, pooled.astype(jnp.bfloat16), zg2], axis=1)

    return kernel


# ------------------------------ forward wrapper --------------------------------

def visual_embedder_forward(slices, params):
    """slices: (B, S, H, W) -> (embeddings (B, S, emb), conv NCHW (B*S, C, h, w))."""
    B, S, H, W = slices.shape
    N = B * S
    geoms = params["geoms"]
    channels = params["channels"]
    n_stages = len(channels) - 1
    assert (H, W) == (geoms[0]["H"], geoms[0]["W"])

    # Stage-1 input: per-image 'same' zero ring + guard columns, flattened
    # lane-dense, cast ONCE to bf16.
    g0 = geoms[0]
    x = slices.reshape(N, H, W)
    xp = jnp.pad(x, ((0, 0), (1, 1), (1, 1))).reshape(1, N * g0["L"])
    xg = jnp.pad(xp, ((0, 0), (g0["G"], g0["G"]))).astype(jnp.bfloat16)

    args = [xg]
    for s in range(n_stages):
        st = params["stages"][s]
        g = geoms[s]
        sel = jnp.asarray(
            _pool_select_batched(g["H"], g["W"], N, last=(s == n_stages - 1)),
            dtype=jnp.bfloat16)
        mask = jnp.tile(st["mask"], (1, N))      # per-image interior mask -> batch
        args += [st["w1"], st["b1"], st["w2"], st["b2"],
                 st["ws"], st["bs"], mask, sel]
    args += [params["wlt"], params["blt"]]

    C_last = channels[-1]
    h_out = H // (2 ** n_stages)
    w_out = W // (2 ** n_stages)
    Ld = h_out * w_out
    emb_size = params["wlt"].shape[0]

    kernel = _make_fused_kernel(geoms, N, channels, Ld)
    vmem = pl.BlockSpec(memory_space=pltpu.MemorySpace.VMEM)
    featT, embT = pl.pallas_call(
        kernel,
        out_shape=(jax.ShapeDtypeStruct((Ld * C_last, N), jnp.float32),
                   jax.ShapeDtypeStruct((emb_size, N), jnp.float32)),
        in_specs=[vmem] * len(args),
        out_specs=(vmem, vmem),
        compiler_params=pltpu.CompilerParams(vmem_limit_bytes=32 * 1024 * 1024),
    )(*args)

    # Tiny (few-KB) layout fixups outside the kernel: features are stored
    # position-major (p*C + c, n); emb is stored transposed (E, N).
    conv_nchw = jnp.transpose(featT.reshape(Ld, C_last, N), (2, 1, 0)
                              ).reshape(N, C_last, h_out, w_out)
    emb = embT.T.reshape(B, S, emb_size)
    return emb, conv_nchw


# ----------------------- deterministic parameter init --------------------------

def _fold_bn(gamma, beta, mean, var, conv_bias, eps=1e-5):
    scale = gamma / jnp.sqrt(var + eps)
    bias = beta + (conv_bias - mean) * scale
    return scale, bias                       # (C,) vectors


def _bn_params(keys, c):
    gamma = 1.0 + 0.1 * jax.random.normal(keys[0], (c,), jnp.float32)
    beta = 0.05 * jax.random.normal(keys[1], (c,), jnp.float32)
    mean = 0.05 * jax.random.normal(keys[2], (c,), jnp.float32)
    var = 0.5 + jax.random.uniform(keys[3], (c,), jnp.float32)
    return gamma, beta, mean, var


def init_params(key, channels, height, width, pool_k, emb_size):
    assert pool_k == 2
    n_stages = len(channels) - 1
    geoms, stages = [], []
    H, W = height, width
    for i in range(n_stages):
        cin, cout = channels[i], channels[i + 1]
        geoms.append(_stage_geometry(H, W))
        key, *ks = jax.random.split(key, 20)
        # conv weights packed as (Cout, 9*Cin) with column index k*Cin + c,
        # k = dy*3 + dx  (== torch (Cout, Cin, 3, 3) permuted).  BN scale is
        # folded into the weight rows; only the bias remains in the epilogue.
        w1 = 0.1 * jax.random.normal(ks[0], (cout, 9 * cin), jnp.float32)
        cb1 = 0.05 * jax.random.normal(ks[1], (cout,), jnp.float32)
        s1, b1 = _fold_bn(*_bn_params(ks[2:6], cout), cb1)
        w2 = 0.1 * jax.random.normal(ks[6], (cout, 9 * cout), jnp.float32)
        cb2 = 0.05 * jax.random.normal(ks[7], (cout,), jnp.float32)
        s2, b2 = _fold_bn(*_bn_params(ks[8:12], cout), cb2)
        ws = 0.1 * jax.random.normal(ks[12], (cout, cin), jnp.float32)   # 1x1, no bias
        ss, bs = _fold_bn(*_bn_params(ks[13:17], cout),
                          jnp.zeros((cout,), jnp.float32))
        stages.append(dict(
            w1=(w1 * s1[:, None]).astype(jnp.bfloat16), b1=b1[:, None],
            w2=(w2 * s2[:, None]).astype(jnp.bfloat16), b2=b2[:, None],
            ws=(ws * ss[:, None]).astype(jnp.bfloat16), bs=bs[:, None],
            mask=jnp.asarray(_interior_mask(H, W)),
        ))
        H, W = H // 2, W // 2

    C_last = channels[-1]
    Ld = H * W
    feat = Ld * C_last
    key, kw, kb = jax.random.split(key, 3)
    wl = (0.02 * jax.random.normal(kw, (feat, emb_size), jnp.float32)
          ).astype(jnp.bfloat16)                      # math layout: row = c*Ld + p
    bl = 0.02 * jax.random.normal(kb, (1, emb_size), jnp.float32)
    # kernel-side packing of the Linear weight: (E, Ld*C), column index p*C + c
    wlt = (jnp.transpose(wl.astype(jnp.float32).reshape(C_last, Ld, emb_size),
                         (2, 1, 0))
           .reshape(emb_size, Ld * C_last).astype(jnp.bfloat16))
    blt = bl.T                                        # (E, 1) f32
    return {"stages": stages, "geoms": geoms, "channels": tuple(channels),
            "wl": wl, "bl": bl, "wlt": wlt, "blt": blt}


# ------------------------- pure-JAX reference (f32) ----------------------------

def _reference_forward(slices, params):
    B, S, H, W = slices.shape
    N = B * S
    channels = params["channels"]
    x = slices.reshape(N, 1, H, W)

    def conv3(xx, wpack, cout, cin):
        w = wpack.astype(jnp.float32).reshape(cout, 3, 3, cin).transpose(0, 3, 1, 2)
        return lax.conv_general_dilated(xx, w, (1, 1), 'SAME',
                                        dimension_numbers=('NCHW', 'OIHW', 'NCHW'))

    for i, st in enumerate(params["stages"]):
        cin, cout = channels[i], channels[i + 1]
        b1 = st["b1"][:, 0].reshape(1, cout, 1, 1)
        b2 = st["b2"][:, 0].reshape(1, cout, 1, 1)
        h1 = jnp.maximum(conv3(x, st["w1"], cout, cin) + b1, 0.0)
        y2 = conv3(h1, st["w2"], cout, cout) + b2
        if cin == cout:
            res = x
        else:
            bs = st["bs"][:, 0].reshape(1, cout, 1, 1)
            res = jnp.einsum('oc,nchw->nohw', st["ws"].astype(jnp.float32), x) + bs
        y = jnp.maximum(y2 + res, 0.0)
        n_, c_, hh, ww = y.shape
        x = y.reshape(n_, c_, hh // 2, 2, ww // 2, 2).max(axis=(3, 5))
    conv = x
    flat = conv.reshape(N, -1)
    emb = flat @ params["wl"].astype(jnp.float32) + params["bl"]
    return emb.reshape(B, S, -1), conv


# ------------------------------------ main --------------------------------------

if __name__ == "__main__":
    B, S = 2, 2
    H = W = 16
    channels = (1, 8, 16, 32)
    emb_size = 32
    pool_k = 2

    key = jax.random.PRNGKey(0)
    k_in, k_par = jax.random.split(key)
    slices = jax.random.normal(k_in, (B, S, H, W), jnp.float32)
    params = init_params(k_par, channels, H, W, pool_k, emb_size)

    emb_out, conv_out = visual_embedder_forward(slices, params)
    jax.block_until_ready((emb_out, conv_out))

    n_stages = len(channels) - 1
    assert emb_out.shape == (B, S, emb_size)
    assert conv_out.shape == (B * S, channels[-1],
                              H // pool_k ** n_stages, W // pool_k ** n_stages)
    assert emb_out.dtype == jnp.float32 and conv_out.dtype == jnp.float32

    # numerical sanity check against a pure-JAX (f32) reference; the loose
    # tolerance accounts for bf16 MXU inputs inside the kernel.
    emb_ref, conv_ref = _reference_forward(slices, params)
    np.testing.assert_allclose(np.asarray(conv_out), np.asarray(conv_ref),
                               rtol=1e-1, atol=1e-1)
    np.testing.assert_allclose(np.asarray(emb_out), np.asarray(emb_ref),
                               rtol=1e-1, atol=1e-1)
    print("KERNEL_OK")
</pallas_src>

<mosaic_0001>
module attributes {stable_mosaic.version = 11 : i64} {
  func.func @kernel(%arg0: memref<1x1334xbf16, #tpu.memory_space<vmem>>, %arg1: memref<8x9xbf16, #tpu.memory_space<vmem>>, %arg2: memref<8x1xf32, #tpu.memory_space<vmem>>, %arg3: memref<8x72xbf16, #tpu.memory_space<vmem>>, %arg4: memref<8x1xf32, #tpu.memory_space<vmem>>, %arg5: memref<8x1xbf16, #tpu.memory_space<vmem>>, %arg6: memref<8x1xf32, #tpu.memory_space<vmem>>, %arg7: memref<1x1296xf32, #tpu.memory_space<vmem>>, %arg8: memref<1277x400xbf16, #tpu.memory_space<vmem>>, %arg9: memref<16x72xbf16, #tpu.memory_space<vmem>>, %arg10: memref<16x1xf32, #tpu.memory_space<vmem>>, %arg11: memref<16x144xbf16, #tpu.memory_space<vmem>>, %arg12: memref<16x1xf32, #tpu.memory_space<vmem>>, %arg13: memref<16x8xbf16, #tpu.memory_space<vmem>>, %arg14: memref<16x1xf32, #tpu.memory_space<vmem>>, %arg15: memref<1x400xf32, #tpu.memory_space<vmem>>, %arg16: memref<389x144xbf16, #tpu.memory_space<vmem>>, %arg17: memref<32x144xbf16, #tpu.memory_space<vmem>>, %arg18: memref<32x1xf32, #tpu.memory_space<vmem>>, %arg19: memref<32x288xbf16, #tpu.memory_space<vmem>>, %arg20: memref<32x1xf32, #tpu.memory_space<vmem>>, %arg21: memref<32x16xbf16, #tpu.memory_space<vmem>>, %arg22: memref<32x1xf32, #tpu.memory_space<vmem>>, %arg23: memref<1x144xf32, #tpu.memory_space<vmem>>, %arg24: memref<137x16xbf16, #tpu.memory_space<vmem>>, %arg25: memref<32x128xbf16, #tpu.memory_space<vmem>>, %arg26: memref<32x1xf32, #tpu.memory_space<vmem>>, %arg27: memref<128x4xf32, #tpu.memory_space<vmem>>, %arg28: memref<32x4xf32, #tpu.memory_space<vmem>>) attributes {dimension_semantics = [], scalar_prefetch = 0 : i64, scratch_operands = 0 : i64, tpu.core_type = #tpu.core_type<tc>} {
    %c0 = arith.constant 0 : index
    %c0_0 = arith.constant 0 : index
    %0 = vector.load %arg0[%c0, %c0_0] : memref<1x1334xbf16, #tpu.memory_space<vmem>>, vector<1x1334xbf16>
    %1 = vector.extract_strided_slice %0 {offsets = [0, 0], sizes = [1, 1296], strides = [1, 1]} : vector<1x1334xbf16> to vector<1x1296xbf16>
    %2 = vector.extract_strided_slice %0 {offsets = [0, 1], sizes = [1, 1296], strides = [1, 1]} : vector<1x1334xbf16> to vector<1x1296xbf16>
    %3 = vector.extract_strided_slice %0 {offsets = [0, 2], sizes = [1, 1296], strides = [1, 1]} : vector<1x1334xbf16> to vector<1x1296xbf16>
    %4 = vector.extract_strided_slice %0 {offsets = [0, 18], sizes = [1, 1296], strides = [1, 1]} : vector<1x1334xbf16> to vector<1x1296xbf16>
    %5 = vector.extract_strided_slice %0 {offsets = [0, 19], sizes = [1, 1296], strides = [1, 1]} : vector<1x1334xbf16> to vector<1x1296xbf16>
    %6 = vector.extract_strided_slice %0 {offsets = [0, 20], sizes = [1, 1296], strides = [1, 1]} : vector<1x1334xbf16> to vector<1x1296xbf16>
    %7 = vector.extract_strided_slice %0 {offsets = [0, 36], sizes = [1, 1296], strides = [1, 1]} : vector<1x1334xbf16> to vector<1x1296xbf16>
    %8 = vector.extract_strided_slice %0 {offsets = [0, 37], sizes = [1, 1296], strides = [1, 1]} : vector<1x1334xbf16> to vector<1x1296xbf16>
    %9 = vector.extract_strided_slice %0 {offsets = [0, 38], sizes = [1, 1296], strides = [1, 1]} : vector<1x1334xbf16> to vector<1x1296xbf16>
    %10 = tpu.concatenate %1, %2, %3, %4, %5, %6, %7, %8, %9 in 0 : vector<1x1296xbf16>, vector<1x1296xbf16>, vector<1x1296xbf16>, vector<1x1296xbf16>, vector<1x1296xbf16>, vector<1x1296xbf16>, vector<1x1296xbf16>, vector<1x1296xbf16>, vector<1x1296xbf16> -> vector<9x1296xbf16>
    %c0_1 = arith.constant 0 : index
    %c0_2 = arith.constant 0 : index
    %11 = vector.load %arg1[%c0_1, %c0_2] : memref<8x9xbf16, #tpu.memory_space<vmem>>, vector<8x9xbf16>
    %cst = arith.constant dense<0.000000e+00> : vector<8x1296xf32>
    %12 = tpu.matmul %11, %10, %cst {dimension_numbers = #tpu.dot_dimension_numbers<[1], [0], [0], [1], [0, 0, 1, 1], [], []>} : vector<8x9xbf16>, vector<9x1296xbf16>, vector<8x1296xf32> -> vector<8x1296xf32>
    %c0_3 = arith.constant 0 : index
    %c0_4 = arith.constant 0 : index
    %13 = vector.load %arg2[%c0_3, %c0_4] : memref<8x1xf32, #tpu.memory_space<vmem>>, vector<8x1xf32>
    %14 = vector.broadcast %13 : vector<8x1xf32> to vector<8x1296xf32>
    %15 = arith.addf %12, %14 : vector<8x1296xf32>
    %cst_5 = arith.constant 0.000000e+00 : f32
    %16 = vector.broadcast %cst_5 : f32 to vector<8x1296xf32>
    %17 = arith.maximumf %15, %16 : vector<8x1296xf32>
    %c0_6 = arith.constant 0 : index
    %c0_7 = arith.constant 0 : index
    %18 = vector.load %arg7[%c0_6, %c0_7] : memref<1x1296xf32, #tpu.memory_space<vmem>>, vector<1x1296xf32>
    %19 = vector.broadcast %18 : vector<1x1296xf32> to vector<8x1296xf32>
    %20 = arith.mulf %17, %19 : vector<8x1296xf32>
    %21 = arith.truncf %20 : vector<8x1296xf32> to vector<8x1296xbf16>
    %22 = vector.extract_strided_slice %0 {offsets = [0, 19], sizes = [1, 1296], strides = [1, 1]} : vector<1x1334xbf16> to vector<1x1296xbf16>
    %c0_8 = arith.constant 0 : index
    %c0_9 = arith.constant 0 : index
    %23 = vector.load %arg5[%c0_8, %c0_9] : memref<8x1xbf16, #tpu.memory_space<vmem>>, vector<8x1xbf16>
    %cst_10 = arith.constant dense<0.000000e+00> : vector<8x1296xf32>
    %24 = tpu.matmul %23, %22, %cst_10 {dimension_numbers = #tpu.dot_dimension_numbers<[1], [0], [0], [1], [0, 0, 1, 1], [], []>} : vector<8x1xbf16>, vector<1x1296xbf16>, vector<8x1296xf32> -> vector<8x1296xf32>
    %c0_11 = arith.constant 0 : index
    %c0_12 = arith.constant 0 : index
    %25 = vector.load %arg6[%c0_11, %c0_12] : memref<8x1xf32, #tpu.memory_space<vmem>>, vector<8x1xf32>
    %26 = vector.broadcast %25 : vector<8x1xf32> to vector<8x1296xf32>
    %27 = arith.addf %24, %26 : vector<8x1296xf32>
    %cst_13 = arith.constant 0.000000e+00 : bf16
    %28 = vector.broadcast %cst_13 : bf16 to vector<8x19xbf16>
    %29 = tpu.concatenate %28, %21, %28 in 1 : vector<8x19xbf16>, vector<8x1296xbf16>, vector<8x19xbf16> -> vector<8x1334xbf16>
    %30 = vector.extract_strided_slice %29 {offsets = [0, 0], sizes = [8, 1296], strides = [1, 1]} : vector<8x1334xbf16> to vector<8x1296xbf16>
    %31 = vector.extract_strided_slice %29 {offsets = [0, 1], sizes = [8, 1296], strides = [1, 1]} : vector<8x1334xbf16> to vector<8x1296xbf16>
    %32 = vector.extract_strided_slice %29 {offsets = [0, 2], sizes = [8, 1296], strides = [1, 1]} : vector<8x1334xbf16> to vector<8x1296xbf16>
    %33 = vector.extract_strided_slice %29 {offsets = [0, 18], sizes = [8, 1296], strides = [1, 1]} : vector<8x1334xbf16> to vector<8x1296xbf16>
    %34 = vector.extract_strided_slice %29 {offsets = [0, 19], sizes = [8, 1296], strides = [1, 1]} : vector<8x1334xbf16> to vector<8x1296xbf16>
    %35 = vector.extract_strided_slice %29 {offsets = [0, 20], sizes = [8, 1296], strides = [1, 1]} : vector<8x1334xbf16> to vector<8x1296xbf16>
    %36 = vector.extract_strided_slice %29 {offsets = [0, 36], sizes = [8, 1296], strides = [1, 1]} : vector<8x1334xbf16> to vector<8x1296xbf16>
    %37 = vector.extract_strided_slice %29 {offsets = [0, 37], sizes = [8, 1296], strides = [1, 1]} : vector<8x1334xbf16> to vector<8x1296xbf16>
    %38 = vector.extract_strided_slice %29 {offsets = [0, 38], sizes = [8, 1296], strides = [1, 1]} : vector<8x1334xbf16> to vector<8x1296xbf16>
    %39 = tpu.concatenate %30, %31, %32, %33, %34, %35, %36, %37, %38 in 0 : vector<8x1296xbf16>, vector<8x1296xbf16>, vector<8x1296xbf16>, vector<8x1296xbf16>, vector<8x1296xbf16>, vector<8x1296xbf16>, vector<8x1296xbf16>, vector<8x1296xbf16>, vector<8x1296xbf16> -> vector<72x1296xbf16>
    %c0_14 = arith.constant 0 : index
    %c0_15 = arith.constant 0 : index
    %40 = vector.load %arg3[%c0_14, %c0_15] : memref<8x72xbf16, #tpu.memory_space<vmem>>, vector<8x72xbf16>
    %cst_16 = arith.constant dense<0.000000e+00> : vector<8x1296xf32>
    %41 = tpu.matmul %40, %39, %cst_16 {dimension_numbers = #tpu.dot_dimension_numbers<[1], [0], [0], [1], [0, 0, 1, 1], [], []>} : vector<8x72xbf16>, vector<72x1296xbf16>, vector<8x1296xf32> -> vector<8x1296xf32>
    %c0_17 = arith.constant 0 : index
    %c0_18 = arith.constant 0 : index
    %42 = vector.load %arg4[%c0_17, %c0_18] : memref<8x1xf32, #tpu.memory_space<vmem>>, vector<8x1xf32>
    %43 = vector.broadcast %42 : vector<8x1xf32> to vector<8x1296xf32>
    %44 = arith.addf %41, %43 : vector<8x1296xf32>
    %45 = arith.addf %44, %27 : vector<8x1296xf32>
    %cst_19 = arith.constant 0.000000e+00 : f32
    %46 = vector.broadcast %cst_19 : f32 to vector<8x1296xf32>
    %47 = arith.maximumf %45, %46 : vector<8x1296xf32>
    %48 = vector.extract_strided_slice %47 {offsets = [0, 0], sizes = [8, 1277], strides = [1, 1]} : vector<8x1296xf32> to vector<8x1277xf32>
    %49 = vector.extract_strided_slice %47 {offsets = [0, 1], sizes = [8, 1277], strides = [1, 1]} : vector<8x1296xf32> to vector<8x1277xf32>
    %50 = arith.maximumf %48, %49 : vector<8x1277xf32>
    %51 = vector.extract_strided_slice %47 {offsets = [0, 18], sizes = [8, 1277], strides = [1, 1]} : vector<8x1296xf32> to vector<8x1277xf32>
    %52 = vector.extract_strided_slice %47 {offsets = [0, 19], sizes = [8, 1277], strides = [1, 1]} : vector<8x1296xf32> to vector<8x1277xf32>
    %53 = arith.maximumf %51, %52 : vector<8x1277xf32>
    %54 = arith.maximumf %50, %53 : vector<8x1277xf32>
    %55 = arith.truncf %54 : vector<8x1277xf32> to vector<8x1277xbf16>
    %c0_20 = arith.constant 0 : index
    %c0_21 = arith.constant 0 : index
    %56 = vector.load %arg8[%c0_20, %c0_21] : memref<1277x400xbf16, #tpu.memory_space<vmem>>, vector<1277x400xbf16>
    %cst_22 = arith.constant dense<0.000000e+00> : vector<8x400xf32>
    %57 = tpu.matmul %55, %56, %cst_22 {dimension_numbers = #tpu.dot_dimension_numbers<[1], [0], [0], [1], [0, 0, 1, 1], [], []>} : vector<8x1277xbf16>, vector<1277x400xbf16>, vector<8x400xf32> -> vector<8x400xf32>
    %cst_23 = arith.constant 0.000000e+00 : bf16
    %58 = vector.broadcast %cst_23 : bf16 to vector<8x11xbf16>
    %59 = arith.truncf %57 : vector<8x400xf32> to vector<8x400xbf16>
    %60 = tpu.concatenate %58, %59, %58 in 1 : vector<8x11xbf16>, vector<8x400xbf16>, vector<8x11xbf16> -> vector<8x422xbf16>
    %61 = vector.extract_strided_slice %60 {offsets = [0, 0], sizes = [8, 400], strides = [1, 1]} : vector<8x422xbf16> to vector<8x400xbf16>
    %62 = vector.extract_strided_slice %60 {offsets = [0, 1], sizes = [8, 400], strides = [1, 1]} : vector<8x422xbf16> to vector<8x400xbf16>
    %63 = vector.extract_strided_slice %60 {offsets = [0, 2], sizes = [8, 400], strides = [1, 1]} : vector<8x422xbf16> to vector<8x400xbf16>
    %64 = vector.extract_strided_slice %60 {offsets = [0, 10], sizes = [8, 400], strides = [1, 1]} : vector<8x422xbf16> to vector<8x400xbf16>
    %65 = vector.extract_strided_slice %60 {offsets = [0, 11], sizes = [8, 400], strides = [1, 1]} : vector<8x422xbf16> to vector<8x400xbf16>
    %66 = vector.extract_strided_slice %60 {offsets = [0, 12], sizes = [8, 400], strides = [1, 1]} : vector<8x422xbf16> to vector<8x400xbf16>
    %67 = vector.extract_strided_slice %60 {offsets = [0, 20], sizes = [8, 400], strides = [1, 1]} : vector<8x422xbf16> to vector<8x400xbf16>
    %68 = vector.extract_strided_slice %60 {offsets = [0, 21], sizes = [8, 400], strides = [1, 1]} : vector<8x422xbf16> to vector<8x400xbf16>
    %69 = vector.extract_strided_slice %60 {offsets = [0, 22], sizes = [8, 400], strides = [1, 1]} : vector<8x422xbf16> to vector<8x400xbf16>
    %70 = tpu.concatenate %61, %62, %63, %64, %65, %66, %67, %68, %69 in 0 : vector<8x400xbf16>, vector<8x400xbf16>, vector<8x400xbf16>, vector<8x400xbf16>, vector<8x400xbf16>, vector<8x400xbf16>, vector<8x400xbf16>, vector<8x400xbf16>, vector<8x400xbf16> -> vector<72x400xbf16>
    %c0_24 = arith.constant 0 : index
    %c0_25 = arith.constant 0 : index
    %71 = vector.load %arg9[%c0_24, %c0_25] : memref<16x72xbf16, #tpu.memory_space<vmem>>, vector<16x72xbf16>
    %cst_26 = arith.constant dense<0.000000e+00> : vector<16x400xf32>
    %72 = tpu.matmul %71, %70, %cst_26 {dimension_numbers = #tpu.dot_dimension_numbers<[1], [0], [0], [1], [0, 0, 1, 1], [], []>} : vector<16x72xbf16>, vector<72x400xbf16>, vector<16x400xf32> -> vector<16x400xf32>
    %c0_27 = arith.constant 0 : index
    %c0_28 = arith.constant 0 : index
    %73 = vector.load %arg10[%c0_27, %c0_28] : memref<16x1xf32, #tpu.memory_space<vmem>>, vector<16x1xf32>
    %74 = vector.broadcast %73 : vector<16x1xf32> to vector<16x400xf32>
    %75 = arith.addf %72, %74 : vector<16x400xf32>
    %cst_29 = arith.constant 0.000000e+00 : f32
    %76 = vector.broadcast %cst_29 : f32 to vector<16x400xf32>
    %77 = arith.maximumf %75, %76 : vector<16x400xf32>
    %c0_30 = arith.constant 0 : index
    %c0_31 = arith.constant 0 : index
    %78 = vector.load %arg15[%c0_30, %c0_31] : memref<1x400xf32, #tpu.memory_space<vmem>>, vector<1x400xf32>
    %79 = vector.broadcast %78 : vector<1x400xf32> to vector<16x400xf32>
    %80 = arith.mulf %77, %79 : vector<16x400xf32>
    %81 = arith.truncf %80 : vector<16x400xf32> to vector<16x400xbf16>
    %82 = vector.extract_strided_slice %60 {offsets = [0, 11], sizes = [8, 400], strides = [1, 1]} : vector<8x422xbf16> to vector<8x400xbf16>
    %c0_32 = arith.constant 0 : index
    %c0_33 = arith.constant 0 : index
    %83 = vector.load %arg13[%c0_32, %c0_33] : memref<16x8xbf16, #tpu.memory_space<vmem>>, vector<16x8xbf16>
    %cst_34 = arith.constant dense<0.000000e+00> : vector<16x400xf32>
    %84 = tpu.matmul %83, %82, %cst_34 {dimension_numbers = #tpu.dot_dimension_numbers<[1], [0], [0], [1], [0, 0, 1, 1], [], []>} : vector<16x8xbf16>, vector<8x400xbf16>, vector<16x400xf32> -> vector<16x400xf32>
    %c0_35 = arith.constant 0 : index
    %c0_36 = arith.constant 0 : index
    %85 = vector.load %arg14[%c0_35, %c0_36] : memref<16x1xf32, #tpu.memory_space<vmem>>, vector<16x1xf32>
    %86 = vector.broadcast %85 : vector<16x1xf32> to vector<16x400xf32>
    %87 = arith.addf %84, %86 : vector<16x400xf32>
    %cst_37 = arith.constant 0.000000e+00 : bf16
    %88 = vector.broadcast %cst_37 : bf16 to vector<16x11xbf16>
    %89 = tpu.concatenate %88, %81, %88 in 1 : vector<16x11xbf16>, vector<16x400xbf16>, vector<16x11xbf16> -> vector<16x422xbf16>
    %90 = vector.extract_strided_slice %89 {offsets = [0, 0], sizes = [16, 400], strides = [1, 1]} : vector<16x422xbf16> to vector<16x400xbf16>
    %91 = vector.extract_strided_slice %89 {offsets = [0, 1], sizes = [16, 400], strides = [1, 1]} : vector<16x422xbf16> to vector<16x400xbf16>
    %92 = vector.extract_strided_slice %89 {offsets = [0, 2], sizes = [16, 400], strides = [1, 1]} : vector<16x422xbf16> to vector<16x400xbf16>
    %93 = vector.extract_strided_slice %89 {offsets = [0, 10], sizes = [16, 400], strides = [1, 1]} : vector<16x422xbf16> to vector<16x400xbf16>
    %94 = vector.extract_strided_slice %89 {offsets = [0, 11], sizes = [16, 400], strides = [1, 1]} : vector<16x422xbf16> to vector<16x400xbf16>
    %95 = vector.extract_strided_slice %89 {offsets = [0, 12], sizes = [16, 400], strides = [1, 1]} : vector<16x422xbf16> to vector<16x400xbf16>
    %96 = vector.extract_strided_slice %89 {offsets = [0, 20], sizes = [16, 400], strides = [1, 1]} : vector<16x422xbf16> to vector<16x400xbf16>
    %97 = vector.extract_strided_slice %89 {offsets = [0, 21], sizes = [16, 400], strides = [1, 1]} : vector<16x422xbf16> to vector<16x400xbf16>
    %98 = vector.extract_strided_slice %89 {offsets = [0, 22], sizes = [16, 400], strides = [1, 1]} : vector<16x422xbf16> to vector<16x400xbf16>
    %99 = tpu.concatenate %90, %91, %92, %93, %94, %95, %96, %97, %98 in 0 : vector<16x400xbf16>, vector<16x400xbf16>, vector<16x400xbf16>, vector<16x400xbf16>, vector<16x400xbf16>, vector<16x400xbf16>, vector<16x400xbf16>, vector<16x400xbf16>, vector<16x400xbf16> -> vector<144x400xbf16>
    %c0_38 = arith.constant 0 : index
    %c0_39 = arith.constant 0 : index
    %100 = vector.load %arg11[%c0_38, %c0_39] : memref<16x144xbf16, #tpu.memory_space<vmem>>, vector<16x144xbf16>
    %cst_40 = arith.constant dense<0.000000e+00> : vector<16x400xf32>
    %101 = tpu.matmul %100, %99, %cst_40 {dimension_numbers = #tpu.dot_dimension_numbers<[1], [0], [0], [1], [0, 0, 1, 1], [], []>} : vector<16x144xbf16>, vector<144x400xbf16>, vector<16x400xf32> -> vector<16x400xf32>
    %c0_41 = arith.constant 0 : index
    %c0_42 = arith.constant 0 : index
    %102 = vector.load %arg12[%c0_41, %c0_42] : memref<16x1xf32, #tpu.memory_space<vmem>>, vector<16x1xf32>
    %103 = vector.broadcast %102 : vector<16x1xf32> to vector<16x400xf32>
    %104 = arith.addf %101, %103 : vector<16x400xf32>
    %105 = arith.addf %104, %87 : vector<16x400xf32>
    %cst_43 = arith.constant 0.000000e+00 : f32
    %106 = vector.broadcast %cst_43 : f32 to vector<16x400xf32>
    %107 = arith.maximumf %105, %106 : vector<16x400xf32>
    %108 = vector.extract_strided_slice %107 {offsets = [0, 0], sizes = [16, 389], strides = [1, 1]} : vector<16x400xf32> to vector<16x389xf32>
    %109 = vector.extract_strided_slice %107 {offsets = [0, 1], sizes = [16, 389], strides = [1, 1]} : vector<16x400xf32> to vector<16x389xf32>
    %110 = arith.maximumf %108, %109 : vector<16x389xf32>
    %111 = vector.extract_strided_slice %107 {offsets = [0, 10], sizes = [16, 389], strides = [1, 1]} : vector<16x400xf32> to vector<16x389xf32>
    %112 = vector.extract_strided_slice %107 {offsets = [0, 11], sizes = [16, 389], strides = [1, 1]} : vector<16x400xf32> to vector<16x389xf32>
    %113 = arith.maximumf %111, %112 : vector<16x389xf32>
    %114 = arith.maximumf %110, %113 : vector<16x389xf32>
    %115 = arith.truncf %114 : vector<16x389xf32> to vector<16x389xbf16>
    %c0_44 = arith.constant 0 : index
    %c0_45 = arith.constant 0 : index
    %116 = vector.load %arg16[%c0_44, %c0_45] : memref<389x144xbf16, #tpu.memory_space<vmem>>, vector<389x144xbf16>
    %cst_46 = arith.constant dense<0.000000e+00> : vector<16x144xf32>
    %117 = tpu.matmul %115, %116, %cst_46 {dimension_numbers = #tpu.dot_dimension_numbers<[1], [0], [0], [1], [0, 0, 1, 1], [], []>} : vector<16x389xbf16>, vector<389x144xbf16>, vector<16x144xf32> -> vector<16x144xf32>
    %cst_47 = arith.constant 0.000000e+00 : bf16
    %118 = vector.broadcast %cst_47 : bf16 to vector<16x7xbf16>
    %119 = arith.truncf %117 : vector<16x144xf32> to vector<16x144xbf16>
    %120 = tpu.concatenate %118, %119, %118 in 1 : vector<16x7xbf16>, vector<16x144xbf16>, vector<16x7xbf16> -> vector<16x158xbf16>
    %121 = vector.extract_strided_slice %120 {offsets = [0, 0], sizes = [16, 144], strides = [1, 1]} : vector<16x158xbf16> to vector<16x144xbf16>
    %122 = vector.extract_strided_slice %120 {offsets = [0, 1], sizes = [16, 144], strides = [1, 1]} : vector<16x158xbf16> to vector<16x144xbf16>
    %123 = vector.extract_strided_slice %120 {offsets = [0, 2], sizes = [16, 144], strides = [1, 1]} : vector<16x158xbf16> to vector<16x144xbf16>
    %124 = vector.extract_strided_slice %120 {offsets = [0, 6], sizes = [16, 144], strides = [1, 1]} : vector<16x158xbf16> to vector<16x144xbf16>
    %125 = vector.extract_strided_slice %120 {offsets = [0, 7], sizes = [16, 144], strides = [1, 1]} : vector<16x158xbf16> to vector<16x144xbf16>
    %126 = vector.extract_strided_slice %120 {offsets = [0, 8], sizes = [16, 144], strides = [1, 1]} : vector<16x158xbf16> to vector<16x144xbf16>
    %127 = vector.extract_strided_slice %120 {offsets = [0, 12], sizes = [16, 144], strides = [1, 1]} : vector<16x158xbf16> to vector<16x144xbf16>
    %128 = vector.extract_strided_slice %120 {offsets = [0, 13], sizes = [16, 144], strides = [1, 1]} : vector<16x158xbf16> to vector<16x144xbf16>
    %129 = vector.extract_strided_slice %120 {offsets = [0, 14], sizes = [16, 144], strides = [1, 1]} : vector<16x158xbf16> to vector<16x144xbf16>
    %130 = tpu.concatenate %121, %122, %123, %124, %125, %126, %127, %128, %129 in 0 : vector<16x144xbf16>, vector<16x144xbf16>, vector<16x144xbf16>, vector<16x144xbf16>, vector<16x144xbf16>, vector<16x144xbf16>, vector<16x144xbf16>, vector<16x144xbf16>, vector<16x144xbf16> -> vector<144x144xbf16>
    %c0_48 = arith.constant 0 : index
    %c0_49 = arith.constant 0 : index
    %131 = vector.load %arg17[%c0_48, %c0_49] : memref<32x144xbf16, #tpu.memory_space<vmem>>, vector<32x144xbf16>
    %cst_50 = arith.constant dense<0.000000e+00> : vector<32x144xf32>
    %132 = tpu.matmul %131, %130, %cst_50 {dimension_numbers = #tpu.dot_dimension_numbers<[1], [0], [0], [1], [0, 0, 1, 1], [], []>} : vector<32x144xbf16>, vector<144x144xbf16>, vector<32x144xf32> -> vector<32x144xf32>
    %c0_51 = arith.constant 0 : index
    %c0_52 = arith.constant 0 : index
    %133 = vector.load %arg18[%c0_51, %c0_52] : memref<32x1xf32, #tpu.memory_space<vmem>>, vector<32x1xf32>
    %134 = vector.broadcast %133 : vector<32x1xf32> to vector<32x144xf32>
    %135 = arith.addf %132, %134 : vector<32x144xf32>
    %cst_53 = arith.constant 0.000000e+00 : f32
    %136 = vector.broadcast %cst_53 : f32 to vector<32x144xf32>
    %137 = arith.maximumf %135, %136 : vector<32x144xf32>
    %c0_54 = arith.constant 0 : index
    %c0_55 = arith.constant 0 : index
    %138 = vector.load %arg23[%c0_54, %c0_55] : memref<1x144xf32, #tpu.memory_space<vmem>>, vector<1x144xf32>
    %139 = vector.broadcast %138 : vector<1x144xf32> to vector<32x144xf32>
    %140 = arith.mulf %137, %139 : vector<32x144xf32>
    %141 = arith.truncf %140 : vector<32x144xf32> to vector<32x144xbf16>
    %142 = vector.extract_strided_slice %120 {offsets = [0, 7], sizes = [16, 144], strides = [1, 1]} : vector<16x158xbf16> to vector<16x144xbf16>
    %c0_56 = arith.constant 0 : index
    %c0_57 = arith.constant 0 : index
    %143 = vector.load %arg21[%c0_56, %c0_57] : memref<32x16xbf16, #tpu.memory_space<vmem>>, vector<32x16xbf16>
    %cst_58 = arith.constant dense<0.000000e+00> : vector<32x144xf32>
    %144 = tpu.matmul %143, %142, %cst_58 {dimension_numbers = #tpu.dot_dimension_numbers<[1], [0], [0], [1], [0, 0, 1, 1], [], []>} : vector<32x16xbf16>, vector<16x144xbf16>, vector<32x144xf32> -> vector<32x144xf32>
    %c0_59 = arith.constant 0 : index
    %c0_60 = arith.constant 0 : index
    %145 = vector.load %arg22[%c0_59, %c0_60] : memref<32x1xf32, #tpu.memory_space<vmem>>, vector<32x1xf32>
    %146 = vector.broadcast %145 : vector<32x1xf32> to vector<32x144xf32>
    %147 = arith.addf %144, %146 : vector<32x144xf32>
    %cst_61 = arith.constant 0.000000e+00 : bf16
    %148 = vector.broadcast %cst_61 : bf16 to vector<32x7xbf16>
    %149 = tpu.concatenate %148, %141, %148 in 1 : vector<32x7xbf16>, vector<32x144xbf16>, vector<32x7xbf16> -> vector<32x158xbf16>
    %150 = vector.extract_strided_slice %149 {offsets = [0, 0], sizes = [32, 144], strides = [1, 1]} : vector<32x158xbf16> to vector<32x144xbf16>
    %151 = vector.extract_strided_slice %149 {offsets = [0, 1], sizes = [32, 144], strides = [1, 1]} : vector<32x158xbf16> to vector<32x144xbf16>
    %152 = vector.extract_strided_slice %149 {offsets = [0, 2], sizes = [32, 144], strides = [1, 1]} : vector<32x158xbf16> to vector<32x144xbf16>
    %153 = vector.extract_strided_slice %149 {offsets = [0, 6], sizes = [32, 144], strides = [1, 1]} : vector<32x158xbf16> to vector<32x144xbf16>
    %154 = vector.extract_strided_slice %149 {offsets = [0, 7], sizes = [32, 144], strides = [1, 1]} : vector<32x158xbf16> to vector<32x144xbf16>
    %155 = vector.extract_strided_slice %149 {offsets = [0, 8], sizes = [32, 144], strides = [1, 1]} : vector<32x158xbf16> to vector<32x144xbf16>
    %156 = vector.extract_strided_slice %149 {offsets = [0, 12], sizes = [32, 144], strides = [1, 1]} : vector<32x158xbf16> to vector<32x144xbf16>
    %157 = vector.extract_strided_slice %149 {offsets = [0, 13], sizes = [32, 144], strides = [1, 1]} : vector<32x158xbf16> to vector<32x144xbf16>
    %158 = vector.extract_strided_slice %149 {offsets = [0, 14], sizes = [32, 144], strides = [1, 1]} : vector<32x158xbf16> to vector<32x144xbf16>
    %159 = tpu.concatenate %150, %151, %152, %153, %154, %155, %156, %157, %158 in 0 : vector<32x144xbf16>, vector<32x144xbf16>, vector<32x144xbf16>, vector<32x144xbf16>, vector<32x144xbf16>, vector<32x144xbf16>, vector<32x144xbf16>, vector<32x144xbf16>, vector<32x144xbf16> -> vector<288x144xbf16>
    %c0_62 = arith.constant 0 : index
    %c0_63 = arith.constant 0 : index
    %160 = vector.load %arg19[%c0_62, %c0_63] : memref<32x288xbf16, #tpu.memory_space<vmem>>, vector<32x288xbf16>
    %cst_64 = arith.constant dense<0.000000e+00> : vector<32x144xf32>
    %161 = tpu.matmul %160, %159, %cst_64 {dimension_numbers = #tpu.dot_dimension_numbers<[1], [0], [0], [1], [0, 0, 1, 1], [], []>} : vector<32x288xbf16>, vector<288x144xbf16>, vector<32x144xf32> -> vector<32x144xf32>
    %c0_65 = arith.constant 0 : index
    %c0_66 = arith.constant 0 : index
    %162 = vector.load %arg20[%c0_65, %c0_66] : memref<32x1xf32, #tpu.memory_space<vmem>>, vector<32x1xf32>
    %163 = vector.broadcast %162 : vector<32x1xf32> to vector<32x144xf32>
    %164 = arith.addf %161, %163 : vector<32x144xf32>
    %165 = arith.addf %164, %147 : vector<32x144xf32>
    %cst_67 = arith.constant 0.000000e+00 : f32
    %166 = vector.broadcast %cst_67 : f32 to vector<32x144xf32>
    %167 = arith.maximumf %165, %166 : vector<32x144xf32>
    %168 = vector.extract_strided_slice %167 {offsets = [0, 0], sizes = [32, 137], strides = [1, 1]} : vector<32x144xf32> to vector<32x137xf32>
    %169 = vector.extract_strided_slice %167 {offsets = [0, 1], sizes = [32, 137], strides = [1, 1]} : vector<32x144xf32> to vector<32x137xf32>
    %170 = arith.maximumf %168, %169 : vector<32x137xf32>
    %171 = vector.extract_strided_slice %167 {offsets = [0, 6], sizes = [32, 137], strides = [1, 1]} : vector<32x144xf32> to vector<32x137xf32>
    %172 = vector.extract_strided_slice %167 {offsets = [0, 7], sizes = [32, 137], strides = [1, 1]} : vector<32x144xf32> to vector<32x137xf32>
    %173 = arith.maximumf %171, %172 : vector<32x137xf32>
    %174 = arith.maximumf %170, %173 : vector<32x137xf32>
    %175 = arith.truncf %174 : vector<32x137xf32> to vector<32x137xbf16>
    %c0_68 = arith.constant 0 : index
    %c0_69 = arith.constant 0 : index
    %176 = vector.load %arg24[%c0_68, %c0_69] : memref<137x16xbf16, #tpu.memory_space<vmem>>, vector<137x16xbf16>
    %cst_70 = arith.constant dense<0.000000e+00> : vector<32x16xf32>
    %177 = tpu.matmul %175, %176, %cst_70 {dimension_numbers = #tpu.dot_dimension_numbers<[1], [0], [0], [1], [0, 0, 1, 1], [], []>} : vector<32x137xbf16>, vector<137x16xbf16>, vector<32x16xf32> -> vector<32x16xf32>
    %178 = vector.extract_strided_slice %177 {offsets = [0, 0], sizes = [32, 4], strides = [1, 1]} : vector<32x16xf32> to vector<32x4xf32>
    %179 = vector.extract_strided_slice %177 {offsets = [0, 4], sizes = [32, 4], strides = [1, 1]} : vector<32x16xf32> to vector<32x4xf32>
    %180 = vector.extract_strided_slice %177 {offsets = [0, 8], sizes = [32, 4], strides = [1, 1]} : vector<32x16xf32> to vector<32x4xf32>
    %181 = vector.extract_strided_slice %177 {offsets = [0, 12], sizes = [32, 4], strides = [1, 1]} : vector<32x16xf32> to vector<32x4xf32>
    %182 = tpu.concatenate %178, %179, %180, %181 in 0 : vector<32x4xf32>, vector<32x4xf32>, vector<32x4xf32>, vector<32x4xf32> -> vector<128x4xf32>
    %c0_71 = arith.constant 0 : index
    %c0_72 = arith.constant 0 : index
    %183 = vector.load %arg27[%c0_71, %c0_72] : memref<128x4xf32, #tpu.memory_space<vmem>>, vector<128x4xf32>
    tpu.vector_store %arg27[%c0_71, %c0_72], %182 {strides = array<i32>} : memref<128x4xf32, #tpu.memory_space<vmem>>, vector<128x4xf32>,
    %c0_73 = arith.constant 0 : index
    %c0_74 = arith.constant 0 : index
    %184 = vector.load %arg25[%c0_73, %c0_74] : memref<32x128xbf16, #tpu.memory_space<vmem>>, vector<32x128xbf16>
    %185 = arith.truncf %182 : vector<128x4xf32> to vector<128x4xbf16>
    %cst_75 = arith.constant dense<0.000000e+00> : vector<32x4xf32>
    %186 = tpu.matmul %184, %185, %cst_75 {dimension_numbers = #tpu.dot_dimension_numbers<[1], [0], [0], [1], [0, 0, 1, 1], [], []>} : vector<32x128xbf16>, vector<128x4xbf16>, vector<32x4xf32> -> vector<32x4xf32>
    %c0_76 = arith.constant 0 : index
    %c0_77 = arith.constant 0 : index
    %187 = vector.load %arg26[%c0_76, %c0_77] : memref<32x1xf32, #tpu.memory_space<vmem>>, vector<32x1xf32>
    %188 = vector.broadcast %187 : vector<32x1xf32> to vector<32x4xf32>
    %189 = arith.addf %186, %188 : vector<32x4xf32>
    %c0_78 = arith.constant 0 : index
    %c0_79 = arith.constant 0 : index
    %190 = vector.load %arg28[%c0_78, %c0_79] : memref<32x4xf32, #tpu.memory_space<vmem>>, vector<32x4xf32>
    tpu.vector_store %arg28[%c0_78, %c0_79], %189 {strides = array<i32>} : memref<32x4xf32, #tpu.memory_space<vmem>>, vector<32x4xf32>,
    return
  }
}

</mosaic_0001>

<llo_original>
// kernel: tpu_custom_call.1
$region0: #{tpu_custom_call.1}
  #allocation0 [shape = 'u32[]', space=smem, size = 0x4, offset = 0x4, fixed_abs, tag = 'smem constant byte address 0x4 - core index']
  #allocation1 [shape = 'u32[144,128]{1,0:T(1,128)}', space=vmem, size = 0x12000, scoped, tag = 'internal scratch']
  %s0 = inlined_call_operand.vmem [shape: bf16[1,1334], index: 0, kind: input, shape index: {}]
  %s1 = inlined_call_operand.vmem [shape: bf16[8,9], index: 1, kind: input, shape index: {}]
  %s2 = inlined_call_operand.vmem [shape: f32[8,1], index: 2, kind: input, shape index: {}]
  %s3 = inlined_call_operand.vmem [shape: bf16[8,72], index: 3, kind: input, shape index: {}]
  %s4 = inlined_call_operand.vmem [shape: f32[8,1], index: 4, kind: input, shape index: {}]
  %s5 = inlined_call_operand.vmem [shape: bf16[8,1], index: 5, kind: input, shape index: {}]
  %s6 = inlined_call_operand.vmem [shape: f32[8,1], index: 6, kind: input, shape index: {}]
  %s7 = inlined_call_operand.vmem [shape: f32[1,1296], index: 7, kind: input, shape index: {}]
  %s8 = inlined_call_operand.vmem [shape: bf16[1277,400], index: 8, kind: input, shape index: {}]
  %s9 = inlined_call_operand.vmem [shape: bf16[16,72], index: 9, kind: input, shape index: {}]
  %s10 = inlined_call_operand.vmem [shape: f32[16,1], index: 10, kind: input, shape index: {}]
  %s11 = inlined_call_operand.vmem [shape: bf16[16,144], index: 11, kind: input, shape index: {}]
  %s12 = inlined_call_operand.vmem [shape: f32[16,1], index: 12, kind: input, shape index: {}]
  %s13 = inlined_call_operand.vmem [shape: bf16[16,8], index: 13, kind: input, shape index: {}]
  %s14 = inlined_call_operand.vmem [shape: f32[16,1], index: 14, kind: input, shape index: {}]
  %s15 = inlined_call_operand.vmem [shape: f32[1,400], index: 15, kind: input, shape index: {}]
  %s16 = inlined_call_operand.vmem [shape: bf16[389,144], index: 16, kind: input, shape index: {}]
  %s17 = inlined_call_operand.vmem [shape: bf16[32,144], index: 17, kind: input, shape index: {}]
  %s18 = inlined_call_operand.vmem [shape: f32[32,1], index: 18, kind: input, shape index: {}]
  %s19 = inlined_call_operand.vmem [shape: bf16[32,288], index: 19, kind: input, shape index: {}]
  %s20 = inlined_call_operand.vmem [shape: f32[32,1], index: 20, kind: input, shape index: {}]
  %s21 = inlined_call_operand.vmem [shape: bf16[32,16], index: 21, kind: input, shape index: {}]
  %s22 = inlined_call_operand.vmem [shape: f32[32,1], index: 22, kind: input, shape index: {}]
  %s23 = inlined_call_operand.vmem [shape: f32[1,144], index: 23, kind: input, shape index: {}]
  %s24 = inlined_call_operand.vmem [shape: bf16[137,16], index: 24, kind: input, shape index: {}]
  %s25 = inlined_call_operand.vmem [shape: bf16[32,128], index: 25, kind: input, shape index: {}]
  %s26 = inlined_call_operand.vmem [shape: f32[32,1], index: 26, kind: input, shape index: {}]
  %s27 = inlined_call_operand.vmem [shape: f32[128,4], index: 27, kind: output, shape index: {0}]
  %s28 = inlined_call_operand.vmem [shape: f32[32,4], index: 28, kind: output, shape index: {1}]
  %29 = xla_tuple %s27, %s28
  %s30 = sld [smem:[#allocation0]]
  $region126: #{tpu_custom_call.1} parent=0
    _
  %s32 = ssub.s32 1, %s30
  %s33 = scalar_select 0, %s32, %s30
  // Predicated region
  $region2: #{tpu_custom_call.1} parent=0 // pred_check
    _
  $region3: #{tpu_custom_call.1} parent=0 // pred_check_branch
    %35 = sbr.rel (0) target = $region5
  $region4: #{tpu_custom_call.1} parent=0 // pred_region
    _
  $region5: #{tpu_custom_call.1} parent=0 // pred_fallthru
    _
  // Predicated region
  $region6: #{tpu_custom_call.1} parent=0 // pred_check
    _
  $region7: #{tpu_custom_call.1} parent=0 // pred_check_branch
    %37 = sbr.rel (0) target = $region9
  $region8: #{tpu_custom_call.1} parent=0 // pred_region
    _
  $region9: #{tpu_custom_call.1} parent=0 // pred_fallthru
    _
  // Predicated region
  $region10: #{tpu_custom_call.1} parent=0 // pred_check
    _
  $region11: #{tpu_custom_call.1} parent=0 // pred_check_branch
    %39 = sbr.rel (0) target = $region13
  $region12: #{tpu_custom_call.1} parent=0 // pred_region
    _
  $region13: #{tpu_custom_call.1} parent=0 // pred_fallthru
    _
  // Predicated region
  $region14: #{tpu_custom_call.1} parent=0 // pred_check
    _
  $region15: #{tpu_custom_call.1} parent=0 // pred_check_branch
    %41 = sbr.rel (0) target = $region17
  $region16: #{tpu_custom_call.1} parent=0 // pred_region
    _
  $region17: #{tpu_custom_call.1} parent=0 // pred_fallthru
    _
  // Predicated region
  $region18: #{tpu_custom_call.1} parent=0 // pred_check
    _
  $region19: #{tpu_custom_call.1} parent=0 // pred_check_branch
    %43 = sbr.rel (0) target = $region21
  $region20: #{tpu_custom_call.1} parent=0 // pred_region
    _
  $region21: #{tpu_custom_call.1} parent=0 // pred_fallthru
    _
  // Predicated region
  $region22: #{tpu_custom_call.1} parent=0 // pred_check
    _
  $region23: #{tpu_custom_call.1} parent=0 // pred_check_branch
    %45 = sbr.rel (0) target = $region25
  $region24: #{tpu_custom_call.1} parent=0 // pred_region
    _
  $region25: #{tpu_custom_call.1} parent=0 // pred_fallthru
    _
  // Predicated region
  $region26: #{tpu_custom_call.1} parent=0 // pred_check
    _
  $region27: #{tpu_custom_call.1} parent=0 // pred_check_branch
    %47 = sbr.rel (0) target = $region29
  $region28: #{tpu_custom_call.1} parent=0 // pred_region
    _
  $region29: #{tpu_custom_call.1} parent=0 // pred_fallthru
    _
  // Predicated region
  $region30: #{tpu_custom_call.1} parent=0 // pred_check
    _
  $region31: #{tpu_custom_call.1} parent=0 // pred_check_branch
    %49 = sbr.rel (0) target = $region33
  $region32: #{tpu_custom_call.1} parent=0 // pred_region
    _
  $region33: #{tpu_custom_call.1} parent=0 // pred_fallthru
    _
  // Predicated region
  $region34: #{tpu_custom_call.1} parent=0 // pred_check
    _
  $region35: #{tpu_custom_call.1} parent=0 // pred_check_branch
    %51 = sbr.rel (0) target = $region37
  $region36: #{tpu_custom_call.1} parent=0 // pred_region
    _
  $region37: #{tpu_custom_call.1} parent=0 // pred_fallthru
    _
  // Predicated region
  $region38: #{tpu_custom_call.1} parent=0 // pred_check
    _
  $region39: #{tpu_custom_call.1} parent=0 // pred_check_branch
    %53 = sbr.rel (0) target = $region41
  $region40: #{tpu_custom_call.1} parent=0 // pred_region
    _
  $region41: #{tpu_custom_call.1} parent=0 // pred_fallthru
    _
  // Predicated region
  $region42: #{tpu_custom_call.1} parent=0 // pred_check
    _
  $region43: #{tpu_custom_call.1} parent=0 // pred_check_branch
    %55 = sbr.rel (0) target = $region45
  $region44: #{tpu_custom_call.1} parent=0 // pred_region
    _
  $region45: #{tpu_custom_call.1} parent=0 // pred_fallthru
    _
  // Predicated region
  $region46: #{tpu_custom_call.1} parent=0 // pred_check
    _
  $region47: #{tpu_custom_call.1} parent=0 // pred_check_branch
    %57 = sbr.rel (0) target = $region49
  $region48: #{tpu_custom_call.1} parent=0 // pred_region
    _
  $region49: #{tpu_custom_call.1} parent=0 // pred_fallthru
    _
  // Predicated region
  $region50: #{tpu_custom_call.1} parent=0 // pred_check
    _
  $region51: #{tpu_custom_call.1} parent=0 // pred_check_branch
    %59 = sbr.rel (0) target = $region53
  $region52: #{tpu_custom_call.1} parent=0 // pred_region
    _
  $region53: #{tpu_custom_call.1} parent=0 // pred_fallthru
    _
  // Predicated region
  $region54: #{tpu_custom_call.1} parent=0 // pred_check
    _
  $region55: #{tpu_custom_call.1} parent=0 // pred_check_branch
    %61 = sbr.rel (0) target = $region57
  $region56: #{tpu_custom_call.1} parent=0 // pred_region
    _
  $region57: #{tpu_custom_call.1} parent=0 // pred_fallthru
    _
  // Predicated region
  $region58: #{tpu_custom_call.1} parent=0 // pred_check
    _
  $region59: #{tpu_custom_call.1} parent=0 // pred_check_branch
    %63 = sbr.rel (0) target = $region61
  $region60: #{tpu_custom_call.1} parent=0 // pred_region
    _
  $region61: #{tpu_custom_call.1} parent=0 // pred_fallthru
    _
  // Predicated region
  $region62: #{tpu_custom_call.1} parent=0 // pred_check
    _
  $region63: #{tpu_custom_call.1} parent=0 // pred_check_branch
    %65 = sbr.rel (0) target = $region65
  $region64: #{tpu_custom_call.1} parent=0 // pred_region
    _
  $region65: #{tpu_custom_call.1} parent=0 // pred_fallthru
    _
  // Predicated region
  $region66: #{tpu_custom_call.1} parent=0 // pred_check
    _
  $region67: #{tpu_custom_call.1} parent=0 // pred_check_branch
    %67 = sbr.rel (0) target = $region69
  $region68: #{tpu_custom_call.1} parent=0 // pred_region
    _
  $region69: #{tpu_custom_call.1} parent=0 // pred_fallthru
    _
  // Predicated region
  $region70: #{tpu_custom_call.1} parent=0 // pred_check
    _
  $region71: #{tpu_custom_call.1} parent=0 // pred_check_branch
    %69 = sbr.rel (0) target = $region73
  $region72: #{tpu_custom_call.1} parent=0 // pred_region
    _
  $region73: #{tpu_custom_call.1} parent=0 // pred_fallthru
    _
  // Predicated region
  $region74: #{tpu_custom_call.1} parent=0 // pred_check
    _
  $region75: #{tpu_custom_call.1} parent=0 // pred_check_branch
    %71 = sbr.rel (0) target = $region77
  $region76: #{tpu_custom_call.1} parent=0 // pred_region
    _
  $region77: #{tpu_custom_call.1} parent=0 // pred_fallthru
    _
  // Predicated region
  $region78: #{tpu_custom_call.1} parent=0 // pred_check
    _
  $region79: #{tpu_custom_call.1} parent=0 // pred_check_branch
    %73 = sbr.rel (0) target = $region81
  $region80: #{tpu_custom_call.1} parent=0 // pred_region
    _
  $region81: #{tpu_custom_call.1} parent=0 // pred_fallthru
    _
  // Predicated region
  $region82: #{tpu_custom_call.1} parent=0 // pred_check
    _
  $region83: #{tpu_custom_call.1} parent=0 // pred_check_branch
    %75 = sbr.rel (0) target = $region85
  $region84: #{tpu_custom_call.1} parent=0 // pred_region
    _
  $region85: #{tpu_custom_call.1} parent=0 // pred_fallthru
    _
  // Predicated region
  $region86: #{tpu_custom_call.1} parent=0 // pred_check
    _
  $region87: #{tpu_custom_call.1} parent=0 // pred_check_branch
    %77 = sbr.rel (0) target = $region89
  $region88: #{tpu_custom_call.1} parent=0 // pred_region
    _
  $region89: #{tpu_custom_call.1} parent=0 // pred_fallthru
    _
  // Predicated region
  $region90: #{tpu_custom_call.1} parent=0 // pred_check
    _
  $region91: #{tpu_custom_call.1} parent=0 // pred_check_branch
    %79 = sbr.rel (0) target = $region93
  $region92: #{tpu_custom_call.1} parent=0 // pred_region
    _
  $region93: #{tpu_custom_call.1} parent=0 // pred_fallthru
    _
  // Predicated region
  $region94: #{tpu_custom_call.1} parent=0 // pred_check
    _
  $region95: #{tpu_custom_call.1} parent=0 // pred_check_branch
    %81 = sbr.rel (0) target = $region97
  $region96: #{tpu_custom_call.1} parent=0 // pred_region
    _
  $region97: #{tpu_custom_call.1} parent=0 // pred_fallthru
    _
  // Predicated region
  $region98: #{tpu_custom_call.1} parent=0 // pred_check
    _
  $region99: #{tpu_custom_call.1} parent=0 // pred_check_branch
    %83 = sbr.rel (0) target = $region101
  $region100: #{tpu_custom_call.1} parent=0 // pred_region
    _
  $region101: #{tpu_custom_call.1} parent=0 // pred_fallthru
    _
  // Predicated region
  $region102: #{tpu_custom_call.1} parent=0 // pred_check
    _
  $region103: #{tpu_custom_call.1} parent=0 // pred_check_branch
    %85 = sbr.rel (0) target = $region105
  $region104: #{tpu_custom_call.1} parent=0 // pred_region
    _
  $region105: #{tpu_custom_call.1} parent=0 // pred_fallthru
    _
  // Predicated region
  $region106: #{tpu_custom_call.1} parent=0 // pred_check
    _
  $region107: #{tpu_custom_call.1} parent=0 // pred_check_branch
    %87 = sbr.rel (0) target = $region109
  $region108: #{tpu_custom_call.1} parent=0 // pred_region
    _
  $region109: #{tpu_custom_call.1} parent=0 // pred_fallthru
    _
  %v89 = vld [vmem:[%s0] sm:$0xff]
  %v90 = vld [vmem:[%s0 + $0x8] sm:$0x7]
  %v93 = vcombine.high %v89, %v89
  %v95 = vunpack.c.l.s4 1966171168
  %v96 = vunpack.c.0.s8 %v95
  %v97 = vlaneseq
  %v98 = vshrl.u32 %v97, 7
  %v99 = vsub.s32 %v96, %v98
  %v100 = vrot.slane %v89, %v99
  %v102 = vunpack.c.l.s4 1966171168
  %v103 = vunpack.c.0.s8 %v102
  %v104 = vlaneseq
  %v105 = vshrl.u32 %v104, 7
  %v106 = vsub.s32 %v103, %v105
  %v107 = vrot.slane %v93, %v106
  %v108 = vcombine.high %v100, %v100
  %v109 = vcombine.high %v107, %v107
  %v111 = vunpack.c.l.s4 1966171168
  %v112 = vunpack.c.0.s8 %v111
  %v113 = vlaneseq
  %v114 = vshrl.u32 %v113, 7
  %v115 = vsub.s32 %v112, %v114
  %v116 = vrot.slane %v100, %v115
  %v118 = vunpack.c.l.s4 1966171168
  %v119 = vunpack.c.0.s8 %v118
  %v120 = vlaneseq
  %v121 = vshrl.u32 %v120, 7
  %v122 = vsub.s32 %v119, %v121
  %v123 = vrot.slane %v107, %v122
  %v125 = vunpack.c.l.s4 1966171168
  %v126 = vunpack.c.0.s8 %v125
  %v127 = vlaneseq
  %v128 = vshrl.u32 %v127, 7
  %v129 = vsub.s32 %v126, %v128
  %v130 = vrot.slane %v108, %v129
  %v132 = vunpack.c.l.s4 1966171168
  %v133 = vunpack.c.0.s8 %v132
  %v134 = vlaneseq
  %v135 = vshrl.u32 %v134, 7
  %v136 = vsub.s32 %v133, %v135
  %v137 = vrot.slane %v109, %v136
  %v138 = vcombine.high %v116, %v116
  %v139 = vcombine.high %v123, %v123
  %v140 = vcombine.high %v130, %v130
  %v141 = vcombine.high %v137, %v137
  %v143 = vunpack.c.l.s4 1966171168
  %v144 = vunpack.c.0.s8 %v143
  %v145 = vlaneseq
  %v146 = vshrl.u32 %v145, 7
  %v147 = vsub.s32 %v144, %v146
  %v148 = vrot.slane %v90, %v147
  %v149 = vcombine.high %v148, %v148
  %v151 = vunpack.c.l.s4 1966171168
  %v152 = vunpack.c.0.s8 %v151
  %v153 = vlaneseq
  %v154 = vshrl.u32 %v153, 7
  %v155 = vsub.s32 %v152, %v154
  %v156 = vrot.slane %v148, %v155
  %v158 = vunpack.c.l.s4 1966171168
  %v159 = vunpack.c.0.s8 %v158
  %v160 = vlaneseq
  %v161 = vshrl.u32 %v160, 7
  %v162 = vsub.s32 %v159, %v161
  %v163 = vrot.slane %v149, %v162
  %v164 = vcombine.high %v156, %v156
  %v177 = vshll.u32 %v116, 16
  %v180 = vshll.u32 %v130, 16
  %v183 = vshll.u32 %v138, 16
  %v186 = vshll.u32 %v140, 16
  %v189 = vshll.u32 %v123, 16
  %v192 = vshll.u32 %v137, 16
  %v195 = vshll.u32 %v139, 16
  %v198 = vshll.u32 %v141, 16
  %v201 = vshll.u32 %v156, 16
  %v204 = vshll.u32 %v163, 16
  %v207 = vshll.u32 %v164, 16
  %209 = vrot.lane.b32.xlu0 %v177, 127
  %v210 = vpop.permute.xlu0 %209
  %211 = vrot.lane.b32.xlu0 %v180, 127
  %v212 = vpop.permute.xlu0 %211
  %213 = vrot.lane.b32.xlu0 %v183, 127
  %v214 = vpop.permute.xlu0 %213
  %215 = vrot.lane.b32.xlu0 %v186, 127
  %v216 = vpop.permute.xlu0 %215
  %217 = vrot.lane.b32.xlu0 %v189, 127
  %v218 = vpop.permute.xlu0 %217
  %219 = vrot.lane.b32.xlu0 %v192, 127
  %v220 = vpop.permute.xlu0 %219
  %221 = vrot.lane.b32.xlu0 %v195, 127
  %v222 = vpop.permute.xlu0 %221
  %223 = vrot.lane.b32.xlu0 %v198, 127
  %v224 = vpop.permute.xlu0 %223
  %225 = vrot.lane.b32.xlu0 %v201, 127
  %v226 = vpop.permute.xlu0 %225
  %227 = vrot.lane.b32.xlu0 %v204, 127
  %v228 = vpop.permute.xlu0 %227
  %229 = vrot.lane.b32.xlu0 %v207, 127
  %v230 = vpop.permute.xlu0 %229
  %vm231 = vcmask 1039360
  %v232 = vsel %vm231, %v210, %v212
  %v233 = vsel %vm231, %v212, %v214
  %v234 = vsel %vm231, %v214, %v216
  %v235 = vsel %vm231, %v216, %v218
  %v236 = vsel %vm231, %v218, %v220
  %v237 = vsel %vm231, %v220, %v222
  %v238 = vsel %vm231, %v222, %v224
  %v239 = vsel %vm231, %v224, %v226
  %v240 = vsel %vm231, %v226, %v228
  %v241 = vsel %vm231, %v228, %v230
  %v253 = vcombine.low %v89, %v89
  %v255 = vunpack.c.l.s4 1966171168
  %v256 = vunpack.c.0.s8 %v255
  %v257 = vlaneseq
  %v258 = vshrl.u32 %v257, 7
  %v259 = vsub.s32 %v256, %v258
  %v260 = vrot.slane %v253, %v259
  %v261 = vcombine.high %v260, %v260
  %v263 = vunpack.c.l.s4 1966171168
  %v264 = vunpack.c.0.s8 %v263
  %v265 = vlaneseq
  %v266 = vshrl.u32 %v265, 7
  %v267 = vsub.s32 %v264, %v266
  %v268 = vrot.slane %v260, %v267
  %v270 = vunpack.c.l.s4 1966171168
  %v271 = vunpack.c.0.s8 %v270
  %v272 = vlaneseq
  %v273 = vshrl.u32 %v272, 7
  %v274 = vsub.s32 %v271, %v273
  %v275 = vrot.slane %v261, %v274
  %v276 = vcombine.high %v268, %v268
  %v277 = vcombine.high %v275, %v275
  %v278 = vcombine.low %v90, %v90
  %v280 = vunpack.c.l.s4 1966171168
  %v281 = vunpack.c.0.s8 %v280
  %v282 = vlaneseq
  %v283 = vshrl.u32 %v282, 7
  %v284 = vsub.s32 %v281, %v283
  %v285 = vrot.slane %v278, %v284
  %v286 = vcombine.high %v285, %v285
  %v288 = vunpack.c.l.s4 1966171168
  %v289 = vunpack.c.0.s8 %v288
  %v290 = vlaneseq
  %v291 = vshrl.u32 %v290, 7
  %v292 = vsub.s32 %v289, %v291
  %v293 = vrot.slane %v285, %v292
  %v295 = vunpack.c.l.s4 1966171168
  %v296 = vunpack.c.0.s8 %v295
  %v297 = vlaneseq
  %v298 = vshrl.u32 %v297, 7
  %v299 = vsub.s32 %v296, %v298
  %v300 = vrot.slane %v286, %v299
  %v301 = vcombine.high %v293, %v293
  %302 = vrot.lane.b32.xlu0 %v268, 126
  %v303 = vpop.permute.xlu0 %302
  %304 = vrot.lane.b32.xlu0 %v275, 126
  %v305 = vpop.permute.xlu0 %304
  %306 = vrot.lane.b32.xlu0 %v276, 126
  %v307 = vpop.permute.xlu0 %306
  %308 = vrot.lane.b32.xlu0 %v277, 126
  %v309 = vpop.permute.xlu0 %308
  %310 = vrot.lane.b32.xlu0 %v116, 126
  %v311 = vpop.permute.xlu0 %310
  %312 = vrot.lane.b32.xlu0 %v130, 126
  %v313 = vpop.permute.xlu0 %312
  %314 = vrot.lane.b32.xlu0 %v138, 126
  %v315 = vpop.permute.xlu0 %314
  %316 = vrot.lane.b32.xlu0 %v140, 126
  %v317 = vpop.permute.xlu0 %316
  %318 = vrot.lane.b32.xlu0 %v293, 126
  %v319 = vpop.permute.xlu0 %318
  %320 = vrot.lane.b32.xlu0 %v300, 126
  %v321 = vpop.permute.xlu0 %320
  %322 = vrot.lane.b32.xlu0 %v301, 126
  %v323 = vpop.permute.xlu0 %322
  %vm324 = vcmask 1031168
  %v325 = vsel %vm324, %v303, %v305
  %v326 = vsel %vm324, %v305, %v307
  %v327 = vsel %vm324, %v307, %v309
  %v328 = vsel %vm324, %v309, %v311
  %v329 = vsel %vm324, %v311, %v313
  %v330 = vsel %vm324, %v313, %v315
  %v331 = vsel %vm324, %v315, %v317
  %v332 = vsel %vm324, %v317, %v319
  %v333 = vsel %vm324, %v319, %v321
  %v334 = vsel %vm324, %v321, %v323
  %v335 = vrot.slane %v177, 7
  %v336 = vrot.slane %v180, 7
  %v337 = vrot.slane %v183, 7
  %v338 = vrot.slane %v186, 7
  %v339 = vrot.slane %v189, 7
  %v340 = vrot.slane %v192, 7
  %v341 = vrot.slane %v195, 7
  %v342 = vrot.slane %v198, 7
  %v343 = vrot.slane %v201, 7
  %v344 = vrot.slane %v204, 7
  %v345 = vrot.slane %v207, 7
  %346 = vrot.lane.b32.xlu0 %v335, 110
  %v347 = vpop.permute.xlu0 %346
  %348 = vrot.lane.b32.xlu0 %v336, 110
  %v349 = vpop.permute.xlu0 %348
  %350 = vrot.lane.b32.xlu0 %v337, 110
  %v351 = vpop.permute.xlu0 %350
  %352 = vrot.lane.b32.xlu0 %v338, 110
  %v353 = vpop.permute.xlu0 %352
  %354 = vrot.lane.b32.xlu0 %v339, 110
  %v355 = vpop.permute.xlu0 %354
  %356 = vrot.lane.b32.xlu0 %v340, 110
  %v357 = vpop.permute.xlu0 %356
  %358 = vrot.lane.b32.xlu0 %v341, 110
  %v359 = vpop.permute.xlu0 %358
  %360 = vrot.lane.b32.xlu0 %v342, 110
  %v361 = vpop.permute.xlu0 %360
  %362 = vrot.lane.b32.xlu0 %v343, 110
  %v363 = vpop.permute.xlu0 %362
  %364 = vrot.lane.b32.xlu0 %v344, 110
  %v365 = vpop.permute.xlu0 %364
  %366 = vrot.lane.b32.xlu0 %v345, 110
  %v367 = vpop.permute.xlu0 %366
  %vm368 = vcmask 900096
  %v369 = vsel %vm368, %v347, %v349
  %v370 = vsel %vm368, %v349, %v351
  %v371 = vsel %vm368, %v351, %v353
  %v372 = vsel %vm368, %v353, %v355
  %v373 = vsel %vm368, %v355, %v357
  %v374 = vsel %vm368, %v357, %v359
  %v375 = vsel %vm368, %v359, %v361
  %v376 = vsel %vm368, %v361, %v363
  %v377 = vsel %vm368, %v363, %v365
  %v378 = vsel %vm368, %v365, %v367
  %v390 = vcombine.low %v100, %v100
  %v391 = vcombine.low %v107, %v107
  %v393 = vunpack.c.l.s4 1966171168
  %v394 = vunpack.c.0.s8 %v393
  %v395 = vlaneseq
  %v396 = vshrl.u32 %v395, 7
  %v397 = vsub.s32 %v394, %v396
  %v398 = vrot.slane %v390, %v397
  %v400 = vunpack.c.l.s4 1966171168
  %v401 = vunpack.c.0.s8 %v400
  %v402 = vlaneseq
  %v403 = vshrl.u32 %v402, 7
  %v404 = vsub.s32 %v401, %v403
  %v405 = vrot.slane %v391, %v404
  %v406 = vcombine.high %v398, %v398
  %v407 = vcombine.high %v405, %v405
  %v408 = vcombine.low %v148, %v148
  %v410 = vunpack.c.l.s4 1966171168
  %v411 = vunpack.c.0.s8 %v410
  %v412 = vlaneseq
  %v413 = vshrl.u32 %v412, 7
  %v414 = vsub.s32 %v411, %v413
  %v415 = vrot.slane %v408, %v414
  %v416 = vcombine.high %v415, %v415
  %417 = vrot.lane.b32.xlu0 %v398, 109
  %v418 = vpop.permute.xlu0 %417
  %419 = vrot.lane.b32.xlu0 %v116, 109
  %v420 = vpop.permute.xlu0 %419
  %421 = vrot.lane.b32.xlu0 %v406, 109
  %v422 = vpop.permute.xlu0 %421
  %423 = vrot.lane.b32.xlu0 %v138, 109
  %v424 = vpop.permute.xlu0 %423
  %425 = vrot.lane.b32.xlu0 %v405, 109
  %v426 = vpop.permute.xlu0 %425
  %427 = vrot.lane.b32.xlu0 %v123, 109
  %v428 = vpop.permute.xlu0 %427
  %429 = vrot.lane.b32.xlu0 %v407, 109
  %v430 = vpop.permute.xlu0 %429
  %431 = vrot.lane.b32.xlu0 %v139, 109
  %v432 = vpop.permute.xlu0 %431
  %433 = vrot.lane.b32.xlu0 %v415, 109
  %v434 = vpop.permute.xlu0 %433
  %435 = vrot.lane.b32.xlu0 %v156, 109
  %v436 = vpop.permute.xlu0 %435
  %437 = vrot.lane.b32.xlu0 %v416, 109
  %v438 = vpop.permute.xlu0 %437
  %vm439 = vcmask 891904
  %v440 = vsel %vm439, %v418, %v420
  %v441 = vsel %vm439, %v420, %v422
  %v442 = vsel %vm439, %v422, %v424
  %v443 = vsel %vm439, %v424, %v426
  %v444 = vsel %vm439, %v426, %v428
  %v445 = vsel %vm439, %v428, %v430
  %v446 = vsel %vm439, %v430, %v432
  %v447 = vsel %vm439, %v432, %v434
  %v448 = vsel %vm439, %v434, %v436
  %v449 = vsel %vm439, %v436, %v438
  %v450 = vrot.slane %v177, 6
  %v451 = vrot.slane %v180, 6
  %v452 = vrot.slane %v183, 6
  %v453 = vrot.slane %v186, 6
  %v454 = vrot.slane %v189, 6
  %v455 = vrot.slane %v192, 6
  %v456 = vrot.slane %v195, 6
  %v457 = vrot.slane %v198, 6
  %v458 = vrot.slane %v201, 6
  %v459 = vrot.slane %v204, 6
  %v460 = vrot.slane %v207, 6
  %461 = vrot.lane.b32.xlu0 %v450, 108
  %v462 = vpop.permute.xlu0 %461
  %463 = vrot.lane.b32.xlu0 %v451, 108
  %v464 = vpop.permute.xlu0 %463
  %465 = vrot.lane.b32.xlu0 %v452, 108
  %v466 = vpop.permute.xlu0 %465
  %467 = vrot.lane.b32.xlu0 %v453, 108
  %v468 = vpop.permute.xlu0 %467
  %469 = vrot.lane.b32.xlu0 %v454, 108
  %v470 = vpop.permute.xlu0 %469
  %471 = vrot.lane.b32.xlu0 %v455, 108
  %v472 = vpop.permute.xlu0 %471
  %473 = vrot.lane.b32.xlu0 %v456, 108
  %v474 = vpop.permute.xlu0 %473
  %475 = vrot.lane.b32.xlu0 %v457, 108
  %v476 = vpop.permute.xlu0 %475
  %477 = vrot.lane.b32.xlu0 %v458, 108
  %v478 = vpop.permute.xlu0 %477
  %479 = vrot.lane.b32.xlu0 %v459, 108
  %v480 = vpop.permute.xlu0 %479
  %481 = vrot.lane.b32.xlu0 %v460, 108
  %v482 = vpop.permute.xlu0 %481
  %vm483 = vcmask 883712
  %v484 = vsel %vm483, %v462, %v464
  %v485 = vsel %vm483, %v464, %v466
  %v486 = vsel %vm483, %v466, %v468
  %v487 = vsel %vm483, %v468, %v470
  %v488 = vsel %vm483, %v470, %v472
  %v489 = vsel %vm483, %v472, %v474
  %v490 = vsel %vm483, %v474, %v476
  %v491 = vsel %vm483, %v476, %v478
  %v492 = vsel %vm483, %v478, %v480
  %v493 = vsel %vm483, %v480, %v482
  %v505 = vcombine.low %v260, %v260
  %v507 = vunpack.c.l.s4 1966171168
  %v508 = vunpack.c.0.s8 %v507
  %v509 = vlaneseq
  %v510 = vshrl.u32 %v509, 7
  %v511 = vsub.s32 %v508, %v510
  %v512 = vrot.slane %v505, %v511
  %v513 = vcombine.high %v512, %v512
  %v514 = vcombine.low %v285, %v285
  %v516 = vunpack.c.l.s4 1966171168
  %v517 = vunpack.c.0.s8 %v516
  %v518 = vlaneseq
  %v519 = vshrl.u32 %v518, 7
  %v520 = vsub.s32 %v517, %v519
  %v521 = vrot.slane %v514, %v520
  %v522 = vcombine.high %v521, %v521
  %523 = vrot.lane.b32.xlu0 %v512, 92
  %v524 = vpop.permute.xlu0 %523
  %525 = vrot.lane.b32.xlu0 %v268, 92
  %v526 = vpop.permute.xlu0 %525
  %527 = vrot.lane.b32.xlu0 %v513, 92
  %v528 = vpop.permute.xlu0 %527
  %529 = vrot.lane.b32.xlu0 %v276, 92
  %v530 = vpop.permute.xlu0 %529
  %531 = vrot.lane.b32.xlu0 %v398, 92
  %v532 = vpop.permute.xlu0 %531
  %533 = vrot.lane.b32.xlu0 %v116, 92
  %v534 = vpop.permute.xlu0 %533
  %535 = vrot.lane.b32.xlu0 %v406, 92
  %v536 = vpop.permute.xlu0 %535
  %537 = vrot.lane.b32.xlu0 %v138, 92
  %v538 = vpop.permute.xlu0 %537
  %539 = vrot.lane.b32.xlu0 %v521, 92
  %v540 = vpop.permute.xlu0 %539
  %541 = vrot.lane.b32.xlu0 %v293, 92
  %v542 = vpop.permute.xlu0 %541
  %543 = vrot.lane.b32.xlu0 %v522, 92
  %v544 = vpop.permute.xlu0 %543
  %vm545 = vcmask 752640
  %v546 = vsel %vm545, %v524, %v526
  %v547 = vsel %vm545, %v526, %v528
  %v548 = vsel %vm545, %v528, %v530
  %v549 = vsel %vm545, %v530, %v532
  %v550 = vsel %vm545, %v532, %v534
  %v551 = vsel %vm545, %v534, %v536
  %v552 = vsel %vm545, %v536, %v538
  %v553 = vsel %vm545, %v538, %v540
  %v554 = vsel %vm545, %v540, %v542
  %v555 = vsel %vm545, %v542, %v544
  %v556 = vrot.slane %v177, 5
  %v557 = vrot.slane %v180, 5
  %v558 = vrot.slane %v183, 5
  %v559 = vrot.slane %v186, 5
  %v560 = vrot.slane %v189, 5
  %v561 = vrot.slane %v192, 5
  %v562 = vrot.slane %v195, 5
  %v563 = vrot.slane %v198, 5
  %v564 = vrot.slane %v201, 5
  %v565 = vrot.slane %v204, 5
  %v566 = vrot.slane %v207, 5
  %567 = vrot.lane.b32.xlu0 %v556, 91
  %v568 = vpop.permute.xlu0 %567
  %569 = vrot.lane.b32.xlu0 %v557, 91
  %v570 = vpop.permute.xlu0 %569
  %571 = vrot.lane.b32.xlu0 %v558, 91
  %v572 = vpop.permute.xlu0 %571
  %573 = vrot.lane.b32.xlu0 %v559, 91
  %v574 = vpop.permute.xlu0 %573
  %575 = vrot.lane.b32.xlu0 %v560, 91
  %v576 = vpop.permute.xlu0 %575
  %577 = vrot.lane.b32.xlu0 %v561, 91
  %v578 = vpop.permute.xlu0 %577
  %579 = vrot.lane.b32.xlu0 %v562, 91
  %v580 = vpop.permute.xlu0 %579
  %581 = vrot.lane.b32.xlu0 %v563, 91
  %v582 = vpop.permute.xlu0 %581
  %583 = vrot.lane.b32.xlu0 %v564, 91
  %v584 = vpop.permute.xlu0 %583
  %585 = vrot.lane.b32.xlu0 %v565, 91
  %v586 = vpop.permute.xlu0 %585
  %587 = vrot.lane.b32.xlu0 %v566, 91
  %v588 = vpop.permute.xlu0 %587
  %vm589 = vcmask 744448
  %v590 = vsel %vm589, %v568, %v570
  %v591 = vsel %vm589, %v570, %v572
  %v592 = vsel %vm589, %v572, %v574
  %v593 = vsel %vm589, %v574, %v576
  %v594 = vsel %vm589, %v576, %v578
  %v595 = vsel %vm589, %v578, %v580
  %v596 = vsel %vm589, %v580, %v582
  %v597 = vsel %vm589, %v582, %v584
  %v598 = vsel %vm589, %v584, %v586
  %v599 = vsel %vm589, %v586, %v588
  %v611 = vcombine.low %v116, %v116
  %v612 = vcombine.low %v123, %v123
  %v613 = vcombine.low %v130, %v130
  %v614 = vcombine.low %v137, %v137
  %v615 = vcombine.low %v156, %v156
  %v616 = vcombine.low %v163, %v163
  %617 = vrot.lane.b32.xlu0 %v611, 90
  %v618 = vpop.permute.xlu0 %617
  %619 = vrot.lane.b32.xlu0 %v613, 90
  %v620 = vpop.permute.xlu0 %619
  %621 = vrot.lane.b32.xlu0 %v116, 90
  %v622 = vpop.permute.xlu0 %621
  %623 = vrot.lane.b32.xlu0 %v130, 90
  %v624 = vpop.permute.xlu0 %623
  %625 = vrot.lane.b32.xlu0 %v612, 90
  %v626 = vpop.permute.xlu0 %625
  %627 = vrot.lane.b32.xlu0 %v614, 90
  %v628 = vpop.permute.xlu0 %627
  %629 = vrot.lane.b32.xlu0 %v123, 90
  %v630 = vpop.permute.xlu0 %629
  %631 = vrot.lane.b32.xlu0 %v137, 90
  %v632 = vpop.permute.xlu0 %631
  %633 = vrot.lane.b32.xlu0 %v615, 90
  %v634 = vpop.permute.xlu0 %633
  %635 = vrot.lane.b32.xlu0 %v616, 90
  %v636 = vpop.permute.xlu0 %635
  %637 = vrot.lane.b32.xlu0 %v156, 90
  %v638 = vpop.permute.xlu0 %637
  %vm639 = vcmask 736256
  %v640 = vsel %vm639, %v618, %v620
  %v641 = vsel %vm639, %v620, %v622
  %v642 = vsel %vm639, %v622, %v624
  %v643 = vsel %vm639, %v624, %v626
  %v644 = vsel %vm639, %v626, %v628
  %v645 = vsel %vm639, %v628, %v630
  %v646 = vsel %vm639, %v630, %v632
  %v647 = vsel %vm639, %v632, %v634
  %v648 = vsel %vm639, %v634, %v636
  %v649 = vsel %vm639, %v636, %v638
  %vm650 = vcmask 1040384
  %vm651 = vsmask.f32 256
  %vm652 = vmand %vm650, %vm651
  %v653 = vsel %vm652, %v116, %v232
  %v654 = vsel %vm652, %v130, %v233
  %v655 = vsel %vm652, %v138, %v234
  %v656 = vsel %vm652, %v140, %v235
  %v657 = vsel %vm652, %v123, %v236
  %v658 = vsel %vm652, %v137, %v237
  %v659 = vsel %vm652, %v139, %v238
  %v660 = vsel %vm652, %v141, %v239
  %v661 = vsel %vm652, %v156, %v240
  %v662 = vsel %vm652, %v163, %v241
  %v663 = vsel %vm652, %v164, %v230
  %vm664 = vcmask 1040384
  %v667 = vsel %vm664, %v653, %v325
  %v671 = vsel %vm664, %v654, %v326
  %v675 = vsel %vm664, %v655, %v327
  %v679 = vsel %vm664, %v656, %v328
  %v683 = vsel %vm664, %v657, %v329
  %v687 = vsel %vm664, %v658, %v330
  %v691 = vsel %vm664, %v659, %v331
  %v695 = vsel %vm664, %v660, %v332
  %v699 = vsel %vm664, %v661, %v333
  %v703 = vsel %vm664, %v662, %v334
  %v707 = vsel %vm664, %v663, %v323
  %vm709 = vcmask 1041408
  %vm710 = vsmask.f32 1280
  %vm711 = vmand %vm709, %vm710
  %v712 = vsel %vm711, %v667, %v369
  %v713 = vsel %vm711, %v671, %v370
  %v714 = vsel %vm711, %v675, %v371
  %v715 = vsel %vm711, %v679, %v372
  %v716 = vsel %vm711, %v683, %v373
  %v717 = vsel %vm711, %v687, %v374
  %v718 = vsel %vm711, %v691, %v375
  %v719 = vsel %vm711, %v695, %v376
  %v720 = vsel %vm711, %v699, %v377
  %v721 = vsel %vm711, %v703, %v378
  %v722 = vsel %vm711, %v707, %v367
  %vm723 = vcmask 1041408
  %v726 = vsel %vm723, %v712, %v440
  %v730 = vsel %vm723, %v713, %v441
  %v734 = vsel %vm723, %v714, %v442
  %v738 = vsel %vm723, %v715, %v443
  %v742 = vsel %vm723, %v716, %v444
  %v746 = vsel %vm723, %v717, %v445
  %v750 = vsel %vm723, %v718, %v446
  %v754 = vsel %vm723, %v719, %v447
  %v758 = vsel %vm723, %v720, %v448
  %v762 = vsel %vm723, %v721, %v449
  %v766 = vsel %vm723, %v722, %v438
  %vm768 = vcmask 1042432
  %vm769 = vsmask.f32 2304
  %vm770 = vmand %vm768, %vm769
  %v771 = vsel %vm770, %v726, %v484
  %v772 = vsel %vm770, %v730, %v485
  %v773 = vsel %vm770, %v734, %v486
  %v774 = vsel %vm770, %v738, %v487
  %v775 = vsel %vm770, %v742, %v488
  %v776 = vsel %vm770, %v746, %v489
  %v777 = vsel %vm770, %v750, %v490
  %v778 = vsel %vm770, %v754, %v491
  %v779 = vsel %vm770, %v758, %v492
  %v780 = vsel %vm770, %v762, %v493
  %v781 = vsel %vm770, %v766, %v482
  %vm782 = vcmask 1042432
  %v785 = vsel %vm782, %v771, %v546
  %v789 = vsel %vm782, %v772, %v547
  %v793 = vsel %vm782, %v773, %v548
  %v797 = vsel %vm782, %v774, %v549
  %v801 = vsel %vm782, %v775, %v550
  %v805 = vsel %vm782, %v776, %v551
  %v809 = vsel %vm782, %v777, %v552
  %v813 = vsel %vm782, %v778, %v553
  %v817 = vsel %vm782, %v779, %v554
  %v821 = vsel %vm782, %v780, %v555
  %v825 = vsel %vm782, %v781, %v544
  %vm827 = vcmask 1043456
  %vm828 = vsmask.f32 3328
  %vm829 = vmand %vm827, %vm828
  %v830 = vsel %vm829, %v785, %v590
  %v831 = vsel %vm829, %v789, %v591
  %v832 = vsel %vm829, %v793, %v592
  %v833 = vsel %vm829, %v797, %v593
  %v834 = vsel %vm829, %v801, %v594
  %v835 = vsel %vm829, %v805, %v595
  %v836 = vsel %vm829, %v809, %v596
  %v837 = vsel %vm829, %v813, %v597
  %v838 = vsel %vm829, %v817, %v598
  %v839 = vsel %vm829, %v821, %v599
  %v840 = vsel %vm829, %v825, %v588
  %vm841 = vcmask 1043456
  %v844 = vsel %vm841, %v830, %v640
  %v847 = vsel %vm841, %v831, %v641
  %v850 = vsel %vm841, %v832, %v642
  %v853 = vsel %vm841, %v833, %v643
  %v856 = vsel %vm841, %v834, %v644
  %v859 = vsel %vm841, %v835, %v645
  %v862 = vsel %vm841, %v836, %v646
  %v865 = vsel %vm841, %v837, %v647
  %v868 = vsel %vm841, %v838, %v648
  %v871 = vsel %vm841, %v839, %v649
  %v874 = vsel %vm841, %v840, %v638
  %v875 = vld [vmem:[%s1] sm:$0xf]
  %v876 = vld [vmem:[%s2] sm:$0xff]
  %878 = vset.pattern.permute.xlu0 0
  %879 = vperm.xlu0 %878, %v876
  %v880 = vpop.permute.xlu0 %879
  %vm882 = vcmask 72704
  %v884 = vsel %vm882, %v875, 0
  %vm886 = vcmask 1044480
  %v887 = vsel %vm841, 4294967295, 65535
  %v888 = vsel %vm886, %v887, 0
  %v889 = vand.u32 %v844, %v888
  %v891 = vand.u32 %v847, %v888
  %v893 = vand.u32 %v850, %v888
  %v895 = vand.u32 %v853, %v888
  %v897 = vand.u32 %v856, %v888
  %v899 = vand.u32 %v859, %v888
  %v901 = vand.u32 %v862, %v888
  %v903 = vand.u32 %v865, %v888
  %v905 = vand.u32 %v868, %v888
  %v907 = vand.u32 %v871, %v888
  %v909 = vand.u32 %v874, %v888
  %911 = vmatprep.subr.bf16.mxu0 %v891
  %912 = vmatpush1.bf16.msra.mxu0 %v889
  %913 = vmatprep.subr.bf16.mxu0 0
  %914 = vmatpush1.bf16.msra.mxu0 0
  %915 = vmatprep.subr.bf16.mxu0 0
  %916 = vmatpush1.bf16.msra.mxu0 0
  %917 = vmatprep.subr.bf16.mxu0 0
  %918 = vmatpush1.bf16.msra.mxu0 0
  %919 = vmatprep.subr.bf16.mxu0 0
  %920 = vmatpush1.bf16.msra.mxu0 0
  %921 = vmatprep.subr.bf16.mxu0 0
  %922 = vmatpush1.bf16.msra.mxu0 0
  %923 = vmatprep.subr.bf16.mxu0 0
  %924 = vmatpush1.bf16.msra.mxu0 0
  %925 = vmatprep.subr.bf16.mxu0 0
  %926 = vmatpush1.bf16.msra.mxu0 0
  %927 = vmatprep.subr.bf16.mxu0 0
  %928 = vmatpush1.bf16.msra.mxu0 0
  %929 = vmatprep.subr.bf16.mxu0 0
  %930 = vmatpush1.bf16.msra.mxu0 0
  %931 = vmatprep.subr.bf16.mxu0 0
  %932 = vmatpush1.bf16.msra.mxu0 0
  %933 = vmatprep.subr.bf16.mxu0 0
  %934 = vmatpush1.bf16.msra.mxu0 0
  %935 = vmatprep.subr.bf16.mxu0 0
  %936 = vmatpush1.bf16.msra.mxu0 0
  %937 = vmatprep.subr.bf16.mxu0 0
  %938 = vmatpush1.bf16.msra.mxu0 0
  %939 = vmatprep.subr.bf16.mxu0 0
  %940 = vmatpush1.bf16.msra.mxu0 0
  %941 = vmatprep.subr.bf16.mxu0 0
  %942 = vmatpush1.bf16.msra.mxu0 0
  %943 = vmatprep.mubr.bf16.mxu0 0
  %944 = vmatmul.mubr.bf16.gmra.mrb[0].mxu0 %v884
  %v945 = vpop.f32.mrb[0].mxu0
  %v946 = vadd.f32 %v880, %v945
  %v947 = vpop.f32.mrb[0].mxu0
  %v948 = vadd.f32 %v880, %v947
  %v949 = vpop.f32.mrb[0].mxu0
  %v950 = vpop.f32.mrb[0].mxu0
  %951 = vdwg.mxu0
  %952 = vmatprep.subr.bf16.mxu0 %v895
  %953 = vmatpush1.bf16.msra.mxu0 %v893
  %954 = vmatprep.subr.bf16.mxu0 0
  %955 = vmatpush1.bf16.msra.mxu0 0
  %956 = vmatprep.subr.bf16.mxu0 0
  %957 = vmatpush1.bf16.msra.mxu0 0
  %958 = vmatprep.subr.bf16.mxu0 0
  %959 = vmatpush1.bf16.msra.mxu0 0
  %960 = vmatprep.subr.bf16.mxu0 0
  %961 = vmatpush1.bf16.msra.mxu0 0
  %962 = vmatprep.subr.bf16.mxu0 0
  %963 = vmatpush1.bf16.msra.mxu0 0
  %964 = vmatprep.subr.bf16.mxu0 0
  %965 = vmatpush1.bf16.msra.mxu0 0
  %966 = vmatprep.subr.bf16.mxu0 0
  %967 = vmatpush1.bf16.msra.mxu0 0
  %968 = vmatprep.subr.bf16.mxu0 0
  %969 = vmatpush1.bf16.msra.mxu0 0
  %970 = vmatprep.subr.bf16.mxu0 0
  %971 = vmatpush1.bf16.msra.mxu0 0
  %972 = vmatprep.subr.bf16.mxu0 0
  %973 = vmatpush1.bf16.msra.mxu0 0
  %974 = vmatprep.subr.bf16.mxu0 0
  %975 = vmatpush1.bf16.msra.mxu0 0
  %976 = vmatprep.subr.bf16.mxu0 0
  %977 = vmatpush1.bf16.msra.mxu0 0
  %978 = vmatprep.subr.bf16.mxu0 0
  %979 = vmatpush1.bf16.msra.mxu0 0
  %980 = vmatprep.subr.bf16.mxu0 0
  %981 = vmatpush1.bf16.msra.mxu0 0
  %982 = vmatprep.subr.bf16.mxu0 0
  %983 = vmatpush1.bf16.msra.mxu0 0
  %984 = vmatprep.mubr.bf16.mxu0 0
  %985 = vmatmul.mubr.bf16.gmra.mrb[0].mxu0 %v884
  %v986 = vpop.f32.mrb[0].mxu0
  %v987 = vadd.f32 %v880, %v986
  %v988 = vpop.f32.mrb[0].mxu0
  %v989 = vadd.f32 %v880, %v988
  %v990 = vpop.f32.mrb[0].mxu0
  %v991 = vpop.f32.mrb[0].mxu0
  %992 = vdwg.mxu0
  %993 = vmatprep.subr.bf16.mxu0 %v899
  %994 = vmatpush1.bf16.msra.mxu0 %v897
  %995 = vmatprep.subr.bf16.mxu0 0
  %996 = vmatpush1.bf16.msra.mxu0 0
  %997 = vmatprep.subr.bf16.mxu0 0
  %998 = vmatpush1.bf16.msra.mxu0 0
  %999 = vmatprep.subr.bf16.mxu0 0
  %1000 = vmatpush1.bf16.msra.mxu0 0
  %1001 = vmatprep.subr.bf16.mxu0 0
  %1002 = vmatpush1.bf16.msra.mxu0 0
  %1003 = vmatprep.subr.bf16.mxu0 0
  %1004 = vmatpush1.bf16.msra.mxu0 0
  %1005 = vmatprep.subr.bf16.mxu0 0
  %1006 = vmatpush1.bf16.msra.mxu0 0
  %1007 = vmatprep.subr.bf16.mxu0 0
  %1008 = vmatpush1.bf16.msra.mxu0 0
  %1009 = vmatprep.subr.bf16.mxu0 0
  %1010 = vmatpush1.bf16.msra.mxu0 0
  %1011 = vmatprep.subr.bf16.mxu0 0
  %1012 = vmatpush1.bf16.msra.mxu0 0
  %1013 = vmatprep.subr.bf16.mxu0 0
  %1014 = vmatpush1.bf16.msra.mxu0 0
  %1015 = vmatprep.subr.bf16.mxu0 0
  %1016 = vmatpush1.bf16.msra.mxu0 0
  %1017 = vmatprep.subr.bf16.mxu0 0
  %1018 = vmatpush1.bf16.msra.mxu0 0
  %1019 = vmatprep.subr.bf16.mxu0 0
  %1020 = vmatpush1.bf16.msra.mxu0 0
  %1021 = vmatprep.subr.bf16.mxu0 0
  %1022 = vmatpush1.bf16.msra.mxu0 0
  %1023 = vmatprep.subr.bf16.mxu0 0
  %1024 = vmatpush1.bf16.msra.mxu0 0
  %1025 = vmatprep.mubr.bf16.mxu0 0
  %1026 = vmatmul.mubr.bf16.gmra.mrb[0].mxu0 %v884
  %v1027 = vpop.f32.mrb[0].mxu0
  %v1028 = vadd.f32 %v880, %v1027
  %v1029 = vpop.f32.mrb[0].mxu0
  %v1030 = vadd.f32 %v880, %v1029
  %v1031 = vpop.f32.mrb[0].mxu0
  %v1032 = vpop.f32.mrb[0].mxu0
  %1033 = vdwg.mxu0
  %1034 = vmatprep.subr.bf16.mxu0 %v903
  %1035 = vmatpush1.bf16.msra.mxu0 %v901
  %1036 = vmatprep.subr.bf16.mxu0 0
  %1037 = vmatpush1.bf16.msra.mxu0 0
  %1038 = vmatprep.subr.bf16.mxu0 0
  %1039 = vmatpush1.bf16.msra.mxu0 0
  %1040 = vmatprep.subr.bf16.mxu0 0
  %1041 = vmatpush1.bf16.msra.mxu0 0
  %1042 = vmatprep.subr.bf16.mxu0 0
  %1043 = vmatpush1.bf16.msra.mxu0 0
  %1044 = vmatprep.subr.bf16.mxu0 0
  %1045 = vmatpush1.bf16.msra.mxu0 0
  %1046 = vmatprep.subr.bf16.mxu0 0
  %1047 = vmatpush1.bf16.msra.mxu0 0
  %1048 = vmatprep.subr.bf16.mxu0 0
  %1049 = vmatpush1.bf16.msra.mxu0 0
  %1050 = vmatprep.subr.bf16.mxu0 0
  %1051 = vmatpush1.bf16.msra.mxu0 0
  %1052 = vmatprep.subr.bf16.mxu0 0
  %1053 = vmatpush1.bf16.msra.mxu0 0
  %1054 = vmatprep.subr.bf16.mxu0 0
  %1055 = vmatpush1.bf16.msra.mxu0 0
  %1056 = vmatprep.subr.bf16.mxu0 0
  %1057 = vmatpush1.bf16.msra.mxu0 0
  %1058 = vmatprep.subr.bf16.mxu0 0
  %1059 = vmatpush1.bf16.msra.mxu0 0
  %1060 = vmatprep.subr.bf16.mxu0 0
  %1061 = vmatpush1.bf16.msra.mxu0 0
  %1062 = vmatprep.subr.bf16.mxu0 0
  %1063 = vmatpush1.bf16.msra.mxu0 0
  %1064 = vmatprep.subr.bf16.mxu0 0
  %1065 = vmatpush1.bf16.msra.mxu0 0
  %1066 = vmatprep.mubr.bf16.mxu0 0
  %1067 = vmatmul.mubr.bf16.gmra.mrb[0].mxu0 %v884
  %v1068 = vpop.f32.mrb[0].mxu0
  %v1069 = vadd.f32 %v880, %v1068
  %v1070 = vpop.f32.mrb[0].mxu0
  %v1071 = vadd.f32 %v880, %v1070
  %v1072 = vpop.f32.mrb[0].mxu0
  %v1073 = vpop.f32.mrb[0].mxu0
  %1074 = vdwg.mxu0
  %1075 = vmatprep.subr.bf16.mxu0 %v907
  %1076 = vmatpush1.bf16.msra.mxu0 %v905
  %1077 = vmatprep.subr.bf16.mxu0 0
  %1078 = vmatpush1.bf16.msra.mxu0 0
  %1079 = vmatprep.subr.bf16.mxu0 0
  %1080 = vmatpush1.bf16.msra.mxu0 0
  %1081 = vmatprep.subr.bf16.mxu0 0
  %1082 = vmatpush1.bf16.msra.mxu0 0
  %1083 = vmatprep.subr.bf16.mxu0 0
  %1084 = vmatpush1.bf16.msra.mxu0 0
  %1085 = vmatprep.subr.bf16.mxu0 0
  %1086 = vmatpush1.bf16.msra.mxu0 0
  %1087 = vmatprep.subr.bf16.mxu0 0
  %1088 = vmatpush1.bf16.msra.mxu0 0
  %1089 = vmatprep.subr.bf16.mxu0 0
  %1090 = vmatpush1.bf16.msra.mxu0 0
  %1091 = vmatprep.subr.bf16.mxu0 0
  %1092 = vmatpush1.bf16.msra.mxu0 0
  %1093 = vmatprep.subr.bf16.mxu0 0
  %1094 = vmatpush1.bf16.msra.mxu0 0
  %1095 = vmatprep.subr.bf16.mxu0 0
  %1096 = vmatpush1.bf16.msra.mxu0 0
  %1097 = vmatprep.subr.bf16.mxu0 0
  %1098 = vmatpush1.bf16.msra.mxu0 0
  %1099 = vmatprep.subr.bf16.mxu0 0
  %1100 = vmatpush1.bf16.msra.mxu0 0
  %1101 = vmatprep.subr.bf16.mxu0 0
  %1102 = vmatpush1.bf16.msra.mxu0 0
  %1103 = vmatprep.subr.bf16.mxu0 0
  %1104 = vmatpush1.bf16.msra.mxu0 0
  %1105 = vmatprep.subr.bf16.mxu0 0
  %1106 = vmatpush1.bf16.msra.mxu0 0
  %1107 = vmatprep.mubr.bf16.mxu0 0
  %1108 = vmatmul.mubr.bf16.gmra.mrb[0].mxu0 %v884
  %v1109 = vpop.f32.mrb[0].mxu0
  %v1110 = vadd.f32 %v880, %v1109
  %v1111 = vpop.f32.mrb[0].mxu0
  %v1112 = vadd.f32 %v880, %v1111
  %v1113 = vpop.f32.mrb[0].mxu0
  %v1114 = vpop.f32.mrb[0].mxu0
  %1115 = vdwg.mxu0
  %1116 = vmatprep.subr.bf16.mxu0 0
  %1117 = vmatpush1.bf16.msra.mxu0 %v909
  %1118 = vmatprep.subr.bf16.mxu0 0
  %1119 = vmatpush1.bf16.msra.mxu0 0
  %1120 = vmatprep.subr.bf16.mxu0 0
  %1121 = vmatpush1.bf16.msra.mxu0 0
  %1122 = vmatprep.subr.bf16.mxu0 0
  %1123 = vmatpush1.bf16.msra.mxu0 0
  %1124 = vmatprep.subr.bf16.mxu0 0
  %1125 = vmatpush1.bf16.msra.mxu0 0
  %1126 = vmatprep.subr.bf16.mxu0 0
  %1127 = vmatpush1.bf16.msra.mxu0 0
  %1128 = vmatprep.subr.bf16.mxu0 0
  %1129 = vmatpush1.bf16.msra.mxu0 0
  %1130 = vmatprep.subr.bf16.mxu0 0
  %1131 = vmatpush1.bf16.msra.mxu0 0
  %1132 = vmatprep.subr.bf16.mxu0 0
  %1133 = vmatpush1.bf16.msra.mxu0 0
  %1134 = vmatprep.subr.bf16.mxu0 0
  %1135 = vmatpush1.bf16.msra.mxu0 0
  %1136 = vmatprep.subr.bf16.mxu0 0
  %1137 = vmatpush1.bf16.msra.mxu0 0
  %1138 = vmatprep.subr.bf16.mxu0 0
  %1139 = vmatpush1.bf16.msra.mxu0 0
  %1140 = vmatprep.subr.bf16.mxu0 0
  %1141 = vmatpush1.bf16.msra.mxu0 0
  %1142 = vmatprep.subr.bf16.mxu0 0
  %1143 = vmatpush1.bf16.msra.mxu0 0
  %1144 = vmatprep.subr.bf16.mxu0 0
  %1145 = vmatpush1.bf16.msra.mxu0 0
  %1146 = vmatprep.subr.bf16.mxu0 0
  %1147 = vmatpush1.bf16.msra.mxu0 0
  %1148 = vmatprep.mubr.bf16.mxu0 0
  %1149 = vmatmul.mubr.bf16.gmra.mrb[0].mxu0 %v884
  %v1150 = vpop.f32.mrb[0].mxu0
  %v1151 = vadd.f32 %v880, %v1150
  %v1152 = vpop.f32.mrb[0].mxu0
  %v1153 = vpop.f32.mrb[0].mxu0
  %v1154 = vpop.f32.mrb[0].mxu0
  %1155 = vdwg.mxu0
  %v1156 = vmax.f32 %v946, 0.0
  %v1157 = vmax.f32 %v948, 0.0
  %v1158 = vmax.f32 %v987, 0.0
  %v1159 = vmax.f32 %v989, 0.0
  %v1160 = vmax.f32 %v1028, 0.0
  %v1161 = vmax.f32 %v1030, 0.0
  %v1162 = vmax.f32 %v1069, 0.0
  %v1163 = vmax.f32 %v1071, 0.0
  %v1164 = vmax.f32 %v1110, 0.0
  %v1165 = vmax.f32 %v1112, 0.0
  %v1166 = vmax.f32 %v1151, 0.0
  %v1167 = vld [vmem:[%s7] sm:$0xff]
  %v1168 = vld [vmem:[%s7 + $0x8] sm:$0x7]
  %v1171 = vlaneseq
  %v1172 = vshrl.u32 %v1171, 7
  %v1173 = vsub.s32 0, %v1172
  %v1174 = vrot.slane %v1167, %v1173
  %v1175 = vlaneseq
  %v1176 = vshrl.u32 %v1175, 7
  %v1177 = vsub.s32 1, %v1176
  %v1178 = vrot.slane %v1167, %v1177
  %v1179 = vlaneseq
  %v1180 = vshrl.u32 %v1179, 7
  %v1181 = vsub.s32 2, %v1180
  %v1182 = vrot.slane %v1167, %v1181
  %v1183 = vlaneseq
  %v1184 = vshrl.u32 %v1183, 7
  %v1185 = vsub.s32 3, %v1184
  %v1186 = vrot.slane %v1167, %v1185
  %v1187 = vlaneseq
  %v1188 = vshrl.u32 %v1187, 7
  %v1189 = vsub.s32 4, %v1188
  %v1190 = vrot.slane %v1167, %v1189
  %v1191 = vlaneseq
  %v1192 = vshrl.u32 %v1191, 7
  %v1193 = vsub.s32 5, %v1192
  %v1194 = vrot.slane %v1167, %v1193
  %v1195 = vlaneseq
  %v1196 = vshrl.u32 %v1195, 7
  %v1197 = vsub.s32 6, %v1196
  %v1198 = vrot.slane %v1167, %v1197
  %v1199 = vlaneseq
  %v1200 = vshrl.u32 %v1199, 7
  %v1201 = vsub.s32 7, %v1200
  %v1202 = vrot.slane %v1167, %v1201
  %v1203 = vlaneseq
  %v1204 = vshrl.u32 %v1203, 7
  %v1205 = vsub.s32 0, %v1204
  %v1206 = vrot.slane %v1168, %v1205
  %v1207 = vlaneseq
  %v1208 = vshrl.u32 %v1207, 7
  %v1209 = vsub.s32 1, %v1208
  %v1210 = vrot.slane %v1168, %v1209
  %v1211 = vlaneseq
  %v1212 = vshrl.u32 %v1211, 7
  %v1213 = vsub.s32 2, %v1212
  %v1214 = vrot.slane %v1168, %v1213
  %v1226 = vmul.f32 %v1156, %v1174
  %v1227 = vmul.f32 %v1157, %v1178
  %v1228 = vmul.f32 %v1158, %v1182
  %v1229 = vmul.f32 %v1159, %v1186
  %v1230 = vmul.f32 %v1160, %v1190
  %v1231 = vmul.f32 %v1161, %v1194
  %v1232 = vmul.f32 %v1162, %v1198
  %v1233 = vmul.f32 %v1163, %v1202
  %v1234 = vmul.f32 %v1164, %v1206
  %v1235 = vmul.f32 %v1165, %v1210
  %v1236 = vmul.f32 %v1166, %v1214
  %v1237 = vpack.c.bf16 %v1226, %v1226
  %v1238 = vpack.c.bf16 %v1227, %v1227
  %v1239 = vpack.c.bf16 %v1228, %v1228
  %v1240 = vpack.c.bf16 %v1229, %v1229
  %v1241 = vpack.c.bf16 %v1230, %v1230
  %v1242 = vpack.c.bf16 %v1231, %v1231
  %v1243 = vpack.c.bf16 %v1232, %v1232
  %v1244 = vpack.c.bf16 %v1233, %v1233
  %v1245 = vpack.c.bf16 %v1234, %v1234
  %v1246 = vpack.c.bf16 %v1235, %v1235
  %v1247 = vpack.c.bf16 %v1236, %v1236
  %v1248 = vld [vmem:[%s5] sm:$0xf]
  %v1249 = vld [vmem:[%s6] sm:$0xff]
  %1251 = vset.pattern.permute.xlu0 0
  %1252 = vperm.xlu0 %1251, %v1249
  %v1253 = vpop.permute.xlu0 %1252
  %1255 = vrot.lane.b32.xlu0 %v130, 109
  %v1256 = vpop.permute.xlu0 %1255
  %1257 = vrot.lane.b32.xlu0 %v140, 109
  %v1258 = vpop.permute.xlu0 %1257
  %1259 = vrot.lane.b32.xlu0 %v137, 109
  %v1260 = vpop.permute.xlu0 %1259
  %1261 = vrot.lane.b32.xlu0 %v141, 109
  %v1262 = vpop.permute.xlu0 %1261
  %1263 = vrot.lane.b32.xlu0 %v163, 109
  %v1264 = vpop.permute.xlu0 %1263
  %1265 = vrot.lane.b32.xlu0 %v164, 109
  %v1266 = vpop.permute.xlu0 %1265
  %v1267 = vsel %vm439, %v420, %v1256
  %v1268 = vsel %vm439, %v1256, %v424
  %v1269 = vsel %vm439, %v424, %v1258
  %v1270 = vsel %vm439, %v1258, %v428
  %v1271 = vsel %vm439, %v428, %v1260
  %v1272 = vsel %vm439, %v1260, %v432
  %v1273 = vsel %vm439, %v432, %v1262
  %v1274 = vsel %vm439, %v1262, %v436
  %v1275 = vsel %vm439, %v436, %v1264
  %v1276 = vsel %vm439, %v1264, %v1266
  %vm1277 = vcmask 7168
  %v1279 = vsel %vm1277, %v1248, 0
  %v1281 = vsel 0, 4294967295, 65535
  %v1282 = vsel %vm664, %v1281, 0
  %v1284 = vand.u32 %v1267, %v1282
  %v1287 = vand.u32 %v1268, %v1282
  %v1290 = vand.u32 %v1269, %v1282
  %v1293 = vand.u32 %v1270, %v1282
  %v1296 = vand.u32 %v1271, %v1282
  %v1299 = vand.u32 %v1272, %v1282
  %v1302 = vand.u32 %v1273, %v1282
  %v1305 = vand.u32 %v1274, %v1282
  %v1308 = vand.u32 %v1275, %v1282
  %v1311 = vand.u32 %v1276, %v1282
  %v1314 = vand.u32 %v1266, %v1282
  %1316 = vmatprep.subr.bf16.mxu0 %v1287
  %1317 = vmatpush1.bf16.msra.mxu0 %v1284
  %1318 = vmatprep.subr.bf16.mxu0 0
  %1319 = vmatpush1.bf16.msra.mxu0 0
  %1320 = vmatprep.subr.bf16.mxu0 0
  %1321 = vmatpush1.bf16.msra.mxu0 0
  %1322 = vmatprep.subr.bf16.mxu0 0
  %1323 = vmatpush1.bf16.msra.mxu0 0
  %1324 = vmatprep.subr.bf16.mxu0 0
  %1325 = vmatpush1.bf16.msra.mxu0 0
  %1326 = vmatprep.subr.bf16.mxu0 0
  %1327 = vmatpush1.bf16.msra.mxu0 0
  %1328 = vmatprep.subr.bf16.mxu0 0
  %1329 = vmatpush1.bf16.msra.mxu0 0
  %1330 = vmatprep.subr.bf16.mxu0 0
  %1331 = vmatpush1.bf16.msra.mxu0 0
  %1332 = vmatprep.subr.bf16.mxu0 0
  %1333 = vmatpush1.bf16.msra.mxu0 0
  %1334 = vmatprep.subr.bf16.mxu0 0
  %1335 = vmatpush1.bf16.msra.mxu0 0
  %1336 = vmatprep.subr.bf16.mxu0 0
  %1337 = vmatpush1.bf16.msra.mxu0 0
  %1338 = vmatprep.subr.bf16.mxu0 0
  %1339 = vmatpush1.bf16.msra.mxu0 0
  %1340 = vmatprep.subr.bf16.mxu0 0
  %1341 = vmatpush1.bf16.msra.mxu0 0
  %1342 = vmatprep.subr.bf16.mxu0 0
  %1343 = vmatpush1.bf16.msra.mxu0 0
  %1344 = vmatprep.subr.bf16.mxu0 0
  %1345 = vmatpush1.bf16.msra.mxu0 0
  %1346 = vmatprep.subr.bf16.mxu0 0
  %1347 = vmatpush1.bf16.msra.mxu0 0
  %1348 = vmatprep.mubr.bf16.mxu0 0
  %1349 = vmatmul.mubr.bf16.gmra.mrb[0].mxu0 %v1279
  %v1350 = vpop.f32.mrb[0].mxu0
  %v1351 = vadd.f32 %v1253, %v1350
  %v1352 = vpop.f32.mrb[0].mxu0
  %v1353 = vadd.f32 %v1253, %v1352
  %v1354 = vpop.f32.mrb[0].mxu0
  %v1355 = vpop.f32.mrb[0].mxu0
  %1356 = vdwg.mxu0
  %1357 = vmatprep.subr.bf16.mxu0 %v1293
  %1358 = vmatpush1.bf16.msra.mxu0 %v1290
  %1359 = vmatprep.subr.bf16.mxu0 0
  %1360 = vmatpush1.bf16.msra.mxu0 0
  %1361 = vmatprep.subr.bf16.mxu0 0
  %1362 = vmatpush1.bf16.msra.mxu0 0
  %1363 = vmatprep.subr.bf16.mxu0 0
  %1364 = vmatpush1.bf16.msra.mxu0 0
  %1365 = vmatprep.subr.bf16.mxu0 0
  %1366 = vmatpush1.bf16.msra.mxu0 0
  %1367 = vmatprep.subr.bf16.mxu0 0
  %1368 = vmatpush1.bf16.msra.mxu0 0
  %1369 = vmatprep.subr.bf16.mxu0 0
  %1370 = vmatpush1.bf16.msra.mxu0 0
  %1371 = vmatprep.subr.bf16.mxu0 0
  %1372 = vmatpush1.bf16.msra.mxu0 0
  %1373 = vmatprep.subr.bf16.mxu0 0
  %1374 = vmatpush1.bf16.msra.mxu0 0
  %1375 = vmatprep.subr.bf16.mxu0 0
  %1376 = vmatpush1.bf16.msra.mxu0 0
  %1377 = vmatprep.subr.bf16.mxu0 0
  %1378 = vmatpush1.bf16.msra.mxu0 0
  %1379 = vmatprep.subr.bf16.mxu0 0
  %1380 = vmatpush1.bf16.msra.mxu0 0
  %1381 = vmatprep.subr.bf16.mxu0 0
  %1382 = vmatpush1.bf16.msra.mxu0 0
  %1383 = vmatprep.subr.bf16.mxu0 0
  %1384 = vmatpush1.bf16.msra.mxu0 0
  %1385 = vmatprep.subr.bf16.mxu0 0
  %1386 = vmatpush1.bf16.msra.mxu0 0
  %1387 = vmatprep.subr.bf16.mxu0 0
  %1388 = vmatpush1.bf16.msra.mxu0 0
  %1389 = vmatprep.mubr.bf16.mxu0 0
  %1390 = vmatmul.mubr.bf16.gmra.mrb[0].mxu0 %v1279
  %v1391 = vpop.f32.mrb[0].mxu0
  %v1392 = vadd.f32 %v1253, %v1391
  %v1393 = vpop.f32.mrb[0].mxu0
  %v1394 = vadd.f32 %v1253, %v1393
  %v1395 = vpop.f32.mrb[0].mxu0
  %v1396 = vpop.f32.mrb[0].mxu0
  %1397 = vdwg.mxu0
  %1398 = vmatprep.subr.bf16.mxu0 %v1299
  %1399 = vmatpush1.bf16.msra.mxu0 %v1296
  %1400 = vmatprep.subr.bf16.mxu0 0
  %1401 = vmatpush1.bf16.msra.mxu0 0
  %1402 = vmatprep.subr.bf16.mxu0 0
  %1403 = vmatpush1.bf16.msra.mxu0 0
  %1404 = vmatprep.subr.bf16.mxu0 0
  %1405 = vmatpush1.bf16.msra.mxu0 0
  %1406 = vmatprep.subr.bf16.mxu0 0
  %1407 = vmatpush1.bf16.msra.mxu0 0
  %1408 = vmatprep.subr.bf16.mxu0 0
  %1409 = vmatpush1.bf16.msra.mxu0 0
  %1410 = vmatprep.subr.bf16.mxu0 0
  %1411 = vmatpush1.bf16.msra.mxu0 0
  %1412 = vmatprep.subr.bf16.mxu0 0
  %1413 = vmatpush1.bf16.msra.mxu0 0
  %1414 = vmatprep.subr.bf16.mxu0 0
  %1415 = vmatpush1.bf16.msra.mxu0 0
  %1416 = vmatprep.subr.bf16.mxu0 0
  %1417 = vmatpush1.bf16.msra.mxu0 0
  %1418 = vmatprep.subr.bf16.mxu0 0
  %1419 = vmatpush1.bf16.msra.mxu0 0
  %1420 = vmatprep.subr.bf16.mxu0 0
  %1421 = vmatpush1.bf16.msra.mxu0 0
  %1422 = vmatprep.subr.bf16.mxu0 0
  %1423 = vmatpush1.bf16.msra.mxu0 0
  %1424 = vmatprep.subr.bf16.mxu0 0
  %1425 = vmatpush1.bf16.msra.mxu0 0
  %1426 = vmatprep.subr.bf16.mxu0 0
  %1427 = vmatpush1.bf16.msra.mxu0 0
  %1428 = vmatprep.subr.bf16.mxu0 0
  %1429 = vmatpush1.bf16.msra.mxu0 0
  %1430 = vmatprep.mubr.bf16.mxu0 0
  %1431 = vmatmul.mubr.bf16.gmra.mrb[0].mxu0 %v1279
  %v1432 = vpop.f32.mrb[0].mxu0
  %v1433 = vadd.f32 %v1253, %v1432
  %v1434 = vpop.f32.mrb[0].mxu0
  %v1435 = vadd.f32 %v1253, %v1434
  %v1436 = vpop.f32.mrb[0].mxu0
  %v1437 = vpop.f32.mrb[0].mxu0
  %1438 = vdwg.mxu0
  %1439 = vmatprep.subr.bf16.mxu0 %v1305
  %1440 = vmatpush1.bf16.msra.mxu0 %v1302
  %1441 = vmatprep.subr.bf16.mxu0 0
  %1442 = vmatpush1.bf16.msra.mxu0 0
  %1443 = vmatprep.subr.bf16.mxu0 0
  %1444 = vmatpush1.bf16.msra.mxu0 0
  %1445 = vmatprep.subr.bf16.mxu0 0
  %1446 = vmatpush1.bf16.msra.mxu0 0
  %1447 = vmatprep.subr.bf16.mxu0 0
  %1448 = vmatpush1.bf16.msra.mxu0 0
  %1449 = vmatprep.subr.bf16.mxu0 0
  %1450 = vmatpush1.bf16.msra.mxu0 0
  %1451 = vmatprep.subr.bf16.mxu0 0
  %1452 = vmatpush1.bf16.msra.mxu0 0
  %1453 = vmatprep.subr.bf16.mxu0 0
  %1454 = vmatpush1.bf16.msra.mxu0 0
  %1455 = vmatprep.subr.bf16.mxu0 0
  %1456 = vmatpush1.bf16.msra.mxu0 0
  %1457 = vmatprep.subr.bf16.mxu0 0
  %1458 = vmatpush1.bf16.msra.mxu0 0
  %1459 = vmatprep.subr.bf16.mxu0 0
  %1460 = vmatpush1.bf16.msra.mxu0 0
  %1461 = vmatprep.subr.bf16.mxu0 0
  %1462 = vmatpush1.bf16.msra.mxu0 0
  %1463 = vmatprep.subr.bf16.mxu0 0
  %1464 = vmatpush1.bf16.msra.mxu0 0
  %1465 = vmatprep.subr.bf16.mxu0 0
  %1466 = vmatpush1.bf16.msra.mxu0 0
  %1467 = vmatprep.subr.bf16.mxu0 0
  %1468 = vmatpush1.bf16.msra.mxu0 0
  %1469 = vmatprep.subr.bf16.mxu0 0
  %1470 = vmatpush1.bf16.msra.mxu0 0
  %1471 = vmatprep.mubr.bf16.mxu0 0
  %1472 = vmatmul.mubr.bf16.gmra.mrb[0].mxu0 %v1279
  %v1473 = vpop.f32.mrb[0].mxu0
  %v1474 = vadd.f32 %v1253, %v1473
  %v1475 = vpop.f32.mrb[0].mxu0
  %v1476 = vadd.f32 %v1253, %v1475
  %v1477 = vpop.f32.mrb[0].mxu0
  %v1478 = vpop.f32.mrb[0].mxu0
  %1479 = vdwg.mxu0
  %1480 = vmatprep.subr.bf16.mxu0 %v1311
  %1481 = vmatpush1.bf16.msra.mxu0 %v1308
  %1482 = vmatprep.subr.bf16.mxu0 0
  %1483 = vmatpush1.bf16.msra.mxu0 0
  %1484 = vmatprep.subr.bf16.mxu0 0
  %1485 = vmatpush1.bf16.msra.mxu0 0
  %1486 = vmatprep.subr.bf16.mxu0 0
  %1487 = vmatpush1.bf16.msra.mxu0 0
  %1488 = vmatprep.subr.bf16.mxu0 0
  %1489 = vmatpush1.bf16.msra.mxu0 0
  %1490 = vmatprep.subr.bf16.mxu0 0
  %1491 = vmatpush1.bf16.msra.mxu0 0
  %1492 = vmatprep.subr.bf16.mxu0 0
  %1493 = vmatpush1.bf16.msra.mxu0 0
  %1494 = vmatprep.subr.bf16.mxu0 0
  %1495 = vmatpush1.bf16.msra.mxu0 0
  %1496 = vmatprep.subr.bf16.mxu0 0
  %1497 = vmatpush1.bf16.msra.mxu0 0
  %1498 = vmatprep.subr.bf16.mxu0 0
  %1499 = vmatpush1.bf16.msra.mxu0 0
  %1500 = vmatprep.subr.bf16.mxu0 0
  %1501 = vmatpush1.bf16.msra.mxu0 0
  %1502 = vmatprep.subr.bf16.mxu0 0
  %1503 = vmatpush1.bf16.msra.mxu0 0
  %1504 = vmatprep.subr.bf16.mxu0 0
  %1505 = vmatpush1.bf16.msra.mxu0 0
  %1506 = vmatprep.subr.bf16.mxu0 0
  %1507 = vmatpush1.bf16.msra.mxu0 0
  %1508 = vmatprep.subr.bf16.mxu0 0
  %1509 = vmatpush1.bf16.msra.mxu0 0
  %1510 = vmatprep.subr.bf16.mxu0 0
  %1511 = vmatpush1.bf16.msra.mxu0 0
  %1512 = vmatprep.mubr.bf16.mxu0 0
  %1513 = vmatmul.mubr.bf16.gmra.mrb[0].mxu0 %v1279
  %v1514 = vpop.f32.mrb[0].mxu0
  %v1515 = vadd.f32 %v1253, %v1514
  %v1516 = vpop.f32.mrb[0].mxu0
  %v1517 = vadd.f32 %v1253, %v1516
  %v1518 = vpop.f32.mrb[0].mxu0
  %v1519 = vpop.f32.mrb[0].mxu0
  %1520 = vdwg.mxu0
  %1521 = vmatprep.subr.bf16.mxu0 0
  %1522 = vmatpush1.bf16.msra.mxu0 %v1314
  %1523 = vmatprep.subr.bf16.mxu0 0
  %1524 = vmatpush1.bf16.msra.mxu0 0
  %1525 = vmatprep.subr.bf16.mxu0 0
  %1526 = vmatpush1.bf16.msra.mxu0 0
  %1527 = vmatprep.subr.bf16.mxu0 0
  %1528 = vmatpush1.bf16.msra.mxu0 0
  %1529 = vmatprep.subr.bf16.mxu0 0
  %1530 = vmatpush1.bf16.msra.mxu0 0
  %1531 = vmatprep.subr.bf16.mxu0 0
  %1532 = vmatpush1.bf16.msra.mxu0 0
  %1533 = vmatprep.subr.bf16.mxu0 0
  %1534 = vmatpush1.bf16.msra.mxu0 0
  %1535 = vmatprep.subr.bf16.mxu0 0
  %1536 = vmatpush1.bf16.msra.mxu0 0
  %1537 = vmatprep.subr.bf16.mxu0 0
  %1538 = vmatpush1.bf16.msra.mxu0 0
  %1539 = vmatprep.subr.bf16.mxu0 0
  %1540 = vmatpush1.bf16.msra.mxu0 0
  %1541 = vmatprep.subr.bf16.mxu0 0
  %1542 = vmatpush1.bf16.msra.mxu0 0
  %1543 = vmatprep.subr.bf16.mxu0 0
  %1544 = vmatpush1.bf16.msra.mxu0 0
  %1545 = vmatprep.subr.bf16.mxu0 0
  %1546 = vmatpush1.bf16.msra.mxu0 0
  %1547 = vmatprep.subr.bf16.mxu0 0
  %1548 = vmatpush1.bf16.msra.mxu0 0
  %1549 = vmatprep.subr.bf16.mxu0 0
  %1550 = vmatpush1.bf16.msra.mxu0 0
  %1551 = vmatprep.subr.bf16.mxu0 0
  %1552 = vmatpush1.bf16.msra.mxu0 0
  %1553 = vmatprep.mubr.bf16.mxu0 0
  %1554 = vmatmul.mubr.bf16.gmra.mrb[0].mxu0 %v1279
  %v1555 = vpop.f32.mrb[0].mxu0
  %v1556 = vadd.f32 %v1253, %v1555
  %v1557 = vpop.f32.mrb[0].mxu0
  %v1558 = vpop.f32.mrb[0].mxu0
  %v1559 = vpop.f32.mrb[0].mxu0
  %1560 = vdwg.mxu0
  %1572 = vrot.lane.b32.xlu0 %v1237, 19
  %v1573 = vpop.permute.xlu0 %1572
  %1574 = vrot.lane.b32.xlu0 %v1238, 19
  %v1575 = vpop.permute.xlu0 %1574
  %1576 = vrot.lane.b32.xlu0 %v1239, 19
  %v1577 = vpop.permute.xlu0 %1576
  %1578 = vrot.lane.b32.xlu0 %v1240, 19
  %v1579 = vpop.permute.xlu0 %1578
  %1580 = vrot.lane.b32.xlu0 %v1241, 19
  %v1581 = vpop.permute.xlu0 %1580
  %1582 = vrot.lane.b32.xlu0 %v1242, 19
  %v1583 = vpop.permute.xlu0 %1582
  %1584 = vrot.lane.b32.xlu0 %v1243, 19
  %v1585 = vpop.permute.xlu0 %1584
  %1586 = vrot.lane.b32.xlu0 %v1244, 19
  %v1587 = vpop.permute.xlu0 %1586
  %1588 = vrot.lane.b32.xlu0 %v1245, 19
  %v1589 = vpop.permute.xlu0 %1588
  %1590 = vrot.lane.b32.xlu0 %v1246, 19
  %v1591 = vpop.permute.xlu0 %1590
  %1592 = vrot.lane.b32.xlu0 %v1247, 19
  %v1593 = vpop.permute.xlu0 %1592
  %vm1594 = vcmask 154624
  %v1595 = vsel %vm1594, %v1573, %v1575
  %v1596 = vsel %vm1594, %v1575, %v1577
  %v1597 = vsel %vm1594, %v1577, %v1579
  %v1598 = vsel %vm1594, %v1579, %v1581
  %v1599 = vsel %vm1594, %v1581, %v1583
  %v1600 = vsel %vm1594, %v1583, %v1585
  %v1601 = vsel %vm1594, %v1585, %v1587
  %v1602 = vsel %vm1594, %v1587, %v1589
  %v1603 = vsel %vm1594, %v1589, %v1591
  %v1604 = vsel %vm1594, %v1591, %v1593
  %vm1605 = vcmask 154624
  %v1608 = vsel %vm1605, 0, %v1573
  %vm1609 = vcmask 285696
  %v1611 = vsel %vm1609, %v1604, 0
  %v1614 = vrot.slane %v1608, 4
  %v1615 = vrot.slane %v1595, 4
  %v1616 = vrot.slane %v1596, 4
  %v1617 = vrot.slane %v1597, 4
  %v1618 = vrot.slane %v1598, 4
  %v1619 = vrot.slane %v1599, 4
  %v1620 = vrot.slane %v1600, 4
  %v1621 = vrot.slane %v1601, 4
  %v1622 = vrot.slane %v1602, 4
  %v1623 = vrot.slane %v1603, 4
  %v1624 = vrot.slane %v1611, 4
  %1625 = vrot.lane.b32.xlu0 %v1614, 127
  %v1626 = vpop.permute.xlu0 %1625
  %1627 = vrot.lane.b32.xlu0 %v1615, 127
  %v1628 = vpop.permute.xlu0 %1627
  %1629 = vrot.lane.b32.xlu0 %v1616, 127
  %v1630 = vpop.permute.xlu0 %1629
  %1631 = vrot.lane.b32.xlu0 %v1617, 127
  %v1632 = vpop.permute.xlu0 %1631
  %1633 = vrot.lane.b32.xlu0 %v1618, 127
  %v1634 = vpop.permute.xlu0 %1633
  %1635 = vrot.lane.b32.xlu0 %v1619, 127
  %v1636 = vpop.permute.xlu0 %1635
  %1637 = vrot.lane.b32.xlu0 %v1620, 127
  %v1638 = vpop.permute.xlu0 %1637
  %1639 = vrot.lane.b32.xlu0 %v1621, 127
  %v1640 = vpop.permute.xlu0 %1639
  %1641 = vrot.lane.b32.xlu0 %v1622, 127
  %v1642 = vpop.permute.xlu0 %1641
  %1643 = vrot.lane.b32.xlu0 %v1623, 127
  %v1644 = vpop.permute.xlu0 %1643
  %1645 = vrot.lane.b32.xlu0 %v1624, 127
  %v1646 = vpop.permute.xlu0 %1645
  %v1647 = vsel %vm231, %v1626, %v1628
  %v1648 = vsel %vm231, %v1628, %v1630
  %v1649 = vsel %vm231, %v1630, %v1632
  %v1650 = vsel %vm231, %v1632, %v1634
  %v1651 = vsel %vm231, %v1634, %v1636
  %v1652 = vsel %vm231, %v1636, %v1638
  %v1653 = vsel %vm231, %v1638, %v1640
  %v1654 = vsel %vm231, %v1640, %v1642
  %v1655 = vsel %vm231, %v1642, %v1644
  %v1656 = vsel %vm231, %v1644, %v1646
  %1657 = vrot.lane.b32.xlu0 %v1608, 126
  %v1658 = vpop.permute.xlu0 %1657
  %1659 = vrot.lane.b32.xlu0 %v1595, 126
  %v1660 = vpop.permute.xlu0 %1659
  %1661 = vrot.lane.b32.xlu0 %v1596, 126
  %v1662 = vpop.permute.xlu0 %1661
  %1663 = vrot.lane.b32.xlu0 %v1597, 126
  %v1664 = vpop.permute.xlu0 %1663
  %1665 = vrot.lane.b32.xlu0 %v1598, 126
  %v1666 = vpop.permute.xlu0 %1665
  %1667 = vrot.lane.b32.xlu0 %v1599, 126
  %v1668 = vpop.permute.xlu0 %1667
  %1669 = vrot.lane.b32.xlu0 %v1600, 126
  %v1670 = vpop.permute.xlu0 %1669
  %1671 = vrot.lane.b32.xlu0 %v1601, 126
  %v1672 = vpop.permute.xlu0 %1671
  %1673 = vrot.lane.b32.xlu0 %v1602, 126
  %v1674 = vpop.permute.xlu0 %1673
  %1675 = vrot.lane.b32.xlu0 %v1603, 126
  %v1676 = vpop.permute.xlu0 %1675
  %1677 = vrot.lane.b32.xlu0 %v1611, 126
  %v1678 = vpop.permute.xlu0 %1677
  %v1679 = vsel %vm324, %v1658, %v1660
  %v1680 = vsel %vm324, %v1660, %v1662
  %v1681 = vsel %vm324, %v1662, %v1664
  %v1682 = vsel %vm324, %v1664, %v1666
  %v1683 = vsel %vm324, %v1666, %v1668
  %v1684 = vsel %vm324, %v1668, %v1670
  %v1685 = vsel %vm324, %v1670, %v1672
  %v1686 = vsel %vm324, %v1672, %v1674
  %v1687 = vsel %vm324, %v1674, %v1676
  %v1688 = vsel %vm324, %v1676, %v1678
  %1689 = vrot.lane.b32.xlu0 %v1614, 110
  %v1690 = vpop.permute.xlu0 %1689
  %1691 = vrot.lane.b32.xlu0 %v1615, 110
  %v1692 = vpop.permute.xlu0 %1691
  %1693 = vrot.lane.b32.xlu0 %v1616, 110
  %v1694 = vpop.permute.xlu0 %1693
  %1695 = vrot.lane.b32.xlu0 %v1617, 110
  %v1696 = vpop.permute.xlu0 %1695
  %1697 = vrot.lane.b32.xlu0 %v1618, 110
  %v1698 = vpop.permute.xlu0 %1697
  %1699 = vrot.lane.b32.xlu0 %v1619, 110
  %v1700 = vpop.permute.xlu0 %1699
  %1701 = vrot.lane.b32.xlu0 %v1620, 110
  %v1702 = vpop.permute.xlu0 %1701
  %1703 = vrot.lane.b32.xlu0 %v1621, 110
  %v1704 = vpop.permute.xlu0 %1703
  %1705 = vrot.lane.b32.xlu0 %v1622, 110
  %v1706 = vpop.permute.xlu0 %1705
  %1707 = vrot.lane.b32.xlu0 %v1623, 110
  %v1708 = vpop.permute.xlu0 %1707
  %1709 = vrot.lane.b32.xlu0 %v1624, 110
  %v1710 = vpop.permute.xlu0 %1709
  %v1711 = vsel %vm368, %v1690, %v1692
  %v1712 = vsel %vm368, %v1692, %v1694
  %v1713 = vsel %vm368, %v1694, %v1696
  %v1714 = vsel %vm368, %v1696, %v1698
  %v1715 = vsel %vm368, %v1698, %v1700
  %v1716 = vsel %vm368, %v1700, %v1702
  %v1717 = vsel %vm368, %v1702, %v1704
  %v1718 = vsel %vm368, %v1704, %v1706
  %v1719 = vsel %vm368, %v1706, %v1708
  %v1720 = vsel %vm368, %v1708, %v1710
  %1721 = vrot.lane.b32.xlu0 %v1608, 109
  %v1722 = vpop.permute.xlu0 %1721
  %1723 = vrot.lane.b32.xlu0 %v1595, 109
  %v1724 = vpop.permute.xlu0 %1723
  %1725 = vrot.lane.b32.xlu0 %v1596, 109
  %v1726 = vpop.permute.xlu0 %1725
  %1727 = vrot.lane.b32.xlu0 %v1597, 109
  %v1728 = vpop.permute.xlu0 %1727
  %1729 = vrot.lane.b32.xlu0 %v1598, 109
  %v1730 = vpop.permute.xlu0 %1729
  %1731 = vrot.lane.b32.xlu0 %v1599, 109
  %v1732 = vpop.permute.xlu0 %1731
  %1733 = vrot.lane.b32.xlu0 %v1600, 109
  %v1734 = vpop.permute.xlu0 %1733
  %1735 = vrot.lane.b32.xlu0 %v1601, 109
  %v1736 = vpop.permute.xlu0 %1735
  %1737 = vrot.lane.b32.xlu0 %v1602, 109
  %v1738 = vpop.permute.xlu0 %1737
  %1739 = vrot.lane.b32.xlu0 %v1603, 109
  %v1740 = vpop.permute.xlu0 %1739
  %1741 = vrot.lane.b32.xlu0 %v1611, 109
  %v1742 = vpop.permute.xlu0 %1741
  %v1743 = vsel %vm439, %v1722, %v1724
  %v1744 = vsel %vm439, %v1724, %v1726
  %v1745 = vsel %vm439, %v1726, %v1728
  %v1746 = vsel %vm439, %v1728, %v1730
  %v1747 = vsel %vm439, %v1730, %v1732
  %v1748 = vsel %vm439, %v1732, %v1734
  %v1749 = vsel %vm439, %v1734, %v1736
  %v1750 = vsel %vm439, %v1736, %v1738
  %v1751 = vsel %vm439, %v1738, %v1740
  %v1752 = vsel %vm439, %v1740, %v1742
  %1753 = vrot.lane.b32.xlu0 %v1614, 108
  %v1754 = vpop.permute.xlu0 %1753
  %1755 = vrot.lane.b32.xlu0 %v1615, 108
  %v1756 = vpop.permute.xlu0 %1755
  %1757 = vrot.lane.b32.xlu0 %v1616, 108
  %v1758 = vpop.permute.xlu0 %1757
  %1759 = vrot.lane.b32.xlu0 %v1617, 108
  %v1760 = vpop.permute.xlu0 %1759
  %1761 = vrot.lane.b32.xlu0 %v1618, 108
  %v1762 = vpop.permute.xlu0 %1761
  %1763 = vrot.lane.b32.xlu0 %v1619, 108
  %v1764 = vpop.permute.xlu0 %1763
  %1765 = vrot.lane.b32.xlu0 %v1620, 108
  %v1766 = vpop.permute.xlu0 %1765
  %1767 = vrot.lane.b32.xlu0 %v1621, 108
  %v1768 = vpop.permute.xlu0 %1767
  %1769 = vrot.lane.b32.xlu0 %v1622, 108
  %v1770 = vpop.permute.xlu0 %1769
  %1771 = vrot.lane.b32.xlu0 %v1623, 108
  %v1772 = vpop.permute.xlu0 %1771
  %1773 = vrot.lane.b32.xlu0 %v1624, 108
  %v1774 = vpop.permute.xlu0 %1773
  %v1775 = vsel %vm483, %v1754, %v1756
  %v1776 = vsel %vm483, %v1756, %v1758
  %v1777 = vsel %vm483, %v1758, %v1760
  %v1778 = vsel %vm483, %v1760, %v1762
  %v1779 = vsel %vm483, %v1762, %v1764
  %v1780 = vsel %vm483, %v1764, %v1766
  %v1781 = vsel %vm483, %v1766, %v1768
  %v1782 = vsel %vm483, %v1768, %v1770
  %v1783 = vsel %vm483, %v1770, %v1772
  %v1784 = vsel %vm483, %v1772, %v1774
  %1785 = vrot.lane.b32.xlu0 %v1608, 92
  %v1786 = vpop.permute.xlu0 %1785
  %1787 = vrot.lane.b32.xlu0 %v1595, 92
  %v1788 = vpop.permute.xlu0 %1787
  %1789 = vrot.lane.b32.xlu0 %v1596, 92
  %v1790 = vpop.permute.xlu0 %1789
  %1791 = vrot.lane.b32.xlu0 %v1597, 92
  %v1792 = vpop.permute.xlu0 %1791
  %1793 = vrot.lane.b32.xlu0 %v1598, 92
  %v1794 = vpop.permute.xlu0 %1793
  %1795 = vrot.lane.b32.xlu0 %v1599, 92
  %v1796 = vpop.permute.xlu0 %1795
  %1797 = vrot.lane.b32.xlu0 %v1600, 92
  %v1798 = vpop.permute.xlu0 %1797
  %1799 = vrot.lane.b32.xlu0 %v1601, 92
  %v1800 = vpop.permute.xlu0 %1799
  %1801 = vrot.lane.b32.xlu0 %v1602, 92
  %v1802 = vpop.permute.xlu0 %1801
  %1803 = vrot.lane.b32.xlu0 %v1603, 92
  %v1804 = vpop.permute.xlu0 %1803
  %1805 = vrot.lane.b32.xlu0 %v1611, 92
  %v1806 = vpop.permute.xlu0 %1805
  %v1807 = vsel %vm545, %v1786, %v1788
  %v1808 = vsel %vm545, %v1788, %v1790
  %v1809 = vsel %vm545, %v1790, %v1792
  %v1810 = vsel %vm545, %v1792, %v1794
  %v1811 = vsel %vm545, %v1794, %v1796
  %v1812 = vsel %vm545, %v1796, %v1798
  %v1813 = vsel %vm545, %v1798, %v1800
  %v1814 = vsel %vm545, %v1800, %v1802
  %v1815 = vsel %vm545, %v1802, %v1804
  %v1816 = vsel %vm545, %v1804, %v1806
  %1817 = vrot.lane.b32.xlu0 %v1614, 91
  %v1818 = vpop.permute.xlu0 %1817
  %1819 = vrot.lane.b32.xlu0 %v1615, 91
  %v1820 = vpop.permute.xlu0 %1819
  %1821 = vrot.lane.b32.xlu0 %v1616, 91
  %v1822 = vpop.permute.xlu0 %1821
  %1823 = vrot.lane.b32.xlu0 %v1617, 91
  %v1824 = vpop.permute.xlu0 %1823
  %1825 = vrot.lane.b32.xlu0 %v1618, 91
  %v1826 = vpop.permute.xlu0 %1825
  %1827 = vrot.lane.b32.xlu0 %v1619, 91
  %v1828 = vpop.permute.xlu0 %1827
  %1829 = vrot.lane.b32.xlu0 %v1620, 91
  %v1830 = vpop.permute.xlu0 %1829
  %1831 = vrot.lane.b32.xlu0 %v1621, 91
  %v1832 = vpop.permute.xlu0 %1831
  %1833 = vrot.lane.b32.xlu0 %v1622, 91
  %v1834 = vpop.permute.xlu0 %1833
  %1835 = vrot.lane.b32.xlu0 %v1623, 91
  %v1836 = vpop.permute.xlu0 %1835
  %1837 = vrot.lane.b32.xlu0 %v1624, 91
  %v1838 = vpop.permute.xlu0 %1837
  %v1839 = vsel %vm589, %v1818, %v1820
  %v1840 = vsel %vm589, %v1820, %v1822
  %v1841 = vsel %vm589, %v1822, %v1824
  %v1842 = vsel %vm589, %v1824, %v1826
  %v1843 = vsel %vm589, %v1826, %v1828
  %v1844 = vsel %vm589, %v1828, %v1830
  %v1845 = vsel %vm589, %v1830, %v1832
  %v1846 = vsel %vm589, %v1832, %v1834
  %v1847 = vsel %vm589, %v1834, %v1836
  %v1848 = vsel %vm589, %v1836, %v1838
  %1849 = vrot.lane.b32.xlu0 %v1608, 90
  %v1850 = vpop.permute.xlu0 %1849
  %1851 = vrot.lane.b32.xlu0 %v1595, 90
  %v1852 = vpop.permute.xlu0 %1851
  %1853 = vrot.lane.b32.xlu0 %v1596, 90
  %v1854 = vpop.permute.xlu0 %1853
  %1855 = vrot.lane.b32.xlu0 %v1597, 90
  %v1856 = vpop.permute.xlu0 %1855
  %1857 = vrot.lane.b32.xlu0 %v1598, 90
  %v1858 = vpop.permute.xlu0 %1857
  %1859 = vrot.lane.b32.xlu0 %v1599, 90
  %v1860 = vpop.permute.xlu0 %1859
  %1861 = vrot.lane.b32.xlu0 %v1600, 90
  %v1862 = vpop.permute.xlu0 %1861
  %1863 = vrot.lane.b32.xlu0 %v1601, 90
  %v1864 = vpop.permute.xlu0 %1863
  %1865 = vrot.lane.b32.xlu0 %v1602, 90
  %v1866 = vpop.permute.xlu0 %1865
  %1867 = vrot.lane.b32.xlu0 %v1603, 90
  %v1868 = vpop.permute.xlu0 %1867
  %1869 = vrot.lane.b32.xlu0 %v1611, 90
  %v1870 = vpop.permute.xlu0 %1869
  %v1871 = vsel %vm639, %v1850, %v1852
  %v1872 = vsel %vm639, %v1852, %v1854
  %v1873 = vsel %vm639, %v1854, %v1856
  %v1874 = vsel %vm639, %v1856, %v1858
  %v1875 = vsel %vm639, %v1858, %v1860
  %v1876 = vsel %vm639, %v1860, %v1862
  %v1877 = vsel %vm639, %v1862, %v1864
  %v1878 = vsel %vm639, %v1864, %v1866
  %v1879 = vsel %vm639, %v1866, %v1868
  %v1880 = vsel %vm639, %v1868, %v1870
  %v1882 = vsel %vm841, %v1608, %v1647
  %v1886 = vsel %vm841, %v1595, %v1648
  %v1890 = vsel %vm841, %v1596, %v1649
  %v1894 = vsel %vm841, %v1597, %v1650
  %v1898 = vsel %vm841, %v1598, %v1651
  %v1902 = vsel %vm841, %v1599, %v1652
  %v1906 = vsel %vm841, %v1600, %v1653
  %v1910 = vsel %vm841, %v1601, %v1654
  %v1914 = vsel %vm841, %v1602, %v1655
  %v1918 = vsel %vm841, %v1603, %v1656
  %v1921 = vsel %vm841, %v1611, %v1646
  %v1925 = vsel %vm841, %v1679, %v1711
  %v1929 = vsel %vm841, %v1680, %v1712
  %v1933 = vsel %vm841, %v1681, %v1713
  %v1937 = vsel %vm841, %v1682, %v1714
  %v1941 = vsel %vm841, %v1683, %v1715
  %v1945 = vsel %vm841, %v1684, %v1716
  %v1949 = vsel %vm841, %v1685, %v1717
  %v1953 = vsel %vm841, %v1686, %v1718
  %v1957 = vsel %vm841, %v1687, %v1719
  %v1961 = vsel %vm841, %v1688, %v1720
  %v1965 = vsel %vm841, %v1678, %v1710
  %v1969 = vsel %vm841, %v1743, %v1775
  %v1973 = vsel %vm841, %v1744, %v1776
  %v1977 = vsel %vm841, %v1745, %v1777
  %v1981 = vsel %vm841, %v1746, %v1778
  %v1985 = vsel %vm841, %v1747, %v1779
  %v1989 = vsel %vm841, %v1748, %v1780
  %v1993 = vsel %vm841, %v1749, %v1781
  %v1997 = vsel %vm841, %v1750, %v1782
  %v2001 = vsel %vm841, %v1751, %v1783
  %v2005 = vsel %vm841, %v1752, %v1784
  %v2009 = vsel %vm841, %v1742, %v1774
  %v2013 = vsel %vm841, %v1807, %v1839
  %v2017 = vsel %vm841, %v1808, %v1840
  %v2021 = vsel %vm841, %v1809, %v1841
  %v2025 = vsel %vm841, %v1810, %v1842
  %v2029 = vsel %vm841, %v1811, %v1843
  %v2033 = vsel %vm841, %v1812, %v1844
  %v2037 = vsel %vm841, %v1813, %v1845
  %v2041 = vsel %vm841, %v1814, %v1846
  %v2045 = vsel %vm841, %v1815, %v1847
  %v2049 = vsel %vm841, %v1816, %v1848
  %v2053 = vsel %vm841, %v1806, %v1838
  %v2055 = vld [vmem:[%s3] sm:$0xf]
  %v2056 = vld [vmem:[%s4] sm:$0xff]
  %2058 = vset.pattern.permute.xlu0 0
  %2059 = vperm.xlu0 %2058, %v2056
  %v2060 = vpop.permute.xlu0 %2059
  %vm2062 = vcmask 588800
  %v2064 = vsel %vm2062, %v2055, 0
  %v2067 = vsel %vm841, %v1871, 0
  %v2070 = vsel %vm841, %v1872, 0
  %v2073 = vsel %vm841, %v1873, 0
  %v2076 = vsel %vm841, %v1874, 0
  %v2079 = vsel %vm841, %v1875, 0
  %v2082 = vsel %vm841, %v1876, 0
  %v2085 = vsel %vm841, %v1877, 0
  %v2088 = vsel %vm841, %v1878, 0
  %v2091 = vsel %vm841, %v1879, 0
  %v2094 = vsel %vm841, %v1880, 0
  %v2097 = vsel %vm841, %v1870, 0
  %2099 = vmatprep.subr.bf16.mxu0 %v1886
  %2100 = vmatpush1.bf16.msra.mxu0 %v1882
  %2101 = vmatprep.subr.bf16.mxu0 %v1929
  %2102 = vmatpush1.bf16.msra.mxu0 %v1925
  %2103 = vmatprep.subr.bf16.mxu0 %v1973
  %2104 = vmatpush1.bf16.msra.mxu0 %v1969
  %2105 = vmatprep.subr.bf16.mxu0 %v2017
  %2106 = vmatpush1.bf16.msra.mxu0 %v2013
  %2107 = vmatprep.subr.bf16.mxu0 %v2070
  %2108 = vmatpush1.bf16.msra.mxu0 %v2067
  %2109 = vmatprep.subr.bf16.mxu0 0
  %2110 = vmatpush1.bf16.msra.mxu0 0
  %2111 = vmatprep.subr.bf16.mxu0 0
  %2112 = vmatpush1.bf16.msra.mxu0 0
  %2113 = vmatprep.subr.bf16.mxu0 0
  %2114 = vmatpush1.bf16.msra.mxu0 0
  %2115 = vmatprep.subr.bf16.mxu0 0
  %2116 = vmatpush1.bf16.msra.mxu0 0
  %2117 = vmatprep.subr.bf16.mxu0 0
  %2118 = vmatpush1.bf16.msra.mxu0 0
  %2119 = vmatprep.subr.bf16.mxu0 0
  %2120 = vmatpush1.bf16.msra.mxu0 0
  %2121 = vmatprep.subr.bf16.mxu0 0
  %2122 = vmatpush1.bf16.msra.mxu0 0
  %2123 = vmatprep.subr.bf16.mxu0 0
  %2124 = vmatpush1.bf16.msra.mxu0 0
  %2125 = vmatprep.subr.bf16.mxu0 0
  %2126 = vmatpush1.bf16.msra.mxu0 0
  %2127 = vmatprep.subr.bf16.mxu0 0
  %2128 = vmatpush1.bf16.msra.mxu0 0
  %2129 = vmatprep.subr.bf16.mxu0 0
  %2130 = vmatpush1.bf16.msra.mxu0 0
  %2131 = vmatprep.mubr.bf16.mxu0 0
  %2132 = vmatmul.mubr.bf16.gmra.mrb[0].mxu0 %v2064
  %v2133 = vpop.f32.mrb[0].mxu0
  %v2134 = vadd.f32 %v2060, %v2133
  %v2135 = vpop.f32.mrb[0].mxu0
  %v2136 = vadd.f32 %v2060, %v2135
  %v2137 = vpop.f32.mrb[0].mxu0
  %v2138 = vpop.f32.mrb[0].mxu0
  %2139 = vdwg.mxu0
  %2140 = vmatprep.subr.bf16.mxu0 %v1894
  %2141 = vmatpush1.bf16.msra.mxu0 %v1890
  %2142 = vmatprep.subr.bf16.mxu0 %v1937
  %2143 = vmatpush1.bf16.msra.mxu0 %v1933
  %2144 = vmatprep.subr.bf16.mxu0 %v1981
  %2145 = vmatpush1.bf16.msra.mxu0 %v1977
  %2146 = vmatprep.subr.bf16.mxu0 %v2025
  %2147 = vmatpush1.bf16.msra.mxu0 %v2021
  %2148 = vmatprep.subr.bf16.mxu0 %v2076
  %2149 = vmatpush1.bf16.msra.mxu0 %v2073
  %2150 = vmatprep.subr.bf16.mxu0 0
  %2151 = vmatpush1.bf16.msra.mxu0 0
  %2152 = vmatprep.subr.bf16.mxu0 0
  %2153 = vmatpush1.bf16.msra.mxu0 0
  %2154 = vmatprep.subr.bf16.mxu0 0
  %2155 = vmatpush1.bf16.msra.mxu0 0
  %2156 = vmatprep.subr.bf16.mxu0 0
  %2157 = vmatpush1.bf16.msra.mxu0 0
  %2158 = vmatprep.subr.bf16.mxu0 0
  %2159 = vmatpush1.bf16.msra.mxu0 0
  %2160 = vmatprep.subr.bf16.mxu0 0
  %2161 = vmatpush1.bf16.msra.mxu0 0
  %2162 = vmatprep.subr.bf16.mxu0 0
  %2163 = vmatpush1.bf16.msra.mxu0 0
  %2164 = vmatprep.subr.bf16.mxu0 0
  %2165 = vmatpush1.bf16.msra.mxu0 0
  %2166 = vmatprep.subr.bf16.mxu0 0
  %2167 = vmatpush1.bf16.msra.mxu0 0
  %2168 = vmatprep.subr.bf16.mxu0 0
  %2169 = vmatpush1.bf16.msra.mxu0 0
  %2170 = vmatprep.subr.bf16.mxu0 0
  %2171 = vmatpush1.bf16.msra.mxu0 0
  %2172 = vmatprep.mubr.bf16.mxu0 0
  %2173 = vmatmul.mubr.bf16.gmra.mrb[0].mxu0 %v2064
  %v2174 = vpop.f32.mrb[0].mxu0
  %v2175 = vadd.f32 %v2060, %v2174
  %v2176 = vpop.f32.mrb[0].mxu0
  %v2177 = vadd.f32 %v2060, %v2176
  %v2178 = vpop.f32.mrb[0].mxu0
  %v2179 = vpop.f32.mrb[0].mxu0
  %2180 = vdwg.mxu0
  %2181 = vmatprep.subr.bf16.mxu0 %v1902
  %2182 = vmatpush1.bf16.msra.mxu0 %v1898
  %2183 = vmatprep.subr.bf16.mxu0 %v1945
  %2184 = vmatpush1.bf16.msra.mxu0 %v1941
  %2185 = vmatprep.subr.bf16.mxu0 %v1989
  %2186 = vmatpush1.bf16.msra.mxu0 %v1985
  %2187 = vmatprep.subr.bf16.mxu0 %v2033
  %2188 = vmatpush1.bf16.msra.mxu0 %v2029
  %2189 = vmatprep.subr.bf16.mxu0 %v2082
  %2190 = vmatpush1.bf16.msra.mxu0 %v2079
  %2191 = vmatprep.subr.bf16.mxu0 0
  %2192 = vmatpush1.bf16.msra.mxu0 0
  %2193 = vmatprep.subr.bf16.mxu0 0
  %2194 = vmatpush1.bf16.msra.mxu0 0
  %2195 = vmatprep.subr.bf16.mxu0 0
  %2196 = vmatpush1.bf16.msra.mxu0 0
  %2197 = vmatprep.subr.bf16.mxu0 0
  %2198 = vmatpush1.bf16.msra.mxu0 0
  %2199 = vmatprep.subr.bf16.mxu0 0
  %2200 = vmatpush1.bf16.msra.mxu0 0
  %2201 = vmatprep.subr.bf16.mxu0 0
  %2202 = vmatpush1.bf16.msra.mxu0 0
  %2203 = vmatprep.subr.bf16.mxu0 0
  %2204 = vmatpush1.bf16.msra.mxu0 0
  %2205 = vmatprep.subr.bf16.mxu0 0
  %2206 = vmatpush1.bf16.msra.mxu0 0
  %2207 = vmatprep.subr.bf16.mxu0 0
  %2208 = vmatpush1.bf16.msra.mxu0 0
  %2209 = vmatprep.subr.bf16.mxu0 0
  %2210 = vmatpush1.bf16.msra.mxu0 0
  %2211 = vmatprep.subr.bf16.mxu0 0
  %2212 = vmatpush1.bf16.msra.mxu0 0
  %2213 = vmatprep.mubr.bf16.mxu0 0
  %2214 = vmatmul.mubr.bf16.gmra.mrb[0].mxu0 %v2064
  %v2215 = vpop.f32.mrb[0].mxu0
  %v2216 = vadd.f32 %v2060, %v2215
  %v2217 = vpop.f32.mrb[0].mxu0
  %v2218 = vadd.f32 %v2060, %v2217
  %v2219 = vpop.f32.mrb[0].mxu0
  %v2220 = vpop.f32.mrb[0].mxu0
  %2221 = vdwg.mxu0
  %2222 = vmatprep.subr.bf16.mxu0 %v1910
  %2223 = vmatpush1.bf16.msra.mxu0 %v1906
  %2224 = vmatprep.subr.bf16.mxu0 %v1953
  %2225 = vmatpush1.bf16.msra.mxu0 %v1949
  %2226 = vmatprep.subr.bf16.mxu0 %v1997
  %2227 = vmatpush1.bf16.msra.mxu0 %v1993
  %2228 = vmatprep.subr.bf16.mxu0 %v2041
  %2229 = vmatpush1.bf16.msra.mxu0 %v2037
  %2230 = vmatprep.subr.bf16.mxu0 %v2088
  %2231 = vmatpush1.bf16.msra.mxu0 %v2085
  %2232 = vmatprep.subr.bf16.mxu0 0
  %2233 = vmatpush1.bf16.msra.mxu0 0
  %2234 = vmatprep.subr.bf16.mxu0 0
  %2235 = vmatpush1.bf16.msra.mxu0 0
  %2236 = vmatprep.subr.bf16.mxu0 0
  %2237 = vmatpush1.bf16.msra.mxu0 0
  %2238 = vmatprep.subr.bf16.mxu0 0
  %2239 = vmatpush1.bf16.msra.mxu0 0
  %2240 = vmatprep.subr.bf16.mxu0 0
  %2241 = vmatpush1.bf16.msra.mxu0 0
  %2242 = vmatprep.subr.bf16.mxu0 0
  %2243 = vmatpush1.bf16.msra.mxu0 0
  %2244 = vmatprep.subr.bf16.mxu0 0
  %2245 = vmatpush1.bf16.msra.mxu0 0
  %2246 = vmatprep.subr.bf16.mxu0 0
  %2247 = vmatpush1.bf16.msra.mxu0 0
  %2248 = vmatprep.subr.bf16.mxu0 0
  %2249 = vmatpush1.bf16.msra.mxu0 0
  %2250 = vmatprep.subr.bf16.mxu0 0
  %2251 = vmatpush1.bf16.msra.mxu0 0
  %2252 = vmatprep.subr.bf16.mxu0 0
  %2253 = vmatpush1.bf16.msra.mxu0 0
  %2254 = vmatprep.mubr.bf16.mxu0 0
  %2255 = vmatmul.mubr.bf16.gmra.mrb[0].mxu0 %v2064
  %v2256 = vpop.f32.mrb[0].mxu0
  %v2257 = vadd.f32 %v2060, %v2256
  %v2258 = vpop.f32.mrb[0].mxu0
  %v2259 = vadd.f32 %v2060, %v2258
  %v2260 = vpop.f32.mrb[0].mxu0
  %v2261 = vpop.f32.mrb[0].mxu0
  %2262 = vdwg.mxu0
  %2263 = vmatprep.subr.bf16.mxu0 %v1918
  %2264 = vmatpush1.bf16.msra.mxu0 %v1914
  %2265 = vmatprep.subr.bf16.mxu0 %v1961
  %2266 = vmatpush1.bf16.msra.mxu0 %v1957
  %2267 = vmatprep.subr.bf16.mxu0 %v2005
  %2268 = vmatpush1.bf16.msra.mxu0 %v2001
  %2269 = vmatprep.subr.bf16.mxu0 %v2049
  %2270 = vmatpush1.bf16.msra.mxu0 %v2045
  %2271 = vmatprep.subr.bf16.mxu0 %v2094
  %2272 = vmatpush1.bf16.msra.mxu0 %v2091
  %2273 = vmatprep.subr.bf16.mxu0 0
  %2274 = vmatpush1.bf16.msra.mxu0 0
  %2275 = vmatprep.subr.bf16.mxu0 0
  %2276 = vmatpush1.bf16.msra.mxu0 0
  %2277 = vmatprep.subr.bf16.mxu0 0
  %2278 = vmatpush1.bf16.msra.mxu0 0
  %2279 = vmatprep.subr.bf16.mxu0 0
  %2280 = vmatpush1.bf16.msra.mxu0 0
  %2281 = vmatprep.subr.bf16.mxu0 0
  %2282 = vmatpush1.bf16.msra.mxu0 0
  %2283 = vmatprep.subr.bf16.mxu0 0
  %2284 = vmatpush1.bf16.msra.mxu0 0
  %2285 = vmatprep.subr.bf16.mxu0 0
  %2286 = vmatpush1.bf16.msra.mxu0 0
  %2287 = vmatprep.subr.bf16.mxu0 0
  %2288 = vmatpush1.bf16.msra.mxu0 0
  %2289 = vmatprep.subr.bf16.mxu0 0
  %2290 = vmatpush1.bf16.msra.mxu0 0
  %2291 = vmatprep.subr.bf16.mxu0 0
  %2292 = vmatpush1.bf16.msra.mxu0 0
  %2293 = vmatprep.subr.bf16.mxu0 0
  %2294 = vmatpush1.bf16.msra.mxu0 0
  %2295 = vmatprep.mubr.bf16.mxu0 0
  %2296 = vmatmul.mubr.bf16.gmra.mrb[0].mxu0 %v2064
  %v2297 = vpop.f32.mrb[0].mxu0
  %v2298 = vadd.f32 %v2060, %v2297
  %v2299 = vpop.f32.mrb[0].mxu0
  %v2300 = vadd.f32 %v2060, %v2299
  %v2301 = vpop.f32.mrb[0].mxu0
  %v2302 = vpop.f32.mrb[0].mxu0
  %2303 = vdwg.mxu0
  %2304 = vmatprep.subr.bf16.mxu0 0
  %2305 = vmatpush1.bf16.msra.mxu0 %v1921
  %2306 = vmatprep.subr.bf16.mxu0 0
  %2307 = vmatpush1.bf16.msra.mxu0 %v1965
  %2308 = vmatprep.subr.bf16.mxu0 0
  %2309 = vmatpush1.bf16.msra.mxu0 %v2009
  %2310 = vmatprep.subr.bf16.mxu0 0
  %2311 = vmatpush1.bf16.msra.mxu0 %v2053
  %2312 = vmatprep.subr.bf16.mxu0 0
  %2313 = vmatpush1.bf16.msra.mxu0 %v2097
  %2314 = vmatprep.subr.bf16.mxu0 0
  %2315 = vmatpush1.bf16.msra.mxu0 0
  %2316 = vmatprep.subr.bf16.mxu0 0
  %2317 = vmatpush1.bf16.msra.mxu0 0
  %2318 = vmatprep.subr.bf16.mxu0 0
  %2319 = vmatpush1.bf16.msra.mxu0 0
  %2320 = vmatprep.subr.bf16.mxu0 0
  %2321 = vmatpush1.bf16.msra.mxu0 0
  %2322 = vmatprep.subr.bf16.mxu0 0
  %2323 = vmatpush1.bf16.msra.mxu0 0
  %2324 = vmatprep.subr.bf16.mxu0 0
  %2325 = vmatpush1.bf16.msra.mxu0 0
  %2326 = vmatprep.subr.bf16.mxu0 0
  %2327 = vmatpush1.bf16.msra.mxu0 0
  %2328 = vmatprep.subr.bf16.mxu0 0
  %2329 = vmatpush1.bf16.msra.mxu0 0
  %2330 = vmatprep.subr.bf16.mxu0 0
  %2331 = vmatpush1.bf16.msra.mxu0 0
  %2332 = vmatprep.subr.bf16.mxu0 0
  %2333 = vmatpush1.bf16.msra.mxu0 0
  %2334 = vmatprep.subr.bf16.mxu0 0
  %2335 = vmatpush1.bf16.msra.mxu0 0
  %2336 = vmatprep.mubr.bf16.mxu0 0
  %2337 = vmatmul.mubr.bf16.gmra.mrb[0].mxu0 %v2064
  %v2338 = vpop.f32.mrb[0].mxu0
  %v2339 = vadd.f32 %v2060, %v2338
  %v2340 = vpop.f32.mrb[0].mxu0
  %v2341 = vpop.f32.mrb[0].mxu0
  %v2342 = vpop.f32.mrb[0].mxu0
  %2343 = vdwg.mxu0
  %v2344 = vadd.f32 %v2134, %v1351
  %v2345 = vadd.f32 %v2136, %v1353
  %v2346 = vadd.f32 %v2175, %v1392
  %v2347 = vadd.f32 %v2177, %v1394
  %v2348 = vadd.f32 %v2216, %v1433
  %v2349 = vadd.f32 %v2218, %v1435
  %v2350 = vadd.f32 %v2257, %v1474
  %v2351 = vadd.f32 %v2259, %v1476
  %v2352 = vadd.f32 %v2298, %v1515
  %v2353 = vadd.f32 %v2300, %v1517
  %v2354 = vadd.f32 %v2339, %v1556
  %v2355 = vmax.f32 %v2344, 0.0
  %v2356 = vmax.f32 %v2345, 0.0
  %v2357 = vmax.f32 %v2346, 0.0
  %v2358 = vmax.f32 %v2347, 0.0
  %v2359 = vmax.f32 %v2348, 0.0
  %v2360 = vmax.f32 %v2349, 0.0
  %v2361 = vmax.f32 %v2350, 0.0
  %v2362 = vmax.f32 %v2351, 0.0
  %v2363 = vmax.f32 %v2352, 0.0
  %v2364 = vmax.f32 %v2353, 0.0
  %v2365 = vmax.f32 %v2354, 0.0
  %2376 = vrot.lane.b32.xlu0 %v2355, 127
  %v2377 = vpop.permute.xlu0 %2376
  %2378 = vrot.lane.b32.xlu0 %v2356, 127
  %v2379 = vpop.permute.xlu0 %2378
  %2380 = vrot.lane.b32.xlu0 %v2357, 127
  %v2381 = vpop.permute.xlu0 %2380
  %2382 = vrot.lane.b32.xlu0 %v2358, 127
  %v2383 = vpop.permute.xlu0 %2382
  %2384 = vrot.lane.b32.xlu0 %v2359, 127
  %v2385 = vpop.permute.xlu0 %2384
  %2386 = vrot.lane.b32.xlu0 %v2360, 127
  %v2387 = vpop.permute.xlu0 %2386
  %2388 = vrot.lane.b32.xlu0 %v2361, 127
  %v2389 = vpop.permute.xlu0 %2388
  %2390 = vrot.lane.b32.xlu0 %v2362, 127
  %v2391 = vpop.permute.xlu0 %2390
  %2392 = vrot.lane.b32.xlu0 %v2363, 127
  %v2393 = vpop.permute.xlu0 %2392
  %2394 = vrot.lane.b32.xlu0 %v2364, 127
  %v2395 = vpop.permute.xlu0 %2394
  %vm2396 = vcmask 1039360
  %v2397 = vsel %vm2396, %v2377, %v2379
  %v2398 = vsel %vm2396, %v2379, %v2381
  %v2399 = vsel %vm2396, %v2381, %v2383
  %v2400 = vsel %vm2396, %v2383, %v2385
  %v2401 = vsel %vm2396, %v2385, %v2387
  %v2402 = vsel %vm2396, %v2387, %v2389
  %v2403 = vsel %vm2396, %v2389, %v2391
  %v2404 = vsel %vm2396, %v2391, %v2393
  %v2405 = vsel %vm2396, %v2393, %v2395
  %v2416 = vmax.f32 %v2355, %v2397
  %v2417 = vmax.f32 %v2356, %v2398
  %v2418 = vmax.f32 %v2357, %v2399
  %v2419 = vmax.f32 %v2358, %v2400
  %v2420 = vmax.f32 %v2359, %v2401
  %v2421 = vmax.f32 %v2360, %v2402
  %v2422 = vmax.f32 %v2361, %v2403
  %v2423 = vmax.f32 %v2362, %v2404
  %v2424 = vmax.f32 %v2363, %v2405
  %v2425 = vmax.f32 %v2364, %v2395
  %2427 = vrot.lane.b32.xlu0 %v2365, 127
  %v2428 = vpop.permute.xlu0 %2427
  %v2429 = vsel %vm2396, %v2395, %v2428
  %v2432 = vmax.f32 %v2364, %v2429
  %v2433 = vmax.f32 %v2365, %v2428
  %2445 = vrot.lane.b32.xlu0 %v2416, 110
  %v2446 = vpop.permute.xlu0 %2445
  %2447 = vrot.lane.b32.xlu0 %v2417, 110
  %v2448 = vpop.permute.xlu0 %2447
  %2449 = vrot.lane.b32.xlu0 %v2418, 110
  %v2450 = vpop.permute.xlu0 %2449
  %2451 = vrot.lane.b32.xlu0 %v2419, 110
  %v2452 = vpop.permute.xlu0 %2451
  %2453 = vrot.lane.b32.xlu0 %v2420, 110
  %v2454 = vpop.permute.xlu0 %2453
  %2455 = vrot.lane.b32.xlu0 %v2421, 110
  %v2456 = vpop.permute.xlu0 %2455
  %2457 = vrot.lane.b32.xlu0 %v2422, 110
  %v2458 = vpop.permute.xlu0 %2457
  %2459 = vrot.lane.b32.xlu0 %v2423, 110
  %v2460 = vpop.permute.xlu0 %2459
  %2461 = vrot.lane.b32.xlu0 %v2424, 110
  %v2462 = vpop.permute.xlu0 %2461
  %2463 = vrot.lane.b32.xlu0 %v2432, 110
  %v2464 = vpop.permute.xlu0 %2463
  %2465 = vrot.lane.b32.xlu0 %v2433, 110
  %v2466 = vpop.permute.xlu0 %2465
  %vm2467 = vcmask 900096
  %v2468 = vsel %vm2467, %v2446, %v2448
  %v2469 = vsel %vm2467, %v2448, %v2450
  %v2470 = vsel %vm2467, %v2450, %v2452
  %v2471 = vsel %vm2467, %v2452, %v2454
  %v2472 = vsel %vm2467, %v2454, %v2456
  %v2473 = vsel %vm2467, %v2456, %v2458
  %v2474 = vsel %vm2467, %v2458, %v2460
  %v2475 = vsel %vm2467, %v2460, %v2462
  %v2476 = vsel %vm2467, %v2462, %v2464
  %v2477 = vsel %vm2467, %v2464, %v2466
  %v2488 = vmax.f32 %v2416, %v2468
  %v2489 = vmax.f32 %v2417, %v2469
  %v2490 = vmax.f32 %v2418, %v2470
  %v2491 = vmax.f32 %v2419, %v2471
  %v2492 = vmax.f32 %v2420, %v2472
  %v2493 = vmax.f32 %v2421, %v2473
  %v2494 = vmax.f32 %v2422, %v2474
  %v2495 = vmax.f32 %v2423, %v2475
  %v2496 = vmax.f32 %v2424, %v2476
  %v2497 = vmax.f32 %v2425, %v2477
  %v2498 = vpack.c.bf16 %v2488, %v2488
  %v2499 = vpack.c.bf16 %v2489, %v2489
  %v2500 = vpack.c.bf16 %v2490, %v2490
  %v2501 = vpack.c.bf16 %v2491, %v2491
  %v2502 = vpack.c.bf16 %v2492, %v2492
  %v2503 = vpack.c.bf16 %v2493, %v2493
  %v2504 = vpack.c.bf16 %v2494, %v2494
  %v2505 = vpack.c.bf16 %v2495, %v2495
  %v2506 = vpack.c.bf16 %v2496, %v2496
  %v2507 = vpack.c.bf16 %v2497, %v2497
  %v2508 = vld [vmem:[%s8] sm:$0xff]
  %v2509 = vld [vmem:[%s8 + $0x8] sm:$0xff]
  %v2510 = vld [vmem:[%s8 + $0x10] sm:$0xff]
  %v2511 = vld [vmem:[%s8 + $0x18] sm:$0xff]
  %v2512 = vld [vmem:[%s8 + $0x20] sm:$0xff]
  %v2513 = vld [vmem:[%s8 + $0x28] sm:$0xff]
  %v2514 = vld [vmem:[%s8 + $0x30] sm:$0xff]
  %v2515 = vld [vmem:[%s8 + $0x38] sm:$0xff]
  %v2516 = vld [vmem:[%s8 + $0x40] sm:$0xff]
  %v2517 = vld [vmem:[%s8 + $0x48] sm:$0xff]
  %v2518 = vld [vmem:[%s8 + $0x50] sm:$0xff]
  %v2519 = vld [vmem:[%s8 + $0x58] sm:$0xff]
  %v2520 = vld [vmem:[%s8 + $0x60] sm:$0xff]
  %v2521 = vld [vmem:[%s8 + $0x68] sm:$0xff]
  %v2522 = vld [vmem:[%s8 + $0x70] sm:$0xff]
  %v2523 = vld [vmem:[%s8 + $0x78] sm:$0xff]
  %v2524 = vld [vmem:[%s8 + $0x80] sm:$0xff]
  %v2525 = vld [vmem:[%s8 + $0x88] sm:$0xff]
  %v2526 = vld [vmem:[%s8 + $0x90] sm:$0xff]
  %v2527 = vld [vmem:[%s8 + $0x98] sm:$0xff]
  %v2528 = vld [vmem:[%s8 + $0xa0] sm:$0xff]
  %v2529 = vld [vmem:[%s8 + $0xa8] sm:$0xff]
  %v2530 = vld [vmem:[%s8 + $0xb0] sm:$0xff]
  %v2531 = vld [vmem:[%s8 + $0xb8] sm:$0xff]
  %v2532 = vld [vmem:[%s8 + $0xc0] sm:$0xff]
  %v2533 = vld [vmem:[%s8 + $0xc8] sm:$0xff]
  %v2534 = vld [vmem:[%s8 + $0xd0] sm:$0xff]
  %v2535 = vld [vmem:[%s8 + $0xd8] sm:$0xff]
  %v2536 = vld [vmem:[%s8 + $0xe0] sm:$0xff]
  %v2537 = vld [vmem:[%s8 + $0xe8] sm:$0xff]
  %v2538 = vld [vmem:[%s8 + $0xf0] sm:$0xff]
  %v2539 = vld [vmem:[%s8 + $0xf8] sm:$0xff]
  %v2540 = vld [vmem:[%s8 + $0x100] sm:$0xff]
  %v2541 = vld [vmem:[%s8 + $0x108] sm:$0xff]
  %v2542 = vld [vmem:[%s8 + $0x110] sm:$0xff]
  %v2543 = vld [vmem:[%s8 + $0x118] sm:$0xff]
  %v2544 = vld [vmem:[%s8 + $0x120] sm:$0xff]
  %v2545 = vld [vmem:[%s8 + $0x128] sm:$0xff]
  %v2546 = vld [vmem:[%s8 + $0x130] sm:$0xff]
  %v2547 = vld [vmem:[%s8 + $0x138] sm:$0xff]
  %v2548 = vld [vmem:[%s8 + $0x140] sm:$0xff]
  %v2549 = vld [vmem:[%s8 + $0x148] sm:$0xff]
  %v2550 = vld [vmem:[%s8 + $0x150] sm:$0xff]
  %v2551 = vld [vmem:[%s8 + $0x158] sm:$0xff]
  %v2552 = vld [vmem:[%s8 + $0x160] sm:$0xff]
  %v2553 = vld [vmem:[%s8 + $0x168] sm:$0xff]
  %v2554 = vld [vmem:[%s8 + $0x170] sm:$0xff]
  %v2555 = vld [vmem:[%s8 + $0x178] sm:$0xff]
  %v2556 = vld [vmem:[%s8 + $0x180] sm:$0xff]
  %v2557 = vld [vmem:[%s8 + $0x188] sm:$0xff]
  %v2558 = vld [vmem:[%s8 + $0x190] sm:$0xff]
  %v2559 = vld [vmem:[%s8 + $0x198] sm:$0xff]
  %v2560 = vld [vmem:[%s8 + $0x1a0] sm:$0xff]
  %v2561 = vld [vmem:[%s8 + $0x1a8] sm:$0xff]
  %v2562 = vld [vmem:[%s8 + $0x1b0] sm:$0xff]
  %v2563 = vld [vmem:[%s8 + $0x1b8] sm:$0xff]
  %v2564 = vld [vmem:[%s8 + $0x1c0] sm:$0xff]
  %v2565 = vld [vmem:[%s8 + $0x1c8] sm:$0xff]
  %v2566 = vld [vmem:[%s8 + $0x1d0] sm:$0xff]
  %v2567 = vld [vmem:[%s8 + $0x1d8] sm:$0xff]
  %v2568 = vld [vmem:[%s8 + $0x1e0] sm:$0xff]
  %v2569 = vld [vmem:[%s8 + $0x1e8] sm:$0xff]
  %v2570 = vld [vmem:[%s8 + $0x1f0] sm:$0xff]
  %v2571 = vld [vmem:[%s8 + $0x1f8] sm:$0xff]
  %v2572 = vld [vmem:[%s8 + $0x200] sm:$0xff]
  %v2573 = vld [vmem:[%s8 + $0x208] sm:$0xff]
  %v2574 = vld [vmem:[%s8 + $0x210] sm:$0xff]
  %v2575 = vld [vmem:[%s8 + $0x218] sm:$0xff]
  %v2576 = vld [vmem:[%s8 + $0x220] sm:$0xff]
  %v2577 = vld [vmem:[%s8 + $0x228] sm:$0xff]
  %v2578 = vld [vmem:[%s8 + $0x230] sm:$0xff]
  %v2579 = vld [vmem:[%s8 + $0x238] sm:$0xff]
  %v2580 = vld [vmem:[%s8 + $0x240] sm:$0xff]
  %v2581 = vld [vmem:[%s8 + $0x248] sm:$0xff]
  %v2582 = vld [vmem:[%s8 + $0x250] sm:$0xff]
  %v2583 = vld [vmem:[%s8 + $0x258] sm:$0xff]
  %v2584 = vld [vmem:[%s8 + $0x260] sm:$0xff]
  %v2585 = vld [vmem:[%s8 + $0x268] sm:$0xff]
  %v2586 = vld [vmem:[%s8 + $0x270] sm:$0xff]
  %v2587 = vld [vmem:[%s8 + $0x278] sm:$0xff]
  %v2588 = vld [vmem:[%s8 + $0x280] sm:$0xff]
  %v2589 = vld [vmem:[%s8 + $0x288] sm:$0xff]
  %v2590 = vld [vmem:[%s8 + $0x290] sm:$0xff]
  %v2591 = vld [vmem:[%s8 + $0x298] sm:$0xff]
  %v2592 = vld [vmem:[%s8 + $0x2a0] sm:$0xff]
  %v2593 = vld [vmem:[%s8 + $0x2a8] sm:$0xff]
  %v2594 = vld [vmem:[%s8 + $0x2b0] sm:$0xff]
  %v2595 = vld [vmem:[%s8 + $0x2b8] sm:$0xff]
  %v2596 = vld [vmem:[%s8 + $0x2c0] sm:$0xff]
  %v2597 = vld [vmem:[%s8 + $0x2c8] sm:$0xff]
  %v2598 = vld [vmem:[%s8 + $0x2d0] sm:$0xff]
  %v2599 = vld [vmem:[%s8 + $0x2d8] sm:$0xff]
  %v2600 = vld [vmem:[%s8 + $0x2e0] sm:$0xff]
  %v2601 = vld [vmem:[%s8 + $0x2e8] sm:$0xff]
  %v2602 = vld [vmem:[%s8 + $0x2f0] sm:$0xff]
  %v2603 = vld [vmem:[%s8 + $0x2f8] sm:$0xff]
  %v2604 = vld [vmem:[%s8 + $0x300] sm:$0xff]
  %v2605 = vld [vmem:[%s8 + $0x308] sm:$0xff]
  %v2606 = vld [vmem:[%s8 + $0x310] sm:$0xff]
  %v2607 = vld [vmem:[%s8 + $0x318] sm:$0xff]
  %v2608 = vld [vmem:[%s8 + $0x320] sm:$0xff]
  %v2609 = vld [vmem:[%s8 + $0x328] sm:$0xff]
  %v2610 = vld [vmem:[%s8 + $0x330] sm:$0xff]
  %v2611 = vld [vmem:[%s8 + $0x338] sm:$0xff]
  %v2612 = vld [vmem:[%s8 + $0x340] sm:$0xff]
  %v2613 = vld [vmem:[%s8 + $0x348] sm:$0xff]
  %v2614 = vld [vmem:[%s8 + $0x350] sm:$0xff]
  %v2615 = vld [vmem:[%s8 + $0x358] sm:$0xff]
  %v2616 = vld [vmem:[%s8 + $0x360] sm:$0xff]
  %v2617 = vld [vmem:[%s8 + $0x368] sm:$0xff]
  %v2618 = vld [vmem:[%s8 + $0x370] sm:$0xff]
  %v2619 = vld [vmem:[%s8 + $0x378] sm:$0xff]
  %v2620 = vld [vmem:[%s8 + $0x380] sm:$0xff]
  %v2621 = vld [vmem:[%s8 + $0x388] sm:$0xff]
  %v2622 = vld [vmem:[%s8 + $0x390] sm:$0xff]
  %v2623 = vld [vmem:[%s8 + $0x398] sm:$0xff]
  %v2624 = vld [vmem:[%s8 + $0x3a0] sm:$0xff]
  %v2625 = vld [vmem:[%s8 + $0x3a8] sm:$0xff]
  %v2626 = vld [vmem:[%s8 + $0x3b0] sm:$0xff]
  %v2627 = vld [vmem:[%s8 + $0x3b8] sm:$0xff]
  %v2628 = vld [vmem:[%s8 + $0x3c0] sm:$0xff]
  %v2629 = vld [vmem:[%s8 + $0x3c8] sm:$0xff]
  %v2630 = vld [vmem:[%s8 + $0x3d0] sm:$0xff]
  %v2631 = vld [vmem:[%s8 + $0x3d8] sm:$0xff]
  %v2632 = vld [vmem:[%s8 + $0x3e0] sm:$0xff]
  %v2633 = vld [vmem:[%s8 + $0x3e8] sm:$0xff]
  %v2634 = vld [vmem:[%s8 + $0x3f0] sm:$0xff]
  %v2635 = vld [vmem:[%s8 + $0x3f8] sm:$0xff]
  %v2636 = vld [vmem:[%s8 + $0x400] sm:$0xff]
  %v2637 = vld [vmem:[%s8 + $0x408] sm:$0xff]
  %v2638 = vld [vmem:[%s8 + $0x410] sm:$0xff]
  %v2639 = vld [vmem:[%s8 + $0x418] sm:$0xff]
  %v2640 = vld [vmem:[%s8 + $0x420] sm:$0xff]
  %v2641 = vld [vmem:[%s8 + $0x428] sm:$0xff]
  %v2642 = vld [vmem:[%s8 + $0x430] sm:$0xff]
  %v2643 = vld [vmem:[%s8 + $0x438] sm:$0xff]
  %v2644 = vld [vmem:[%s8 + $0x440] sm:$0xff]
  %v2645 = vld [vmem:[%s8 + $0x448] sm:$0xff]
  %v2646 = vld [vmem:[%s8 + $0x450] sm:$0xff]
  %v2647 = vld [vmem:[%s8 + $0x458] sm:$0xff]
  %v2648 = vld [vmem:[%s8 + $0x460] sm:$0xff]
  %v2649 = vld [vmem:[%s8 + $0x468] sm:$0xff]
  %v2650 = vld [vmem:[%s8 + $0x470] sm:$0xff]
  %v2651 = vld [vmem:[%s8 + $0x478] sm:$0xff]
  %v2652 = vld [vmem:[%s8 + $0x480] sm:$0xff]
  %v2653 = vld [vmem:[%s8 + $0x488] sm:$0xff]
  %v2654 = vld [vmem:[%s8 + $0x490] sm:$0xff]
  %v2655 = vld [vmem:[%s8 + $0x498] sm:$0xff]
  %v2656 = vld [vmem:[%s8 + $0x4a0] sm:$0xff]
  %v2657 = vld [vmem:[%s8 + $0x4a8] sm:$0xff]
  %v2658 = vld [vmem:[%s8 + $0x4b0] sm:$0xff]
  %v2659 = vld [vmem:[%s8 + $0x4b8] sm:$0xff]
  %v2660 = vld [vmem:[%s8 + $0x4c0] sm:$0xff]
  %v2661 = vld [vmem:[%s8 + $0x4c8] sm:$0xff]
  %v2662 = vld [vmem:[%s8 + $0x4d0] sm:$0xff]
  %v2663 = vld [vmem:[%s8 + $0x4d8] sm:$0xff]
  %v2664 = vld [vmem:[%s8 + $0x4e0] sm:$0xff]
  %v2665 = vld [vmem:[%s8 + $0x4e8] sm:$0xff]
  %v2666 = vld [vmem:[%s8 + $0x4f0] sm:$0xff]
  %v2667 = vld [vmem:[%s8 + $0x4f8] sm:$0xff]
  %v2668 = vld [vmem:[%s8 + $0x500] sm:$0xff]
  %v2669 = vld [vmem:[%s8 + $0x508] sm:$0xff]
  %v2670 = vld [vmem:[%s8 + $0x510] sm:$0xff]
  %v2671 = vld [vmem:[%s8 + $0x518] sm:$0xff]
  %v2672 = vld [vmem:[%s8 + $0x520] sm:$0xff]
  %v2673 = vld [vmem:[%s8 + $0x528] sm:$0xff]
  %v2674 = vld [vmem:[%s8 + $0x530] sm:$0xff]
  %v2675 = vld [vmem:[%s8 + $0x538] sm:$0xff]
  %v2676 = vld [vmem:[%s8 + $0x540] sm:$0xff]
  %v2677 = vld [vmem:[%s8 + $0x548] sm:$0xff]
  %v2678 = vld [vmem:[%s8 + $0x550] sm:$0xff]
  %v2679 = vld [vmem:[%s8 + $0x558] sm:$0xff]
  %v2680 = vld [vmem:[%s8 + $0x560] sm:$0xff]
  %v2681 = vld [vmem:[%s8 + $0x568] sm:$0xff]
  %v2682 = vld [vmem:[%s8 + $0x570] sm:$0xff]
  %v2683 = vld [vmem:[%s8 + $0x578] sm:$0xff]
  %v2684 = vld [vmem:[%s8 + $0x580] sm:$0xff]
  %v2685 = vld [vmem:[%s8 + $0x588] sm:$0xff]
  %v2686 = vld [vmem:[%s8 + $0x590] sm:$0xff]
  %v2687 = vld [vmem:[%s8 + $0x598] sm:$0xff]
  %v2688 = vld [vmem:[%s8 + $0x5a0] sm:$0xff]
  %v2689 = vld [vmem:[%s8 + $0x5a8] sm:$0xff]
  %v2690 = vld [vmem:[%s8 + $0x5b0] sm:$0xff]
  %v2691 = vld [vmem:[%s8 + $0x5b8] sm:$0xff]
  %v2692 = vld [vmem:[%s8 + $0x5c0] sm:$0xff]
  %v2693 = vld [vmem:[%s8 + $0x5c8] sm:$0xff]
  %v2694 = vld [vmem:[%s8 + $0x5d0] sm:$0xff]
  %v2695 = vld [vmem:[%s8 + $0x5d8] sm:$0xff]
  %v2696 = vld [vmem:[%s8 + $0x5e0] sm:$0xff]
  %v2697 = vld [vmem:[%s8 + $0x5e8] sm:$0xff]
  %v2698 = vld [vmem:[%s8 + $0x5f0] sm:$0xff]
  %v2699 = vld [vmem:[%s8 + $0x5f8] sm:$0xff]
  %v2700 = vld [vmem:[%s8 + $0x600] sm:$0xff]
  %v2701 = vld [vmem:[%s8 + $0x608] sm:$0xff]
  %v2702 = vld [vmem:[%s8 + $0x610] sm:$0xff]
  %v2703 = vld [vmem:[%s8 + $0x618] sm:$0xff]
  %v2704 = vld [vmem:[%s8 + $0x620] sm:$0xff]
  %v2705 = vld [vmem:[%s8 + $0x628] sm:$0xff]
  %v2706 = vld [vmem:[%s8 + $0x630] sm:$0xff]
  %v2707 = vld [vmem:[%s8 + $0x638] sm:$0xff]
  %v2708 = vld [vmem:[%s8 + $0x640] sm:$0xff]
  %v2709 = vld [vmem:[%s8 + $0x648] sm:$0xff]
  %v2710 = vld [vmem:[%s8 + $0x650] sm:$0xff]
  %v2711 = vld [vmem:[%s8 + $0x658] sm:$0xff]
  %v2712 = vld [vmem:[%s8 + $0x660] sm:$0xff]
  %v2713 = vld [vmem:[%s8 + $0x668] sm:$0xff]
  %v2714 = vld [vmem:[%s8 + $0x670] sm:$0xff]
  %v2715 = vld [vmem:[%s8 + $0x678] sm:$0xff]
  %v2716 = vld [vmem:[%s8 + $0x680] sm:$0xff]
  %v2717 = vld [vmem:[%s8 + $0x688] sm:$0xff]
  %v2718 = vld [vmem:[%s8 + $0x690] sm:$0xff]
  %v2719 = vld [vmem:[%s8 + $0x698] sm:$0xff]
  %v2720 = vld [vmem:[%s8 + $0x6a0] sm:$0xff]
  %v2721 = vld [vmem:[%s8 + $0x6a8] sm:$0xff]
  %v2722 = vld [vmem:[%s8 + $0x6b0] sm:$0xff]
  %v2723 = vld [vmem:[%s8 + $0x6b8] sm:$0xff]
  %v2724 = vld [vmem:[%s8 + $0x6c0] sm:$0xff]
  %v2725 = vld [vmem:[%s8 + $0x6c8] sm:$0xff]
  %v2726 = vld [vmem:[%s8 + $0x6d0] sm:$0xff]
  %v2727 = vld [vmem:[%s8 + $0x6d8] sm:$0xff]
  %v2728 = vld [vmem:[%s8 + $0x6e0] sm:$0xff]
  %v2729 = vld [vmem:[%s8 + $0x6e8] sm:$0xff]
  %v2730 = vld [vmem:[%s8 + $0x6f0] sm:$0xff]
  %v2731 = vld [vmem:[%s8 + $0x6f8] sm:$0xff]
  %v2732 = vld [vmem:[%s8 + $0x700] sm:$0xff]
  %v2733 = vld [vmem:[%s8 + $0x708] sm:$0xff]
  %v2734 = vld [vmem:[%s8 + $0x710] sm:$0xff]
  %v2735 = vld [vmem:[%s8 + $0x718] sm:$0xff]
  %v2736 = vld [vmem:[%s8 + $0x720] sm:$0xff]
  %v2737 = vld [vmem:[%s8 + $0x728] sm:$0xff]
  %v2738 = vld [vmem:[%s8 + $0x730] sm:$0xff]
  %v2739 = vld [vmem:[%s8 + $0x738] sm:$0xff]
  %v2740 = vld [vmem:[%s8 + $0x740] sm:$0xff]
  %v2741 = vld [vmem:[%s8 + $0x748] sm:$0xff]
  %v2742 = vld [vmem:[%s8 + $0x750] sm:$0xff]
  %v2743 = vld [vmem:[%s8 + $0x758] sm:$0xff]
  %v2744 = vld [vmem:[%s8 + $0x760] sm:$0xff]
  %v2745 = vld [vmem:[%s8 + $0x768] sm:$0xff]
  %v2746 = vld [vmem:[%s8 + $0x770] sm:$0xff]
  %v2747 = vld [vmem:[%s8 + $0x778] sm:$0xff]
  %v2748 = vld [vmem:[%s8 + $0x780] sm:$0xff]
  %v2749 = vld [vmem:[%s8 + $0x788] sm:$0xff]
  %v2750 = vld [vmem:[%s8 + $0x790] sm:$0xff]
  %v2751 = vld [vmem:[%s8 + $0x798] sm:$0xff]
  %v2752 = vld [vmem:[%s8 + $0x7a0] sm:$0xff]
  %v2753 = vld [vmem:[%s8 + $0x7a8] sm:$0xff]
  %v2754 = vld [vmem:[%s8 + $0x7b0] sm:$0xff]
  %v2755 = vld [vmem:[%s8 + $0x7b8] sm:$0xff]
  %v2756 = vld [vmem:[%s8 + $0x7c0] sm:$0xff]
  %v2757 = vld [vmem:[%s8 + $0x7c8] sm:$0xff]
  %v2758 = vld [vmem:[%s8 + $0x7d0] sm:$0xff]
  %v2759 = vld [vmem:[%s8 + $0x7d8] sm:$0xff]
  %v2760 = vld [vmem:[%s8 + $0x7e0] sm:$0xff]
  %v2761 = vld [vmem:[%s8 + $0x7e8] sm:$0xff]
  %v2762 = vld [vmem:[%s8 + $0x7f0] sm:$0xff]
  %v2763 = vld [vmem:[%s8 + $0x7f8] sm:$0xff]
  %v2764 = vld [vmem:[%s8 + $0x800] sm:$0xff]
  %v2765 = vld [vmem:[%s8 + $0x808] sm:$0xff]
  %v2766 = vld [vmem:[%s8 + $0x810] sm:$0xff]
  %v2767 = vld [vmem:[%s8 + $0x818] sm:$0xff]
  %v2768 = vld [vmem:[%s8 + $0x820] sm:$0xff]
  %v2769 = vld [vmem:[%s8 + $0x828] sm:$0xff]
  %v2770 = vld [vmem:[%s8 + $0x830] sm:$0xff]
  %v2771 = vld [vmem:[%s8 + $0x838] sm:$0xff]
  %v2772 = vld [vmem:[%s8 + $0x840] sm:$0xff]
  %v2773 = vld [vmem:[%s8 + $0x848] sm:$0xff]
  %v2774 = vld [vmem:[%s8 + $0x850] sm:$0xff]
  %v2775 = vld [vmem:[%s8 + $0x858] sm:$0xff]
  %v2776 = vld [vmem:[%s8 + $0x860] sm:$0xff]
  %v2777 = vld [vmem:[%s8 + $0x868] sm:$0xff]
  %v2778 = vld [vmem:[%s8 + $0x870] sm:$0xff]
  %v2779 = vld [vmem:[%s8 + $0x878] sm:$0xff]
  %v2780 = vld [vmem:[%s8 + $0x880] sm:$0xff]
  %v2781 = vld [vmem:[%s8 + $0x888] sm:$0xff]
  %v2782 = vld [vmem:[%s8 + $0x890] sm:$0xff]
  %v2783 = vld [vmem:[%s8 + $0x898] sm:$0xff]
  %v2784 = vld [vmem:[%s8 + $0x8a0] sm:$0xff]
  %v2785 = vld [vmem:[%s8 + $0x8a8] sm:$0xff]
  %v2786 = vld [vmem:[%s8 + $0x8b0] sm:$0xff]
  %v2787 = vld [vmem:[%s8 + $0x8b8] sm:$0xff]
  %v2788 = vld [vmem:[%s8 + $0x8c0] sm:$0xff]
  %v2789 = vld [vmem:[%s8 + $0x8c8] sm:$0xff]
  %v2790 = vld [vmem:[%s8 + $0x8d0] sm:$0xff]
  %v2791 = vld [vmem:[%s8 + $0x8d8] sm:$0xff]
  %v2792 = vld [vmem:[%s8 + $0x8e0] sm:$0xff]
  %v2793 = vld [vmem:[%s8 + $0x8e8] sm:$0xff]
  %v2794 = vld [vmem:[%s8 + $0x8f0] sm:$0xff]
  %v2795 = vld [vmem:[%s8 + $0x8f8] sm:$0xff]
  %v2796 = vld [vmem:[%s8 + $0x900] sm:$0xff]
  %v2797 = vld [vmem:[%s8 + $0x908] sm:$0xff]
  %v2798 = vld [vmem:[%s8 + $0x910] sm:$0xff]
  %v2799 = vld [vmem:[%s8 + $0x918] sm:$0xff]
  %v2800 = vld [vmem:[%s8 + $0x920] sm:$0xff]
  %v2801 = vld [vmem:[%s8 + $0x928] sm:$0xff]
  %v2802 = vld [vmem:[%s8 + $0x930] sm:$0xff]
  %v2803 = vld [vmem:[%s8 + $0x938] sm:$0xff]
  %v2804 = vld [vmem:[%s8 + $0x940] sm:$0xff]
  %v2805 = vld [vmem:[%s8 + $0x948] sm:$0xff]
  %v2806 = vld [vmem:[%s8 + $0x950] sm:$0xff]
  %v2807 = vld [vmem:[%s8 + $0x958] sm:$0xff]
  %v2808 = vld [vmem:[%s8 + $0x960] sm:$0xff]
  %v2809 = vld [vmem:[%s8 + $0x968] sm:$0xff]
  %v2810 = vld [vmem:[%s8 + $0x970] sm:$0xff]
  %v2811 = vld [vmem:[%s8 + $0x978] sm:$0xff]
  %v2812 = vld [vmem:[%s8 + $0x980] sm:$0xff]
  %v2813 = vld [vmem:[%s8 + $0x988] sm:$0xff]
  %v2814 = vld [vmem:[%s8 + $0x990] sm:$0xff]
  %v2815 = vld [vmem:[%s8 + $0x998] sm:$0xff]
  %v2816 = vld [vmem:[%s8 + $0x9a0] sm:$0xff]
  %v2817 = vld [vmem:[%s8 + $0x9a8] sm:$0xff]
  %v2818 = vld [vmem:[%s8 + $0x9b0] sm:$0xff]
  %v2819 = vld [vmem:[%s8 + $0x9b8] sm:$0xff]
  %v2820 = vld [vmem:[%s8 + $0x9c0] sm:$0xff]
  %v2821 = vld [vmem:[%s8 + $0x9c8] sm:$0xff]
  %v2822 = vld [vmem:[%s8 + $0x9d0] sm:$0xff]
  %v2823 = vld [vmem:[%s8 + $0x9d8] sm:$0xff]
  %v2824 = vld [vmem:[%s8 + $0x9e0] sm:$0xff]
  %v2825 = vld [vmem:[%s8 + $0x9e8] sm:$0xff]
  %v2826 = vld [vmem:[%s8 + $0x9f0] sm:$0x77]
  %v2827 = vld [vmem:[%s8 + $0x9f8] sm:$0x77]
  %v3148 = vunpack.c.l.b16 %v2508
  %v3149 = vunpack.c.h.b16 %v2508
  %v3150 = vunpack.c.l.b16 %v2509
  %v3151 = vunpack.c.h.b16 %v2509
  %v3152 = vunpack.c.l.b16 %v2510
  %v3153 = vunpack.c.h.b16 %v2510
  %v3154 = vunpack.c.l.b16 %v2511
  %v3155 = vunpack.c.h.b16 %v2511
  %v3156 = vunpack.c.l.b16 %v2512
  %v3157 = vunpack.c.h.b16 %v2512
  %v3158 = vunpack.c.l.b16 %v2513
  %v3159 = vunpack.c.h.b16 %v2513
  %v3160 = vunpack.c.l.b16 %v2514
  %v3161 = vunpack.c.h.b16 %v2514
  %v3162 = vunpack.c.l.b16 %v2515
  %v3163 = vunpack.c.h.b16 %v2515
  %v3164 = vunpack.c.l.b16 %v2516
  %v3165 = vunpack.c.h.b16 %v2516
  %v3166 = vunpack.c.l.b16 %v2517
  %v3167 = vunpack.c.h.b16 %v2517
  %v3168 = vunpack.c.l.b16 %v2518
  %v3169 = vunpack.c.h.b16 %v2518
  %v3170 = vunpack.c.l.b16 %v2519
  %v3171 = vunpack.c.h.b16 %v2519
  %v3172 = vunpack.c.l.b16 %v2520
  %v3173 = vunpack.c.h.b16 %v2520
  %v3174 = vunpack.c.l.b16 %v2521
  %v3175 = vunpack.c.h.b16 %v2521
  %v3176 = vunpack.c.l.b16 %v2522
  %v3177 = vunpack.c.h.b16 %v2522
  %v3178 = vunpack.c.l.b16 %v2523
  %v3179 = vunpack.c.h.b16 %v2523
  %v3180 = vunpack.c.l.b16 %v2524
  %v3181 = vunpack.c.h.b16 %v2524
  %v3182 = vunpack.c.l.b16 %v2525
  %v3183 = vunpack.c.h.b16 %v2525
  %v3184 = vunpack.c.l.b16 %v2526
  %v3185 = vunpack.c.h.b16 %v2526
  %v3186 = vunpack.c.l.b16 %v2527
  %v3187 = vunpack.c.h.b16 %v2527
  %v3188 = vunpack.c.l.b16 %v2528
  %v3189 = vunpack.c.h.b16 %v2528
  %v3190 = vunpack.c.l.b16 %v2529
  %v3191 = vunpack.c.h.b16 %v2529
  %v3192 = vunpack.c.l.b16 %v2530
  %v3193 = vunpack.c.h.b16 %v2530
  %v3194 = vunpack.c.l.b16 %v2531
  %v3195 = vunpack.c.h.b16 %v2531
  %v3196 = vunpack.c.l.b16 %v2532
  %v3197 = vunpack.c.h.b16 %v2532
  %v3198 = vunpack.c.l.b16 %v2533
  %v3199 = vunpack.c.h.b16 %v2533
  %v3200 = vunpack.c.l.b16 %v2534
  %v3201 = vunpack.c.h.b16 %v2534
  %v3202 = vunpack.c.l.b16 %v2535
  %v3203 = vunpack.c.h.b16 %v2535
  %v3204 = vunpack.c.l.b16 %v2536
  %v3205 = vunpack.c.h.b16 %v2536
  %v3206 = vunpack.c.l.b16 %v2537
  %v3207 = vunpack.c.h.b16 %v2537
  %v3208 = vunpack.c.l.b16 %v2538
  %v3209 = vunpack.c.h.b16 %v2538
  %v3210 = vunpack.c.l.b16 %v2539
  %v3211 = vunpack.c.h.b16 %v2539
  %v3212 = vunpack.c.l.b16 %v2540
  %v3213 = vunpack.c.h.b16 %v2540
  %v3214 = vunpack.c.l.b16 %v2541
  %v3215 = vunpack.c.h.b16 %v2541
  %v3216 = vunpack.c.l.b16 %v2542
  %v3217 = vunpack.c.h.b16 %v2542
  %v3218 = vunpack.c.l.b16 %v2543
  %v3219 = vunpack.c.h.b16 %v2543
  %v3220 = vunpack.c.l.b16 %v2544
  %v3221 = vunpack.c.h.b16 %v2544
  %v3222 = vunpack.c.l.b16 %v2545
  %v3223 = vunpack.c.h.b16 %v2545
  %v3224 = vunpack.c.l.b16 %v2546
  %v3225 = vunpack.c.h.b16 %v2546
  %v3226 = vunpack.c.l.b16 %v2547
  %v3227 = vunpack.c.h.b16 %v2547
  %v3228 = vunpack.c.l.b16 %v2548
  %v3229 = vunpack.c.h.b16 %v2548
  %v3230 = vunpack.c.l.b16 %v2549
  %v3231 = vunpack.c.h.b16 %v2549
  %v3232 = vunpack.c.l.b16 %v2550
  %v3233 = vunpack.c.h.b16 %v2550
  %v3234 = vunpack.c.l.b16 %v2551
  %v3235 = vunpack.c.h.b16 %v2551
  %v3236 = vunpack.c.l.b16 %v2552
  %v3237 = vunpack.c.h.b16 %v2552
  %v3238 = vunpack.c.l.b16 %v2553
  %v3239 = vunpack.c.h.b16 %v2553
  %v3240 = vunpack.c.l.b16 %v2554
  %v3241 = vunpack.c.h.b16 %v2554
  %v3242 = vunpack.c.l.b16 %v2555
  %v3243 = vunpack.c.h.b16 %v2555
  %v3244 = vunpack.c.l.b16 %v2556
  %v3245 = vunpack.c.h.b16 %v2556
  %v3246 = vunpack.c.l.b16 %v2557
  %v3247 = vunpack.c.h.b16 %v2557
  %v3248 = vunpack.c.l.b16 %v2558
  %v3249 = vunpack.c.h.b16 %v2558
  %v3250 = vunpack.c.l.b16 %v2559
  %v3251 = vunpack.c.h.b16 %v2559
  %v3252 = vunpack.c.l.b16 %v2560
  %v3253 = vunpack.c.h.b16 %v2560
  %v3254 = vunpack.c.l.b16 %v2561
  %v3255 = vunpack.c.h.b16 %v2561
  %v3256 = vunpack.c.l.b16 %v2562
  %v3257 = vunpack.c.h.b16 %v2562
  %v3258 = vunpack.c.l.b16 %v2563
  %v3259 = vunpack.c.h.b16 %v2563
  %v3260 = vunpack.c.l.b16 %v2564
  %v3261 = vunpack.c.h.b16 %v2564
  %v3262 = vunpack.c.l.b16 %v2565
  %v3263 = vunpack.c.h.b16 %v2565
  %v3264 = vunpack.c.l.b16 %v2566
  %v3265 = vunpack.c.h.b16 %v2566
  %v3266 = vunpack.c.l.b16 %v2567
  %v3267 = vunpack.c.h.b16 %v2567
  %v3268 = vunpack.c.l.b16 %v2568
  %v3269 = vunpack.c.h.b16 %v2568
  %v3270 = vunpack.c.l.b16 %v2569
  %v3271 = vunpack.c.h.b16 %v2569
  %v3272 = vunpack.c.l.b16 %v2570
  %v3273 = vunpack.c.h.b16 %v2570
  %v3274 = vunpack.c.l.b16 %v2571
  %v3275 = vunpack.c.h.b16 %v2571
  %v3276 = vunpack.c.l.b16 %v2572
  %v3277 = vunpack.c.h.b16 %v2572
  %v3278 = vunpack.c.l.b16 %v2573
  %v3279 = vunpack.c.h.b16 %v2573
  %v3280 = vunpack.c.l.b16 %v2574
  %v3281 = vunpack.c.h.b16 %v2574
  %v3282 = vunpack.c.l.b16 %v2575
  %v3283 = vunpack.c.h.b16 %v2575
  %v3284 = vunpack.c.l.b16 %v2576
  %v3285 = vunpack.c.h.b16 %v2576
  %v3286 = vunpack.c.l.b16 %v2577
  %v3287 = vunpack.c.h.b16 %v2577
  %v3288 = vunpack.c.l.b16 %v2578
  %v3289 = vunpack.c.h.b16 %v2578
  %v3290 = vunpack.c.l.b16 %v2579
  %v3291 = vunpack.c.h.b16 %v2579
  %v3292 = vunpack.c.l.b16 %v2580
  %v3293 = vunpack.c.h.b16 %v2580
  %v3294 = vunpack.c.l.b16 %v2581
  %v3295 = vunpack.c.h.b16 %v2581
  %v3296 = vunpack.c.l.b16 %v2582
  %v3297 = vunpack.c.h.b16 %v2582
  %v3298 = vunpack.c.l.b16 %v2583
  %v3299 = vunpack.c.h.b16 %v2583
  %v3300 = vunpack.c.l.b16 %v2584
  %v3301 = vunpack.c.h.b16 %v2584
  %v3302 = vunpack.c.l.b16 %v2585
  %v3303 = vunpack.c.h.b16 %v2585
  %v3304 = vunpack.c.l.b16 %v2586
  %v3305 = vunpack.c.h.b16 %v2586
  %v3306 = vunpack.c.l.b16 %v2587
  %v3307 = vunpack.c.h.b16 %v2587
  %v3308 = vunpack.c.l.b16 %v2588
  %v3309 = vunpack.c.h.b16 %v2588
  %v3310 = vunpack.c.l.b16 %v2589
  %v3311 = vunpack.c.h.b16 %v2589
  %v3312 = vunpack.c.l.b16 %v2590
  %v3313 = vunpack.c.h.b16 %v2590
  %v3314 = vunpack.c.l.b16 %v2591
  %v3315 = vunpack.c.h.b16 %v2591
  %v3316 = vunpack.c.l.b16 %v2592
  %v3317 = vunpack.c.h.b16 %v2592
  %v3318 = vunpack.c.l.b16 %v2593
  %v3319 = vunpack.c.h.b16 %v2593
  %v3320 = vunpack.c.l.b16 %v2594
  %v3321 = vunpack.c.h.b16 %v2594
  %v3322 = vunpack.c.l.b16 %v2595
  %v3323 = vunpack.c.h.b16 %v2595
  %v3324 = vunpack.c.l.b16 %v2596
  %v3325 = vunpack.c.h.b16 %v2596
  %v3326 = vunpack.c.l.b16 %v2597
  %v3327 = vunpack.c.h.b16 %v2597
  %v3328 = vunpack.c.l.b16 %v2598
  %v3329 = vunpack.c.h.b16 %v2598
  %v3330 = vunpack.c.l.b16 %v2599
  %v3331 = vunpack.c.h.b16 %v2599
  %v3332 = vunpack.c.l.b16 %v2600
  %v3333 = vunpack.c.h.b16 %v2600
  %v3334 = vunpack.c.l.b16 %v2601
  %v3335 = vunpack.c.h.b16 %v2601
  %v3336 = vunpack.c.l.b16 %v2602
  %v3337 = vunpack.c.h.b16 %v2602
  %v3338 = vunpack.c.l.b16 %v2603
  %v3339 = vunpack.c.h.b16 %v2603
  %v3340 = vunpack.c.l.b16 %v2604
  %v3341 = vunpack.c.h.b16 %v2604
  %v3342 = vunpack.c.l.b16 %v2605
  %v3343 = vunpack.c.h.b16 %v2605
  %v3344 = vunpack.c.l.b16 %v2606
  %v3345 = vunpack.c.h.b16 %v2606
  %v3346 = vunpack.c.l.b16 %v2607
  %v3347 = vunpack.c.h.b16 %v2607
  %v3348 = vunpack.c.l.b16 %v2608
  %v3349 = vunpack.c.h.b16 %v2608
  %v3350 = vunpack.c.l.b16 %v2609
  %v3351 = vunpack.c.h.b16 %v2609
  %v3352 = vunpack.c.l.b16 %v2610
  %v3353 = vunpack.c.h.b16 %v2610
  %v3354 = vunpack.c.l.b16 %v2611
  %v3355 = vunpack.c.h.b16 %v2611
  %v3356 = vunpack.c.l.b16 %v2612
  %v3357 = vunpack.c.h.b16 %v2612
  %v3358 = vunpack.c.l.b16 %v2613
  %v3359 = vunpack.c.h.b16 %v2613
  %v3360 = vunpack.c.l.b16 %v2614
  %v3361 = vunpack.c.h.b16 %v2614
  %v3362 = vunpack.c.l.b16 %v2615
  %v3363 = vunpack.c.h.b16 %v2615
  %v3364 = vunpack.c.l.b16 %v2616
  %v3365 = vunpack.c.h.b16 %v2616
  %v3366 = vunpack.c.l.b16 %v2617
  %v3367 = vunpack.c.h.b16 %v2617
  %v3368 = vunpack.c.l.b16 %v2618
  %v3369 = vunpack.c.h.b16 %v2618
  %v3370 = vunpack.c.l.b16 %v2619
  %v3371 = vunpack.c.h.b16 %v2619
  %v3372 = vunpack.c.l.b16 %v2620
  %v3373 = vunpack.c.h.b16 %v2620
  %v3374 = vunpack.c.l.b16 %v2621
  %v3375 = vunpack.c.h.b16 %v2621
  %v3376 = vunpack.c.l.b16 %v2622
  %v3377 = vunpack.c.h.b16 %v2622
  %v3378 = vunpack.c.l.b16 %v2623
  %v3379 = vunpack.c.h.b16 %v2623
  %v3380 = vunpack.c.l.b16 %v2624
  %v3381 = vunpack.c.h.b16 %v2624
  %v3382 = vunpack.c.l.b16 %v2625
  %v3383 = vunpack.c.h.b16 %v2625
  %v3384 = vunpack.c.l.b16 %v2626
  %v3385 = vunpack.c.h.b16 %v2626
  %v3386 = vunpack.c.l.b16 %v2627
  %v3387 = vunpack.c.h.b16 %v2627
  %v3388 = vunpack.c.l.b16 %v2628
  %v3389 = vunpack.c.h.b16 %v2628
  %v3390 = vunpack.c.l.b16 %v2629
  %v3391 = vunpack.c.h.b16 %v2629
  %v3392 = vunpack.c.l.b16 %v2630
  %v3393 = vunpack.c.h.b16 %v2630
  %v3394 = vunpack.c.l.b16 %v2631
  %v3395 = vunpack.c.h.b16 %v2631
  %v3396 = vunpack.c.l.b16 %v2632
  %v3397 = vunpack.c.h.b16 %v2632
  %v3398 = vunpack.c.l.b16 %v2633
  %v3399 = vunpack.c.h.b16 %v2633
  %v3400 = vunpack.c.l.b16 %v2634
  %v3401 = vunpack.c.h.b16 %v2634
  %v3402 = vunpack.c.l.b16 %v2635
  %v3403 = vunpack.c.h.b16 %v2635
  %v3404 = vunpack.c.l.b16 %v2636
  %v3405 = vunpack.c.h.b16 %v2636
  %v3406 = vunpack.c.l.b16 %v2637
  %v3407 = vunpack.c.h.b16 %v2637
  %v3408 = vunpack.c.l.b16 %v2638
  %v3409 = vunpack.c.h.b16 %v2638
  %v3410 = vunpack.c.l.b16 %v2639
  %v3411 = vunpack.c.h.b16 %v2639
  %v3412 = vunpack.c.l.b16 %v2640
  %v3413 = vunpack.c.h.b16 %v2640
  %v3414 = vunpack.c.l.b16 %v2641
  %v3415 = vunpack.c.h.b16 %v2641
  %v3416 = vunpack.c.l.b16 %v2642
  %v3417 = vunpack.c.h.b16 %v2642
  %v3418 = vunpack.c.l.b16 %v2643
  %v3419 = vunpack.c.h.b16 %v2643
  %v3420 = vunpack.c.l.b16 %v2644
  %v3421 = vunpack.c.h.b16 %v2644
  %v3422 = vunpack.c.l.b16 %v2645
  %v3423 = vunpack.c.h.b16 %v2645
  %v3424 = vunpack.c.l.b16 %v2646
  %v3425 = vunpack.c.h.b16 %v2646
  %v3426 = vunpack.c.l.b16 %v2647
  %v3427 = vunpack.c.h.b16 %v2647
  %v3428 = vunpack.c.l.b16 %v2648
  %v3429 = vunpack.c.h.b16 %v2648
  %v3430 = vunpack.c.l.b16 %v2649
  %v3431 = vunpack.c.h.b16 %v2649
  %v3432 = vunpack.c.l.b16 %v2650
  %v3433 = vunpack.c.h.b16 %v2650
  %v3434 = vunpack.c.l.b16 %v2651
  %v3435 = vunpack.c.h.b16 %v2651
  %v3436 = vunpack.c.l.b16 %v2652
  %v3437 = vunpack.c.h.b16 %v2652
  %v3438 = vunpack.c.l.b16 %v2653
  %v3439 = vunpack.c.h.b16 %v2653
  %v3440 = vunpack.c.l.b16 %v2654
  %v3441 = vunpack.c.h.b16 %v2654
  %v3442 = vunpack.c.l.b16 %v2655
  %v3443 = vunpack.c.h.b16 %v2655
  %v3444 = vunpack.c.l.b16 %v2656
  %v3445 = vunpack.c.h.b16 %v2656
  %v3446 = vunpack.c.l.b16 %v2657
  %v3447 = vunpack.c.h.b16 %v2657
  %v3448 = vunpack.c.l.b16 %v2658
  %v3449 = vunpack.c.h.b16 %v2658
  %v3450 = vunpack.c.l.b16 %v2659
  %v3451 = vunpack.c.h.b16 %v2659
  %v3452 = vunpack.c.l.b16 %v2660
  %v3453 = vunpack.c.h.b16 %v2660
  %v3454 = vunpack.c.l.b16 %v2661
  %v3455 = vunpack.c.h.b16 %v2661
  %v3456 = vunpack.c.l.b16 %v2662
  %v3457 = vunpack.c.h.b16 %v2662
  %v3458 = vunpack.c.l.b16 %v2663
  %v3459 = vunpack.c.h.b16 %v2663
  %v3460 = vunpack.c.l.b16 %v2664
  %v3461 = vunpack.c.h.b16 %v2664
  %v3462 = vunpack.c.l.b16 %v2665
  %v3463 = vunpack.c.h.b16 %v2665
  %v3464 = vunpack.c.l.b16 %v2666
  %v3465 = vunpack.c.h.b16 %v2666
  %v3466 = vunpack.c.l.b16 %v2667
  %v3467 = vunpack.c.h.b16 %v2667
  %v3468 = vunpack.c.l.b16 %v2668
  %v3469 = vunpack.c.h.b16 %v2668
  %v3470 = vunpack.c.l.b16 %v2669
  %v3471 = vunpack.c.h.b16 %v2669
  %v3472 = vunpack.c.l.b16 %v2670
  %v3473 = vunpack.c.h.b16 %v2670
  %v3474 = vunpack.c.l.b16 %v2671
  %v3475 = vunpack.c.h.b16 %v2671
  %v3476 = vunpack.c.l.b16 %v2672
  %v3477 = vunpack.c.h.b16 %v2672
  %v3478 = vunpack.c.l.b16 %v2673
  %v3479 = vunpack.c.h.b16 %v2673
  %v3480 = vunpack.c.l.b16 %v2674
  %v3481 = vunpack.c.h.b16 %v2674
  %v3482 = vunpack.c.l.b16 %v2675
  %v3483 = vunpack.c.h.b16 %v2675
  %v3484 = vunpack.c.l.b16 %v2676
  %v3485 = vunpack.c.h.b16 %v2676
  %v3486 = vunpack.c.l.b16 %v2677
  %v3487 = vunpack.c.h.b16 %v2677
  %v3488 = vunpack.c.l.b16 %v2678
  %v3489 = vunpack.c.h.b16 %v2678
  %v3490 = vunpack.c.l.b16 %v2679
  %v3491 = vunpack.c.h.b16 %v2679
  %v3492 = vunpack.c.l.b16 %v2680
  %v3493 = vunpack.c.h.b16 %v2680
  %v3494 = vunpack.c.l.b16 %v2681
  %v3495 = vunpack.c.h.b16 %v2681
  %v3496 = vunpack.c.l.b16 %v2682
  %v3497 = vunpack.c.h.b16 %v2682
  %v3498 = vunpack.c.l.b16 %v2683
  %v3499 = vunpack.c.h.b16 %v2683
  %v3500 = vunpack.c.l.b16 %v2684
  %v3501 = vunpack.c.h.b16 %v2684
  %v3502 = vunpack.c.l.b16 %v2685
  %v3503 = vunpack.c.h.b16 %v2685
  %v3504 = vunpack.c.l.b16 %v2686
  %v3505 = vunpack.c.h.b16 %v2686
  %v3506 = vunpack.c.l.b16 %v2687
  %v3507 = vunpack.c.h.b16 %v2687
  %v3508 = vunpack.c.l.b16 %v2688
  %v3509 = vunpack.c.h.b16 %v2688
  %v3510 = vunpack.c.l.b16 %v2689
  %v3511 = vunpack.c.h.b16 %v2689
  %v3512 = vunpack.c.l.b16 %v2690
  %v3513 = vunpack.c.h.b16 %v2690
  %v3514 = vunpack.c.l.b16 %v2691
  %v3515 = vunpack.c.h.b16 %v2691
  %v3516 = vunpack.c.l.b16 %v2692
  %v3517 = vunpack.c.h.b16 %v2692
  %v3518 = vunpack.c.l.b16 %v2693
  %v3519 = vunpack.c.h.b16 %v2693
  %v3520 = vunpack.c.l.b16 %v2694
  %v3521 = vunpack.c.h.b16 %v2694
  %v3522 = vunpack.c.l.b16 %v2695
  %v3523 = vunpack.c.h.b16 %v2695
  %v3524 = vunpack.c.l.b16 %v2696
  %v3525 = vunpack.c.h.b16 %v2696
  %v3526 = vunpack.c.l.b16 %v2697
  %v3527 = vunpack.c.h.b16 %v2697
  %v3528 = vunpack.c.l.b16 %v2698
  %v3529 = vunpack.c.h.b16 %v2698
  %v3530 = vunpack.c.l.b16 %v2699
  %v3531 = vunpack.c.h.b16 %v2699
  %v3532 = vunpack.c.l.b16 %v2700
  %v3533 = vunpack.c.h.b16 %v2700
  %v3534 = vunpack.c.l.b16 %v2701
  %v3535 = vunpack.c.h.b16 %v2701
  %v3536 = vunpack.c.l.b16 %v2702
  %v3537 = vunpack.c.h.b16 %v2702
  %v3538 = vunpack.c.l.b16 %v2703
  %v3539 = vunpack.c.h.b16 %v2703
  %v3540 = vunpack.c.l.b16 %v2704
  %v3541 = vunpack.c.h.b16 %v2704
  %v3542 = vunpack.c.l.b16 %v2705
  %v3543 = vunpack.c.h.b16 %v2705
  %v3544 = vunpack.c.l.b16 %v2706
  %v3545 = vunpack.c.h.b16 %v2706
  %v3546 = vunpack.c.l.b16 %v2707
  %v3547 = vunpack.c.h.b16 %v2707
  %v3548 = vunpack.c.l.b16 %v2708
  %v3549 = vunpack.c.h.b16 %v2708
  %v3550 = vunpack.c.l.b16 %v2709
  %v3551 = vunpack.c.h.b16 %v2709
  %v3552 = vunpack.c.l.b16 %v2710
  %v3553 = vunpack.c.h.b16 %v2710
  %v3554 = vunpack.c.l.b16 %v2711
  %v3555 = vunpack.c.h.b16 %v2711
  %v3556 = vunpack.c.l.b16 %v2712
  %v3557 = vunpack.c.h.b16 %v2712
  %v3558 = vunpack.c.l.b16 %v2713
  %v3559 = vunpack.c.h.b16 %v2713
  %v3560 = vunpack.c.l.b16 %v2714
  %v3561 = vunpack.c.h.b16 %v2714
  %v3562 = vunpack.c.l.b16 %v2715
  %v3563 = vunpack.c.h.b16 %v2715
  %v3564 = vunpack.c.l.b16 %v2716
  %v3565 = vunpack.c.h.b16 %v2716
  %v3566 = vunpack.c.l.b16 %v2717
  %v3567 = vunpack.c.h.b16 %v2717
  %v3568 = vunpack.c.l.b16 %v2718
  %v3569 = vunpack.c.h.b16 %v2718
  %v3570 = vunpack.c.l.b16 %v2719
  %v3571 = vunpack.c.h.b16 %v2719
  %v3572 = vunpack.c.l.b16 %v2720
  %v3573 = vunpack.c.h.b16 %v2720
  %v3574 = vunpack.c.l.b16 %v2721
  %v3575 = vunpack.c.h.b16 %v2721
  %v3576 = vunpack.c.l.b16 %v2722
  %v3577 = vunpack.c.h.b16 %v2722
  %v3578 = vunpack.c.l.b16 %v2723
  %v3579 = vunpack.c.h.b16 %v2723
  %v3580 = vunpack.c.l.b16 %v2724
  %v3581 = vunpack.c.h.b16 %v2724
  %v3582 = vunpack.c.l.b16 %v2725
  %v3583 = vunpack.c.h.b16 %v2725
  %v3584 = vunpack.c.l.b16 %v2726
  %v3585 = vunpack.c.h.b16 %v2726
  %v3586 = vunpack.c.l.b16 %v2727
  %v3587 = vunpack.c.h.b16 %v2727
  %v3588 = vunpack.c.l.b16 %v2728
  %v3589 = vunpack.c.h.b16 %v2728
  %v3590 = vunpack.c.l.b16 %v2729
  %v3591 = vunpack.c.h.b16 %v2729
  %v3592 = vunpack.c.l.b16 %v2730
  %v3593 = vunpack.c.h.b16 %v2730
  %v3594 = vunpack.c.l.b16 %v2731
  %v3595 = vunpack.c.h.b16 %v2731
  %v3596 = vunpack.c.l.b16 %v2732
  %v3597 = vunpack.c.h.b16 %v2732
  %v3598 = vunpack.c.l.b16 %v2733
  %v3599 = vunpack.c.h.b16 %v2733
  %v3600 = vunpack.c.l.b16 %v2734
  %v3601 = vunpack.c.h.b16 %v2734
  %v3602 = vunpack.c.l.b16 %v2735
  %v3603 = vunpack.c.h.b16 %v2735
  %v3604 = vunpack.c.l.b16 %v2736
  %v3605 = vunpack.c.h.b16 %v2736
  %v3606 = vunpack.c.l.b16 %v2737
  %v3607 = vunpack.c.h.b16 %v2737
  %v3608 = vunpack.c.l.b16 %v2738
  %v3609 = vunpack.c.h.b16 %v2738
  %v3610 = vunpack.c.l.b16 %v2739
  %v3611 = vunpack.c.h.b16 %v2739
  %v3612 = vunpack.c.l.b16 %v2740
  %v3613 = vunpack.c.h.b16 %v2740
  %v3614 = vunpack.c.l.b16 %v2741
  %v3615 = vunpack.c.h.b16 %v2741
  %v3616 = vunpack.c.l.b16 %v2742
  %v3617 = vunpack.c.h.b16 %v2742
  %v3618 = vunpack.c.l.b16 %v2743
  %v3619 = vunpack.c.h.b16 %v2743
  %v3620 = vunpack.c.l.b16 %v2744
  %v3621 = vunpack.c.h.b16 %v2744
  %v3622 = vunpack.c.l.b16 %v2745
  %v3623 = vunpack.c.h.b16 %v2745
  %v3624 = vunpack.c.l.b16 %v2746
  %v3625 = vunpack.c.h.b16 %v2746
  %v3626 = vunpack.c.l.b16 %v2747
  %v3627 = vunpack.c.h.b16 %v2747
  %v3628 = vunpack.c.l.b16 %v2748
  %v3629 = vunpack.c.h.b16 %v2748
  %v3630 = vunpack.c.l.b16 %v2749
  %v3631 = vunpack.c.h.b16 %v2749
  %v3632 = vunpack.c.l.b16 %v2750
  %v3633 = vunpack.c.h.b16 %v2750
  %v3634 = vunpack.c.l.b16 %v2751
  %v3635 = vunpack.c.h.b16 %v2751
  %v3636 = vunpack.c.l.b16 %v2752
  %v3637 = vunpack.c.h.b16 %v2752
  %v3638 = vunpack.c.l.b16 %v2753
  %v3639 = vunpack.c.h.b16 %v2753
  %v3640 = vunpack.c.l.b16 %v2754
  %v3641 = vunpack.c.h.b16 %v2754
  %v3642 = vunpack.c.l.b16 %v2755
  %v3643 = vunpack.c.h.b16 %v2755
  %v3644 = vunpack.c.l.b16 %v2756
  %v3645 = vunpack.c.h.b16 %v2756
  %v3646 = vunpack.c.l.b16 %v2757
  %v3647 = vunpack.c.h.b16 %v2757
  %v3648 = vunpack.c.l.b16 %v2758
  %v3649 = vunpack.c.h.b16 %v2758
  %v3650 = vunpack.c.l.b16 %v2759
  %v3651 = vunpack.c.h.b16 %v2759
  %v3652 = vunpack.c.l.b16 %v2760
  %v3653 = vunpack.c.h.b16 %v2760
  %v3654 = vunpack.c.l.b16 %v2761
  %v3655 = vunpack.c.h.b16 %v2761
  %v3656 = vunpack.c.l.b16 %v2762
  %v3657 = vunpack.c.h.b16 %v2762
  %v3658 = vunpack.c.l.b16 %v2763
  %v3659 = vunpack.c.h.b16 %v2763
  %v3660 = vunpack.c.l.b16 %v2764
  %v3661 = vunpack.c.h.b16 %v2764
  %v3662 = vunpack.c.l.b16 %v2765
  %v3663 = vunpack.c.h.b16 %v2765
  %v3664 = vunpack.c.l.b16 %v2766
  %v3665 = vunpack.c.h.b16 %v2766
  %v3666 = vunpack.c.l.b16 %v2767
  %v3667 = vunpack.c.h.b16 %v2767
  %v3668 = vunpack.c.l.b16 %v2768
  %v3669 = vunpack.c.h.b16 %v2768
  %v3670 = vunpack.c.l.b16 %v2769
  %v3671 = vunpack.c.h.b16 %v2769
  %v3672 = vunpack.c.l.b16 %v2770
  %v3673 = vunpack.c.h.b16 %v2770
  %v3674 = vunpack.c.l.b16 %v2771
  %v3675 = vunpack.c.h.b16 %v2771
  %v3676 = vunpack.c.l.b16 %v2772
  %v3677 = vunpack.c.h.b16 %v2772
  %v3678 = vunpack.c.l.b16 %v2773
  %v3679 = vunpack.c.h.b16 %v2773
  %v3680 = vunpack.c.l.b16 %v2774
  %v3681 = vunpack.c.h.b16 %v2774
  %v3682 = vunpack.c.l.b16 %v2775
  %v3683 = vunpack.c.h.b16 %v2775
  %v3684 = vunpack.c.l.b16 %v2776
  %v3685 = vunpack.c.h.b16 %v2776
  %v3686 = vunpack.c.l.b16 %v2777
  %v3687 = vunpack.c.h.b16 %v2777
  %v3688 = vunpack.c.l.b16 %v2778
  %v3689 = vunpack.c.h.b16 %v2778
  %v3690 = vunpack.c.l.b16 %v2779
  %v3691 = vunpack.c.h.b16 %v2779
  %v3692 = vunpack.c.l.b16 %v2780
  %v3693 = vunpack.c.h.b16 %v2780
  %v3694 = vunpack.c.l.b16 %v2781
  %v3695 = vunpack.c.h.b16 %v2781
  %v3696 = vunpack.c.l.b16 %v2782
  %v3697 = vunpack.c.h.b16 %v2782
  %v3698 = vunpack.c.l.b16 %v2783
  %v3699 = vunpack.c.h.b16 %v2783
  %v3700 = vunpack.c.l.b16 %v2784
  %v3701 = vunpack.c.h.b16 %v2784
  %v3702 = vunpack.c.l.b16 %v2785
  %v3703 = vunpack.c.h.b16 %v2785
  %v3704 = vunpack.c.l.b16 %v2786
  %v3705 = vunpack.c.h.b16 %v2786
  %v3706 = vunpack.c.l.b16 %v2787
  %v3707 = vunpack.c.h.b16 %v2787
  %v3708 = vunpack.c.l.b16 %v2788
  %v3709 = vunpack.c.h.b16 %v2788
  %v3710 = vunpack.c.l.b16 %v2789
  %v3711 = vunpack.c.h.b16 %v2789
  %v3712 = vunpack.c.l.b16 %v2790
  %v3713 = vunpack.c.h.b16 %v2790
  %v3714 = vunpack.c.l.b16 %v2791
  %v3715 = vunpack.c.h.b16 %v2791
  %v3716 = vunpack.c.l.b16 %v2792
  %v3717 = vunpack.c.h.b16 %v2792
  %v3718 = vunpack.c.l.b16 %v2793
  %v3719 = vunpack.c.h.b16 %v2793
  %v3720 = vunpack.c.l.b16 %v2794
  %v3721 = vunpack.c.h.b16 %v2794
  %v3722 = vunpack.c.l.b16 %v2795
  %v3723 = vunpack.c.h.b16 %v2795
  %v3724 = vunpack.c.l.b16 %v2796
  %v3725 = vunpack.c.h.b16 %v2796
  %v3726 = vunpack.c.l.b16 %v2797
  %v3727 = vunpack.c.h.b16 %v2797
  %v3728 = vunpack.c.l.b16 %v2798
  %v3729 = vunpack.c.h.b16 %v2798
  %v3730 = vunpack.c.l.b16 %v2799
  %v3731 = vunpack.c.h.b16 %v2799
  %v3732 = vunpack.c.l.b16 %v2800
  %v3733 = vunpack.c.h.b16 %v2800
  %v3734 = vunpack.c.l.b16 %v2801
  %v3735 = vunpack.c.h.b16 %v2801
  %v3736 = vunpack.c.l.b16 %v2802
  %v3737 = vunpack.c.h.b16 %v2802
  %v3738 = vunpack.c.l.b16 %v2803
  %v3739 = vunpack.c.h.b16 %v2803
  %v3740 = vunpack.c.l.b16 %v2804
  %v3741 = vunpack.c.h.b16 %v2804
  %v3742 = vunpack.c.l.b16 %v2805
  %v3743 = vunpack.c.h.b16 %v2805
  %v3744 = vunpack.c.l.b16 %v2806
  %v3745 = vunpack.c.h.b16 %v2806
  %v3746 = vunpack.c.l.b16 %v2807
  %v3747 = vunpack.c.h.b16 %v2807
  %v3748 = vunpack.c.l.b16 %v2808
  %v3749 = vunpack.c.h.b16 %v2808
  %v3750 = vunpack.c.l.b16 %v2809
  %v3751 = vunpack.c.h.b16 %v2809
  %v3752 = vunpack.c.l.b16 %v2810
  %v3753 = vunpack.c.h.b16 %v2810
  %v3754 = vunpack.c.l.b16 %v2811
  %v3755 = vunpack.c.h.b16 %v2811
  %v3756 = vunpack.c.l.b16 %v2812
  %v3757 = vunpack.c.h.b16 %v2812
  %v3758 = vunpack.c.l.b16 %v2813
  %v3759 = vunpack.c.h.b16 %v2813
  %v3760 = vunpack.c.l.b16 %v2814
  %v3761 = vunpack.c.h.b16 %v2814
  %v3762 = vunpack.c.l.b16 %v2815
  %v3763 = vunpack.c.h.b16 %v2815
  %v3764 = vunpack.c.l.b16 %v2816
  %v3765 = vunpack.c.h.b16 %v2816
  %v3766 = vunpack.c.l.b16 %v2817
  %v3767 = vunpack.c.h.b16 %v2817
  %v3768 = vunpack.c.l.b16 %v2818
  %v3769 = vunpack.c.h.b16 %v2818
  %v3770 = vunpack.c.l.b16 %v2819
  %v3771 = vunpack.c.h.b16 %v2819
  %v3772 = vunpack.c.l.b16 %v2820
  %v3773 = vunpack.c.h.b16 %v2820
  %v3774 = vunpack.c.l.b16 %v2821
  %v3775 = vunpack.c.h.b16 %v2821
  %v3776 = vunpack.c.l.b16 %v2822
  %v3777 = vunpack.c.h.b16 %v2822
  %v3778 = vunpack.c.l.b16 %v2823
  %v3779 = vunpack.c.h.b16 %v2823
  %v3780 = vunpack.c.l.b16 %v2824
  %v3781 = vunpack.c.h.b16 %v2824
  %v3782 = vunpack.c.l.b16 %v2825
  %v3783 = vunpack.c.h.b16 %v2825
  %v3784 = vunpack.c.l.b16 %v2826
  %v3785 = vunpack.c.h.b16 %v2826
  %v3786 = vunpack.c.l.b16 %v2827
  %v3787 = vunpack.c.h.b16 %v2827
  %v3788 = vpack.c.b16 %v3152, %v3148
  %v3789 = vpack.c.b16 %v3153, %v3149
  %v3790 = vpack.c.b16 %v3154, %v3150
  %v3791 = vpack.c.b16 %v3155, %v3151
  %v3792 = vpack.c.b16 %v3160, %v3156
  %v3793 = vpack.c.b16 %v3161, %v3157
  %v3794 = vpack.c.b16 %v3162, %v3158
  %v3795 = vpack.c.b16 %v3163, %v3159
  %v3796 = vpack.c.b16 %v3168, %v3164
  %v3797 = vpack.c.b16 %v3169, %v3165
  %v3798 = vpack.c.b16 %v3170, %v3166
  %v3799 = vpack.c.b16 %v3171, %v3167
  %v3800 = vpack.c.b16 %v3176, %v3172
  %v3801 = vpack.c.b16 %v3177, %v3173
  %v3802 = vpack.c.b16 %v3178, %v3174
  %v3803 = vpack.c.b16 %v3179, %v3175
  %v3804 = vpack.c.b16 %v3184, %v3180
  %v3805 = vpack.c.b16 %v3185, %v3181
  %v3806 = vpack.c.b16 %v3186, %v3182
  %v3807 = vpack.c.b16 %v3187, %v3183
  %v3808 = vpack.c.b16 %v3192, %v3188
  %v3809 = vpack.c.b16 %v3193, %v3189
  %v3810 = vpack.c.b16 %v3194, %v3190
  %v3811 = vpack.c.b16 %v3195, %v3191
  %v3812 = vpack.c.b16 %v3200, %v3196
  %v3813 = vpack.c.b16 %v3201, %v3197
  %v3814 = vpack.c.b16 %v3202, %v3198
  %v3815 = vpack.c.b16 %v3203, %v3199
  %v3816 = vpack.c.b16 %v3208, %v3204
  %v3817 = vpack.c.b16 %v3209, %v3205
  %v3818 = vpack.c.b16 %v3210, %v3206
  %v3819 = vpack.c.b16 %v3211, %v3207
  %v3820 = vpack.c.b16 %v3216, %v3212
  %v3821 = vpack.c.b16 %v3217, %v3213
  %v3822 = vpack.c.b16 %v3218, %v3214
  %v3823 = vpack.c.b16 %v3219, %v3215
  %v3824 = vpack.c.b16 %v3224, %v3220
  %v3825 = vpack.c.b16 %v3225, %v3221
  %v3826 = vpack.c.b16 %v3226, %v3222
  %v3827 = vpack.c.b16 %v3227, %v3223
  %v3828 = vpack.c.b16 %v3232, %v3228
  %v3829 = vpack.c.b16 %v3233, %v3229
  %v3830 = vpack.c.b16 %v3234, %v3230
  %v3831 = vpack.c.b16 %v3235, %v3231
  %v3832 = vpack.c.b16 %v3240, %v3236
  %v3833 = vpack.c.b16 %v3241, %v3237
  %v3834 = vpack.c.b16 %v3242, %v3238
  %v3835 = vpack.c.b16 %v3243, %v3239
  %v3836 = vpack.c.b16 %v3248, %v3244
  %v3837 = vpack.c.b16 %v3249, %v3245
  %v3838 = vpack.c.b16 %v3250, %v3246
  %v3839 = vpack.c.b16 %v3251, %v3247
  %v3840 = vpack.c.b16 %v3256, %v3252
  %v3841 = vpack.c.b16 %v3257, %v3253
  %v3842 = vpack.c.b16 %v3258, %v3254
  %v3843 = vpack.c.b16 %v3259, %v3255
  %v3844 = vpack.c.b16 %v3264, %v3260
  %v3845 = vpack.c.b16 %v3265, %v3261
  %v3846 = vpack.c.b16 %v3266, %v3262
  %v3847 = vpack.c.b16 %v3267, %v3263
  %v3848 = vpack.c.b16 %v3272, %v3268
  %v3849 = vpack.c.b16 %v3273, %v3269
  %v3850 = vpack.c.b16 %v3274, %v3270
  %v3851 = vpack.c.b16 %v3275, %v3271
  %v3852 = vpack.c.b16 %v3280, %v3276
  %v3853 = vpack.c.b16 %v3281, %v3277
  %v3854 = vpack.c.b16 %v3282, %v3278
  %v3855 = vpack.c.b16 %v3283, %v3279
  %v3856 = vpack.c.b16 %v3288, %v3284
  %v3857 = vpack.c.b16 %v3289, %v3285
  %v3858 = vpack.c.b16 %v3290, %v3286
  %v3859 = vpack.c.b16 %v3291, %v3287
  %v3860 = vpack.c.b16 %v3296, %v3292
  %v3861 = vpack.c.b16 %v3297, %v3293
  %v3862 = vpack.c.b16 %v3298, %v3294
  %v3863 = vpack.c.b16 %v3299, %v3295
  %v3864 = vpack.c.b16 %v3304, %v3300
  %v3865 = vpack.c.b16 %v3305, %v3301
  %v3866 = vpack.c.b16 %v3306, %v3302
  %v3867 = vpack.c.b16 %v3307, %v3303
  %v3868 = vpack.c.b16 %v3312, %v3308
  %v3869 = vpack.c.b16 %v3313, %v3309
  %v3870 = vpack.c.b16 %v3314, %v3310
  %v3871 = vpack.c.b16 %v3315, %v3311
  %v3872 = vpack.c.b16 %v3320, %v3316
  %v3873 = vpack.c.b16 %v3321, %v3317
  %v3874 = vpack.c.b16 %v3322, %v3318
  %v3875 = vpack.c.b16 %v3323, %v3319
  %v3876 = vpack.c.b16 %v3328, %v3324
  %v3877 = vpack.c.b16 %v3329, %v3325
  %v3878 = vpack.c.b16 %v3330, %v3326
  %v3879 = vpack.c.b16 %v3331, %v3327
  %v3880 = vpack.c.b16 %v3336, %v3332
  %v3881 = vpack.c.b16 %v3337, %v3333
  %v3882 = vpack.c.b16 %v3338, %v3334
  %v3883 = vpack.c.b16 %v3339, %v3335
  %v3884 = vpack.c.b16 %v3344, %v3340
  %v3885 = vpack.c.b16 %v3345, %v3341
  %v3886 = vpack.c.b16 %v3346, %v3342
  %v3887 = vpack.c.b16 %v3347, %v3343
  %v3888 = vpack.c.b16 %v3352, %v3348
  %v3889 = vpack.c.b16 %v3353, %v3349
  %v3890 = vpack.c.b16 %v3354, %v3350
  %v3891 = vpack.c.b16 %v3355, %v3351
  %v3892 = vpack.c.b16 %v3360, %v3356
  %v3893 = vpack.c.b16 %v3361, %v3357
  %v3894 = vpack.c.b16 %v3362, %v3358
  %v3895 = vpack.c.b16 %v3363, %v3359
  %v3896 = vpack.c.b16 %v3368, %v3364
  %v3897 = vpack.c.b16 %v3369, %v3365
  %v3898 = vpack.c.b16 %v3370, %v3366
  %v3899 = vpack.c.b16 %v3371, %v3367
  %v3900 = vpack.c.b16 %v3376, %v3372
  %v3901 = vpack.c.b16 %v3377, %v3373
  %v3902 = vpack.c.b16 %v3378, %v3374
  %v3903 = vpack.c.b16 %v3379, %v3375
  %v3904 = vpack.c.b16 %v3384, %v3380
  %v3905 = vpack.c.b16 %v3385, %v3381
  %v3906 = vpack.c.b16 %v3386, %v3382
  %v3907 = vpack.c.b16 %v3387, %v3383
  %v3908 = vpack.c.b16 %v3392, %v3388
  %v3909 = vpack.c.b16 %v3393, %v3389
  %v3910 = vpack.c.b16 %v3394, %v3390
  %v3911 = vpack.c.b16 %v3395, %v3391
  %v3912 = vpack.c.b16 %v3400, %v3396
  %v3913 = vpack.c.b16 %v3401, %v3397
  %v3914 = vpack.c.b16 %v3402, %v3398
  %v3915 = vpack.c.b16 %v3403, %v3399
  %v3916 = vpack.c.b16 %v3408, %v3404
  %v3917 = vpack.c.b16 %v3409, %v3405
  %v3918 = vpack.c.b16 %v3410, %v3406
  %v3919 = vpack.c.b16 %v3411, %v3407
  %v3920 = vpack.c.b16 %v3416, %v3412
  %v3921 = vpack.c.b16 %v3417, %v3413
  %v3922 = vpack.c.b16 %v3418, %v3414
  %v3923 = vpack.c.b16 %v3419, %v3415
  %v3924 = vpack.c.b16 %v3424, %v3420
  %v3925 = vpack.c.b16 %v3425, %v3421
  %v3926 = vpack.c.b16 %v3426, %v3422
  %v3927 = vpack.c.b16 %v3427, %v3423
  %v3928 = vpack.c.b16 %v3432, %v3428
  %v3929 = vpack.c.b16 %v3433, %v3429
  %v3930 = vpack.c.b16 %v3434, %v3430
  %v3931 = vpack.c.b16 %v3435, %v3431
  %v3932 = vpack.c.b16 %v3440, %v3436
  %v3933 = vpack.c.b16 %v3441, %v3437
  %v3934 = vpack.c.b16 %v3442, %v3438
  %v3935 = vpack.c.b16 %v3443, %v3439
  %v3936 = vpack.c.b16 %v3448, %v3444
  %v3937 = vpack.c.b16 %v3449, %v3445
  %v3938 = vpack.c.b16 %v3450, %v3446
  %v3939 = vpack.c.b16 %v3451, %v3447
  %v3940 = vpack.c.b16 %v3456, %v3452
  %v3941 = vpack.c.b16 %v3457, %v3453
  %v3942 = vpack.c.b16 %v3458, %v3454
  %v3943 = vpack.c.b16 %v3459, %v3455
  %v3944 = vpack.c.b16 %v3464, %v3460
  %v3945 = vpack.c.b16 %v3465, %v3461
  %v3946 = vpack.c.b16 %v3466, %v3462
  %v3947 = vpack.c.b16 %v3467, %v3463
  %v3948 = vpack.c.b16 %v3472, %v3468
  %v3949 = vpack.c.b16 %v3473, %v3469
  %v3950 = vpack.c.b16 %v3474, %v3470
  %v3951 = vpack.c.b16 %v3475, %v3471
  %v3952 = vpack.c.b16 %v3480, %v3476
  %v3953 = vpack.c.b16 %v3481, %v3477
  %v3954 = vpack.c.b16 %v3482, %v3478
  %v3955 = vpack.c.b16 %v3483, %v3479
  %v3956 = vpack.c.b16 %v3488, %v3484
  %v3957 = vpack.c.b16 %v3489, %v3485
  %v3958 = vpack.c.b16 %v3490, %v3486
  %v3959 = vpack.c.b16 %v3491, %v3487
  %v3960 = vpack.c.b16 %v3496, %v3492
  %v3961 = vpack.c.b16 %v3497, %v3493
  %v3962 = vpack.c.b16 %v3498, %v3494
  %v3963 = vpack.c.b16 %v3499, %v3495
  %v3964 = vpack.c.b16 %v3504, %v3500
  %v3965 = vpack.c.b16 %v3505, %v3501
  %v3966 = vpack.c.b16 %v3506, %v3502
  %v3967 = vpack.c.b16 %v3507, %v3503
  %v3968 = vpack.c.b16 %v3512, %v3508
  %v3969 = vpack.c.b16 %v3513, %v3509
  %v3970 = vpack.c.b16 %v3514, %v3510
  %v3971 = vpack.c.b16 %v3515, %v3511
  %v3972 = vpack.c.b16 %v3520, %v3516
  %v3973 = vpack.c.b16 %v3521, %v3517
  %v3974 = vpack.c.b16 %v3522, %v3518
  %v3975 = vpack.c.b16 %v3523, %v3519
  %v3976 = vpack.c.b16 %v3528, %v3524
  %v3977 = vpack.c.b16 %v3529, %v3525
  %v3978 = vpack.c.b16 %v3530, %v3526
  %v3979 = vpack.c.b16 %v3531, %v3527
  %v3980 = vpack.c.b16 %v3536, %v3532
  %v3981 = vpack.c.b16 %v3537, %v3533
  %v3982 = vpack.c.b16 %v3538, %v3534
  %v3983 = vpack.c.b16 %v3539, %v3535
  %v3984 = vpack.c.b16 %v3544, %v3540
  %v3985 = vpack.c.b16 %v3545, %v3541
  %v3986 = vpack.c.b16 %v3546, %v3542
  %v3987 = vpack.c.b16 %v3547, %v3543
  %v3988 = vpack.c.b16 %v3552, %v3548
  %v3989 = vpack.c.b16 %v3553, %v3549
  %v3990 = vpack.c.b16 %v3554, %v3550
  %v3991 = vpack.c.b16 %v3555, %v3551
  %v3992 = vpack.c.b16 %v3560, %v3556
  %v3993 = vpack.c.b16 %v3561, %v3557
  %v3994 = vpack.c.b16 %v3562, %v3558
  %v3995 = vpack.c.b16 %v3563, %v3559
  %v3996 = vpack.c.b16 %v3568, %v3564
  %v3997 = vpack.c.b16 %v3569, %v3565
  %v3998 = vpack.c.b16 %v3570, %v3566
  %v3999 = vpack.c.b16 %v3571, %v3567
  %v4000 = vpack.c.b16 %v3576, %v3572
  %v4001 = vpack.c.b16 %v3577, %v3573
  %v4002 = vpack.c.b16 %v3578, %v3574
  %v4003 = vpack.c.b16 %v3579, %v3575
  %v4004 = vpack.c.b16 %v3584, %v3580
  %v4005 = vpack.c.b16 %v3585, %v3581
  %v4006 = vpack.c.b16 %v3586, %v3582
  %v4007 = vpack.c.b16 %v3587, %v3583
  %v4008 = vpack.c.b16 %v3592, %v3588
  %v4009 = vpack.c.b16 %v3593, %v3589
  %v4010 = vpack.c.b16 %v3594, %v3590
  %v4011 = vpack.c.b16 %v3595, %v3591
  %v4012 = vpack.c.b16 %v3600, %v3596
  %v4013 = vpack.c.b16 %v3601, %v3597
  %v4014 = vpack.c.b16 %v3602, %v3598
  %v4015 = vpack.c.b16 %v3603, %v3599
  %v4016 = vpack.c.b16 %v3608, %v3604
  %v4017 = vpack.c.b16 %v3609, %v3605
  %v4018 = vpack.c.b16 %v3610, %v3606
  %v4019 = vpack.c.b16 %v3611, %v3607
  %v4020 = vpack.c.b16 %v3616, %v3612
  %v4021 = vpack.c.b16 %v3617, %v3613
  %v4022 = vpack.c.b16 %v3618, %v3614
  %v4023 = vpack.c.b16 %v3619, %v3615
  %v4024 = vpack.c.b16 %v3624, %v3620
  %v4025 = vpack.c.b16 %v3625, %v3621
  %v4026 = vpack.c.b16 %v3626, %v3622
  %v4027 = vpack.c.b16 %v3627, %v3623
  %v4028 = vpack.c.b16 %v3632, %v3628
  %v4029 = vpack.c.b16 %v3633, %v3629
  %v4030 = vpack.c.b16 %v3634, %v3630
  %v4031 = vpack.c.b16 %v3635, %v3631
  %v4032 = vpack.c.b16 %v3640, %v3636
  %v4033 = vpack.c.b16 %v3641, %v3637
  %v4034 = vpack.c.b16 %v3642, %v3638
  %v4035 = vpack.c.b16 %v3643, %v3639
  %v4036 = vpack.c.b16 %v3648, %v3644
  %v4037 = vpack.c.b16 %v3649, %v3645
  %v4038 = vpack.c.b16 %v3650, %v3646
  %v4039 = vpack.c.b16 %v3651, %v3647
  %v4040 = vpack.c.b16 %v3656, %v3652
  %v4041 = vpack.c.b16 %v3657, %v3653
  %v4042 = vpack.c.b16 %v3658, %v3654
  %v4043 = vpack.c.b16 %v3659, %v3655
  %v4044 = vpack.c.b16 %v3664, %v3660
  %v4045 = vpack.c.b16 %v3665, %v3661
  %v4046 = vpack.c.b16 %v3666, %v3662
  %v4047 = vpack.c.b16 %v3667, %v3663
  %v4048 = vpack.c.b16 %v3672, %v3668
  %v4049 = vpack.c.b16 %v3673, %v3669
  %v4050 = vpack.c.b16 %v3674, %v3670
  %v4051 = vpack.c.b16 %v3675, %v3671
  %v4052 = vpack.c.b16 %v3680, %v3676
  %v4053 = vpack.c.b16 %v3681, %v3677
  %v4054 = vpack.c.b16 %v3682, %v3678
  %v4055 = vpack.c.b16 %v3683, %v3679
  %v4056 = vpack.c.b16 %v3688, %v3684
  %v4057 = vpack.c.b16 %v3689, %v3685
  %v4058 = vpack.c.b16 %v3690, %v3686
  %v4059 = vpack.c.b16 %v3691, %v3687
  %v4060 = vpack.c.b16 %v3696, %v3692
  %v4061 = vpack.c.b16 %v3697, %v3693
  %v4062 = vpack.c.b16 %v3698, %v3694
  %v4063 = vpack.c.b16 %v3699, %v3695
  %v4064 = vpack.c.b16 %v3704, %v3700
  %v4065 = vpack.c.b16 %v3705, %v3701
  %v4066 = vpack.c.b16 %v3706, %v3702
  %v4067 = vpack.c.b16 %v3707, %v3703
  %v4068 = vpack.c.b16 %v3712, %v3708
  %v4069 = vpack.c.b16 %v3713, %v3709
  %v4070 = vpack.c.b16 %v3714, %v3710
  %v4071 = vpack.c.b16 %v3715, %v3711
  %v4072 = vpack.c.b16 %v3720, %v3716
  %v4073 = vpack.c.b16 %v3721, %v3717
  %v4074 = vpack.c.b16 %v3722, %v3718
  %v4075 = vpack.c.b16 %v3723, %v3719
  %v4076 = vpack.c.b16 %v3728, %v3724
  %v4077 = vpack.c.b16 %v3729, %v3725
  %v4078 = vpack.c.b16 %v3730, %v3726
  %v4079 = vpack.c.b16 %v3731, %v3727
  %v4080 = vpack.c.b16 %v3736, %v3732
  %v4081 = vpack.c.b16 %v3737, %v3733
  %v4082 = vpack.c.b16 %v3738, %v3734
  %v4083 = vpack.c.b16 %v3739, %v3735
  %v4084 = vpack.c.b16 %v3744, %v3740
  %v4085 = vpack.c.b16 %v3745, %v3741
  %v4086 = vpack.c.b16 %v3746, %v3742
  %v4087 = vpack.c.b16 %v3747, %v3743
  %v4088 = vpack.c.b16 %v3752, %v3748
  %v4089 = vpack.c.b16 %v3753, %v3749
  %v4090 = vpack.c.b16 %v3754, %v3750
  %v4091 = vpack.c.b16 %v3755, %v3751
  %v4092 = vpack.c.b16 %v3760, %v3756
  %v4093 = vpack.c.b16 %v3761, %v3757
  %v4094 = vpack.c.b16 %v3762, %v3758
  %v4095 = vpack.c.b16 %v3763, %v3759
  %v4096 = vpack.c.b16 %v3768, %v3764
  %v4097 = vpack.c.b16 %v3769, %v3765
  %v4098 = vpack.c.b16 %v3770, %v3766
  %v4099 = vpack.c.b16 %v3771, %v3767
  %v4100 = vpack.c.b16 %v3776, %v3772
  %v4101 = vpack.c.b16 %v3777, %v3773
  %v4102 = vpack.c.b16 %v3778, %v3774
  %v4103 = vpack.c.b16 %v3779, %v3775
  %v4104 = vpack.c.b16 %v3784, %v3780
  %v4105 = vpack.c.b16 %v3785, %v3781
  %v4106 = vpack.c.b16 %v3786, %v3782
  %v4107 = vpack.c.b16 %v3787, %v3783
  %vm4424 = vcmask 1022976
  %v4426 = vsel %vm4424, %v2507, 0
  %vm4428 = vcmask 1045504
  %vm4429 = vcmask 1046528
  %v4430 = vsel %vm4428, 4294967295, 65535
  %v4431 = vsel %vm4429, %v4430, 0
  %v4433 = vand.u32 %v4104, %v4431
  %v4436 = vand.u32 %v4105, %v4431
  %v4439 = vand.u32 %v4106, %v4431
  %v4442 = vand.u32 %v4107, %v4431
  %4444 = vmatprep.subr.bf16.mxu0 %v3789
  %4445 = vmatpush1.bf16.msra.mxu0 %v3788
  %4446 = vmatprep.subr.bf16.mxu0 %v3793
  %4447 = vmatpush1.bf16.msra.mxu0 %v3792
  %4448 = vmatprep.subr.bf16.mxu0 %v3797
  %4449 = vmatpush1.bf16.msra.mxu0 %v3796
  %4450 = vmatprep.subr.bf16.mxu0 %v3801
  %4451 = vmatpush1.bf16.msra.mxu0 %v3800
  %4452 = vmatprep.subr.bf16.mxu0 %v3805
  %4453 = vmatpush1.bf16.msra.mxu0 %v3804
  %4454 = vmatprep.subr.bf16.mxu0 %v3809
  %4455 = vmatpush1.bf16.msra.mxu0 %v3808
  %4456 = vmatprep.subr.bf16.mxu0 %v3813
  %4457 = vmatpush1.bf16.msra.mxu0 %v3812
  %4458 = vmatprep.subr.bf16.mxu0 %v3817
  %4459 = vmatpush1.bf16.msra.mxu0 %v3816
  %4460 = vmatprep.subr.bf16.mxu0 %v3821
  %4461 = vmatpush1.bf16.msra.mxu0 %v3820
  %4462 = vmatprep.subr.bf16.mxu0 %v3825
  %4463 = vmatpush1.bf16.msra.mxu0 %v3824
  %4464 = vmatprep.subr.bf16.mxu0 %v3829
  %4465 = vmatpush1.bf16.msra.mxu0 %v3828
  %4466 = vmatprep.subr.bf16.mxu0 %v3833
  %4467 = vmatpush1.bf16.msra.mxu0 %v3832
  %4468 = vmatprep.subr.bf16.mxu0 %v3837
  %4469 = vmatpush1.bf16.msra.mxu0 %v3836
  %4470 = vmatprep.subr.bf16.mxu0 %v3841
  %4471 = vmatpush1.bf16.msra.mxu0 %v3840
  %4472 = vmatprep.subr.bf16.mxu0 %v3845
  %4473 = vmatpush1.bf16.msra.mxu0 %v3844
  %4474 = vmatprep.subr.bf16.mxu0 %v3849
  %4475 = vmatpush1.bf16.msra.mxu0 %v3848
  %4476 = vmatprep.mubr.bf16.mxu0 %v2499
  %4477 = vmatmul.mubr.bf16.gmra.mrb[0].mxu0 %v2498
  %v4478 = vpop.f32.mrb[0].mxu0
  %v4479 = vadd.f32 0.0, %v4478
  %v4480 = vpop.f32.mrb[0].mxu0
  %v4481 = vadd.f32 0.0, %v4480
  %v4482 = vpop.f32.mrb[0].mxu0
  %v4483 = vpop.f32.mrb[0].mxu0
  %4484 = vdwg.mxu0
  %4485 = vmatprep.subr.bf16.mxu0 %v3853
  %4486 = vmatpush1.bf16.msra.mxu0 %v3852
  %4487 = vmatprep.subr.bf16.mxu0 %v3857
  %4488 = vmatpush1.bf16.msra.mxu0 %v3856
  %4489 = vmatprep.subr.bf16.mxu0 %v3861
  %4490 = vmatpush1.bf16.msra.mxu0 %v3860
  %4491 = vmatprep.subr.bf16.mxu0 %v3865
  %4492 = vmatpush1.bf16.msra.mxu0 %v3864
  %4493 = vmatprep.subr.bf16.mxu0 %v3869
  %4494 = vmatpush1.bf16.msra.mxu0 %v3868
  %4495 = vmatprep.subr.bf16.mxu0 %v3873
  %4496 = vmatpush1.bf16.msra.mxu0 %v3872
  %4497 = vmatprep.subr.bf16.mxu0 %v3877
  %4498 = vmatpush1.bf16.msra.mxu0 %v3876
  %4499 = vmatprep.subr.bf16.mxu0 %v3881
  %4500 = vmatpush1.bf16.msra.mxu0 %v3880
  %4501 = vmatprep.subr.bf16.mxu0 %v3885
  %4502 = vmatpush1.bf16.msra.mxu0 %v3884
  %4503 = vmatprep.subr.bf16.mxu0 %v3889
  %4504 = vmatpush1.bf16.msra.mxu0 %v3888
  %4505 = vmatprep.subr.bf16.mxu0 %v3893
  %4506 = vmatpush1.bf16.msra.mxu0 %v3892
  %4507 = vmatprep.subr.bf16.mxu0 %v3897
  %4508 = vmatpush1.bf16.msra.mxu0 %v3896
  %4509 = vmatprep.subr.bf16.mxu0 %v3901
  %4510 = vmatpush1.bf16.msra.mxu0 %v3900
  %4511 = vmatprep.subr.bf16.mxu0 %v3905
  %4512 = vmatpush1.bf16.msra.mxu0 %v3904
  %4513 = vmatprep.subr.bf16.mxu0 %v3909
  %4514 = vmatpush1.bf16.msra.mxu0 %v3908
  %4515 = vmatprep.subr.bf16.mxu0 %v3913
  %4516 = vmatpush1.bf16.msra.mxu0 %v3912
  %4517 = vmatprep.mubr.bf16.mxu0 %v2501
  %4518 = vmatmul.mubr.bf16.gmra.mrb[0].mxu0 %v2500
  %v4519 = vpop.f32.mrb[0].mxu0
  %v4520 = vadd.f32 %v4479, %v4519
  %v4521 = vpop.f32.mrb[0].mxu0
  %v4522 = vadd.f32 %v4481, %v4521
  %v4523 = vpop.f32.mrb[0].mxu0
  %v4524 = vpop.f32.mrb[0].mxu0
  %4525 = vdwg.mxu0
  %4526 = vmatprep.subr.bf16.mxu0 %v3917
  %4527 = vmatpush1.bf16.msra.mxu0 %v3916
  %4528 = vmatprep.subr.bf16.mxu0 %v3921
  %4529 = vmatpush1.bf16.msra.mxu0 %v3920
  %4530 = vmatprep.subr.bf16.mxu0 %v3925
  %4531 = vmatpush1.bf16.msra.mxu0 %v3924
  %4532 = vmatprep.subr.bf16.mxu0 %v3929
  %4533 = vmatpush1.bf16.msra.mxu0 %v3928
  %4534 = vmatprep.subr.bf16.mxu0 %v3933
  %4535 = vmatpush1.bf16.msra.mxu0 %v3932
  %4536 = vmatprep.subr.bf16.mxu0 %v3937
  %4537 = vmatpush1.bf16.msra.mxu0 %v3936
  %4538 = vmatprep.subr.bf16.mxu0 %v3941
  %4539 = vmatpush1.bf16.msra.mxu0 %v3940
  %4540 = vmatprep.subr.bf16.mxu0 %v3945
  %4541 = vmatpush1.bf16.msra.mxu0 %v3944
  %4542 = vmatprep.subr.bf16.mxu0 %v3949
  %4543 = vmatpush1.bf16.msra.mxu0 %v3948
  %4544 = vmatprep.subr.bf16.mxu0 %v3953
  %4545 = vmatpush1.bf16.msra.mxu0 %v3952
  %4546 = vmatprep.subr.bf16.mxu0 %v3957
  %4547 = vmatpush1.bf16.msra.mxu0 %v3956
  %4548 = vmatprep.subr.bf16.mxu0 %v3961
  %4549 = vmatpush1.bf16.msra.mxu0 %v3960
  %4550 = vmatprep.subr.bf16.mxu0 %v3965
  %4551 = vmatpush1.bf16.msra.mxu0 %v3964
  %4552 = vmatprep.subr.bf16.mxu0 %v3969
  %4553 = vmatpush1.bf16.msra.mxu0 %v3968
  %4554 = vmatprep.subr.bf16.mxu0 %v3973
  %4555 = vmatpush1.bf16.msra.mxu0 %v3972
  %4556 = vmatprep.subr.bf16.mxu0 %v3977
  %4557 = vmatpush1.bf16.msra.mxu0 %v3976
  %4558 = vmatprep.mubr.bf16.mxu0 %v2503
  %4559 = vmatmul.mubr.bf16.gmra.mrb[0].mxu0 %v2502
  %v4560 = vpop.f32.mrb[0].mxu0
  %v4561 = vadd.f32 %v4520, %v4560
  %v4562 = vpop.f32.mrb[0].mxu0
  %v4563 = vadd.f32 %v4522, %v4562
  %v4564 = vpop.f32.mrb[0].mxu0
  %v4565 = vpop.f32.mrb[0].mxu0
  %4566 = vdwg.mxu0
  %4567 = vmatprep.subr.bf16.mxu0 %v3981
  %4568 = vmatpush1.bf16.msra.mxu0 %v3980
  %4569 = vmatprep.subr.bf16.mxu0 %v3985
  %4570 = vmatpush1.bf16.msra.mxu0 %v3984
  %4571 = vmatprep.subr.bf16.mxu0 %v3989
  %4572 = vmatpush1.bf16.msra.mxu0 %v3988
  %4573 = vmatprep.subr.bf16.mxu0 %v3993
  %4574 = vmatpush1.bf16.msra.mxu0 %v3992
  %4575 = vmatprep.subr.bf16.mxu0 %v3997
  %4576 = vmatpush1.bf16.msra.mxu0 %v3996
  %4577 = vmatprep.subr.bf16.mxu0 %v4001
  %4578 = vmatpush1.bf16.msra.mxu0 %v4000
  %4579 = vmatprep.subr.bf16.mxu0 %v4005
  %4580 = vmatpush1.bf16.msra.mxu0 %v4004
  %4581 = vmatprep.subr.bf16.mxu0 %v4009
  %4582 = vmatpush1.bf16.msra.mxu0 %v4008
  %4583 = vmatprep.subr.bf16.mxu0 %v4013
  %4584 = vmatpush1.bf16.msra.mxu0 %v4012
  %4585 = vmatprep.subr.bf16.mxu0 %v4017
  %4586 = vmatpush1.bf16.msra.mxu0 %v4016
  %4587 = vmatprep.subr.bf16.mxu0 %v4021
  %4588 = vmatpush1.bf16.msra.mxu0 %v4020
  %4589 = vmatprep.subr.bf16.mxu0 %v4025
  %4590 = vmatpush1.bf16.msra.mxu0 %v4024
  %4591 = vmatprep.subr.bf16.mxu0 %v4029
  %4592 = vmatpush1.bf16.msra.mxu0 %v4028
  %4593 = vmatprep.subr.bf16.mxu0 %v4033
  %4594 = vmatpush1.bf16.msra.mxu0 %v4032
  %4595 = vmatprep.subr.bf16.mxu0 %v4037
  %4596 = vmatpush1.bf16.msra.mxu0 %v4036
  %4597 = vmatprep.subr.bf16.mxu0 %v4041
  %4598 = vmatpush1.bf16.msra.mxu0 %v4040
  %4599 = vmatprep.mubr.bf16.mxu0 %v2505
  %4600 = vmatmul.mubr.bf16.gmra.mrb[0].mxu0 %v2504
  %v4601 = vpop.f32.mrb[0].mxu0
  %v4602 = vadd.f32 %v4561, %v4601
  %v4603 = vpop.f32.mrb[0].mxu0
  %v4604 = vadd.f32 %v4563, %v4603
  %v4605 = vpop.f32.mrb[0].mxu0
  %v4606 = vpop.f32.mrb[0].mxu0
  %4607 = vdwg.mxu0
  %4608 = vmatprep.subr.bf16.mxu0 %v4045
  %4609 = vmatpush1.bf16.msra.mxu0 %v4044
  %4610 = vmatprep.subr.bf16.mxu0 %v4049
  %4611 = vmatpush1.bf16.msra.mxu0 %v4048
  %4612 = vmatprep.subr.bf16.mxu0 %v4053
  %4613 = vmatpush1.bf16.msra.mxu0 %v4052
  %4614 = vmatprep.subr.bf16.mxu0 %v4057
  %4615 = vmatpush1.bf16.msra.mxu0 %v4056
  %4616 = vmatprep.subr.bf16.mxu0 %v4061
  %4617 = vmatpush1.bf16.msra.mxu0 %v4060
  %4618 = vmatprep.subr.bf16.mxu0 %v4065
  %4619 = vmatpush1.bf16.msra.mxu0 %v4064
  %4620 = vmatprep.subr.bf16.mxu0 %v4069
  %4621 = vmatpush1.bf16.msra.mxu0 %v4068
  %4622 = vmatprep.subr.bf16.mxu0 %v4073
  %4623 = vmatpush1.bf16.msra.mxu0 %v4072
  %4624 = vmatprep.subr.bf16.mxu0 %v4077
  %4625 = vmatpush1.bf16.msra.mxu0 %v4076
  %4626 = vmatprep.subr.bf16.mxu0 %v4081
  %4627 = vmatpush1.bf16.msra.mxu0 %v4080
  %4628 = vmatprep.subr.bf16.mxu0 %v4085
  %4629 = vmatpush1.bf16.msra.mxu0 %v4084
  %4630 = vmatprep.subr.bf16.mxu0 %v4089
  %4631 = vmatpush1.bf16.msra.mxu0 %v4088
  %4632 = vmatprep.subr.bf16.mxu0 %v4093
  %4633 = vmatpush1.bf16.msra.mxu0 %v4092
  %4634 = vmatprep.subr.bf16.mxu0 %v4097
  %4635 = vmatpush1.bf16.msra.mxu0 %v4096
  %4636 = vmatprep.subr.bf16.mxu0 %v4101
  %4637 = vmatpush1.bf16.msra.mxu0 %v4100
  %4638 = vmatprep.subr.bf16.mxu0 %v4436
  %4639 = vmatpush1.bf16.msra.mxu0 %v4433
  %4640 = vmatprep.mubr.bf16.mxu0 %v4426
  %4641 = vmatmul.mubr.bf16.gmra.mrb[0].mxu0 %v2506
  %v4642 = vpop.f32.mrb[0].mxu0
  %v4643 = vadd.f32 %v4602, %v4642
  %v4644 = vpop.f32.mrb[0].mxu0
  %v4645 = vadd.f32 %v4604, %v4644
  %v4646 = vpop.f32.mrb[0].mxu0
  %v4647 = vpop.f32.mrb[0].mxu0
  %4648 = vdwg.mxu0
  %4649 = vmatprep.subr.bf16.mxu0 %v3791
  %4650 = vmatpush1.bf16.msra.mxu0 %v3790
  %4651 = vmatprep.subr.bf16.mxu0 %v3795
  %4652 = vmatpush1.bf16.msra.mxu0 %v3794
  %4653 = vmatprep.subr.bf16.mxu0 %v3799
  %4654 = vmatpush1.bf16.msra.mxu0 %v3798
  %4655 = vmatprep.subr.bf16.mxu0 %v3803
  %4656 = vmatpush1.bf16.msra.mxu0 %v3802
  %4657 = vmatprep.subr.bf16.mxu0 %v3807
  %4658 = vmatpush1.bf16.msra.mxu0 %v3806
  %4659 = vmatprep.subr.bf16.mxu0 %v3811
  %4660 = vmatpush1.bf16.msra.mxu0 %v3810
  %4661 = vmatprep.subr.bf16.mxu0 %v3815
  %4662 = vmatpush1.bf16.msra.mxu0 %v3814
  %4663 = vmatprep.subr.bf16.mxu0 %v3819
  %4664 = vmatpush1.bf16.msra.mxu0 %v3818
  %4665 = vmatprep.subr.bf16.mxu0 %v3823
  %4666 = vmatpush1.bf16.msra.mxu0 %v3822
  %4667 = vmatprep.subr.bf16.mxu0 %v3827
  %4668 = vmatpush1.bf16.msra.mxu0 %v3826
  %4669 = vmatprep.subr.bf16.mxu0 %v3831
  %4670 = vmatpush1.bf16.msra.mxu0 %v3830
  %4671 = vmatprep.subr.bf16.mxu0 %v3835
  %4672 = vmatpush1.bf16.msra.mxu0 %v3834
  %4673 = vmatprep.subr.bf16.mxu0 %v3839
  %4674 = vmatpush1.bf16.msra.mxu0 %v3838
  %4675 = vmatprep.subr.bf16.mxu0 %v3843
  %4676 = vmatpush1.bf16.msra.mxu0 %v3842
  %4677 = vmatprep.subr.bf16.mxu0 %v3847
  %4678 = vmatpush1.bf16.msra.mxu0 %v3846
  %4679 = vmatprep.subr.bf16.mxu0 %v3851
  %4680 = vmatpush1.bf16.msra.mxu0 %v3850
  %4681 = vmatprep.mubr.bf16.mxu0 %v2499
  %4682 = vmatmul.mubr.bf16.gmra.mrb[0].mxu0 %v2498
  %v4683 = vpop.f32.mrb[0].mxu0
  %v4684 = vadd.f32 0.0, %v4683
  %v4685 = vpop.f32.mrb[0].mxu0
  %v4686 = vadd.f32 0.0, %v4685
  %v4687 = vpop.f32.mrb[0].mxu0
  %v4688 = vpop.f32.mrb[0].mxu0
  %4689 = vdwg.mxu0
  %4690 = vmatprep.subr.bf16.mxu0 %v3855
  %4691 = vmatpush1.bf16.msra.mxu0 %v3854
  %4692 = vmatprep.subr.bf16.mxu0 %v3859
  %4693 = vmatpush1.bf16.msra.mxu0 %v3858
  %4694 = vmatprep.subr.bf16.mxu0 %v3863
  %4695 = vmatpush1.bf16.msra.mxu0 %v3862
  %4696 = vmatprep.subr.bf16.mxu0 %v3867
  %4697 = vmatpush1.bf16.msra.mxu0 %v3866
  %4698 = vmatprep.subr.bf16.mxu0 %v3871
  %4699 = vmatpush1.bf16.msra.mxu0 %v3870
  %4700 = vmatprep.subr.bf16.mxu0 %v3875
  %4701 = vmatpush1.bf16.msra.mxu0 %v3874
  %4702 = vmatprep.subr.bf16.mxu0 %v3879
  %4703 = vmatpush1.bf16.msra.mxu0 %v3878
  %4704 = vmatprep.subr.bf16.mxu0 %v3883
  %4705 = vmatpush1.bf16.msra.mxu0 %v3882
  %4706 = vmatprep.subr.bf16.mxu0 %v3887
  %4707 = vmatpush1.bf16.msra.mxu0 %v3886
  %4708 = vmatprep.subr.bf16.mxu0 %v3891
  %4709 = vmatpush1.bf16.msra.mxu0 %v3890
  %4710 = vmatprep.subr.bf16.mxu0 %v3895
  %4711 = vmatpush1.bf16.msra.mxu0 %v3894
  %4712 = vmatprep.subr.bf16.mxu0 %v3899
  %4713 = vmatpush1.bf16.msra.mxu0 %v3898
  %4714 = vmatprep.subr.bf16.mxu0 %v3903
  %4715 = vmatpush1.bf16.msra.mxu0 %v3902
  %4716 = vmatprep.subr.bf16.mxu0 %v3907
  %4717 = vmatpush1.bf16.msra.mxu0 %v3906
  %4718 = vmatprep.subr.bf16.mxu0 %v3911
  %4719 = vmatpush1.bf16.msra.mxu0 %v3910
  %4720 = vmatprep.subr.bf16.mxu0 %v3915
  %4721 = vmatpush1.bf16.msra.mxu0 %v3914
  %4722 = vmatprep.mubr.bf16.mxu0 %v2501
  %4723 = vmatmul.mubr.bf16.gmra.mrb[0].mxu0 %v2500
  %v4724 = vpop.f32.mrb[0].mxu0
  %v4725 = vadd.f32 %v4684, %v4724
  %v4726 = vpop.f32.mrb[0].mxu0
  %v4727 = vadd.f32 %v4686, %v4726
  %v4728 = vpop.f32.mrb[0].mxu0
  %v4729 = vpop.f32.mrb[0].mxu0
  %4730 = vdwg.mxu0
  %4731 = vmatprep.subr.bf16.mxu0 %v3919
  %4732 = vmatpush1.bf16.msra.mxu0 %v3918
  %4733 = vmatprep.subr.bf16.mxu0 %v3923
  %4734 = vmatpush1.bf16.msra.mxu0 %v3922
  %4735 = vmatprep.subr.bf16.mxu0 %v3927
  %4736 = vmatpush1.bf16.msra.mxu0 %v3926
  %4737 = vmatprep.subr.bf16.mxu0 %v3931
  %4738 = vmatpush1.bf16.msra.mxu0 %v3930
  %4739 = vmatprep.subr.bf16.mxu0 %v3935
  %4740 = vmatpush1.bf16.msra.mxu0 %v3934
  %4741 = vmatprep.subr.bf16.mxu0 %v3939
  %4742 = vmatpush1.bf16.msra.mxu0 %v3938
  %4743 = vmatprep.subr.bf16.mxu0 %v3943
  %4744 = vmatpush1.bf16.msra.mxu0 %v3942
  %4745 = vmatprep.subr.bf16.mxu0 %v3947
  %4746 = vmatpush1.bf16.msra.mxu0 %v3946
  %4747 = vmatprep.subr.bf16.mxu0 %v3951
  %4748 = vmatpush1.bf16.msra.mxu0 %v3950
  %4749 = vmatprep.subr.bf16.mxu0 %v3955
  %4750 = vmatpush1.bf16.msra.mxu0 %v3954
  %4751 = vmatprep.subr.bf16.mxu0 %v3959
  %4752 = vmatpush1.bf16.msra.mxu0 %v3958
  %4753 = vmatprep.subr.bf16.mxu0 %v3963
  %4754 = vmatpush1.bf16.msra.mxu0 %v3962
  %4755 = vmatprep.subr.bf16.mxu0 %v3967
  %4756 = vmatpush1.bf16.msra.mxu0 %v3966
  %4757 = vmatprep.subr.bf16.mxu0 %v3971
  %4758 = vmatpush1.bf16.msra.mxu0 %v3970
  %4759 = vmatprep.subr.bf16.mxu0 %v3975
  %4760 = vmatpush1.bf16.msra.mxu0 %v3974
  %4761 = vmatprep.subr.bf16.mxu0 %v3979
  %4762 = vmatpush1.bf16.msra.mxu0 %v3978
  %4763 = vmatprep.mubr.bf16.mxu0 %v2503
  %4764 = vmatmul.mubr.bf16.gmra.mrb[0].mxu0 %v2502
  %v4765 = vpop.f32.mrb[0].mxu0
  %v4766 = vadd.f32 %v4725, %v4765
  %v4767 = vpop.f32.mrb[0].mxu0
  %v4768 = vadd.f32 %v4727, %v4767
  %v4769 = vpop.f32.mrb[0].mxu0
  %v4770 = vpop.f32.mrb[0].mxu0
  %4771 = vdwg.mxu0
  %4772 = vmatprep.subr.bf16.mxu0 %v3983
  %4773 = vmatpush1.bf16.msra.mxu0 %v3982
  %4774 = vmatprep.subr.bf16.mxu0 %v3987
  %4775 = vmatpush1.bf16.msra.mxu0 %v3986
  %4776 = vmatprep.subr.bf16.mxu0 %v3991
  %4777 = vmatpush1.bf16.msra.mxu0 %v3990
  %4778 = vmatprep.subr.bf16.mxu0 %v3995
  %4779 = vmatpush1.bf16.msra.mxu0 %v3994
  %4780 = vmatprep.subr.bf16.mxu0 %v3999
  %4781 = vmatpush1.bf16.msra.mxu0 %v3998
  %4782 = vmatprep.subr.bf16.mxu0 %v4003
  %4783 = vmatpush1.bf16.msra.mxu0 %v4002
  %4784 = vmatprep.subr.bf16.mxu0 %v4007
  %4785 = vmatpush1.bf16.msra.mxu0 %v4006
  %4786 = vmatprep.subr.bf16.mxu0 %v4011
  %4787 = vmatpush1.bf16.msra.mxu0 %v4010
  %4788 = vmatprep.subr.bf16.mxu0 %v4015
  %4789 = vmatpush1.bf16.msra.mxu0 %v4014
  %4790 = vmatprep.subr.bf16.mxu0 %v4019
  %4791 = vmatpush1.bf16.msra.mxu0 %v4018
  %4792 = vmatprep.subr.bf16.mxu0 %v4023
  %4793 = vmatpush1.bf16.msra.mxu0 %v4022
  %4794 = vmatprep.subr.bf16.mxu0 %v4027
  %4795 = vmatpush1.bf16.msra.mxu0 %v4026
  %4796 = vmatprep.subr.bf16.mxu0 %v4031
  %4797 = vmatpush1.bf16.msra.mxu0 %v4030
  %4798 = vmatprep.subr.bf16.mxu0 %v4035
  %4799 = vmatpush1.bf16.msra.mxu0 %v4034
  %4800 = vmatprep.subr.bf16.mxu0 %v4039
  %4801 = vmatpush1.bf16.msra.mxu0 %v4038
  %4802 = vmatprep.subr.bf16.mxu0 %v4043
  %4803 = vmatpush1.bf16.msra.mxu0 %v4042
  %4804 = vmatprep.mubr.bf16.mxu0 %v2505
  %4805 = vmatmul.mubr.bf16.gmra.mrb[0].mxu0 %v2504
  %v4806 = vpop.f32.mrb[0].mxu0
  %v4807 = vadd.f32 %v4766, %v4806
  %v4808 = vpop.f32.mrb[0].mxu0
  %v4809 = vadd.f32 %v4768, %v4808
  %v4810 = vpop.f32.mrb[0].mxu0
  %v4811 = vpop.f32.mrb[0].mxu0
  %4812 = vdwg.mxu0
  %4813 = vmatprep.subr.bf16.mxu0 %v4047
  %4814 = vmatpush1.bf16.msra.mxu0 %v4046
  %4815 = vmatprep.subr.bf16.mxu0 %v4051
  %4816 = vmatpush1.bf16.msra.mxu0 %v4050
  %4817 = vmatprep.subr.bf16.mxu0 %v4055
  %4818 = vmatpush1.bf16.msra.mxu0 %v4054
  %4819 = vmatprep.subr.bf16.mxu0 %v4059
  %4820 = vmatpush1.bf16.msra.mxu0 %v4058
  %4821 = vmatprep.subr.bf16.mxu0 %v4063
  %4822 = vmatpush1.bf16.msra.mxu0 %v4062
  %4823 = vmatprep.subr.bf16.mxu0 %v4067
  %4824 = vmatpush1.bf16.msra.mxu0 %v4066
  %4825 = vmatprep.subr.bf16.mxu0 %v4071
  %4826 = vmatpush1.bf16.msra.mxu0 %v4070
  %4827 = vmatprep.subr.bf16.mxu0 %v4075
  %4828 = vmatpush1.bf16.msra.mxu0 %v4074
  %4829 = vmatprep.subr.bf16.mxu0 %v4079
  %4830 = vmatpush1.bf16.msra.mxu0 %v4078
  %4831 = vmatprep.subr.bf16.mxu0 %v4083
  %4832 = vmatpush1.bf16.msra.mxu0 %v4082
  %4833 = vmatprep.subr.bf16.mxu0 %v4087
  %4834 = vmatpush1.bf16.msra.mxu0 %v4086
  %4835 = vmatprep.subr.bf16.mxu0 %v4091
  %4836 = vmatpush1.bf16.msra.mxu0 %v4090
  %4837 = vmatprep.subr.bf16.mxu0 %v4095
  %4838 = vmatpush1.bf16.msra.mxu0 %v4094
  %4839 = vmatprep.subr.bf16.mxu0 %v4099
  %4840 = vmatpush1.bf16.msra.mxu0 %v4098
  %4841 = vmatprep.subr.bf16.mxu0 %v4103
  %4842 = vmatpush1.bf16.msra.mxu0 %v4102
  %4843 = vmatprep.subr.bf16.mxu0 %v4442
  %4844 = vmatpush1.bf16.msra.mxu0 %v4439
  %4845 = vmatprep.mubr.bf16.mxu0 %v4426
  %4846 = vmatmul.mubr.bf16.gmra.mrb[0].mxu0 %v2506
  %v4847 = vpop.f32.mrb[0].mxu0
  %v4848 = vadd.f32 %v4807, %v4847
  %v4849 = vpop.f32.mrb[0].mxu0
  %v4850 = vadd.f32 %v4809, %v4849
  %v4851 = vpop.f32.mrb[0].mxu0
  %v4852 = vpop.f32.mrb[0].mxu0
  %4853 = vdwg.mxu0
  %v4854 = vpack.c.bf16 %v4643, %v4643
  %v4855 = vpack.c.bf16 %v4645, %v4645
  %v4856 = vpack.c.bf16 %v4848, %v4848
  %v4857 = vpack.c.bf16 %v4850, %v4850
  %4862 = vrot.lane.b32.xlu0 %v4854, 11
  %v4863 = vpop.permute.xlu0 %4862
  %4864 = vrot.lane.b32.xlu0 %v4855, 11
  %v4865 = vpop.permute.xlu0 %4864
  %4866 = vrot.lane.b32.xlu0 %v4856, 11
  %v4867 = vpop.permute.xlu0 %4866
  %4868 = vrot.lane.b32.xlu0 %v4857, 11
  %v4869 = vpop.permute.xlu0 %4868
  %vm4870 = vcmask 89088
  %v4871 = vsel %vm4870, %v4863, %v4865
  %v4872 = vsel %vm4870, %v4865, %v4867
  %v4873 = vsel %vm4870, %v4867, %v4869
  %vm4874 = vcmask 89088
  %v4876 = vsel %vm4874, 0, %v4863
  %vm4877 = vcmask 220160
  %v4879 = vsel %vm4877, %v4873, 0
  %v4882 = vrot.slane %v4876, 4
  %v4883 = vrot.slane %v4871, 4
  %v4884 = vrot.slane %v4872, 4
  %v4885 = vrot.slane %v4879, 4
  %4886 = vrot.lane.b32.xlu0 %v4882, 127
  %v4887 = vpop.permute.xlu0 %4886
  %4888 = vrot.lane.b32.xlu0 %v4883, 127
  %v4889 = vpop.permute.xlu0 %4888
  %4890 = vrot.lane.b32.xlu0 %v4884, 127
  %v4891 = vpop.permute.xlu0 %4890
  %4892 = vrot.lane.b32.xlu0 %v4885, 127
  %v4893 = vpop.permute.xlu0 %4892
  %v4894 = vsel %vm231, %v4887, %v4889
  %v4895 = vsel %vm231, %v4889, %v4891
  %v4896 = vsel %vm231, %v4891, %v4893
  %4897 = vrot.lane.b32.xlu0 %v4876, 126
  %v4898 = vpop.permute.xlu0 %4897
  %4899 = vrot.lane.b32.xlu0 %v4871, 126
  %v4900 = vpop.permute.xlu0 %4899
  %4901 = vrot.lane.b32.xlu0 %v4872, 126
  %v4902 = vpop.permute.xlu0 %4901
  %4903 = vrot.lane.b32.xlu0 %v4879, 126
  %v4904 = vpop.permute.xlu0 %4903
  %v4905 = vsel %vm324, %v4898, %v4900
  %v4906 = vsel %vm324, %v4900, %v4902
  %v4907 = vsel %vm324, %v4902, %v4904
  %4908 = vrot.lane.b32.xlu0 %v4882, 118
  %v4909 = vpop.permute.xlu0 %4908
  %4910 = vrot.lane.b32.xlu0 %v4883, 118
  %v4911 = vpop.permute.xlu0 %4910
  %4912 = vrot.lane.b32.xlu0 %v4884, 118
  %v4913 = vpop.permute.xlu0 %4912
  %4914 = vrot.lane.b32.xlu0 %v4885, 118
  %v4915 = vpop.permute.xlu0 %4914
  %vm4916 = vcmask 965632
  %v4917 = vsel %vm4916, %v4909, %v4911
  %v4918 = vsel %vm4916, %v4911, %v4913
  %v4919 = vsel %vm4916, %v4913, %v4915
  %4920 = vrot.lane.b32.xlu0 %v4876, 117
  %v4921 = vpop.permute.xlu0 %4920
  %4922 = vrot.lane.b32.xlu0 %v4871, 117
  %v4923 = vpop.permute.xlu0 %4922
  %4924 = vrot.lane.b32.xlu0 %v4872, 117
  %v4925 = vpop.permute.xlu0 %4924
  %4926 = vrot.lane.b32.xlu0 %v4879, 117
  %v4927 = vpop.permute.xlu0 %4926
  %vm4928 = vcmask 957440
  %v4929 = vsel %vm4928, %v4921, %v4923
  %v4930 = vsel %vm4928, %v4923, %v4925
  %v4931 = vsel %vm4928, %v4925, %v4927
  %4932 = vrot.lane.b32.xlu0 %v4882, 116
  %v4933 = vpop.permute.xlu0 %4932
  %4934 = vrot.lane.b32.xlu0 %v4883, 116
  %v4935 = vpop.permute.xlu0 %4934
  %4936 = vrot.lane.b32.xlu0 %v4884, 116
  %v4937 = vpop.permute.xlu0 %4936
  %4938 = vrot.lane.b32.xlu0 %v4885, 116
  %v4939 = vpop.permute.xlu0 %4938
  %vm4940 = vcmask 949248
  %v4941 = vsel %vm4940, %v4933, %v4935
  %v4942 = vsel %vm4940, %v4935, %v4937
  %v4943 = vsel %vm4940, %v4937, %v4939
  %4944 = vrot.lane.b32.xlu0 %v4876, 108
  %v4945 = vpop.permute.xlu0 %4944
  %4946 = vrot.lane.b32.xlu0 %v4871, 108
  %v4947 = vpop.permute.xlu0 %4946
  %4948 = vrot.lane.b32.xlu0 %v4872, 108
  %v4949 = vpop.permute.xlu0 %4948
  %4950 = vrot.lane.b32.xlu0 %v4879, 108
  %v4951 = vpop.permute.xlu0 %4950
  %v4952 = vsel %vm483, %v4945, %v4947
  %v4953 = vsel %vm483, %v4947, %v4949
  %v4954 = vsel %vm483, %v4949, %v4951
  %4955 = vrot.lane.b32.xlu0 %v4882, 107
  %v4956 = vpop.permute.xlu0 %4955
  %4957 = vrot.lane.b32.xlu0 %v4883, 107
  %v4958 = vpop.permute.xlu0 %4957
  %4959 = vrot.lane.b32.xlu0 %v4884, 107
  %v4960 = vpop.permute.xlu0 %4959
  %4961 = vrot.lane.b32.xlu0 %v4885, 107
  %v4962 = vpop.permute.xlu0 %4961
  %vm4963 = vcmask 875520
  %v4964 = vsel %vm4963, %v4956, %v4958
  %v4965 = vsel %vm4963, %v4958, %v4960
  %v4966 = vsel %vm4963, %v4960, %v4962
  %4967 = vrot.lane.b32.xlu0 %v4876, 106
  %v4968 = vpop.permute.xlu0 %4967
  %4969 = vrot.lane.b32.xlu0 %v4871, 106
  %v4970 = vpop.permute.xlu0 %4969
  %4971 = vrot.lane.b32.xlu0 %v4872, 106
  %v4972 = vpop.permute.xlu0 %4971
  %4973 = vrot.lane.b32.xlu0 %v4879, 106
  %v4974 = vpop.permute.xlu0 %4973
  %vm4975 = vcmask 867328
  %v4976 = vsel %vm4975, %v4968, %v4970
  %v4977 = vsel %vm4975, %v4970, %v4972
  %v4978 = vsel %vm4975, %v4972, %v4974
  %v4980 = vsel %vm841, %v4876, %v4894
  %v4984 = vsel %vm841, %v4871, %v4895
  %v4988 = vsel %vm841, %v4872, %v4896
  %v4991 = vsel %vm841, %v4879, %v4893
  %v4995 = vsel %vm841, %v4905, %v4917
  %v4999 = vsel %vm841, %v4906, %v4918
  %v5003 = vsel %vm841, %v4907, %v4919
  %v5007 = vsel %vm841, %v4904, %v4915
  %v5011 = vsel %vm841, %v4929, %v4941
  %v5015 = vsel %vm841, %v4930, %v4942
  %v5019 = vsel %vm841, %v4931, %v4943
  %v5023 = vsel %vm841, %v4927, %v4939
  %v5027 = vsel %vm841, %v4952, %v4964
  %v5031 = vsel %vm841, %v4953, %v4965
  %v5035 = vsel %vm841, %v4954, %v4966
  %v5039 = vsel %vm841, %v4951, %v4962
  %v5041 = vld [vmem:[%s9] sm:$0xf]
  %v5042 = vld [vmem:[%s9 + $0x4] sm:$0xf]
  %v5043 = vld [vmem:[%s10] sm:$0xff]
  %v5044 = vld [vmem:[%s10 + $0x8] sm:$0xff]
  %5046 = vset.pattern.permute.xlu0 0
  %5047 = vperm.xlu0 %5046, %v5043
  %v5048 = vpop.permute.xlu0 %5047
  %5051 = vset.pattern.permute.xlu0 0
  %5052 = vperm.xlu0 %5051, %v5044
  %v5053 = vpop.permute.xlu0 %5052
  %v5057 = vunpack.c.l.b16 %v5041
  %v5058 = vunpack.c.l.b16 %v5042
  %v5059 = vpack.c.b16 %v5058, %v5057
  %v5061 = vsel %vm2062, %v5059, 0
  %v5064 = vsel %vm841, %v4976, 0
  %v5067 = vsel %vm841, %v4977, 0
  %v5070 = vsel %vm841, %v4978, 0
  %v5073 = vsel %vm841, %v4974, 0
  %5075 = vmatprep.subr.bf16.mxu0 %v4984
  %5076 = vmatpush1.bf16.msra.mxu0 %v4980
  %5077 = vmatprep.subr.bf16.mxu0 %v4999
  %5078 = vmatpush1.bf16.msra.mxu0 %v4995
  %5079 = vmatprep.subr.bf16.mxu0 %v5015
  %5080 = vmatpush1.bf16.msra.mxu0 %v5011
  %5081 = vmatprep.subr.bf16.mxu0 %v5031
  %5082 = vmatpush1.bf16.msra.mxu0 %v5027
  %5083 = vmatprep.subr.bf16.mxu0 %v5067
  %5084 = vmatpush1.bf16.msra.mxu0 %v5064
  %5085 = vmatprep.subr.bf16.mxu0 0
  %5086 = vmatpush1.bf16.msra.mxu0 0
  %5087 = vmatprep.subr.bf16.mxu0 0
  %5088 = vmatpush1.bf16.msra.mxu0 0
  %5089 = vmatprep.subr.bf16.mxu0 0
  %5090 = vmatpush1.bf16.msra.mxu0 0
  %5091 = vmatprep.subr.bf16.mxu0 0
  %5092 = vmatpush1.bf16.msra.mxu0 0
  %5093 = vmatprep.subr.bf16.mxu0 0
  %5094 = vmatpush1.bf16.msra.mxu0 0
  %5095 = vmatprep.subr.bf16.mxu0 0
  %5096 = vmatpush1.bf16.msra.mxu0 0
  %5097 = vmatprep.subr.bf16.mxu0 0
  %5098 = vmatpush1.bf16.msra.mxu0 0
  %5099 = vmatprep.subr.bf16.mxu0 0
  %5100 = vmatpush1.bf16.msra.mxu0 0
  %5101 = vmatprep.subr.bf16.mxu0 0
  %5102 = vmatpush1.bf16.msra.mxu0 0
  %5103 = vmatprep.subr.bf16.mxu0 0
  %5104 = vmatpush1.bf16.msra.mxu0 0
  %5105 = vmatprep.subr.bf16.mxu0 0
  %5106 = vmatpush1.bf16.msra.mxu0 0
  %5107 = vmatprep.mubr.bf16.mxu0 0
  %5108 = vmatmul.mubr.bf16.gmra.mrb[0].mxu0 %v5061
  %v5109 = vpop.f32.mrb[0].mxu0
  %v5110 = vadd.f32 %v5048, %v5109
  %v5111 = vpop.f32.mrb[0].mxu0
  %v5112 = vadd.f32 %v5048, %v5111
  %v5113 = vpop.f32.mrb[0].mxu0
  %v5114 = vadd.f32 %v5053, %v5113
  %v5115 = vpop.f32.mrb[0].mxu0
  %v5116 = vadd.f32 %v5053, %v5115
  %5117 = vdwg.mxu0
  %5118 = vmatprep.subr.bf16.mxu0 %v4991
  %5119 = vmatpush1.bf16.msra.mxu0 %v4988
  %5120 = vmatprep.subr.bf16.mxu0 %v5007
  %5121 = vmatpush1.bf16.msra.mxu0 %v5003
  %5122 = vmatprep.subr.bf16.mxu0 %v5023
  %5123 = vmatpush1.bf16.msra.mxu0 %v5019
  %5124 = vmatprep.subr.bf16.mxu0 %v5039
  %5125 = vmatpush1.bf16.msra.mxu0 %v5035
  %5126 = vmatprep.subr.bf16.mxu0 %v5073
  %5127 = vmatpush1.bf16.msra.mxu0 %v5070
  %5128 = vmatprep.subr.bf16.mxu0 0
  %5129 = vmatpush1.bf16.msra.mxu0 0
  %5130 = vmatprep.subr.bf16.mxu0 0
  %5131 = vmatpush1.bf16.msra.mxu0 0
  %5132 = vmatprep.subr.bf16.mxu0 0
  %5133 = vmatpush1.bf16.msra.mxu0 0
  %5134 = vmatprep.subr.bf16.mxu0 0
  %5135 = vmatpush1.bf16.msra.mxu0 0
  %5136 = vmatprep.subr.bf16.mxu0 0
  %5137 = vmatpush1.bf16.msra.mxu0 0
  %5138 = vmatprep.subr.bf16.mxu0 0
  %5139 = vmatpush1.bf16.msra.mxu0 0
  %5140 = vmatprep.subr.bf16.mxu0 0
  %5141 = vmatpush1.bf16.msra.mxu0 0
  %5142 = vmatprep.subr.bf16.mxu0 0
  %5143 = vmatpush1.bf16.msra.mxu0 0
  %5144 = vmatprep.subr.bf16.mxu0 0
  %5145 = vmatpush1.bf16.msra.mxu0 0
  %5146 = vmatprep.subr.bf16.mxu0 0
  %5147 = vmatpush1.bf16.msra.mxu0 0
  %5148 = vmatprep.subr.bf16.mxu0 0
  %5149 = vmatpush1.bf16.msra.mxu0 0
  %5150 = vmatprep.mubr.bf16.mxu0 0
  %5151 = vmatmul.mubr.bf16.gmra.mrb[0].mxu0 %v5061
  %v5152 = vpop.f32.mrb[0].mxu0
  %v5153 = vadd.f32 %v5048, %v5152
  %v5154 = vpop.f32.mrb[0].mxu0
  %v5155 = vadd.f32 %v5048, %v5154
  %v5156 = vpop.f32.mrb[0].mxu0
  %v5157 = vadd.f32 %v5053, %v5156
  %v5158 = vpop.f32.mrb[0].mxu0
  %v5159 = vadd.f32 %v5053, %v5158
  %5160 = vdwg.mxu0
  %v5161 = vmax.f32 %v5110, 0.0
  %v5162 = vmax.f32 %v5112, 0.0
  %v5163 = vmax.f32 %v5153, 0.0
  %v5164 = vmax.f32 %v5155, 0.0
  %v5165 = vmax.f32 %v5114, 0.0
  %v5166 = vmax.f32 %v5116, 0.0
  %v5167 = vmax.f32 %v5157, 0.0
  %v5168 = vmax.f32 %v5159, 0.0
  %v5169 = vld [vmem:[%s15] sm:$0xf]
  %v5171 = vlaneseq
  %v5172 = vshrl.u32 %v5171, 7
  %v5173 = vsub.s32 0, %v5172
  %v5174 = vrot.slane %v5169, %v5173
  %v5175 = vlaneseq
  %v5176 = vshrl.u32 %v5175, 7
  %v5177 = vsub.s32 1, %v5176
  %v5178 = vrot.slane %v5169, %v5177
  %v5179 = vlaneseq
  %v5180 = vshrl.u32 %v5179, 7
  %v5181 = vsub.s32 2, %v5180
  %v5182 = vrot.slane %v5169, %v5181
  %v5183 = vlaneseq
  %v5184 = vshrl.u32 %v5183, 7
  %v5185 = vsub.s32 3, %v5184
  %v5186 = vrot.slane %v5169, %v5185
  %v5191 = vmul.f32 %v5161, %v5174
  %v5192 = vmul.f32 %v5162, %v5178
  %v5193 = vmul.f32 %v5163, %v5182
  %v5194 = vmul.f32 %v5164, %v5186
  %v5195 = vmul.f32 %v5165, %v5174
  %v5196 = vmul.f32 %v5166, %v5178
  %v5197 = vmul.f32 %v5167, %v5182
  %v5198 = vmul.f32 %v5168, %v5186
  %v5199 = vpack.c.bf16 %v5195, %v5191
  %v5200 = vpack.c.bf16 %v5196, %v5192
  %v5201 = vpack.c.bf16 %v5197, %v5193
  %v5202 = vpack.c.bf16 %v5198, %v5194
  %v5203 = vld [vmem:[%s13] sm:$0xf]
  %v5204 = vld [vmem:[%s13 + $0x4] sm:$0xf]
  %v5205 = vld [vmem:[%s14] sm:$0xff]
  %v5206 = vld [vmem:[%s14 + $0x8] sm:$0xff]
  %5208 = vset.pattern.permute.xlu0 0
  %5209 = vperm.xlu0 %5208, %v5205
  %v5210 = vpop.permute.xlu0 %5209
  %5213 = vset.pattern.permute.xlu0 0
  %5214 = vperm.xlu0 %5213, %v5206
  %v5215 = vpop.permute.xlu0 %5214
  %v5219 = vunpack.c.l.b16 %v5203
  %v5220 = vunpack.c.l.b16 %v5204
  %v5221 = vpack.c.b16 %v5220, %v5219
  %vm5222 = vcmask 64512
  %v5224 = vsel %vm5222, %v5221, 0
  %v5226 = vsel %vm841, %v4929, 0
  %v5228 = vsel %vm841, %v4930, 0
  %v5230 = vsel %vm841, %v4931, 0
  %v5232 = vsel %vm841, %v4927, 0
  %5234 = vmatprep.subr.bf16.mxu0 %v5228
  %5235 = vmatpush1.bf16.msra.mxu0 %v5226
  %5236 = vmatprep.subr.bf16.mxu0 0
  %5237 = vmatpush1.bf16.msra.mxu0 0
  %5238 = vmatprep.subr.bf16.mxu0 0
  %5239 = vmatpush1.bf16.msra.mxu0 0
  %5240 = vmatprep.subr.bf16.mxu0 0
  %5241 = vmatpush1.bf16.msra.mxu0 0
  %5242 = vmatprep.subr.bf16.mxu0 0
  %5243 = vmatpush1.bf16.msra.mxu0 0
  %5244 = vmatprep.subr.bf16.mxu0 0
  %5245 = vmatpush1.bf16.msra.mxu0 0
  %5246 = vmatprep.subr.bf16.mxu0 0
  %5247 = vmatpush1.bf16.msra.mxu0 0
  %5248 = vmatprep.subr.bf16.mxu0 0
  %5249 = vmatpush1.bf16.msra.mxu0 0
  %5250 = vmatprep.subr.bf16.mxu0 0
  %5251 = vmatpush1.bf16.msra.mxu0 0
  %5252 = vmatprep.subr.bf16.mxu0 0
  %5253 = vmatpush1.bf16.msra.mxu0 0
  %5254 = vmatprep.subr.bf16.mxu0 0
  %5255 = vmatpush1.bf16.msra.mxu0 0
  %5256 = vmatprep.subr.bf16.mxu0 0
  %5257 = vmatpush1.bf16.msra.mxu0 0
  %5258 = vmatprep.subr.bf16.mxu0 0
  %5259 = vmatpush1.bf16.msra.mxu0 0
  %5260 = vmatprep.subr.bf16.mxu0 0
  %5261 = vmatpush1.bf16.msra.mxu0 0
  %5262 = vmatprep.subr.bf16.mxu0 0
  %5263 = vmatpush1.bf16.msra.mxu0 0
  %5264 = vmatprep.subr.bf16.mxu0 0
  %5265 = vmatpush1.bf16.msra.mxu0 0
  %5266 = vmatprep.mubr.bf16.mxu0 0
  %5267 = vmatmul.mubr.bf16.gmra.mrb[0].mxu0 %v5224
  %v5268 = vpop.f32.mrb[0].mxu0
  %v5269 = vadd.f32 %v5210, %v5268
  %v5270 = vpop.f32.mrb[0].mxu0
  %v5271 = vadd.f32 %v5210, %v5270
  %v5272 = vpop.f32.mrb[0].mxu0
  %v5273 = vadd.f32 %v5215, %v5272
  %v5274 = vpop.f32.mrb[0].mxu0
  %v5275 = vadd.f32 %v5215, %v5274
  %5276 = vdwg.mxu0
  %5277 = vmatprep.subr.bf16.mxu0 %v5232
  %5278 = vmatpush1.bf16.msra.mxu0 %v5230
  %5279 = vmatprep.subr.bf16.mxu0 0
  %5280 = vmatpush1.bf16.msra.mxu0 0
  %5281 = vmatprep.subr.bf16.mxu0 0
  %5282 = vmatpush1.bf16.msra.mxu0 0
  %5283 = vmatprep.subr.bf16.mxu0 0
  %5284 = vmatpush1.bf16.msra.mxu0 0
  %5285 = vmatprep.subr.bf16.mxu0 0
  %5286 = vmatpush1.bf16.msra.mxu0 0
  %5287 = vmatprep.subr.bf16.mxu0 0
  %5288 = vmatpush1.bf16.msra.mxu0 0
  %5289 = vmatprep.subr.bf16.mxu0 0
  %5290 = vmatpush1.bf16.msra.mxu0 0
  %5291 = vmatprep.subr.bf16.mxu0 0
  %5292 = vmatpush1.bf16.msra.mxu0 0
  %5293 = vmatprep.subr.bf16.mxu0 0
  %5294 = vmatpush1.bf16.msra.mxu0 0
  %5295 = vmatprep.subr.bf16.mxu0 0
  %5296 = vmatpush1.bf16.msra.mxu0 0
  %5297 = vmatprep.subr.bf16.mxu0 0
  %5298 = vmatpush1.bf16.msra.mxu0 0
  %5299 = vmatprep.subr.bf16.mxu0 0
  %5300 = vmatpush1.bf16.msra.mxu0 0
  %5301 = vmatprep.subr.bf16.mxu0 0
  %5302 = vmatpush1.bf16.msra.mxu0 0
  %5303 = vmatprep.subr.bf16.mxu0 0
  %5304 = vmatpush1.bf16.msra.mxu0 0
  %5305 = vmatprep.subr.bf16.mxu0 0
  %5306 = vmatpush1.bf16.msra.mxu0 0
  %5307 = vmatprep.subr.bf16.mxu0 0
  %5308 = vmatpush1.bf16.msra.mxu0 0
  %5309 = vmatprep.mubr.bf16.mxu0 0
  %5310 = vmatmul.mubr.bf16.gmra.mrb[0].mxu0 %v5224
  %v5311 = vpop.f32.mrb[0].mxu0
  %v5312 = vadd.f32 %v5210, %v5311
  %v5313 = vpop.f32.mrb[0].mxu0
  %v5314 = vadd.f32 %v5210, %v5313
  %v5315 = vpop.f32.mrb[0].mxu0
  %v5316 = vadd.f32 %v5215, %v5315
  %v5317 = vpop.f32.mrb[0].mxu0
  %v5318 = vadd.f32 %v5215, %v5317
  %5319 = vdwg.mxu0
  %5324 = vrot.lane.b32.xlu0 %v5199, 11
  %v5325 = vpop.permute.xlu0 %5324
  %5326 = vrot.lane.b32.xlu0 %v5200, 11
  %v5327 = vpop.permute.xlu0 %5326
  %5328 = vrot.lane.b32.xlu0 %v5201, 11
  %v5329 = vpop.permute.xlu0 %5328
  %5330 = vrot.lane.b32.xlu0 %v5202, 11
  %v5331 = vpop.permute.xlu0 %5330
  %v5332 = vsel %vm4870, %v5325, %v5327
  %v5333 = vsel %vm4870, %v5327, %v5329
  %v5334 = vsel %vm4870, %v5329, %v5331
  %v5338 = vsel %vm4874, 0, %v5325
  %v5341 = vsel %vm4877, %v5334, 0
  %5345 = vrot.lane.b32.xlu0 %v5338, 127
  %v5346 = vpop.permute.xlu0 %5345
  %5347 = vrot.lane.b32.xlu0 %v5332, 127
  %v5348 = vpop.permute.xlu0 %5347
  %5349 = vrot.lane.b32.xlu0 %v5333, 127
  %v5350 = vpop.permute.xlu0 %5349
  %5351 = vrot.lane.b32.xlu0 %v5341, 127
  %v5352 = vpop.permute.xlu0 %5351
  %v5353 = vsel %vm231, %v5346, %v5348
  %v5354 = vsel %vm231, %v5348, %v5350
  %v5355 = vsel %vm231, %v5350, %v5352
  %5360 = vrot.lane.b32.xlu0 %v5338, 126
  %v5361 = vpop.permute.xlu0 %5360
  %5362 = vrot.lane.b32.xlu0 %v5332, 126
  %v5363 = vpop.permute.xlu0 %5362
  %5364 = vrot.lane.b32.xlu0 %v5333, 126
  %v5365 = vpop.permute.xlu0 %5364
  %5366 = vrot.lane.b32.xlu0 %v5341, 126
  %v5367 = vpop.permute.xlu0 %5366
  %v5368 = vsel %vm324, %v5361, %v5363
  %v5369 = vsel %vm324, %v5363, %v5365
  %v5370 = vsel %vm324, %v5365, %v5367
  %5375 = vrot.lane.b32.xlu0 %v5338, 118
  %v5376 = vpop.permute.xlu0 %5375
  %5377 = vrot.lane.b32.xlu0 %v5332, 118
  %v5378 = vpop.permute.xlu0 %5377
  %5379 = vrot.lane.b32.xlu0 %v5333, 118
  %v5380 = vpop.permute.xlu0 %5379
  %5381 = vrot.lane.b32.xlu0 %v5341, 118
  %v5382 = vpop.permute.xlu0 %5381
  %v5383 = vsel %vm4916, %v5376, %v5378
  %v5384 = vsel %vm4916, %v5378, %v5380
  %v5385 = vsel %vm4916, %v5380, %v5382
  %5390 = vrot.lane.b32.xlu0 %v5338, 117
  %v5391 = vpop.permute.xlu0 %5390
  %5392 = vrot.lane.b32.xlu0 %v5332, 117
  %v5393 = vpop.permute.xlu0 %5392
  %5394 = vrot.lane.b32.xlu0 %v5333, 117
  %v5395 = vpop.permute.xlu0 %5394
  %5396 = vrot.lane.b32.xlu0 %v5341, 117
  %v5397 = vpop.permute.xlu0 %5396
  %v5398 = vsel %vm4928, %v5391, %v5393
  %v5399 = vsel %vm4928, %v5393, %v5395
  %v5400 = vsel %vm4928, %v5395, %v5397
  %5405 = vrot.lane.b32.xlu0 %v5338, 116
  %v5406 = vpop.permute.xlu0 %5405
  %5407 = vrot.lane.b32.xlu0 %v5332, 116
  %v5408 = vpop.permute.xlu0 %5407
  %5409 = vrot.lane.b32.xlu0 %v5333, 116
  %v5410 = vpop.permute.xlu0 %5409
  %5411 = vrot.lane.b32.xlu0 %v5341, 116
  %v5412 = vpop.permute.xlu0 %5411
  %v5413 = vsel %vm4940, %v5406, %v5408
  %v5414 = vsel %vm4940, %v5408, %v5410
  %v5415 = vsel %vm4940, %v5410, %v5412
  %5420 = vrot.lane.b32.xlu0 %v5338, 108
  %v5421 = vpop.permute.xlu0 %5420
  %5422 = vrot.lane.b32.xlu0 %v5332, 108
  %v5423 = vpop.permute.xlu0 %5422
  %5424 = vrot.lane.b32.xlu0 %v5333, 108
  %v5425 = vpop.permute.xlu0 %5424
  %5426 = vrot.lane.b32.xlu0 %v5341, 108
  %v5427 = vpop.permute.xlu0 %5426
  %v5428 = vsel %vm483, %v5421, %v5423
  %v5429 = vsel %vm483, %v5423, %v5425
  %v5430 = vsel %vm483, %v5425, %v5427
  %5435 = vrot.lane.b32.xlu0 %v5338, 107
  %v5436 = vpop.permute.xlu0 %5435
  %5437 = vrot.lane.b32.xlu0 %v5332, 107
  %v5438 = vpop.permute.xlu0 %5437
  %5439 = vrot.lane.b32.xlu0 %v5333, 107
  %v5440 = vpop.permute.xlu0 %5439
  %5441 = vrot.lane.b32.xlu0 %v5341, 107
  %v5442 = vpop.permute.xlu0 %5441
  %v5443 = vsel %vm4963, %v5436, %v5438
  %v5444 = vsel %vm4963, %v5438, %v5440
  %v5445 = vsel %vm4963, %v5440, %v5442
  %5450 = vrot.lane.b32.xlu0 %v5338, 106
  %v5451 = vpop.permute.xlu0 %5450
  %5452 = vrot.lane.b32.xlu0 %v5332, 106
  %v5453 = vpop.permute.xlu0 %5452
  %5454 = vrot.lane.b32.xlu0 %v5333, 106
  %v5455 = vpop.permute.xlu0 %5454
  %5456 = vrot.lane.b32.xlu0 %v5341, 106
  %v5457 = vpop.permute.xlu0 %5456
  %v5458 = vsel %vm4975, %v5451, %v5453
  %v5459 = vsel %vm4975, %v5453, %v5455
  %v5460 = vsel %vm4975, %v5455, %v5457
  %v5465 = vld [vmem:[%s11] sm:$0xff]
  %v5466 = vld [vmem:[%s11 + $0x8] sm:$0xff]
  %v5467 = vld [vmem:[%s12] sm:$0xff]
  %v5468 = vld [vmem:[%s12 + $0x8] sm:$0xff]
  %5470 = vset.pattern.permute.xlu0 0
  %5471 = vperm.xlu0 %5470, %v5467
  %v5472 = vpop.permute.xlu0 %5471
  %5475 = vset.pattern.permute.xlu0 0
  %5476 = vperm.xlu0 %5475, %v5468
  %v5477 = vpop.permute.xlu0 %5476
  %v5481 = vunpack.c.l.b16 %v5465
  %v5482 = vunpack.c.h.b16 %v5465
  %v5483 = vunpack.c.l.b16 %v5466
  %v5484 = vunpack.c.h.b16 %v5466
  %v5485 = vpack.c.b16 %v5483, %v5481
  %v5486 = vpack.c.b16 %v5484, %v5482
  %vm5488 = vcmask 130048
  %v5490 = vsel %vm5488, %v5486, 0
  %5492 = vmatprep.subr.bf16.mxu0 %v5332
  %5493 = vmatpush1.bf16.msra.mxu0 %v5338
  %5494 = vmatprep.subr.bf16.mxu0 %v5354
  %5495 = vmatpush1.bf16.msra.mxu0 %v5353
  %5496 = vmatprep.subr.bf16.mxu0 %v5369
  %5497 = vmatpush1.bf16.msra.mxu0 %v5368
  %5498 = vmatprep.subr.bf16.mxu0 %v5384
  %5499 = vmatpush1.bf16.msra.mxu0 %v5383
  %5500 = vmatprep.subr.bf16.mxu0 %v5399
  %5501 = vmatpush1.bf16.msra.mxu0 %v5398
  %5502 = vmatprep.subr.bf16.mxu0 %v5414
  %5503 = vmatpush1.bf16.msra.mxu0 %v5413
  %5504 = vmatprep.subr.bf16.mxu0 %v5429
  %5505 = vmatpush1.bf16.msra.mxu0 %v5428
  %5506 = vmatprep.subr.bf16.mxu0 %v5444
  %5507 = vmatpush1.bf16.msra.mxu0 %v5443
  %5508 = vmatprep.subr.bf16.mxu0 %v5459
  %5509 = vmatpush1.bf16.msra.mxu0 %v5458
  %5510 = vmatprep.subr.bf16.mxu0 0
  %5511 = vmatpush1.bf16.msra.mxu0 0
  %5512 = vmatprep.subr.bf16.mxu0 0
  %5513 = vmatpush1.bf16.msra.mxu0 0
  %5514 = vmatprep.subr.bf16.mxu0 0
  %5515 = vmatpush1.bf16.msra.mxu0 0
  %5516 = vmatprep.subr.bf16.mxu0 0
  %5517 = vmatpush1.bf16.msra.mxu0 0
  %5518 = vmatprep.subr.bf16.mxu0 0
  %5519 = vmatpush1.bf16.msra.mxu0 0
  %5520 = vmatprep.subr.bf16.mxu0 0
  %5521 = vmatpush1.bf16.msra.mxu0 0
  %5522 = vmatprep.subr.bf16.mxu0 0
  %5523 = vmatpush1.bf16.msra.mxu0 0
  %5524 = vmatprep.mubr.bf16.mxu0 %v5490
  %5525 = vmatmul.mubr.bf16.gmra.mrb[0].mxu0 %v5485
  %v5526 = vpop.f32.mrb[0].mxu0
  %v5527 = vadd.f32 %v5472, %v5526
  %v5528 = vpop.f32.mrb[0].mxu0
  %v5529 = vadd.f32 %v5472, %v5528
  %v5530 = vpop.f32.mrb[0].mxu0
  %v5531 = vadd.f32 %v5477, %v5530
  %v5532 = vpop.f32.mrb[0].mxu0
  %v5533 = vadd.f32 %v5477, %v5532
  %5534 = vdwg.mxu0
  %5535 = vmatprep.subr.bf16.mxu0 %v5341
  %5536 = vmatpush1.bf16.msra.mxu0 %v5333
  %5537 = vmatprep.subr.bf16.mxu0 %v5352
  %5538 = vmatpush1.bf16.msra.mxu0 %v5355
  %5539 = vmatprep.subr.bf16.mxu0 %v5367
  %5540 = vmatpush1.bf16.msra.mxu0 %v5370
  %5541 = vmatprep.subr.bf16.mxu0 %v5382
  %5542 = vmatpush1.bf16.msra.mxu0 %v5385
  %5543 = vmatprep.subr.bf16.mxu0 %v5397
  %5544 = vmatpush1.bf16.msra.mxu0 %v5400
  %5545 = vmatprep.subr.bf16.mxu0 %v5412
  %5546 = vmatpush1.bf16.msra.mxu0 %v5415
  %5547 = vmatprep.subr.bf16.mxu0 %v5427
  %5548 = vmatpush1.bf16.msra.mxu0 %v5430
  %5549 = vmatprep.subr.bf16.mxu0 %v5442
  %5550 = vmatpush1.bf16.msra.mxu0 %v5445
  %5551 = vmatprep.subr.bf16.mxu0 %v5457
  %5552 = vmatpush1.bf16.msra.mxu0 %v5460
  %5553 = vmatprep.subr.bf16.mxu0 0
  %5554 = vmatpush1.bf16.msra.mxu0 0
  %5555 = vmatprep.subr.bf16.mxu0 0
  %5556 = vmatpush1.bf16.msra.mxu0 0
  %5557 = vmatprep.subr.bf16.mxu0 0
  %5558 = vmatpush1.bf16.msra.mxu0 0
  %5559 = vmatprep.subr.bf16.mxu0 0
  %5560 = vmatpush1.bf16.msra.mxu0 0
  %5561 = vmatprep.subr.bf16.mxu0 0
  %5562 = vmatpush1.bf16.msra.mxu0 0
  %5563 = vmatprep.subr.bf16.mxu0 0
  %5564 = vmatpush1.bf16.msra.mxu0 0
  %5565 = vmatprep.subr.bf16.mxu0 0
  %5566 = vmatpush1.bf16.msra.mxu0 0
  %5567 = vmatprep.mubr.bf16.mxu0 %v5490
  %5568 = vmatmul.mubr.bf16.gmra.mrb[0].mxu0 %v5485
  %v5569 = vpop.f32.mrb[0].mxu0
  %v5570 = vadd.f32 %v5472, %v5569
  %v5571 = vpop.f32.mrb[0].mxu0
  %v5572 = vadd.f32 %v5472, %v5571
  %v5573 = vpop.f32.mrb[0].mxu0
  %v5574 = vadd.f32 %v5477, %v5573
  %v5575 = vpop.f32.mrb[0].mxu0
  %v5576 = vadd.f32 %v5477, %v5575
  %5577 = vdwg.mxu0
  %v5578 = vadd.f32 %v5527, %v5269
  %v5579 = vadd.f32 %v5529, %v5271
  %v5580 = vadd.f32 %v5570, %v5312
  %v5581 = vadd.f32 %v5572, %v5314
  %v5582 = vadd.f32 %v5531, %v5273
  %v5583 = vadd.f32 %v5533, %v5275
  %v5584 = vadd.f32 %v5574, %v5316
  %v5585 = vadd.f32 %v5576, %v5318
  %v5586 = vmax.f32 %v5578, 0.0
  %v5587 = vmax.f32 %v5579, 0.0
  %v5588 = vmax.f32 %v5580, 0.0
  %v5589 = vmax.f32 %v5581, 0.0
  %v5590 = vmax.f32 %v5582, 0.0
  %v5591 = vmax.f32 %v5583, 0.0
  %v5592 = vmax.f32 %v5584, 0.0
  %v5593 = vmax.f32 %v5585, 0.0
  %5602 = vrot.lane.b32.xlu0 %v5586, 127
  %v5603 = vpop.permute.xlu0 %5602
  %5604 = vrot.lane.b32.xlu0 %v5587, 127
  %v5605 = vpop.permute.xlu0 %5604
  %5606 = vrot.lane.b32.xlu0 %v5588, 127
  %v5607 = vpop.permute.xlu0 %5606
  %5608 = vrot.lane.b32.xlu0 %v5589, 127
  %v5609 = vpop.permute.xlu0 %5608
  %5610 = vrot.lane.b32.xlu0 %v5590, 127
  %v5611 = vpop.permute.xlu0 %5610
  %5612 = vrot.lane.b32.xlu0 %v5591, 127
  %v5613 = vpop.permute.xlu0 %5612
  %5614 = vrot.lane.b32.xlu0 %v5592, 127
  %v5615 = vpop.permute.xlu0 %5614
  %5616 = vrot.lane.b32.xlu0 %v5593, 127
  %v5617 = vpop.permute.xlu0 %5616
  %v5618 = vsel %vm2396, %v5603, %v5605
  %v5619 = vsel %vm2396, %v5605, %v5607
  %v5620 = vsel %vm2396, %v5607, %v5609
  %v5621 = vsel %vm2396, %v5611, %v5613
  %v5622 = vsel %vm2396, %v5613, %v5615
  %v5623 = vsel %vm2396, %v5615, %v5617
  %v5632 = vmax.f32 %v5586, %v5618
  %v5633 = vmax.f32 %v5587, %v5619
  %v5634 = vmax.f32 %v5588, %v5620
  %v5635 = vmax.f32 %v5589, %v5609
  %v5636 = vmax.f32 %v5590, %v5621
  %v5637 = vmax.f32 %v5591, %v5622
  %v5638 = vmax.f32 %v5592, %v5623
  %v5639 = vmax.f32 %v5593, %v5617
  %5648 = vrot.lane.b32.xlu0 %v5632, 118
  %v5649 = vpop.permute.xlu0 %5648
  %5650 = vrot.lane.b32.xlu0 %v5633, 118
  %v5651 = vpop.permute.xlu0 %5650
  %5652 = vrot.lane.b32.xlu0 %v5634, 118
  %v5653 = vpop.permute.xlu0 %5652
  %5654 = vrot.lane.b32.xlu0 %v5635, 118
  %v5655 = vpop.permute.xlu0 %5654
  %5656 = vrot.lane.b32.xlu0 %v5636, 118
  %v5657 = vpop.permute.xlu0 %5656
  %5658 = vrot.lane.b32.xlu0 %v5637, 118
  %v5659 = vpop.permute.xlu0 %5658
  %5660 = vrot.lane.b32.xlu0 %v5638, 118
  %v5661 = vpop.permute.xlu0 %5660
  %5662 = vrot.lane.b32.xlu0 %v5639, 118
  %v5663 = vpop.permute.xlu0 %5662
  %vm5664 = vcmask 965632
  %v5665 = vsel %vm5664, %v5649, %v5651
  %v5666 = vsel %vm5664, %v5651, %v5653
  %v5667 = vsel %vm5664, %v5653, %v5655
  %v5668 = vsel %vm5664, %v5657, %v5659
  %v5669 = vsel %vm5664, %v5659, %v5661
  %v5670 = vsel %vm5664, %v5661, %v5663
  %v5679 = vmax.f32 %v5632, %v5665
  %v5680 = vmax.f32 %v5633, %v5666
  %v5681 = vmax.f32 %v5634, %v5667
  %v5682 = vmax.f32 %v5635, %v5655
  %v5683 = vmax.f32 %v5636, %v5668
  %v5684 = vmax.f32 %v5637, %v5669
  %v5685 = vmax.f32 %v5638, %v5670
  %v5686 = vmax.f32 %v5639, %v5663
  %v5687 = vpack.c.bf16 %v5683, %v5679
  %v5688 = vpack.c.bf16 %v5684, %v5680
  %v5689 = vpack.c.bf16 %v5685, %v5681
  %v5690 = vpack.c.bf16 %v5686, %v5682
  %v5691 = vld [vmem:[%s16] sm:$0xff]
  %v5692 = vld [vmem:[%s16 + $0x8] sm:$0xff]
  %v5693 = vld [vmem:[%s16 + $0x10] sm:$0xff]
  %v5694 = vld [vmem:[%s16 + $0x18] sm:$0xff]
  %v5695 = vld [vmem:[%s16 + $0x20] sm:$0xff]
  %v5696 = vld [vmem:[%s16 + $0x28] sm:$0xff]
  %v5697 = vld [vmem:[%s16 + $0x30] sm:$0xff]
  %v5698 = vld [vmem:[%s16 + $0x38] sm:$0xff]
  %v5699 = vld [vmem:[%s16 + $0x40] sm:$0xff]
  %v5700 = vld [vmem:[%s16 + $0x48] sm:$0xff]
  %v5701 = vld [vmem:[%s16 + $0x50] sm:$0xff]
  %v5702 = vld [vmem:[%s16 + $0x58] sm:$0xff]
  %v5703 = vld [vmem:[%s16 + $0x60] sm:$0xff]
  %v5704 = vld [vmem:[%s16 + $0x68] sm:$0xff]
  %v5705 = vld [vmem:[%s16 + $0x70] sm:$0xff]
  %v5706 = vld [vmem:[%s16 + $0x78] sm:$0xff]
  %v5707 = vld [vmem:[%s16 + $0x80] sm:$0xff]
  %v5708 = vld [vmem:[%s16 + $0x88] sm:$0xff]
  %v5709 = vld [vmem:[%s16 + $0x90] sm:$0xff]
  %v5710 = vld [vmem:[%s16 + $0x98] sm:$0xff]
  %v5711 = vld [vmem:[%s16 + $0xa0] sm:$0xff]
  %v5712 = vld [vmem:[%s16 + $0xa8] sm:$0xff]
  %v5713 = vld [vmem:[%s16 + $0xb0] sm:$0xff]
  %v5714 = vld [vmem:[%s16 + $0xb8] sm:$0xff]
  %v5715 = vld [vmem:[%s16 + $0xc0] sm:$0xff]
  %v5716 = vld [vmem:[%s16 + $0xc8] sm:$0xff]
  %v5717 = vld [vmem:[%s16 + $0xd0] sm:$0xff]
  %v5718 = vld [vmem:[%s16 + $0xd8] sm:$0xff]
  %v5719 = vld [vmem:[%s16 + $0xe0] sm:$0xff]
  %v5720 = vld [vmem:[%s16 + $0xe8] sm:$0xff]
  %v5721 = vld [vmem:[%s16 + $0xf0] sm:$0xff]
  %v5722 = vld [vmem:[%s16 + $0xf8] sm:$0xff]
  %v5723 = vld [vmem:[%s16 + $0x100] sm:$0xff]
  %v5724 = vld [vmem:[%s16 + $0x108] sm:$0xff]
  %v5725 = vld [vmem:[%s16 + $0x110] sm:$0xff]
  %v5726 = vld [vmem:[%s16 + $0x118] sm:$0xff]
  %v5727 = vld [vmem:[%s16 + $0x120] sm:$0xff]
  %v5728 = vld [vmem:[%s16 + $0x128] sm:$0xff]
  %v5729 = vld [vmem:[%s16 + $0x130] sm:$0xff]
  %v5730 = vld [vmem:[%s16 + $0x138] sm:$0xff]
  %v5731 = vld [vmem:[%s16 + $0x140] sm:$0xff]
  %v5732 = vld [vmem:[%s16 + $0x148] sm:$0xff]
  %v5733 = vld [vmem:[%s16 + $0x150] sm:$0xff]
  %v5734 = vld [vmem:[%s16 + $0x158] sm:$0xff]
  %v5735 = vld [vmem:[%s16 + $0x160] sm:$0xff]
  %v5736 = vld [vmem:[%s16 + $0x168] sm:$0xff]
  %v5737 = vld [vmem:[%s16 + $0x170] sm:$0xff]
  %v5738 = vld [vmem:[%s16 + $0x178] sm:$0xff]
  %v5739 = vld [vmem:[%s16 + $0x180] sm:$0x77]
  %v5789 = vunpack.c.l.b16 %v5691
  %v5790 = vunpack.c.h.b16 %v5691
  %v5791 = vunpack.c.l.b16 %v5692
  %v5792 = vunpack.c.h.b16 %v5692
  %v5793 = vunpack.c.l.b16 %v5693
  %v5794 = vunpack.c.h.b16 %v5693
  %v5795 = vunpack.c.l.b16 %v5694
  %v5796 = vunpack.c.h.b16 %v5694
  %v5797 = vunpack.c.l.b16 %v5695
  %v5798 = vunpack.c.h.b16 %v5695
  %v5799 = vunpack.c.l.b16 %v5696
  %v5800 = vunpack.c.h.b16 %v5696
  %v5801 = vunpack.c.l.b16 %v5697
  %v5802 = vunpack.c.h.b16 %v5697
  %v5803 = vunpack.c.l.b16 %v5698
  %v5804 = vunpack.c.h.b16 %v5698
  %v5805 = vunpack.c.l.b16 %v5699
  %v5806 = vunpack.c.h.b16 %v5699
  %v5807 = vunpack.c.l.b16 %v5700
  %v5808 = vunpack.c.h.b16 %v5700
  %v5809 = vunpack.c.l.b16 %v5701
  %v5810 = vunpack.c.h.b16 %v5701
  %v5811 = vunpack.c.l.b16 %v5702
  %v5812 = vunpack.c.h.b16 %v5702
  %v5813 = vunpack.c.l.b16 %v5703
  %v5814 = vunpack.c.h.b16 %v5703
  %v5815 = vunpack.c.l.b16 %v5704
  %v5816 = vunpack.c.h.b16 %v5704
  %v5817 = vunpack.c.l.b16 %v5705
  %v5818 = vunpack.c.h.b16 %v5705
  %v5819 = vunpack.c.l.b16 %v5706
  %v5820 = vunpack.c.h.b16 %v5706
  %v5821 = vunpack.c.l.b16 %v5707
  %v5822 = vunpack.c.h.b16 %v5707
  %v5823 = vunpack.c.l.b16 %v5708
  %v5824 = vunpack.c.h.b16 %v5708
  %v5825 = vunpack.c.l.b16 %v5709
  %v5826 = vunpack.c.h.b16 %v5709
  %v5827 = vunpack.c.l.b16 %v5710
  %v5828 = vunpack.c.h.b16 %v5710
  %v5829 = vunpack.c.l.b16 %v5711
  %v5830 = vunpack.c.h.b16 %v5711
  %v5831 = vunpack.c.l.b16 %v5712
  %v5832 = vunpack.c.h.b16 %v5712
  %v5833 = vunpack.c.l.b16 %v5713
  %v5834 = vunpack.c.h.b16 %v5713
  %v5835 = vunpack.c.l.b16 %v5714
  %v5836 = vunpack.c.h.b16 %v5714
  %v5837 = vunpack.c.l.b16 %v5715
  %v5838 = vunpack.c.h.b16 %v5715
  %v5839 = vunpack.c.l.b16 %v5716
  %v5840 = vunpack.c.h.b16 %v5716
  %v5841 = vunpack.c.l.b16 %v5717
  %v5842 = vunpack.c.h.b16 %v5717
  %v5843 = vunpack.c.l.b16 %v5718
  %v5844 = vunpack.c.h.b16 %v5718
  %v5845 = vunpack.c.l.b16 %v5719
  %v5846 = vunpack.c.h.b16 %v5719
  %v5847 = vunpack.c.l.b16 %v5720
  %v5848 = vunpack.c.h.b16 %v5720
  %v5849 = vunpack.c.l.b16 %v5721
  %v5850 = vunpack.c.h.b16 %v5721
  %v5851 = vunpack.c.l.b16 %v5722
  %v5852 = vunpack.c.h.b16 %v5722
  %v5853 = vunpack.c.l.b16 %v5723
  %v5854 = vunpack.c.h.b16 %v5723
  %v5855 = vunpack.c.l.b16 %v5724
  %v5856 = vunpack.c.h.b16 %v5724
  %v5857 = vunpack.c.l.b16 %v5725
  %v5858 = vunpack.c.h.b16 %v5725
  %v5859 = vunpack.c.l.b16 %v5726
  %v5860 = vunpack.c.h.b16 %v5726
  %v5861 = vunpack.c.l.b16 %v5727
  %v5862 = vunpack.c.h.b16 %v5727
  %v5863 = vunpack.c.l.b16 %v5728
  %v5864 = vunpack.c.h.b16 %v5728
  %v5865 = vunpack.c.l.b16 %v5729
  %v5866 = vunpack.c.h.b16 %v5729
  %v5867 = vunpack.c.l.b16 %v5730
  %v5868 = vunpack.c.h.b16 %v5730
  %v5869 = vunpack.c.l.b16 %v5731
  %v5870 = vunpack.c.h.b16 %v5731
  %v5871 = vunpack.c.l.b16 %v5732
  %v5872 = vunpack.c.h.b16 %v5732
  %v5873 = vunpack.c.l.b16 %v5733
  %v5874 = vunpack.c.h.b16 %v5733
  %v5875 = vunpack.c.l.b16 %v5734
  %v5876 = vunpack.c.h.b16 %v5734
  %v5877 = vunpack.c.l.b16 %v5735
  %v5878 = vunpack.c.h.b16 %v5735
  %v5879 = vunpack.c.l.b16 %v5736
  %v5880 = vunpack.c.h.b16 %v5736
  %v5881 = vunpack.c.l.b16 %v5737
  %v5882 = vunpack.c.h.b16 %v5737
  %v5883 = vunpack.c.l.b16 %v5738
  %v5884 = vunpack.c.h.b16 %v5738
  %v5885 = vunpack.c.l.b16 %v5739
  %v5886 = vunpack.c.h.b16 %v5739
  %v5887 = vpack.c.b16 %v5791, %v5789
  %v5888 = vpack.c.b16 %v5792, %v5790
  %v5889 = vpack.c.b16 %v5795, %v5793
  %v5890 = vpack.c.b16 %v5796, %v5794
  %v5891 = vpack.c.b16 %v5799, %v5797
  %v5892 = vpack.c.b16 %v5800, %v5798
  %v5893 = vpack.c.b16 %v5803, %v5801
  %v5894 = vpack.c.b16 %v5804, %v5802
  %v5895 = vpack.c.b16 %v5807, %v5805
  %v5896 = vpack.c.b16 %v5808, %v5806
  %v5897 = vpack.c.b16 %v5811, %v5809
  %v5898 = vpack.c.b16 %v5812, %v5810
  %v5899 = vpack.c.b16 %v5815, %v5813
  %v5900 = vpack.c.b16 %v5816, %v5814
  %v5901 = vpack.c.b16 %v5819, %v5817
  %v5902 = vpack.c.b16 %v5820, %v5818
  %v5903 = vpack.c.b16 %v5823, %v5821
  %v5904 = vpack.c.b16 %v5824, %v5822
  %v5905 = vpack.c.b16 %v5827, %v5825
  %v5906 = vpack.c.b16 %v5828, %v5826
  %v5907 = vpack.c.b16 %v5831, %v5829
  %v5908 = vpack.c.b16 %v5832, %v5830
  %v5909 = vpack.c.b16 %v5835, %v5833
  %v5910 = vpack.c.b16 %v5836, %v5834
  %v5911 = vpack.c.b16 %v5839, %v5837
  %v5912 = vpack.c.b16 %v5840, %v5838
  %v5913 = vpack.c.b16 %v5843, %v5841
  %v5914 = vpack.c.b16 %v5844, %v5842
  %v5915 = vpack.c.b16 %v5847, %v5845
  %v5916 = vpack.c.b16 %v5848, %v5846
  %v5917 = vpack.c.b16 %v5851, %v5849
  %v5918 = vpack.c.b16 %v5852, %v5850
  %v5919 = vpack.c.b16 %v5855, %v5853
  %v5920 = vpack.c.b16 %v5856, %v5854
  %v5921 = vpack.c.b16 %v5859, %v5857
  %v5922 = vpack.c.b16 %v5860, %v5858
  %v5923 = vpack.c.b16 %v5863, %v5861
  %v5924 = vpack.c.b16 %v5864, %v5862
  %v5925 = vpack.c.b16 %v5867, %v5865
  %v5926 = vpack.c.b16 %v5868, %v5866
  %v5927 = vpack.c.b16 %v5871, %v5869
  %v5928 = vpack.c.b16 %v5872, %v5870
  %v5929 = vpack.c.b16 %v5875, %v5873
  %v5930 = vpack.c.b16 %v5876, %v5874
  %v5931 = vpack.c.b16 %v5879, %v5877
  %v5932 = vpack.c.b16 %v5880, %v5878
  %v5933 = vpack.c.b16 %v5883, %v5881
  %v5934 = vpack.c.b16 %v5884, %v5882
  %v5935 = vpack.c.b16 %v5885, %v5885
  %v5936 = vpack.c.b16 %v5886, %v5886
  %vm5985 = vcmask 39936
  %v5987 = vsel %vm5985, %v5690, 0
  %v5989 = vsel %vm723, 4294967295, 65535
  %v5990 = vsel %vm782, %v5989, 0
  %v5992 = vand.u32 %v5935, %v5990
  %v5995 = vand.u32 %v5936, %v5990
  %5997 = vmatprep.subr.bf16.mxu0 %v5888
  %5998 = vmatpush1.bf16.msra.mxu0 %v5887
  %5999 = vmatprep.subr.bf16.mxu0 %v5890
  %6000 = vmatpush1.bf16.msra.mxu0 %v5889
  %6001 = vmatprep.subr.bf16.mxu0 %v5892
  %6002 = vmatpush1.bf16.msra.mxu0 %v5891
  %6003 = vmatprep.subr.bf16.mxu0 %v5894
  %6004 = vmatpush1.bf16.msra.mxu0 %v5893
  %6005 = vmatprep.subr.bf16.mxu0 %v5896
  %6006 = vmatpush1.bf16.msra.mxu0 %v5895
  %6007 = vmatprep.subr.bf16.mxu0 %v5898
  %6008 = vmatpush1.bf16.msra.mxu0 %v5897
  %6009 = vmatprep.subr.bf16.mxu0 %v5900
  %6010 = vmatpush1.bf16.msra.mxu0 %v5899
  %6011 = vmatprep.subr.bf16.mxu0 %v5902
  %6012 = vmatpush1.bf16.msra.mxu0 %v5901
  %6013 = vmatprep.subr.bf16.mxu0 %v5904
  %6014 = vmatpush1.bf16.msra.mxu0 %v5903
  %6015 = vmatprep.subr.bf16.mxu0 %v5906
  %6016 = vmatpush1.bf16.msra.mxu0 %v5905
  %6017 = vmatprep.subr.bf16.mxu0 %v5908
  %6018 = vmatpush1.bf16.msra.mxu0 %v5907
  %6019 = vmatprep.subr.bf16.mxu0 %v5910
  %6020 = vmatpush1.bf16.msra.mxu0 %v5909
  %6021 = vmatprep.subr.bf16.mxu0 %v5912
  %6022 = vmatpush1.bf16.msra.mxu0 %v5911
  %6023 = vmatprep.subr.bf16.mxu0 %v5914
  %6024 = vmatpush1.bf16.msra.mxu0 %v5913
  %6025 = vmatprep.subr.bf16.mxu0 %v5916
  %6026 = vmatpush1.bf16.msra.mxu0 %v5915
  %6027 = vmatprep.subr.bf16.mxu0 %v5918
  %6028 = vmatpush1.bf16.msra.mxu0 %v5917
  %6029 = vmatprep.mubr.bf16.mxu0 %v5688
  %6030 = vmatmul.mubr.bf16.gmra.mrb[0].mxu0 %v5687
  %v6031 = vpop.f32.mrb[0].mxu0
  %v6032 = vadd.f32 0.0, %v6031
  %v6033 = vpop.f32.mrb[0].mxu0
  %v6034 = vadd.f32 0.0, %v6033
  %v6035 = vpop.f32.mrb[0].mxu0
  %v6036 = vadd.f32 0.0, %v6035
  %v6037 = vpop.f32.mrb[0].mxu0
  %v6038 = vadd.f32 0.0, %v6037
  %6039 = vdwg.mxu0
  %6040 = vmatprep.subr.bf16.mxu0 %v5920
  %6041 = vmatpush1.bf16.msra.mxu0 %v5919
  %6042 = vmatprep.subr.bf16.mxu0 %v5922
  %6043 = vmatpush1.bf16.msra.mxu0 %v5921
  %6044 = vmatprep.subr.bf16.mxu0 %v5924
  %6045 = vmatpush1.bf16.msra.mxu0 %v5923
  %6046 = vmatprep.subr.bf16.mxu0 %v5926
  %6047 = vmatpush1.bf16.msra.mxu0 %v5925
  %6048 = vmatprep.subr.bf16.mxu0 %v5928
  %6049 = vmatpush1.bf16.msra.mxu0 %v5927
  %6050 = vmatprep.subr.bf16.mxu0 %v5930
  %6051 = vmatpush1.bf16.msra.mxu0 %v5929
  %6052 = vmatprep.subr.bf16.mxu0 %v5932
  %6053 = vmatpush1.bf16.msra.mxu0 %v5931
  %6054 = vmatprep.subr.bf16.mxu0 %v5934
  %6055 = vmatpush1.bf16.msra.mxu0 %v5933
  %6056 = vmatprep.subr.bf16.mxu0 %v5995
  %6057 = vmatpush1.bf16.msra.mxu0 %v5992
  %6058 = vmatprep.subr.bf16.mxu0 0
  %6059 = vmatpush1.bf16.msra.mxu0 0
  %6060 = vmatprep.subr.bf16.mxu0 0
  %6061 = vmatpush1.bf16.msra.mxu0 0
  %6062 = vmatprep.subr.bf16.mxu0 0
  %6063 = vmatpush1.bf16.msra.mxu0 0
  %6064 = vmatprep.subr.bf16.mxu0 0
  %6065 = vmatpush1.bf16.msra.mxu0 0
  %6066 = vmatprep.subr.bf16.mxu0 0
  %6067 = vmatpush1.bf16.msra.mxu0 0
  %6068 = vmatprep.subr.bf16.mxu0 0
  %6069 = vmatpush1.bf16.msra.mxu0 0
  %6070 = vmatprep.subr.bf16.mxu0 0
  %6071 = vmatpush1.bf16.msra.mxu0 0
  %6072 = vmatprep.mubr.bf16.mxu0 %v5987
  %6073 = vmatmul.mubr.bf16.gmra.mrb[0].mxu0 %v5689
  %v6074 = vpop.f32.mrb[0].mxu0
  %v6075 = vadd.f32 %v6032, %v6074
  %v6076 = vpop.f32.mrb[0].mxu0
  %v6077 = vadd.f32 %v6034, %v6076
  %v6078 = vpop.f32.mrb[0].mxu0
  %v6079 = vadd.f32 %v6036, %v6078
  %v6080 = vpop.f32.mrb[0].mxu0
  %v6081 = vadd.f32 %v6038, %v6080
  %6082 = vdwg.mxu0
  %v6083 = vpack.c.bf16 %v6079, %v6075
  %v6084 = vpack.c.bf16 %v6081, %v6077
  %6087 = vrot.lane.b32.xlu0 %v6083, 7
  %v6088 = vpop.permute.xlu0 %6087
  %6089 = vrot.lane.b32.xlu0 %v6084, 7
  %v6090 = vpop.permute.xlu0 %6089
  %vm6091 = vcmask 56320
  %v6092 = vsel %vm6091, %v6088, %v6090
  %vm6093 = vcmask 56320
  %v6095 = vsel %vm6093, 0, %v6088
  %vm6097 = vcmask 187392
  %v6099 = vsel %vm6097, %v6092, 0
  %6103 = vrot.lane.b32.xlu0 %v6095, 127
  %v6104 = vpop.permute.xlu0 %6103
  %6105 = vrot.lane.b32.xlu0 %v6099, 127
  %v6106 = vpop.permute.xlu0 %6105
  %v6107 = vsel %vm231, %v6104, %v6106
  %6110 = vrot.lane.b32.xlu0 %v6095, 126
  %v6111 = vpop.permute.xlu0 %6110
  %6112 = vrot.lane.b32.xlu0 %v6099, 126
  %v6113 = vpop.permute.xlu0 %6112
  %v6114 = vsel %vm324, %v6111, %v6113
  %6117 = vrot.lane.b32.xlu0 %v6095, 122
  %v6118 = vpop.permute.xlu0 %6117
  %6119 = vrot.lane.b32.xlu0 %v6099, 122
  %v6120 = vpop.permute.xlu0 %6119
  %vm6121 = vcmask 998400
  %v6122 = vsel %vm6121, %v6118, %v6120
  %6125 = vrot.lane.b32.xlu0 %v6095, 121
  %v6126 = vpop.permute.xlu0 %6125
  %6127 = vrot.lane.b32.xlu0 %v6099, 121
  %v6128 = vpop.permute.xlu0 %6127
  %vm6129 = vcmask 990208
  %v6130 = vsel %vm6129, %v6126, %v6128
  %6133 = vrot.lane.b32.xlu0 %v6095, 120
  %v6134 = vpop.permute.xlu0 %6133
  %6135 = vrot.lane.b32.xlu0 %v6099, 120
  %v6136 = vpop.permute.xlu0 %6135
  %vm6137 = vcmask 982016
  %v6138 = vsel %vm6137, %v6134, %v6136
  %6141 = vrot.lane.b32.xlu0 %v6095, 116
  %v6142 = vpop.permute.xlu0 %6141
  %6143 = vrot.lane.b32.xlu0 %v6099, 116
  %v6144 = vpop.permute.xlu0 %6143
  %v6145 = vsel %vm4940, %v6142, %v6144
  %6148 = vrot.lane.b32.xlu0 %v6095, 115
  %v6149 = vpop.permute.xlu0 %6148
  %6150 = vrot.lane.b32.xlu0 %v6099, 115
  %v6151 = vpop.permute.xlu0 %6150
  %vm6152 = vcmask 941056
  %v6153 = vsel %vm6152, %v6149, %v6151
  %6156 = vrot.lane.b32.xlu0 %v6095, 114
  %v6157 = vpop.permute.xlu0 %6156
  %6158 = vrot.lane.b32.xlu0 %v6099, 114
  %v6159 = vpop.permute.xlu0 %6158
  %vm6160 = vcmask 932864
  %v6161 = vsel %vm6160, %v6157, %v6159
  %v6164 = vld [vmem:[%s17] sm:$0xff]
  %v6165 = vld [vmem:[%s17 + $0x8] sm:$0xff]
  %v6166 = vld [vmem:[%s17 + $0x10] sm:$0xff]
  %v6167 = vld [vmem:[%s17 + $0x18] sm:$0xff]
  %v6168 = vld [vmem:[%s18] sm:$0xff]
  %v6169 = vld [vmem:[%s18 + $0x8] sm:$0xff]
  %v6170 = vld [vmem:[%s18 + $0x10] sm:$0xff]
  %v6171 = vld [vmem:[%s18 + $0x18] sm:$0xff]
  %6173 = vset.pattern.permute.xlu0 0
  %6174 = vperm.xlu0 %6173, %v6168
  %v6175 = vpop.permute.xlu0 %6174
  %6178 = vset.pattern.permute.xlu0 0
  %6179 = vperm.xlu0 %6178, %v6169
  %v6180 = vpop.permute.xlu0 %6179
  %6183 = vset.pattern.permute.xlu0 0
  %6184 = vperm.xlu0 %6183, %v6170
  %v6185 = vpop.permute.xlu0 %6184
  %6188 = vset.pattern.permute.xlu0 0
  %6189 = vperm.xlu0 %6188, %v6171
  %v6190 = vpop.permute.xlu0 %6189
  %v6196 = vunpack.c.l.b16 %v6164
  %v6197 = vunpack.c.h.b16 %v6164
  %v6198 = vunpack.c.l.b16 %v6165
  %v6199 = vunpack.c.h.b16 %v6165
  %v6200 = vunpack.c.l.b16 %v6166
  %v6201 = vunpack.c.h.b16 %v6166
  %v6202 = vunpack.c.l.b16 %v6167
  %v6203 = vunpack.c.h.b16 %v6167
  %v6204 = vpack.c.b16 %v6198, %v6196
  %v6205 = vpack.c.b16 %v6199, %v6197
  %v6206 = vpack.c.b16 %v6202, %v6200
  %v6207 = vpack.c.b16 %v6203, %v6201
  %v6211 = vsel %vm5488, %v6205, 0
  %v6214 = vsel %vm5488, %v6207, 0
  %6216 = vmatprep.subr.bf16.mxu0 %v6099
  %6217 = vmatpush1.bf16.msra.mxu0 %v6095
  %6218 = vmatprep.subr.bf16.mxu0 %v6106
  %6219 = vmatpush1.bf16.msra.mxu0 %v6107
  %6220 = vmatprep.subr.bf16.mxu0 %v6113
  %6221 = vmatpush1.bf16.msra.mxu0 %v6114
  %6222 = vmatprep.subr.bf16.mxu0 %v6120
  %6223 = vmatpush1.bf16.msra.mxu0 %v6122
  %6224 = vmatprep.subr.bf16.mxu0 %v6128
  %6225 = vmatpush1.bf16.msra.mxu0 %v6130
  %6226 = vmatprep.subr.bf16.mxu0 %v6136
  %6227 = vmatpush1.bf16.msra.mxu0 %v6138
  %6228 = vmatprep.subr.bf16.mxu0 %v6144
  %6229 = vmatpush1.bf16.msra.mxu0 %v6145
  %6230 = vmatprep.subr.bf16.mxu0 %v6151
  %6231 = vmatpush1.bf16.msra.mxu0 %v6153
  %6232 = vmatprep.subr.bf16.mxu0 %v6159
  %6233 = vmatpush1.bf16.msra.mxu0 %v6161
  %6234 = vmatprep.subr.bf16.mxu0 0
  %6235 = vmatpush1.bf16.msra.mxu0 0
  %6236 = vmatprep.subr.bf16.mxu0 0
  %6237 = vmatpush1.bf16.msra.mxu0 0
  %6238 = vmatprep.subr.bf16.mxu0 0
  %6239 = vmatpush1.bf16.msra.mxu0 0
  %6240 = vmatprep.subr.bf16.mxu0 0
  %6241 = vmatpush1.bf16.msra.mxu0 0
  %6242 = vmatprep.subr.bf16.mxu0 0
  %6243 = vmatpush1.bf16.msra.mxu0 0
  %6244 = vmatprep.subr.bf16.mxu0 0
  %6245 = vmatpush1.bf16.msra.mxu0 0
  %6246 = vmatprep.subr.bf16.mxu0 0
  %6247 = vmatpush1.bf16.msra.mxu0 0
  %6248 = vmatprep.mubr.bf16.mxu0 %v6211
  %6249 = vmatmul.mubr.bf16.gmra.mrb[0].mxu0 %v6204
  %v6250 = vpop.f32.mrb[0].mxu0
  %v6251 = vadd.f32 %v6175, %v6250
  %v6252 = vpop.f32.mrb[0].mxu0
  %v6253 = vadd.f32 %v6175, %v6252
  %v6254 = vpop.f32.mrb[0].mxu0
  %v6255 = vadd.f32 %v6180, %v6254
  %v6256 = vpop.f32.mrb[0].mxu0
  %v6257 = vadd.f32 %v6180, %v6256
  %6258 = vmatprep.mubr.bf16.mxu0 %v6214
  %6259 = vmatmul.mubr.bf16.gmra.mrb[0].mxu0 %v6206
  %v6260 = vpop.f32.mrb[0].mxu0
  %v6261 = vadd.f32 %v6185, %v6260
  %v6262 = vpop.f32.mrb[0].mxu0
  %v6263 = vadd.f32 %v6185, %v6262
  %v6264 = vpop.f32.mrb[0].mxu0
  %v6265 = vadd.f32 %v6190, %v6264
  %v6266 = vpop.f32.mrb[0].mxu0
  %v6267 = vadd.f32 %v6190, %v6266
  %6268 = vdwg.mxu0
  %v6269 = vmax.f32 %v6251, 0.0
  %v6270 = vmax.f32 %v6253, 0.0
  %v6271 = vmax.f32 %v6255, 0.0
  %v6272 = vmax.f32 %v6257, 0.0
  %v6273 = vmax.f32 %v6261, 0.0
  %v6274 = vmax.f32 %v6263, 0.0
  %v6275 = vmax.f32 %v6265, 0.0
  %v6276 = vmax.f32 %v6267, 0.0
  %v6277 = vld [vmem:[%s23] sm:$0x3]
  %v6279 = vlaneseq
  %v6280 = vshrl.u32 %v6279, 7
  %v6281 = vsub.s32 0, %v6280
  %v6282 = vrot.slane %v6277, %v6281
  %v6283 = vlaneseq
  %v6284 = vshrl.u32 %v6283, 7
  %v6285 = vsub.s32 1, %v6284
  %v6286 = vrot.slane %v6277, %v6285
  %v6289 = vmul.f32 %v6269, %v6282
  %v6290 = vmul.f32 %v6270, %v6286
  %v6291 = vmul.f32 %v6271, %v6282
  %v6292 = vmul.f32 %v6272, %v6286
  %v6293 = vmul.f32 %v6273, %v6282
  %v6294 = vmul.f32 %v6274, %v6286
  %v6295 = vmul.f32 %v6275, %v6282
  %v6296 = vmul.f32 %v6276, %v6286
  %v6297 = vpack.c.bf16 %v6291, %v6289
  %v6298 = vpack.c.bf16 %v6292, %v6290
  %v6299 = vpack.c.bf16 %v6295, %v6293
  %v6300 = vpack.c.bf16 %v6296, %v6294
  %v6301 = vld [vmem:[%s21] sm:$0xf]
  %v6302 = vld [vmem:[%s21 + $0x4] sm:$0xf]
  %v6303 = vld [vmem:[%s21 + $0x8] sm:$0xf]
  %v6304 = vld [vmem:[%s21 + $0xc] sm:$0xf]
  %v6305 = vld [vmem:[%s22] sm:$0xff]
  %v6306 = vld [vmem:[%s22 + $0x8] sm:$0xff]
  %v6307 = vld [vmem:[%s22 + $0x10] sm:$0xff]
  %v6308 = vld [vmem:[%s22 + $0x18] sm:$0xff]
  %6310 = vset.pattern.permute.xlu0 0
  %6311 = vperm.xlu0 %6310, %v6305
  %v6312 = vpop.permute.xlu0 %6311
  %6315 = vset.pattern.permute.xlu0 0
  %6316 = vperm.xlu0 %6315, %v6306
  %v6317 = vpop.permute.xlu0 %6316
  %6320 = vset.pattern.permute.xlu0 0
  %6321 = vperm.xlu0 %6320, %v6307
  %v6322 = vpop.permute.xlu0 %6321
  %6325 = vset.pattern.permute.xlu0 0
  %6326 = vperm.xlu0 %6325, %v6308
  %v6327 = vpop.permute.xlu0 %6326
  %v6333 = vunpack.c.l.b16 %v6301
  %v6334 = vunpack.c.l.b16 %v6302
  %v6335 = vunpack.c.l.b16 %v6303
  %v6336 = vunpack.c.l.b16 %v6304
  %v6337 = vpack.c.b16 %v6334, %v6333
  %v6338 = vpack.c.b16 %v6336, %v6335
  %v6340 = vsel %vm5488, %v6337, 0
  %v6343 = vsel %vm5488, %v6338, 0
  %6345 = vmatprep.subr.bf16.mxu0 %v6128
  %6346 = vmatpush1.bf16.msra.mxu0 %v6130
  %6347 = vmatprep.subr.bf16.mxu0 0
  %6348 = vmatpush1.bf16.msra.mxu0 0
  %6349 = vmatprep.subr.bf16.mxu0 0
  %6350 = vmatpush1.bf16.msra.mxu0 0
  %6351 = vmatprep.subr.bf16.mxu0 0
  %6352 = vmatpush1.bf16.msra.mxu0 0
  %6353 = vmatprep.subr.bf16.mxu0 0
  %6354 = vmatpush1.bf16.msra.mxu0 0
  %6355 = vmatprep.subr.bf16.mxu0 0
  %6356 = vmatpush1.bf16.msra.mxu0 0
  %6357 = vmatprep.subr.bf16.mxu0 0
  %6358 = vmatpush1.bf16.msra.mxu0 0
  %6359 = vmatprep.subr.bf16.mxu0 0
  %6360 = vmatpush1.bf16.msra.mxu0 0
  %6361 = vmatprep.subr.bf16.mxu0 0
  %6362 = vmatpush1.bf16.msra.mxu0 0
  %6363 = vmatprep.subr.bf16.mxu0 0
  %6364 = vmatpush1.bf16.msra.mxu0 0
  %6365 = vmatprep.subr.bf16.mxu0 0
  %6366 = vmatpush1.bf16.msra.mxu0 0
  %6367 = vmatprep.subr.bf16.mxu0 0
  %6368 = vmatpush1.bf16.msra.mxu0 0
  %6369 = vmatprep.subr.bf16.mxu0 0
  %6370 = vmatpush1.bf16.msra.mxu0 0
  %6371 = vmatprep.subr.bf16.mxu0 0
  %6372 = vmatpush1.bf16.msra.mxu0 0
  %6373 = vmatprep.subr.bf16.mxu0 0
  %6374 = vmatpush1.bf16.msra.mxu0 0
  %6375 = vmatprep.subr.bf16.mxu0 0
  %6376 = vmatpush1.bf16.msra.mxu0 0
  %6377 = vmatprep.mubr.bf16.mxu0 0
  %6378 = vmatmul.mubr.bf16.gmra.mrb[0].mxu0 %v6340
  %v6379 = vpop.f32.mrb[0].mxu0
  %v6380 = vadd.f32 %v6312, %v6379
  %v6381 = vpop.f32.mrb[0].mxu0
  %v6382 = vadd.f32 %v6312, %v6381
  %v6383 = vpop.f32.mrb[0].mxu0
  %v6384 = vadd.f32 %v6317, %v6383
  %v6385 = vpop.f32.mrb[0].mxu0
  %v6386 = vadd.f32 %v6317, %v6385
  %6387 = vmatprep.mubr.bf16.mxu0 0
  %6388 = vmatmul.mubr.bf16.gmra.mrb[0].mxu0 %v6343
  %v6389 = vpop.f32.mrb[0].mxu0
  %v6390 = vadd.f32 %v6322, %v6389
  %v6391 = vpop.f32.mrb[0].mxu0
  %v6392 = vadd.f32 %v6322, %v6391
  %v6393 = vpop.f32.mrb[0].mxu0
  %v6394 = vadd.f32 %v6327, %v6393
  %v6395 = vpop.f32.mrb[0].mxu0
  %v6396 = vadd.f32 %v6327, %v6395
  %6397 = vdwg.mxu0
  %6402 = vrot.lane.b32.xlu0 %v6297, 7
  %v6403 = vpop.permute.xlu0 %6402
  %6404 = vrot.lane.b32.xlu0 %v6298, 7
  %v6405 = vpop.permute.xlu0 %6404
  %6406 = vrot.lane.b32.xlu0 %v6299, 7
  %v6407 = vpop.permute.xlu0 %6406
  %6408 = vrot.lane.b32.xlu0 %v6300, 7
  %v6409 = vpop.permute.xlu0 %6408
  %v6410 = vsel %vm6091, %v6403, %v6405
  %v6411 = vsel %vm6091, %v6407, %v6409
  %v6413 = vsel %vm6093, 0, %v6403
  %v6416 = vsel %vm6093, 0, %v6407
  %v6419 = vsel %vm6097, %v6410, 0
  %v6422 = vsel %vm6097, %v6411, 0
  %6428 = vrot.lane.b32.xlu0 %v6413, 127
  %v6429 = vpop.permute.xlu0 %6428
  %6430 = vrot.lane.b32.xlu0 %v6419, 127
  %v6431 = vpop.permute.xlu0 %6430
  %6432 = vrot.lane.b32.xlu0 %v6416, 127
  %v6433 = vpop.permute.xlu0 %6432
  %6434 = vrot.lane.b32.xlu0 %v6422, 127
  %v6435 = vpop.permute.xlu0 %6434
  %v6436 = vsel %vm231, %v6429, %v6431
  %v6437 = vsel %vm231, %v6433, %v6435
  %6442 = vrot.lane.b32.xlu0 %v6413, 126
  %v6443 = vpop.permute.xlu0 %6442
  %6444 = vrot.lane.b32.xlu0 %v6419, 126
  %v6445 = vpop.permute.xlu0 %6444
  %6446 = vrot.lane.b32.xlu0 %v6416, 126
  %v6447 = vpop.permute.xlu0 %6446
  %6448 = vrot.lane.b32.xlu0 %v6422, 126
  %v6449 = vpop.permute.xlu0 %6448
  %v6450 = vsel %vm324, %v6443, %v6445
  %v6451 = vsel %vm324, %v6447, %v6449
  %6456 = vrot.lane.b32.xlu0 %v6413, 122
  %v6457 = vpop.permute.xlu0 %6456
  %6458 = vrot.lane.b32.xlu0 %v6419, 122
  %v6459 = vpop.permute.xlu0 %6458
  %6460 = vrot.lane.b32.xlu0 %v6416, 122
  %v6461 = vpop.permute.xlu0 %6460
  %6462 = vrot.lane.b32.xlu0 %v6422, 122
  %v6463 = vpop.permute.xlu0 %6462
  %v6464 = vsel %vm6121, %v6457, %v6459
  %v6465 = vsel %vm6121, %v6461, %v6463
  %6470 = vrot.lane.b32.xlu0 %v6413, 121
  %v6471 = vpop.permute.xlu0 %6470
  %6472 = vrot.lane.b32.xlu0 %v6419, 121
  %v6473 = vpop.permute.xlu0 %6472
  %6474 = vrot.lane.b32.xlu0 %v6416, 121
  %v6475 = vpop.permute.xlu0 %6474
  %6476 = vrot.lane.b32.xlu0 %v6422, 121
  %v6477 = vpop.permute.xlu0 %6476
  %v6478 = vsel %vm6129, %v6471, %v6473
  %v6479 = vsel %vm6129, %v6475, %v6477
  %6484 = vrot.lane.b32.xlu0 %v6413, 120
  %v6485 = vpop.permute.xlu0 %6484
  %6486 = vrot.lane.b32.xlu0 %v6419, 120
  %v6487 = vpop.permute.xlu0 %6486
  %6488 = vrot.lane.b32.xlu0 %v6416, 120
  %v6489 = vpop.permute.xlu0 %6488
  %6490 = vrot.lane.b32.xlu0 %v6422, 120
  %v6491 = vpop.permute.xlu0 %6490
  %v6492 = vsel %vm6137, %v6485, %v6487
  %v6493 = vsel %vm6137, %v6489, %v6491
  %6498 = vrot.lane.b32.xlu0 %v6413, 116
  %v6499 = vpop.permute.xlu0 %6498
  %6500 = vrot.lane.b32.xlu0 %v6419, 116
  %v6501 = vpop.permute.xlu0 %6500
  %6502 = vrot.lane.b32.xlu0 %v6416, 116
  %v6503 = vpop.permute.xlu0 %6502
  %6504 = vrot.lane.b32.xlu0 %v6422, 116
  %v6505 = vpop.permute.xlu0 %6504
  %v6506 = vsel %vm4940, %v6499, %v6501
  %v6507 = vsel %vm4940, %v6503, %v6505
  %6512 = vrot.lane.b32.xlu0 %v6413, 115
  %v6513 = vpop.permute.xlu0 %6512
  %6514 = vrot.lane.b32.xlu0 %v6419, 115
  %v6515 = vpop.permute.xlu0 %6514
  %6516 = vrot.lane.b32.xlu0 %v6416, 115
  %v6517 = vpop.permute.xlu0 %6516
  %6518 = vrot.lane.b32.xlu0 %v6422, 115
  %v6519 = vpop.permute.xlu0 %6518
  %v6520 = vsel %vm6152, %v6513, %v6515
  %v6521 = vsel %vm6152, %v6517, %v6519
  %6526 = vrot.lane.b32.xlu0 %v6413, 114
  %v6527 = vpop.permute.xlu0 %6526
  %6528 = vrot.lane.b32.xlu0 %v6419, 114
  %v6529 = vpop.permute.xlu0 %6528
  %6530 = vrot.lane.b32.xlu0 %v6416, 114
  %v6531 = vpop.permute.xlu0 %6530
  %6532 = vrot.lane.b32.xlu0 %v6422, 114
  %v6533 = vpop.permute.xlu0 %6532
  %v6534 = vsel %vm6160, %v6527, %v6529
  %v6535 = vsel %vm6160, %v6531, %v6533
  %v6540 = vld [vmem:[%s19] sm:$0xff]
  %v6541 = vld [vmem:[%s19 + $0x8] sm:$0xf]
  %v6542 = vld [vmem:[%s19 + $0xc] sm:$0xff]
  %v6543 = vld [vmem:[%s19 + $0x14] sm:$0xf]
  %v6544 = vld [vmem:[%s19 + $0x18] sm:$0xff]
  %v6545 = vld [vmem:[%s19 + $0x20] sm:$0xf]
  %v6546 = vld [vmem:[%s19 + $0x24] sm:$0xff]
  %v6547 = vld [vmem:[%s19 + $0x2c] sm:$0xf]
  %v6548 = vld [vmem:[%s20] sm:$0xff]
  %v6549 = vld [vmem:[%s20 + $0x8] sm:$0xff]
  %v6550 = vld [vmem:[%s20 + $0x10] sm:$0xff]
  %v6551 = vld [vmem:[%s20 + $0x18] sm:$0xff]
  %6553 = vset.pattern.permute.xlu0 0
  %6554 = vperm.xlu0 %6553, %v6548
  %v6555 = vpop.permute.xlu0 %6554
  %6558 = vset.pattern.permute.xlu0 0
  %6559 = vperm.xlu0 %6558, %v6549
  %v6560 = vpop.permute.xlu0 %6559
  %6563 = vset.pattern.permute.xlu0 0
  %6564 = vperm.xlu0 %6563, %v6550
  %v6565 = vpop.permute.xlu0 %6564
  %6568 = vset.pattern.permute.xlu0 0
  %6569 = vperm.xlu0 %6568, %v6551
  %v6570 = vpop.permute.xlu0 %6569
  %v6580 = vunpack.c.l.b16 %v6540
  %v6581 = vunpack.c.h.b16 %v6540
  %v6582 = vunpack.c.l.b16 %v6541
  %v6583 = vunpack.c.l.b16 %v6542
  %v6584 = vunpack.c.h.b16 %v6542
  %v6585 = vunpack.c.l.b16 %v6543
  %v6586 = vunpack.c.l.b16 %v6544
  %v6587 = vunpack.c.h.b16 %v6544
  %v6588 = vunpack.c.l.b16 %v6545
  %v6589 = vunpack.c.l.b16 %v6546
  %v6590 = vunpack.c.h.b16 %v6546
  %v6591 = vunpack.c.l.b16 %v6547
  %v6592 = vpack.c.b16 %v6583, %v6580
  %v6593 = vpack.c.b16 %v6584, %v6581
  %v6594 = vpack.c.b16 %v6585, %v6582
  %v6595 = vpack.c.b16 %v6589, %v6586
  %v6596 = vpack.c.b16 %v6590, %v6587
  %v6597 = vpack.c.b16 %v6591, %v6588
  %vm6602 = vcmask 261120
  %v6604 = vsel %vm6602, %v6594, 0
  %v6607 = vsel %vm6602, %v6597, 0
  %6609 = vmatprep.subr.bf16.mxu0 %v6419
  %6610 = vmatpush1.bf16.msra.mxu0 %v6413
  %6611 = vmatprep.subr.bf16.mxu0 %v6422
  %6612 = vmatpush1.bf16.msra.mxu0 %v6416
  %6613 = vmatprep.subr.bf16.mxu0 %v6431
  %6614 = vmatpush1.bf16.msra.mxu0 %v6436
  %6615 = vmatprep.subr.bf16.mxu0 %v6435
  %6616 = vmatpush1.bf16.msra.mxu0 %v6437
  %6617 = vmatprep.subr.bf16.mxu0 %v6445
  %6618 = vmatpush1.bf16.msra.mxu0 %v6450
  %6619 = vmatprep.subr.bf16.mxu0 %v6449
  %6620 = vmatpush1.bf16.msra.mxu0 %v6451
  %6621 = vmatprep.subr.bf16.mxu0 %v6459
  %6622 = vmatpush1.bf16.msra.mxu0 %v6464
  %6623 = vmatprep.subr.bf16.mxu0 %v6463
  %6624 = vmatpush1.bf16.msra.mxu0 %v6465
  %6625 = vmatprep.subr.bf16.mxu0 %v6473
  %6626 = vmatpush1.bf16.msra.mxu0 %v6478
  %6627 = vmatprep.subr.bf16.mxu0 %v6477
  %6628 = vmatpush1.bf16.msra.mxu0 %v6479
  %6629 = vmatprep.subr.bf16.mxu0 %v6487
  %6630 = vmatpush1.bf16.msra.mxu0 %v6492
  %6631 = vmatprep.subr.bf16.mxu0 %v6491
  %6632 = vmatpush1.bf16.msra.mxu0 %v6493
  %6633 = vmatprep.subr.bf16.mxu0 %v6501
  %6634 = vmatpush1.bf16.msra.mxu0 %v6506
  %6635 = vmatprep.subr.bf16.mxu0 %v6505
  %6636 = vmatpush1.bf16.msra.mxu0 %v6507
  %6637 = vmatprep.subr.bf16.mxu0 %v6515
  %6638 = vmatpush1.bf16.msra.mxu0 %v6520
  %6639 = vmatprep.subr.bf16.mxu0 %v6519
  %6640 = vmatpush1.bf16.msra.mxu0 %v6521
  %6641 = vmatprep.mubr.bf16.mxu0 %v6593
  %6642 = vmatmul.mubr.bf16.gmra.mrb[0].mxu0 %v6592
  %v6643 = vpop.f32.mrb[0].mxu0
  %v6644 = vadd.f32 %v6555, %v6643
  %v6645 = vpop.f32.mrb[0].mxu0
  %v6646 = vadd.f32 %v6555, %v6645
  %v6647 = vpop.f32.mrb[0].mxu0
  %v6648 = vadd.f32 %v6560, %v6647
  %v6649 = vpop.f32.mrb[0].mxu0
  %v6650 = vadd.f32 %v6560, %v6649
  %6651 = vmatprep.mubr.bf16.mxu0 %v6596
  %6652 = vmatmul.mubr.bf16.gmra.mrb[0].mxu0 %v6595
  %v6653 = vpop.f32.mrb[0].mxu0
  %v6654 = vadd.f32 %v6565, %v6653
  %v6655 = vpop.f32.mrb[0].mxu0
  %v6656 = vadd.f32 %v6565, %v6655
  %v6657 = vpop.f32.mrb[0].mxu0
  %v6658 = vadd.f32 %v6570, %v6657
  %v6659 = vpop.f32.mrb[0].mxu0
  %v6660 = vadd.f32 %v6570, %v6659
  %6661 = vdwg.mxu0
  %6662 = vmatprep.subr.bf16.mxu0 %v6529
  %6663 = vmatpush1.bf16.msra.mxu0 %v6534
  %6664 = vmatprep.subr.bf16.mxu0 %v6533
  %6665 = vmatpush1.bf16.msra.mxu0 %v6535
  %6666 = vmatprep.subr.bf16.mxu0 0
  %6667 = vmatpush1.bf16.msra.mxu0 0
  %6668 = vmatprep.subr.bf16.mxu0 0
  %6669 = vmatpush1.bf16.msra.mxu0 0
  %6670 = vmatprep.subr.bf16.mxu0 0
  %6671 = vmatpush1.bf16.msra.mxu0 0
  %6672 = vmatprep.subr.bf16.mxu0 0
  %6673 = vmatpush1.bf16.msra.mxu0 0
  %6674 = vmatprep.subr.bf16.mxu0 0
  %6675 = vmatpush1.bf16.msra.mxu0 0
  %6676 = vmatprep.subr.bf16.mxu0 0
  %6677 = vmatpush1.bf16.msra.mxu0 0
  %6678 = vmatprep.subr.bf16.mxu0 0
  %6679 = vmatpush1.bf16.msra.mxu0 0
  %6680 = vmatprep.subr.bf16.mxu0 0
  %6681 = vmatpush1.bf16.msra.mxu0 0
  %6682 = vmatprep.subr.bf16.mxu0 0
  %6683 = vmatpush1.bf16.msra.mxu0 0
  %6684 = vmatprep.subr.bf16.mxu0 0
  %6685 = vmatpush1.bf16.msra.mxu0 0
  %6686 = vmatprep.subr.bf16.mxu0 0
  %6687 = vmatpush1.bf16.msra.mxu0 0
  %6688 = vmatprep.subr.bf16.mxu0 0
  %6689 = vmatpush1.bf16.msra.mxu0 0
  %6690 = vmatprep.subr.bf16.mxu0 0
  %6691 = vmatpush1.bf16.msra.mxu0 0
  %6692 = vmatprep.subr.bf16.mxu0 0
  %6693 = vmatpush1.bf16.msra.mxu0 0
  %6694 = vmatprep.mubr.bf16.mxu0 0
  %6695 = vmatmul.mubr.bf16.gmra.mrb[0].mxu0 %v6604
  %v6696 = vpop.f32.mrb[0].mxu0
  %v6697 = vadd.f32 %v6644, %v6696
  %v6698 = vpop.f32.mrb[0].mxu0
  %v6699 = vadd.f32 %v6646, %v6698
  %v6700 = vpop.f32.mrb[0].mxu0
  %v6701 = vadd.f32 %v6648, %v6700
  %v6702 = vpop.f32.mrb[0].mxu0
  %v6703 = vadd.f32 %v6650, %v6702
  %6704 = vmatprep.mubr.bf16.mxu0 0
  %6705 = vmatmul.mubr.bf16.gmra.mrb[0].mxu0 %v6607
  %v6706 = vpop.f32.mrb[0].mxu0
  %v6707 = vadd.f32 %v6654, %v6706
  %v6708 = vpop.f32.mrb[0].mxu0
  %v6709 = vadd.f32 %v6656, %v6708
  %v6710 = vpop.f32.mrb[0].mxu0
  %v6711 = vadd.f32 %v6658, %v6710
  %v6712 = vpop.f32.mrb[0].mxu0
  %v6713 = vadd.f32 %v6660, %v6712
  %6714 = vdwg.mxu0
  %v6715 = vadd.f32 %v6697, %v6380
  %v6716 = vadd.f32 %v6699, %v6382
  %v6717 = vadd.f32 %v6701, %v6384
  %v6718 = vadd.f32 %v6703, %v6386
  %v6719 = vadd.f32 %v6707, %v6390
  %v6720 = vadd.f32 %v6709, %v6392
  %v6721 = vadd.f32 %v6711, %v6394
  %v6722 = vadd.f32 %v6713, %v6396
  %v6723 = vmax.f32 %v6715, 0.0
  %v6724 = vmax.f32 %v6716, 0.0
  %v6725 = vmax.f32 %v6717, 0.0
  %v6726 = vmax.f32 %v6718, 0.0
  %v6727 = vmax.f32 %v6719, 0.0
  %v6728 = vmax.f32 %v6720, 0.0
  %v6729 = vmax.f32 %v6721, 0.0
  %v6730 = vmax.f32 %v6722, 0.0
  %6739 = vrot.lane.b32.xlu0 %v6723, 127
  %v6740 = vpop.permute.xlu0 %6739
  %6741 = vrot.lane.b32.xlu0 %v6724, 127
  %v6742 = vpop.permute.xlu0 %6741
  %6743 = vrot.lane.b32.xlu0 %v6725, 127
  %v6744 = vpop.permute.xlu0 %6743
  %6745 = vrot.lane.b32.xlu0 %v6726, 127
  %v6746 = vpop.permute.xlu0 %6745
  %6747 = vrot.lane.b32.xlu0 %v6727, 127
  %v6748 = vpop.permute.xlu0 %6747
  %6749 = vrot.lane.b32.xlu0 %v6728, 127
  %v6750 = vpop.permute.xlu0 %6749
  %6751 = vrot.lane.b32.xlu0 %v6729, 127
  %v6752 = vpop.permute.xlu0 %6751
  %6753 = vrot.lane.b32.xlu0 %v6730, 127
  %v6754 = vpop.permute.xlu0 %6753
  %v6755 = vsel %vm2396, %v6740, %v6742
  %v6756 = vsel %vm2396, %v6744, %v6746
  %v6757 = vsel %vm2396, %v6748, %v6750
  %v6758 = vsel %vm2396, %v6752, %v6754
  %v6767 = vmax.f32 %v6723, %v6755
  %v6768 = vmax.f32 %v6724, %v6742
  %v6769 = vmax.f32 %v6725, %v6756
  %v6770 = vmax.f32 %v6726, %v6746
  %v6771 = vmax.f32 %v6727, %v6757
  %v6772 = vmax.f32 %v6728, %v6750
  %v6773 = vmax.f32 %v6729, %v6758
  %v6774 = vmax.f32 %v6730, %v6754
  %6783 = vrot.lane.b32.xlu0 %v6767, 122
  %v6784 = vpop.permute.xlu0 %6783
  %6785 = vrot.lane.b32.xlu0 %v6768, 122
  %v6786 = vpop.permute.xlu0 %6785
  %6787 = vrot.lane.b32.xlu0 %v6769, 122
  %v6788 = vpop.permute.xlu0 %6787
  %6789 = vrot.lane.b32.xlu0 %v6770, 122
  %v6790 = vpop.permute.xlu0 %6789
  %6791 = vrot.lane.b32.xlu0 %v6771, 122
  %v6792 = vpop.permute.xlu0 %6791
  %6793 = vrot.lane.b32.xlu0 %v6772, 122
  %v6794 = vpop.permute.xlu0 %6793
  %6795 = vrot.lane.b32.xlu0 %v6773, 122
  %v6796 = vpop.permute.xlu0 %6795
  %6797 = vrot.lane.b32.xlu0 %v6774, 122
  %v6798 = vpop.permute.xlu0 %6797
  %vm6799 = vcmask 998400
  %v6800 = vsel %vm6799, %v6784, %v6786
  %v6801 = vsel %vm6799, %v6788, %v6790
  %v6802 = vsel %vm6799, %v6792, %v6794
  %v6803 = vsel %vm6799, %v6796, %v6798
  %v6812 = vmax.f32 %v6767, %v6800
  %v6813 = vmax.f32 %v6768, %v6786
  %v6814 = vmax.f32 %v6769, %v6801
  %v6815 = vmax.f32 %v6770, %v6790
  %v6816 = vmax.f32 %v6771, %v6802
  %v6817 = vmax.f32 %v6772, %v6794
  %v6818 = vmax.f32 %v6773, %v6803
  %v6819 = vmax.f32 %v6774, %v6798
  %v6820 = vpack.c.bf16 %v6814, %v6812
  %v6821 = vpack.c.bf16 %v6815, %v6813
  %v6822 = vpack.c.bf16 %v6818, %v6816
  %v6823 = vpack.c.bf16 %v6819, %v6817
  %v6824 = vld [vmem:[%s24] sm:$0xf]
  %v6825 = vld [vmem:[%s24 + $0x4] sm:$0xf]
  %v6826 = vld [vmem:[%s24 + $0x8] sm:$0xf]
  %v6827 = vld [vmem:[%s24 + $0xc] sm:$0xf]
  %v6828 = vld [vmem:[%s24 + $0x10] sm:$0xf]
  %v6829 = vld [vmem:[%s24 + $0x14] sm:$0xf]
  %v6830 = vld [vmem:[%s24 + $0x18] sm:$0xf]
  %v6831 = vld [vmem:[%s24 + $0x1c] sm:$0xf]
  %v6832 = vld [vmem:[%s24 + $0x20] sm:$0xf]
  %v6833 = vld [vmem:[%s24 + $0x24] sm:$0xf]
  %v6834 = vld [vmem:[%s24 + $0x28] sm:$0xf]
  %v6835 = vld [vmem:[%s24 + $0x2c] sm:$0xf]
  %v6836 = vld [vmem:[%s24 + $0x30] sm:$0xf]
  %v6837 = vld [vmem:[%s24 + $0x34] sm:$0xf]
  %v6838 = vld [vmem:[%s24 + $0x38] sm:$0xf]
  %v6839 = vld [vmem:[%s24 + $0x3c] sm:$0xf]
  %v6840 = vld [vmem:[%s24 + $0x40] sm:$0xf]
  %v6841 = vld [vmem:[%s24 + $0x44] sm:$0x1]
  %v6860 = vunpack.c.l.b16 %v6824
  %v6861 = vunpack.c.l.b16 %v6825
  %v6862 = vunpack.c.l.b16 %v6826
  %v6863 = vunpack.c.l.b16 %v6827
  %v6864 = vunpack.c.l.b16 %v6828
  %v6865 = vunpack.c.l.b16 %v6829
  %v6866 = vunpack.c.l.b16 %v6830
  %v6867 = vunpack.c.l.b16 %v6831
  %v6868 = vunpack.c.l.b16 %v6832
  %v6869 = vunpack.c.l.b16 %v6833
  %v6870 = vunpack.c.l.b16 %v6834
  %v6871 = vunpack.c.l.b16 %v6835
  %v6872 = vunpack.c.l.b16 %v6836
  %v6873 = vunpack.c.l.b16 %v6837
  %v6874 = vunpack.c.l.b16 %v6838
  %v6875 = vunpack.c.l.b16 %v6839
  %v6876 = vunpack.c.l.b16 %v6840
  %v6877 = vunpack.c.l.b16 %v6841
  %v6878 = vpack.c.b16 %v6861, %v6860
  %v6879 = vpack.c.b16 %v6863, %v6862
  %v6880 = vpack.c.b16 %v6865, %v6864
  %v6881 = vpack.c.b16 %v6867, %v6866
  %v6882 = vpack.c.b16 %v6869, %v6868
  %v6883 = vpack.c.b16 %v6871, %v6870
  %v6884 = vpack.c.b16 %v6873, %v6872
  %v6885 = vpack.c.b16 %v6875, %v6874
  %v6886 = vpack.c.b16 %v6877, %v6876
  %v6896 = vsel %vm882, %v6821, 0
  %v6899 = vsel %vm882, %v6823, 0
  %v6902 = vand.u32 %v6886, %v888
  %6904 = vmatprep.subr.bf16.mxu0 0
  %6905 = vmatpush1.bf16.msra.mxu0 %v6878
  %6906 = vmatprep.subr.bf16.mxu0 0
  %6907 = vmatpush1.bf16.msra.mxu0 %v6879
  %6908 = vmatprep.subr.bf16.mxu0 0
  %6909 = vmatpush1.bf16.msra.mxu0 %v6880
  %6910 = vmatprep.subr.bf16.mxu0 0
  %6911 = vmatpush1.bf16.msra.mxu0 %v6881
  %6912 = vmatprep.subr.bf16.mxu0 0
  %6913 = vmatpush1.bf16.msra.mxu0 %v6882
  %6914 = vmatprep.subr.bf16.mxu0 0
  %6915 = vmatpush1.bf16.msra.mxu0 %v6883
  %6916 = vmatprep.subr.bf16.mxu0 0
  %6917 = vmatpush1.bf16.msra.mxu0 %v6884
  %6918 = vmatprep.subr.bf16.mxu0 0
  %6919 = vmatpush1.bf16.msra.mxu0 %v6885
  %6920 = vmatprep.subr.bf16.mxu0 0
  %6921 = vmatpush1.bf16.msra.mxu0 %v6902
  %6922 = vmatprep.subr.bf16.mxu0 0
  %6923 = vmatpush1.bf16.msra.mxu0 0
  %6924 = vmatprep.subr.bf16.mxu0 0
  %6925 = vmatpush1.bf16.msra.mxu0 0
  %6926 = vmatprep.subr.bf16.mxu0 0
  %6927 = vmatpush1.bf16.msra.mxu0 0
  %6928 = vmatprep.subr.bf16.mxu0 0
  %6929 = vmatpush1.bf16.msra.mxu0 0
  %6930 = vmatprep.subr.bf16.mxu0 0
  %6931 = vmatpush1.bf16.msra.mxu0 0
  %6932 = vmatprep.subr.bf16.mxu0 0
  %6933 = vmatpush1.bf16.msra.mxu0 0
  %6934 = vmatprep.subr.bf16.mxu0 0
  %6935 = vmatpush1.bf16.msra.mxu0 0
  %6936 = vmatprep.mubr.bf16.mxu0 %v6896
  %6937 = vmatmul.mubr.bf16.gmra.mrb[0].mxu0 %v6820
  %v6938 = vpop.f32.mrb[0].mxu0
  %v6939 = vadd.f32 0.0, %v6938
  %v6940 = vpop.f32.mrb[0].mxu0
  %v6941 = vpop.f32.mrb[0].mxu0
  %v6942 = vadd.f32 0.0, %v6941
  %v6943 = vpop.f32.mrb[0].mxu0
  %6944 = vmatprep.mubr.bf16.mxu0 %v6899
  %6945 = vmatmul.mubr.bf16.gmra.mrb[0].mxu0 %v6822
  %v6946 = vpop.f32.mrb[0].mxu0
  %v6947 = vadd.f32 0.0, %v6946
  %v6948 = vpop.f32.mrb[0].mxu0
  %v6949 = vpop.f32.mrb[0].mxu0
  %v6950 = vadd.f32 0.0, %v6949
  %v6951 = vpop.f32.mrb[0].mxu0
  %6952 = vdwg.mxu0
  %6957 = vrot.lane.b32.xlu0 %v6939, 124
  %v6958 = vpop.permute.xlu0 %6957
  %6959 = vrot.lane.b32.xlu0 %v6942, 124
  %v6960 = vpop.permute.xlu0 %6959
  %6961 = vrot.lane.b32.xlu0 %v6947, 124
  %v6962 = vpop.permute.xlu0 %6961
  %6963 = vrot.lane.b32.xlu0 %v6950, 124
  %v6964 = vpop.permute.xlu0 %6963
  %6969 = vrot.lane.b32.xlu0 %v6939, 120
  %v6970 = vpop.permute.xlu0 %6969
  %6971 = vrot.lane.b32.xlu0 %v6942, 120
  %v6972 = vpop.permute.xlu0 %6971
  %6973 = vrot.lane.b32.xlu0 %v6947, 120
  %v6974 = vpop.permute.xlu0 %6973
  %6975 = vrot.lane.b32.xlu0 %v6950, 120
  %v6976 = vpop.permute.xlu0 %6975
  %6981 = vrot.lane.b32.xlu0 %v6939, 116
  %v6982 = vpop.permute.xlu0 %6981
  %6983 = vrot.lane.b32.xlu0 %v6942, 116
  %v6984 = vpop.permute.xlu0 %6983
  %6985 = vrot.lane.b32.xlu0 %v6947, 116
  %v6986 = vpop.permute.xlu0 %6985
  %6987 = vrot.lane.b32.xlu0 %v6950, 116
  %v6988 = vpop.permute.xlu0 %6987
  %vm6993 = vcmask 31744
  %6994 = vst.msk [vmem:[%s27] sm:$0xff] %vm6993, %v6939
  %6995 = vst.msk [vmem:[%s27 + $0x8] sm:$0xff] %vm6993, %v6942
  %6996 = vst.msk [vmem:[%s27 + $0x10] sm:$0xff] %vm6993, %v6947
  %6997 = vst.msk [vmem:[%s27 + $0x18] sm:$0xff] %vm6993, %v6950
  %6998 = vst.msk [vmem:[%s27 + $0x20] sm:$0xff] %vm6993, %v6958
  %6999 = vst.msk [vmem:[%s27 + $0x28] sm:$0xff] %vm6993, %v6960
  %7000 = vst.msk [vmem:[%s27 + $0x30] sm:$0xff] %vm6993, %v6962
  %7001 = vst.msk [vmem:[%s27 + $0x38] sm:$0xff] %vm6993, %v6964
  %7002 = vst.msk [vmem:[%s27 + $0x40] sm:$0xff] %vm6993, %v6970
  %7003 = vst.msk [vmem:[%s27 + $0x48] sm:$0xff] %vm6993, %v6972
  %7004 = vst.msk [vmem:[%s27 + $0x50] sm:$0xff] %vm6993, %v6974
  %7005 = vst.msk [vmem:[%s27 + $0x58] sm:$0xff] %vm6993, %v6976
  %7006 = vst.msk [vmem:[%s27 + $0x60] sm:$0xff] %vm6993, %v6982
  %7007 = vst.msk [vmem:[%s27 + $0x68] sm:$0xff] %vm6993, %v6984
  %7008 = vst.msk [vmem:[%s27 + $0x70] sm:$0xff] %vm6993, %v6986
  %7009 = vst.msk [vmem:[%s27 + $0x78] sm:$0xff] %vm6993, %v6988
  %v7010 = vld [vmem:[%s25] sm:$0xf]
  %v7011 = vld [vmem:[%s25 + $0x4] sm:$0xf]
  %v7012 = vld [vmem:[%s25 + $0x8] sm:$0xf]
  %v7013 = vld [vmem:[%s25 + $0xc] sm:$0xf]
  %v7014 = vpack.c.bf16 %v6942, %v6939
  %v7015 = vpack.c.bf16 %v6950, %v6947
  %v7016 = vpack.c.bf16 %v6960, %v6958
  %v7017 = vpack.c.bf16 %v6964, %v6962
  %v7018 = vpack.c.bf16 %v6972, %v6970
  %v7019 = vpack.c.bf16 %v6976, %v6974
  %v7020 = vpack.c.bf16 %v6984, %v6982
  %v7021 = vpack.c.bf16 %v6988, %v6986
  %v7022 = vld [vmem:[%s26] sm:$0xff]
  %v7023 = vld [vmem:[%s26 + $0x8] sm:$0xff]
  %v7024 = vld [vmem:[%s26 + $0x10] sm:$0xff]
  %v7025 = vld [vmem:[%s26 + $0x18] sm:$0xff]
  %7027 = vset.pattern.permute.xlu0 0
  %7028 = vperm.xlu0 %7027, %v7022
  %v7029 = vpop.permute.xlu0 %7028
  %7032 = vset.pattern.permute.xlu0 0
  %7033 = vperm.xlu0 %7032, %v7023
  %v7034 = vpop.permute.xlu0 %7033
  %7037 = vset.pattern.permute.xlu0 0
  %7038 = vperm.xlu0 %7037, %v7024
  %v7039 = vpop.permute.xlu0 %7038
  %7042 = vset.pattern.permute.xlu0 0
  %7043 = vperm.xlu0 %7042, %v7025
  %v7044 = vpop.permute.xlu0 %7043
  %v7050 = vunpack.c.l.b16 %v7010
  %v7051 = vunpack.c.l.b16 %v7011
  %v7052 = vunpack.c.l.b16 %v7012
  %v7053 = vunpack.c.l.b16 %v7013
  %v7054 = vpack.c.b16 %v7051, %v7050
  %v7055 = vpack.c.b16 %v7053, %v7052
  %7058 = vmatprep.subr.bf16.mxu0 0
  %7059 = vmatpush1.bf16.msra.mxu0 %v7014
  %7060 = vmatprep.subr.bf16.mxu0 0
  %7061 = vmatpush1.bf16.msra.mxu0 %v7015
  %7062 = vmatprep.subr.bf16.mxu0 0
  %7063 = vmatpush1.bf16.msra.mxu0 %v7016
  %7064 = vmatprep.subr.bf16.mxu0 0
  %7065 = vmatpush1.bf16.msra.mxu0 %v7017
  %7066 = vmatprep.subr.bf16.mxu0 0
  %7067 = vmatpush1.bf16.msra.mxu0 %v7018
  %7068 = vmatprep.subr.bf16.mxu0 0
  %7069 = vmatpush1.bf16.msra.mxu0 %v7019
  %7070 = vmatprep.subr.bf16.mxu0 0
  %7071 = vmatpush1.bf16.msra.mxu0 %v7020
  %7072 = vmatprep.subr.bf16.mxu0 0
  %7073 = vmatpush1.bf16.msra.mxu0 %v7021
  %7074 = vmatprep.subr.bf16.mxu0 0
  %7075 = vmatpush1.bf16.msra.mxu0 0
  %7076 = vmatprep.subr.bf16.mxu0 0
  %7077 = vmatpush1.bf16.msra.mxu0 0
  %7078 = vmatprep.subr.bf16.mxu0 0
  %7079 = vmatpush1.bf16.msra.mxu0 0
  %7080 = vmatprep.subr.bf16.mxu0 0
  %7081 = vmatpush1.bf16.msra.mxu0 0
  %7082 = vmatprep.subr.bf16.mxu0 0
  %7083 = vmatpush1.bf16.msra.mxu0 0
  %7084 = vmatprep.subr.bf16.mxu0 0
  %7085 = vmatpush1.bf16.msra.mxu0 0
  %7086 = vmatprep.subr.bf16.mxu0 0
  %7087 = vmatpush1.bf16.msra.mxu0 0
  %7088 = vmatprep.subr.bf16.mxu0 0
  %7089 = vmatpush1.bf16.msra.mxu0 0
  %7090 = vmatprep.mubr.bf16.mxu0 0
  %7091 = vmatmul.mubr.bf16.gmra.mrb[0].mxu0 %v7054
  %v7092 = vpop.f32.mrb[0].mxu0
  %v7093 = vadd.f32 %v7029, %v7092
  %v7094 = vpop.f32.mrb[0].mxu0
  %v7095 = vpop.f32.mrb[0].mxu0
  %v7096 = vadd.f32 %v7034, %v7095
  %v7097 = vpop.f32.mrb[0].mxu0
  %7098 = vmatprep.mubr.bf16.mxu0 0
  %7099 = vmatmul.mubr.bf16.gmra.mrb[0].mxu0 %v7055
  %v7100 = vpop.f32.mrb[0].mxu0
  %v7101 = vadd.f32 %v7039, %v7100
  %v7102 = vpop.f32.mrb[0].mxu0
  %v7103 = vpop.f32.mrb[0].mxu0
  %v7104 = vadd.f32 %v7044, %v7103
  %v7105 = vpop.f32.mrb[0].mxu0
  %7106 = vdwg.mxu0
  %7107 = vst.msk [vmem:[%s28] sm:$0xff] %vm6993, %v7093
  %7108 = vst.msk [vmem:[%s28 + $0x8] sm:$0xff] %vm6993, %v7096
  %7109 = vst.msk [vmem:[%s28 + $0x10] sm:$0xff] %vm6993, %v7101
  %7110 = vst.msk [vmem:[%s28 + $0x18] sm:$0xff] %vm6993, %v7104
  // Predicated region
  $region110: #{tpu_custom_call.1} parent=0 // pred_check
    _
  $region111: #{tpu_custom_call.1} parent=0 // pred_check_branch
    %7112 = sbr.rel (0) target = $region113
  $region112: #{tpu_custom_call.1} parent=0 // pred_region
    _
  $region113: #{tpu_custom_call.1} parent=0 // pred_fallthru
    _
  // Predicated region
  $region114: #{tpu_custom_call.1} parent=0 // pred_check
    _
  $region115: #{tpu_custom_call.1} parent=0 // pred_check_branch
    %7114 = sbr.rel (0) target = $region117
  $region116: #{tpu_custom_call.1} parent=0 // pred_region
    _
  $region117: #{tpu_custom_call.1} parent=0 // pred_fallthru
    _
  // Predicated region
  $region118: #{tpu_custom_call.1} parent=0 // pred_check
    _
  $region119: #{tpu_custom_call.1} parent=0 // pred_check_branch
    %7116 = sbr.rel (0) target = $region121
  $region120: #{tpu_custom_call.1} parent=0 // pred_region
    _
  $region121: #{tpu_custom_call.1} parent=0 // pred_fallthru
    _
  // Predicated region
  $region122: #{tpu_custom_call.1} parent=0 // pred_check
    _
  $region123: #{tpu_custom_call.1} parent=0 // pred_check_branch
    %7118 = sbr.rel (0) target = $region125
  $region124: #{tpu_custom_call.1} parent=0 // pred_region
    _
  $region125: #{tpu_custom_call.1} parent=0 // pred_fallthru
    _

</llo_original>
